<compile_context>
chip_gen: v6e
topology: v6e:2x2x1
jax: 0.10.0
libtpu: 0.0.40
codegen_flags: <defaults>
</compile_context>

<pallas_src>
import functools

import numpy as np
import jax
import jax.numpy as jnp
from jax.experimental import pallas as pl
from jax.experimental.pallas import tpu as pltpu


# ----------------------------------------------------------------------------
# Model hyper-parameters (small shapes consistent with the module)
# ----------------------------------------------------------------------------
IN_CH = 4          # downward_params: input channels
ENC_CH = [8, 16]   # downward_params: per-stage feature widths
BOT_CH = 32        # bottleneck width
N_CLASSES = 3      # output_params: number of classes
H = W = 16

_TAPS = [(dy, dx) for dy in (-1, 0, 1) for dx in (-1, 0, 1)]   # conv tap order
_UPTAPS = [(0, 0), (0, 1), (1, 0), (1, 1)]                     # upconv tap order


# ----------------------------------------------------------------------------
# Host-built resident constants (masks / gather / scatter matrices), numpy only
# ----------------------------------------------------------------------------
def _border_masks(h, w):
    """(3, h*w) 0/1 mask, row dx+1: pixel column w_px+dx stays inside the image."""
    p = h * w
    wp = np.arange(p) % w
    m = np.zeros((3, p), np.float32)
    for dx in (-1, 0, 1):
        m[dx + 1] = ((wp + dx >= 0) & (wp + dx <= w - 1)).astype(np.float32)
    return m


def _pool_gather(h, w):
    """(h*w - w - 1, (h/2)*(w/2)) 0/1 matrix selecting top-left corner rows of each
    2x2 window from the 4-way-maxed slab."""
    ho, wo = h // 2, w // 2
    g = np.zeros((h * w - w - 1, ho * wo), np.float32)
    for i in range(ho):
        for j in range(wo):
            g[2 * i * w + 2 * j, i * wo + j] = 1.0
    return g


def _upsample_scatter(hin, win):
    """(4*Pin, 4*Pin) 0/1 scatter matrix for ConvTranspose2d(k=2, s=2): tap block t
    places source pixel (i,j) at output pixel (2i+a, 2j+b)."""
    pin = hin * win
    wout = 2 * win
    u = np.zeros((4 * pin, 4 * pin), np.float32)
    for t, (a, b) in enumerate(_UPTAPS):
        for i in range(hin):
            for j in range(win):
                u[t * pin + i * win + j, (2 * i + a) * wout + 2 * j + b] = 1.0
    return u


# ----------------------------------------------------------------------------
# In-kernel layer helpers (values are (C, P) bf16 slabs, accumulation in f32)
# ----------------------------------------------------------------------------
def _conv3x3(imcol_ref, mask_ref, w_img, srcs, w_ref, b_ref, relu=True):
    """3x3 same-padded conv (cross-correlation, padding=1) on the channel-concat of
    `srcs`.  Builds an im2col slab (K, P) in VMEM scratch via static shifted lane
    slices + border mask, then one K-dense matmul against w_ref (Cout, K)."""
    p = srcs[0].shape[1]
    k_total = 9 * sum(s.shape[0] for s in srcs)
    imcol_ref[0:k_total, 0:p] = jnp.zeros((k_total, p), jnp.bfloat16)
    row0 = 0
    for x in srcs:
        cin = x.shape[0]
        for t, (dy, dx) in enumerate(_TAPS):
            off = dy * w_img + dx
            lo, hi = max(0, -off), min(p, p - off)
            piece = x[:, lo + off:hi + off] * mask_ref[dx + 1:dx + 2, lo:hi]
            imcol_ref[row0 + t * cin: row0 + t * cin + cin, lo:hi] = piece
        row0 += 9 * cin
    acc = jnp.dot(w_ref[...], imcol_ref[0:k_total, 0:p],
                  preferred_element_type=jnp.float32)
    acc = acc + b_ref[...]
    if relu:
        acc = jnp.maximum(acc, 0.0)
    return acc.astype(jnp.bfloat16)


def _maxpool2x2(x, g_ref, w_img):
    """2x2 stride-2 maxpool: 4-way max of overlapped lane slices, then one small 0/1
    gather matmul selecting the top-left row of each window."""
    p = x.shape[1]
    n = p - w_img - 1
    m = jnp.maximum(jnp.maximum(x[:, 0:n], x[:, 1:1 + n]),
                    jnp.maximum(x[:, w_img:w_img + n], x[:, w_img + 1:w_img + 1 + n]))
    return jnp.dot(m, g_ref[...], preferred_element_type=jnp.float32).astype(jnp.bfloat16)


def _upconv2x2(x, wv_ref, b_ref, scat_ref, cout):
    """ConvTranspose2d(kernel=2, stride=2): one channel matmul producing all 4 taps
    stacked on sublanes, then 4 small 0/1 scatter matmuls to the output grid + bias."""
    pin = x.shape[1]
    pout = scat_ref.shape[1]
    yv = jnp.dot(wv_ref[...], x, preferred_element_type=jnp.float32).astype(jnp.bfloat16)
    acc = jnp.zeros((cout, pout), jnp.float32)
    for t in range(4):
        acc = acc + jnp.dot(yv[t * cout:(t + 1) * cout, :],
                            scat_ref[t * pin:(t + 1) * pin, :],
                            preferred_element_type=jnp.float32)
    return (acc + b_ref[...]).astype(jnp.bfloat16)


# ----------------------------------------------------------------------------
# The fused U-Net kernel (one grid step == one image)
# ----------------------------------------------------------------------------
def _unet_kernel(h_img, w_img,
                 x_ref, m1_ref, m2_ref, m3_ref, g1_ref, g2_ref, u1s_ref, u2s_ref,
                 we1a, be1a, we1b, be1b, we2a, be2a, we2b, be2b,
                 wbna, bbna, wbnb, bbnb,
                 wu1, bu1, wd1a, bd1a, wd1b, bd1b,
                 wu2, bu2, wd2a, bd2a, wd2b, bd2b,
                 wcls, bcls,
                 out_ref, imcol):
    w1 = w_img
    w2 = w_img // 2
    w3 = w_img // 4

    x = x_ref[0]                                                   # (Cin, H*W) bf16

    # --- Encoder ---
    s1 = _conv3x3(imcol, m1_ref, w1, [x], we1a, be1a)
    s1 = _conv3x3(imcol, m1_ref, w1, [s1], we1b, be1b)             # skip 1: (8, 256)
    p1 = _maxpool2x2(s1, g1_ref, w1)                               # (8, 64)
    s2 = _conv3x3(imcol, m2_ref, w2, [p1], we2a, be2a)
    s2 = _conv3x3(imcol, m2_ref, w2, [s2], we2b, be2b)             # skip 2: (16, 64)
    p2 = _maxpool2x2(s2, g2_ref, w2)                               # (16, 16)
    bn = _conv3x3(imcol, m3_ref, w3, [p2], wbna, bbna)
    bn = _conv3x3(imcol, m3_ref, w3, [bn], wbnb, bbnb)             # bottleneck: (32, 16)

    # --- Decoder (skip concat realized as split-weight im2col blocks) ---
    u1 = _upconv2x2(bn, wu1, bu1, u1s_ref, ENC_CH[1])              # (16, 64)
    d1 = _conv3x3(imcol, m2_ref, w2, [u1, s2], wd1a, bd1a)
    d1 = _conv3x3(imcol, m2_ref, w2, [d1], wd1b, bd1b)             # (16, 64)
    u2 = _upconv2x2(d1, wu2, bu2, u2s_ref, ENC_CH[0])              # (8, 256)
    d2 = _conv3x3(imcol, m1_ref, w1, [u2, s1], wd2a, bd2a)
    d2 = _conv3x3(imcol, m1_ref, w1, [d2], wd2b, bd2b)             # (8, 256)

    # --- Classifier (UnetOutputBlock): 1x1 conv + softmax over classes (sublanes) ---
    logits = jnp.dot(wcls[...], d2, preferred_element_type=jnp.float32) + bcls[...]
    mx = jnp.max(logits, axis=0, keepdims=True)
    e = jnp.exp(logits - mx)
    s = jnp.sum(e, axis=0, keepdims=True)
    probs = e * pl.reciprocal(s, approx=True)
    out_ref[0] = probs.astype(out_ref.dtype)                       # lane-dense (3, 256)


# ----------------------------------------------------------------------------
# Parameters (from-scratch init) and host-side operand preparation
# ----------------------------------------------------------------------------
def _conv_init(key, kh, kw, cin, cout):
    kw_, kb_ = jax.random.split(key)
    fan_in = kh * kw * cin
    w = jax.random.normal(kw_, (kh, kw, cin, cout), jnp.float32) / jnp.sqrt(float(fan_in))
    b = 0.01 * jax.random.normal(kb_, (cout,), jnp.float32)
    return w, b


def init_params(key):
    keys = iter(jax.random.split(key, 16))
    p = {}
    # Encoder: stage1 (4->8->8), stage2 (8->16->16), bottleneck (16->32->32)
    p["e1a"] = _conv_init(next(keys), 3, 3, IN_CH, ENC_CH[0])
    p["e1b"] = _conv_init(next(keys), 3, 3, ENC_CH[0], ENC_CH[0])
    p["e2a"] = _conv_init(next(keys), 3, 3, ENC_CH[0], ENC_CH[1])
    p["e2b"] = _conv_init(next(keys), 3, 3, ENC_CH[1], ENC_CH[1])
    p["bna"] = _conv_init(next(keys), 3, 3, ENC_CH[1], BOT_CH)
    p["bnb"] = _conv_init(next(keys), 3, 3, BOT_CH, BOT_CH)
    # Decoder: up1 (32->16), convs (32->16->16); up2 (16->8), convs (16->8->8)
    p["u1"] = _conv_init(next(keys), 2, 2, BOT_CH, ENC_CH[1])
    p["d1a"] = _conv_init(next(keys), 3, 3, 2 * ENC_CH[1], ENC_CH[1])
    p["d1b"] = _conv_init(next(keys), 3, 3, ENC_CH[1], ENC_CH[1])
    p["u2"] = _conv_init(next(keys), 2, 2, ENC_CH[1], ENC_CH[0])
    p["d2a"] = _conv_init(next(keys), 3, 3, 2 * ENC_CH[0], ENC_CH[0])
    p["d2b"] = _conv_init(next(keys), 3, 3, ENC_CH[0], ENC_CH[0])
    # Output head: 1x1 conv to classes
    p["cls"] = _conv_init(next(keys), 1, 1, ENC_CH[0], N_CLASSES)
    return p


def _wmat(w):
    """(3,3,Cin,Cout) -> (Cout, 9*Cin) bf16, im2col row order = tap-major/channel-minor."""
    cin, cout = w.shape[2], w.shape[3]
    return jnp.transpose(w.reshape(9 * cin, cout)).astype(jnp.bfloat16)


def _wsplit(w, c_first):
    """Conv-on-concat([up, skip]) weight -> (Cout, 9*Cu + 9*Cs) split-source matrix."""
    return jnp.concatenate([_wmat(w[:, :, :c_first, :]), _wmat(w[:, :, c_first:, :])],
                           axis=1)


def _wup(w):
    """(2,2,Cin,Cout) -> (4*Cout, Cin) bf16, tap blocks ordered like _UPTAPS."""
    cin, cout = w.shape[2], w.shape[3]
    return jnp.transpose(w, (0, 1, 3, 2)).reshape(4 * cout, cin).astype(jnp.bfloat16)


def _bcol(b):
    """(C,) -> (C, 1) f32 (broadcasts over the pixel lanes)."""
    return b.reshape(-1, 1).astype(jnp.float32)


def encoder_decoder_forward(params, img_input_nchw):
    """Matches EncoderDecoder.forward: encoder -> decoder -> classifier."""
    n, cin, h_img, w_img = img_input_nchw.shape
    p = h_img * w_img
    # NCHW is already channels-first; just flatten pixels onto lanes and cast to bf16.
    x = img_input_nchw.reshape(n, cin, p).astype(jnp.bfloat16)

    c1, c2 = ENC_CH

    # Resident constants (DMA'd once, constant index_map keeps them in VMEM).
    m1 = jnp.asarray(_border_masks(h_img, w_img), jnp.bfloat16)
    m2 = jnp.asarray(_border_masks(h_img // 2, w_img // 2), jnp.bfloat16)
    m3 = jnp.asarray(_border_masks(h_img // 4, w_img // 4), jnp.bfloat16)
    g1 = jnp.asarray(_pool_gather(h_img, w_img), jnp.bfloat16)
    g2 = jnp.asarray(_pool_gather(h_img // 2, w_img // 2), jnp.bfloat16)
    u1s = jnp.asarray(_upsample_scatter(h_img // 4, w_img // 4), jnp.bfloat16)
    u2s = jnp.asarray(_upsample_scatter(h_img // 2, w_img // 2), jnp.bfloat16)

    wcls = jnp.transpose(params["cls"][0].reshape(ENC_CH[0], N_CLASSES)).astype(jnp.bfloat16)

    operands = [
        x, m1, m2, m3, g1, g2, u1s, u2s,
        _wmat(params["e1a"][0]), _bcol(params["e1a"][1]),
        _wmat(params["e1b"][0]), _bcol(params["e1b"][1]),
        _wmat(params["e2a"][0]), _bcol(params["e2a"][1]),
        _wmat(params["e2b"][0]), _bcol(params["e2b"][1]),
        _wmat(params["bna"][0]), _bcol(params["bna"][1]),
        _wmat(params["bnb"][0]), _bcol(params["bnb"][1]),
        _wup(params["u1"][0]), _bcol(params["u1"][1]),
        _wsplit(params["d1a"][0], c2), _bcol(params["d1a"][1]),
        _wmat(params["d1b"][0]), _bcol(params["d1b"][1]),
        _wup(params["u2"][0]), _bcol(params["u2"][1]),
        _wsplit(params["d2a"][0], c1), _bcol(params["d2a"][1]),
        _wmat(params["d2b"][0]), _bcol(params["d2b"][1]),
        wcls, _bcol(params["cls"][1]),
    ]

    def _const_spec(arr):
        zeros = (0,) * arr.ndim
        return pl.BlockSpec(arr.shape, lambda i, _z=zeros: _z)

    in_specs = [pl.BlockSpec((1, cin, p), lambda i: (i, 0, 0))]
    in_specs += [_const_spec(op) for op in operands[1:]]
    out_spec = pl.BlockSpec((1, N_CLASSES, p), lambda i: (i, 0, 0))

    out = pl.pallas_call(
        functools.partial(_unet_kernel, h_img, w_img),
        out_shape=jax.ShapeDtypeStruct((n, N_CLASSES, p), jnp.float32),
        grid_spec=pltpu.PrefetchScalarGridSpec(
            num_scalar_prefetch=0,
            grid=(n,),                                 # one image per grid step
            in_specs=in_specs,
            out_specs=out_spec,
            # shared im2col scratch: max K = 9 * (2*ENC_CH[1]) = 288 rows
            scratch_shapes=[pltpu.VMEM((9 * 2 * ENC_CH[1], p), jnp.bfloat16)],
        ),
        compiler_params=pltpu.CompilerParams(
            dimension_semantics=("parallel",)),        # v7x: one image per TensorCore
    )(*operands)

    # (N, classes, H*W) is already NCHW once reshaped.
    return out.reshape(n, N_CLASSES, h_img, w_img)


if __name__ == "__main__":
    key = jax.random.PRNGKey(0)
    k_param, k_data = jax.random.split(key)
    params = init_params(k_param)
    img_input = jax.random.normal(k_data, (2, IN_CH, H, W), jnp.float32)

    fwd = jax.jit(functools.partial(encoder_decoder_forward, params))
    out = jax.block_until_ready(fwd(img_input))

    assert out.shape == (2, N_CLASSES, H, W), out.shape
    assert bool(jnp.all(jnp.isfinite(out)))
    # softmax over the class axis sums to ~1 (approx reciprocal => loose tolerance)
    assert bool(jnp.allclose(jnp.sum(out, axis=1), 1.0, atol=1e-2))
    print("KERNEL_OK")
</pallas_src>

<mosaic_0001>
module attributes {stable_mosaic.version = 11 : i64} {
  func.func @_unet_kernel(%arg0: i32, %arg1: memref<1x4x256xbf16, #tpu.memory_space<vmem>>, %arg2: memref<3x256xbf16, #tpu.memory_space<vmem>>, %arg3: memref<3x64xbf16, #tpu.memory_space<vmem>>, %arg4: memref<3x16xbf16, #tpu.memory_space<vmem>>, %arg5: memref<239x64xbf16, #tpu.memory_space<vmem>>, %arg6: memref<55x16xbf16, #tpu.memory_space<vmem>>, %arg7: memref<64x64xbf16, #tpu.memory_space<vmem>>, %arg8: memref<256x256xbf16, #tpu.memory_space<vmem>>, %arg9: memref<8x36xbf16, #tpu.memory_space<vmem>>, %arg10: memref<8x1xf32, #tpu.memory_space<vmem>>, %arg11: memref<8x72xbf16, #tpu.memory_space<vmem>>, %arg12: memref<8x1xf32, #tpu.memory_space<vmem>>, %arg13: memref<16x72xbf16, #tpu.memory_space<vmem>>, %arg14: memref<16x1xf32, #tpu.memory_space<vmem>>, %arg15: memref<16x144xbf16, #tpu.memory_space<vmem>>, %arg16: memref<16x1xf32, #tpu.memory_space<vmem>>, %arg17: memref<32x144xbf16, #tpu.memory_space<vmem>>, %arg18: memref<32x1xf32, #tpu.memory_space<vmem>>, %arg19: memref<32x288xbf16, #tpu.memory_space<vmem>>, %arg20: memref<32x1xf32, #tpu.memory_space<vmem>>, %arg21: memref<64x32xbf16, #tpu.memory_space<vmem>>, %arg22: memref<16x1xf32, #tpu.memory_space<vmem>>, %arg23: memref<16x288xbf16, #tpu.memory_space<vmem>>, %arg24: memref<16x1xf32, #tpu.memory_space<vmem>>, %arg25: memref<16x144xbf16, #tpu.memory_space<vmem>>, %arg26: memref<16x1xf32, #tpu.memory_space<vmem>>, %arg27: memref<32x16xbf16, #tpu.memory_space<vmem>>, %arg28: memref<8x1xf32, #tpu.memory_space<vmem>>, %arg29: memref<8x144xbf16, #tpu.memory_space<vmem>>, %arg30: memref<8x1xf32, #tpu.memory_space<vmem>>, %arg31: memref<8x72xbf16, #tpu.memory_space<vmem>>, %arg32: memref<8x1xf32, #tpu.memory_space<vmem>>, %arg33: memref<3x8xbf16, #tpu.memory_space<vmem>>, %arg34: memref<3x1xf32, #tpu.memory_space<vmem>>, %arg35: memref<1x3x256xf32, #tpu.memory_space<vmem>>, %arg36: memref<288x256xbf16, #tpu.memory_space<vmem>>) attributes {dimension_semantics = [#tpu.dimension_semantics<parallel>], iteration_bounds = array<i64: 2>, scalar_prefetch = 0 : i64, scratch_operands = 1 : i64, tpu.core_type = #tpu.core_type<tc>, window_params = [{transform_indices = @transform_0, window_bounds = array<i64: 1, 4, 256>}, {pipeline_mode = #tpu.pipeline_mode<synchronous>, transform_indices = @transform_1, window_bounds = array<i64: 3, 256>}, {pipeline_mode = #tpu.pipeline_mode<synchronous>, transform_indices = @transform_2, window_bounds = array<i64: 3, 64>}, {pipeline_mode = #tpu.pipeline_mode<synchronous>, transform_indices = @transform_3, window_bounds = array<i64: 3, 16>}, {pipeline_mode = #tpu.pipeline_mode<synchronous>, transform_indices = @transform_4, window_bounds = array<i64: 239, 64>}, {pipeline_mode = #tpu.pipeline_mode<synchronous>, transform_indices = @transform_5, window_bounds = array<i64: 55, 16>}, {pipeline_mode = #tpu.pipeline_mode<synchronous>, transform_indices = @transform_6, window_bounds = array<i64: 64, 64>}, {pipeline_mode = #tpu.pipeline_mode<synchronous>, transform_indices = @transform_7, window_bounds = array<i64: 256, 256>}, {pipeline_mode = #tpu.pipeline_mode<synchronous>, transform_indices = @transform_8, window_bounds = array<i64: 8, 36>}, {pipeline_mode = #tpu.pipeline_mode<synchronous>, transform_indices = @transform_9, window_bounds = array<i64: 8, 1>}, {pipeline_mode = #tpu.pipeline_mode<synchronous>, transform_indices = @transform_10, window_bounds = array<i64: 8, 72>}, {pipeline_mode = #tpu.pipeline_mode<synchronous>, transform_indices = @transform_11, window_bounds = array<i64: 8, 1>}, {pipeline_mode = #tpu.pipeline_mode<synchronous>, transform_indices = @transform_12, window_bounds = array<i64: 16, 72>}, {pipeline_mode = #tpu.pipeline_mode<synchronous>, transform_indices = @transform_13, window_bounds = array<i64: 16, 1>}, {pipeline_mode = #tpu.pipeline_mode<synchronous>, transform_indices = @transform_14, window_bounds = array<i64: 16, 144>}, {pipeline_mode = #tpu.pipeline_mode<synchronous>, transform_indices = @transform_15, window_bounds = array<i64: 16, 1>}, {pipeline_mode = #tpu.pipeline_mode<synchronous>, transform_indices = @transform_16, window_bounds = array<i64: 32, 144>}, {pipeline_mode = #tpu.pipeline_mode<synchronous>, transform_indices = @transform_17, window_bounds = array<i64: 32, 1>}, {pipeline_mode = #tpu.pipeline_mode<synchronous>, transform_indices = @transform_18, window_bounds = array<i64: 32, 288>}, {pipeline_mode = #tpu.pipeline_mode<synchronous>, transform_indices = @transform_19, window_bounds = array<i64: 32, 1>}, {pipeline_mode = #tpu.pipeline_mode<synchronous>, transform_indices = @transform_20, window_bounds = array<i64: 64, 32>}, {pipeline_mode = #tpu.pipeline_mode<synchronous>, transform_indices = @transform_21, window_bounds = array<i64: 16, 1>}, {pipeline_mode = #tpu.pipeline_mode<synchronous>, transform_indices = @transform_22, window_bounds = array<i64: 16, 288>}, {pipeline_mode = #tpu.pipeline_mode<synchronous>, transform_indices = @transform_23, window_bounds = array<i64: 16, 1>}, {pipeline_mode = #tpu.pipeline_mode<synchronous>, transform_indices = @transform_24, window_bounds = array<i64: 16, 144>}, {pipeline_mode = #tpu.pipeline_mode<synchronous>, transform_indices = @transform_25, window_bounds = array<i64: 16, 1>}, {pipeline_mode = #tpu.pipeline_mode<synchronous>, transform_indices = @transform_26, window_bounds = array<i64: 32, 16>}, {pipeline_mode = #tpu.pipeline_mode<synchronous>, transform_indices = @transform_27, window_bounds = array<i64: 8, 1>}, {pipeline_mode = #tpu.pipeline_mode<synchronous>, transform_indices = @transform_28, window_bounds = array<i64: 8, 144>}, {pipeline_mode = #tpu.pipeline_mode<synchronous>, transform_indices = @transform_29, window_bounds = array<i64: 8, 1>}, {pipeline_mode = #tpu.pipeline_mode<synchronous>, transform_indices = @transform_30, window_bounds = array<i64: 8, 72>}, {pipeline_mode = #tpu.pipeline_mode<synchronous>, transform_indices = @transform_31, window_bounds = array<i64: 8, 1>}, {pipeline_mode = #tpu.pipeline_mode<synchronous>, transform_indices = @transform_32, window_bounds = array<i64: 3, 8>}, {pipeline_mode = #tpu.pipeline_mode<synchronous>, transform_indices = @transform_33, window_bounds = array<i64: 3, 1>}, {transform_indices = @transform_34, window_bounds = array<i64: 1, 3, 256>}]} {
    %c0 = arith.constant 0 : index
    %c0_0 = arith.constant 0 : index
    %c0_1 = arith.constant 0 : index
    %0 = vector.load %arg1[%c0, %c0_0, %c0_1] : memref<1x4x256xbf16, #tpu.memory_space<vmem>>, vector<1x4x256xbf16>
    %1 = vector.shape_cast %0 : vector<1x4x256xbf16> to vector<4x256xbf16>
    %cst = arith.constant 0.000000e+00 : bf16
    %2 = vector.broadcast %cst : bf16 to vector<36x256xbf16>
    %c0_2 = arith.constant 0 : index
    %c0_3 = arith.constant 0 : index
    %3 = vector.load %arg36[%c0_2, %c0_3] : memref<288x256xbf16, #tpu.memory_space<vmem>>, vector<36x256xbf16>
    tpu.vector_store %arg36[%c0_2, %c0_3], %2 {strides = array<i32>} : memref<288x256xbf16, #tpu.memory_space<vmem>>, vector<36x256xbf16>,
    %4 = vector.extract_strided_slice %1 {offsets = [0, 0], sizes = [4, 239], strides = [1, 1]} : vector<4x256xbf16> to vector<4x239xbf16>
    %c0_4 = arith.constant 0 : index
    %c17 = arith.constant 17 : index
    %5 = vector.load %arg2[%c0_4, %c17] : memref<3x256xbf16, #tpu.memory_space<vmem>>, vector<1x239xbf16>
    %6 = vector.broadcast %5 : vector<1x239xbf16> to vector<4x239xbf16>
    %7 = arith.mulf %4, %6 : vector<4x239xbf16>
    %c0_5 = arith.constant 0 : index
    %c17_6 = arith.constant 17 : index
    %8 = vector.load %arg36[%c0_5, %c17_6] : memref<288x256xbf16, #tpu.memory_space<vmem>>, vector<4x239xbf16>
    tpu.vector_store %arg36[%c0_5, %c17_6], %7 {strides = array<i32>} : memref<288x256xbf16, #tpu.memory_space<vmem>>, vector<4x239xbf16>,
    %9 = vector.extract_strided_slice %1 {offsets = [0, 0], sizes = [4, 240], strides = [1, 1]} : vector<4x256xbf16> to vector<4x240xbf16>
    %c1 = arith.constant 1 : index
    %c16 = arith.constant 16 : index
    %10 = vector.load %arg2[%c1, %c16] : memref<3x256xbf16, #tpu.memory_space<vmem>>, vector<1x240xbf16>
    %11 = vector.broadcast %10 : vector<1x240xbf16> to vector<4x240xbf16>
    %12 = arith.mulf %9, %11 : vector<4x240xbf16>
    %c4 = arith.constant 4 : index
    %c16_7 = arith.constant 16 : index
    %13 = vector.load %arg36[%c4, %c16_7] : memref<288x256xbf16, #tpu.memory_space<vmem>>, vector<4x240xbf16>
    tpu.vector_store %arg36[%c4, %c16_7], %12 {strides = array<i32>} : memref<288x256xbf16, #tpu.memory_space<vmem>>, vector<4x240xbf16>,
    %14 = vector.extract_strided_slice %1 {offsets = [0, 0], sizes = [4, 241], strides = [1, 1]} : vector<4x256xbf16> to vector<4x241xbf16>
    %c2 = arith.constant 2 : index
    %c15 = arith.constant 15 : index
    %15 = vector.load %arg2[%c2, %c15] : memref<3x256xbf16, #tpu.memory_space<vmem>>, vector<1x241xbf16>
    %16 = vector.broadcast %15 : vector<1x241xbf16> to vector<4x241xbf16>
    %17 = arith.mulf %14, %16 : vector<4x241xbf16>
    %c8 = arith.constant 8 : index
    %c15_8 = arith.constant 15 : index
    %18 = vector.load %arg36[%c8, %c15_8] : memref<288x256xbf16, #tpu.memory_space<vmem>>, vector<4x241xbf16>
    tpu.vector_store %arg36[%c8, %c15_8], %17 {strides = array<i32>} : memref<288x256xbf16, #tpu.memory_space<vmem>>, vector<4x241xbf16>,
    %19 = vector.extract_strided_slice %1 {offsets = [0, 0], sizes = [4, 255], strides = [1, 1]} : vector<4x256xbf16> to vector<4x255xbf16>
    %c0_9 = arith.constant 0 : index
    %c1_10 = arith.constant 1 : index
    %20 = vector.load %arg2[%c0_9, %c1_10] : memref<3x256xbf16, #tpu.memory_space<vmem>>, vector<1x255xbf16>
    %21 = vector.broadcast %20 : vector<1x255xbf16> to vector<4x255xbf16>
    %22 = arith.mulf %19, %21 : vector<4x255xbf16>
    %c12 = arith.constant 12 : index
    %c1_11 = arith.constant 1 : index
    %23 = vector.load %arg36[%c12, %c1_11] : memref<288x256xbf16, #tpu.memory_space<vmem>>, vector<4x255xbf16>
    tpu.vector_store %arg36[%c12, %c1_11], %22 {strides = array<i32>} : memref<288x256xbf16, #tpu.memory_space<vmem>>, vector<4x255xbf16>,
    %c1_12 = arith.constant 1 : index
    %c0_13 = arith.constant 0 : index
    %24 = vector.load %arg2[%c1_12, %c0_13] : memref<3x256xbf16, #tpu.memory_space<vmem>>, vector<1x256xbf16>
    %25 = vector.broadcast %24 : vector<1x256xbf16> to vector<4x256xbf16>
    %26 = arith.mulf %1, %25 : vector<4x256xbf16>
    %c16_14 = arith.constant 16 : index
    %c0_15 = arith.constant 0 : index
    %27 = vector.load %arg36[%c16_14, %c0_15] : memref<288x256xbf16, #tpu.memory_space<vmem>>, vector<4x256xbf16>
    tpu.vector_store %arg36[%c16_14, %c0_15], %26 {strides = array<i32>} : memref<288x256xbf16, #tpu.memory_space<vmem>>, vector<4x256xbf16>,
    %28 = vector.extract_strided_slice %1 {offsets = [0, 1], sizes = [4, 255], strides = [1, 1]} : vector<4x256xbf16> to vector<4x255xbf16>
    %c2_16 = arith.constant 2 : index
    %c0_17 = arith.constant 0 : index
    %29 = vector.load %arg2[%c2_16, %c0_17] : memref<3x256xbf16, #tpu.memory_space<vmem>>, vector<1x255xbf16>
    %30 = vector.broadcast %29 : vector<1x255xbf16> to vector<4x255xbf16>
    %31 = arith.mulf %28, %30 : vector<4x255xbf16>
    %c20 = arith.constant 20 : index
    %c0_18 = arith.constant 0 : index
    %32 = vector.load %arg36[%c20, %c0_18] : memref<288x256xbf16, #tpu.memory_space<vmem>>, vector<4x255xbf16>
    tpu.vector_store %arg36[%c20, %c0_18], %31 {strides = array<i32>} : memref<288x256xbf16, #tpu.memory_space<vmem>>, vector<4x255xbf16>,
    %33 = vector.extract_strided_slice %1 {offsets = [0, 15], sizes = [4, 241], strides = [1, 1]} : vector<4x256xbf16> to vector<4x241xbf16>
    %c0_19 = arith.constant 0 : index
    %c0_20 = arith.constant 0 : index
    %34 = vector.load %arg2[%c0_19, %c0_20] : memref<3x256xbf16, #tpu.memory_space<vmem>>, vector<1x241xbf16>
    %35 = vector.broadcast %34 : vector<1x241xbf16> to vector<4x241xbf16>
    %36 = arith.mulf %33, %35 : vector<4x241xbf16>
    %c24 = arith.constant 24 : index
    %c0_21 = arith.constant 0 : index
    %37 = vector.load %arg36[%c24, %c0_21] : memref<288x256xbf16, #tpu.memory_space<vmem>>, vector<4x241xbf16>
    tpu.vector_store %arg36[%c24, %c0_21], %36 {strides = array<i32>} : memref<288x256xbf16, #tpu.memory_space<vmem>>, vector<4x241xbf16>,
    %38 = vector.extract_strided_slice %1 {offsets = [0, 16], sizes = [4, 240], strides = [1, 1]} : vector<4x256xbf16> to vector<4x240xbf16>
    %c1_22 = arith.constant 1 : index
    %c0_23 = arith.constant 0 : index
    %39 = vector.load %arg2[%c1_22, %c0_23] : memref<3x256xbf16, #tpu.memory_space<vmem>>, vector<1x240xbf16>
    %40 = vector.broadcast %39 : vector<1x240xbf16> to vector<4x240xbf16>
    %41 = arith.mulf %38, %40 : vector<4x240xbf16>
    %c28 = arith.constant 28 : index
    %c0_24 = arith.constant 0 : index
    %42 = vector.load %arg36[%c28, %c0_24] : memref<288x256xbf16, #tpu.memory_space<vmem>>, vector<4x240xbf16>
    tpu.vector_store %arg36[%c28, %c0_24], %41 {strides = array<i32>} : memref<288x256xbf16, #tpu.memory_space<vmem>>, vector<4x240xbf16>,
    %43 = vector.extract_strided_slice %1 {offsets = [0, 17], sizes = [4, 239], strides = [1, 1]} : vector<4x256xbf16> to vector<4x239xbf16>
    %c2_25 = arith.constant 2 : index
    %c0_26 = arith.constant 0 : index
    %44 = vector.load %arg2[%c2_25, %c0_26] : memref<3x256xbf16, #tpu.memory_space<vmem>>, vector<1x239xbf16>
    %45 = vector.broadcast %44 : vector<1x239xbf16> to vector<4x239xbf16>
    %46 = arith.mulf %43, %45 : vector<4x239xbf16>
    %c32 = arith.constant 32 : index
    %c0_27 = arith.constant 0 : index
    %47 = vector.load %arg36[%c32, %c0_27] : memref<288x256xbf16, #tpu.memory_space<vmem>>, vector<4x239xbf16>
    tpu.vector_store %arg36[%c32, %c0_27], %46 {strides = array<i32>} : memref<288x256xbf16, #tpu.memory_space<vmem>>, vector<4x239xbf16>,
    %c0_28 = arith.constant 0 : index
    %c0_29 = arith.constant 0 : index
    %48 = vector.load %arg9[%c0_28, %c0_29] : memref<8x36xbf16, #tpu.memory_space<vmem>>, vector<8x36xbf16>
    %c0_30 = arith.constant 0 : index
    %c0_31 = arith.constant 0 : index
    %49 = vector.load %arg36[%c0_30, %c0_31] : memref<288x256xbf16, #tpu.memory_space<vmem>>, vector<36x256xbf16>
    %cst_32 = arith.constant dense<0.000000e+00> : vector<8x256xf32>
    %50 = tpu.matmul %48, %49, %cst_32 {dimension_numbers = #tpu.dot_dimension_numbers<[1], [0], [0], [1], [0, 0, 1, 1], [], []>} : vector<8x36xbf16>, vector<36x256xbf16>, vector<8x256xf32> -> vector<8x256xf32>
    %c0_33 = arith.constant 0 : index
    %c0_34 = arith.constant 0 : index
    %51 = vector.load %arg10[%c0_33, %c0_34] : memref<8x1xf32, #tpu.memory_space<vmem>>, vector<8x1xf32>
    %52 = vector.broadcast %51 : vector<8x1xf32> to vector<8x256xf32>
    %53 = arith.addf %50, %52 : vector<8x256xf32>
    %cst_35 = arith.constant 0.000000e+00 : f32
    %54 = vector.broadcast %cst_35 : f32 to vector<8x256xf32>
    %55 = arith.maximumf %53, %54 : vector<8x256xf32>
    %56 = arith.truncf %55 : vector<8x256xf32> to vector<8x256xbf16>
    %cst_36 = arith.constant 0.000000e+00 : bf16
    %57 = vector.broadcast %cst_36 : bf16 to vector<72x256xbf16>
    %c0_37 = arith.constant 0 : index
    %c0_38 = arith.constant 0 : index
    %58 = vector.load %arg36[%c0_37, %c0_38] : memref<288x256xbf16, #tpu.memory_space<vmem>>, vector<72x256xbf16>
    tpu.vector_store %arg36[%c0_37, %c0_38], %57 {strides = array<i32>} : memref<288x256xbf16, #tpu.memory_space<vmem>>, vector<72x256xbf16>,
    %59 = vector.extract_strided_slice %56 {offsets = [0, 0], sizes = [8, 239], strides = [1, 1]} : vector<8x256xbf16> to vector<8x239xbf16>
    %c0_39 = arith.constant 0 : index
    %c17_40 = arith.constant 17 : index
    %60 = vector.load %arg2[%c0_39, %c17_40] : memref<3x256xbf16, #tpu.memory_space<vmem>>, vector<1x239xbf16>
    %61 = vector.broadcast %60 : vector<1x239xbf16> to vector<8x239xbf16>
    %62 = arith.mulf %59, %61 : vector<8x239xbf16>
    %c0_41 = arith.constant 0 : index
    %c17_42 = arith.constant 17 : index
    %63 = vector.load %arg36[%c0_41, %c17_42] : memref<288x256xbf16, #tpu.memory_space<vmem>>, vector<8x239xbf16>
    tpu.vector_store %arg36[%c0_41, %c17_42], %62 {strides = array<i32>} : memref<288x256xbf16, #tpu.memory_space<vmem>>, vector<8x239xbf16>,
    %64 = vector.extract_strided_slice %56 {offsets = [0, 0], sizes = [8, 240], strides = [1, 1]} : vector<8x256xbf16> to vector<8x240xbf16>
    %c1_43 = arith.constant 1 : index
    %c16_44 = arith.constant 16 : index
    %65 = vector.load %arg2[%c1_43, %c16_44] : memref<3x256xbf16, #tpu.memory_space<vmem>>, vector<1x240xbf16>
    %66 = vector.broadcast %65 : vector<1x240xbf16> to vector<8x240xbf16>
    %67 = arith.mulf %64, %66 : vector<8x240xbf16>
    %c8_45 = arith.constant 8 : index
    %c16_46 = arith.constant 16 : index
    %68 = vector.load %arg36[%c8_45, %c16_46] : memref<288x256xbf16, #tpu.memory_space<vmem>>, vector<8x240xbf16>
    tpu.vector_store %arg36[%c8_45, %c16_46], %67 {strides = array<i32>} : memref<288x256xbf16, #tpu.memory_space<vmem>>, vector<8x240xbf16>,
    %69 = vector.extract_strided_slice %56 {offsets = [0, 0], sizes = [8, 241], strides = [1, 1]} : vector<8x256xbf16> to vector<8x241xbf16>
    %c2_47 = arith.constant 2 : index
    %c15_48 = arith.constant 15 : index
    %70 = vector.load %arg2[%c2_47, %c15_48] : memref<3x256xbf16, #tpu.memory_space<vmem>>, vector<1x241xbf16>
    %71 = vector.broadcast %70 : vector<1x241xbf16> to vector<8x241xbf16>
    %72 = arith.mulf %69, %71 : vector<8x241xbf16>
    %c16_49 = arith.constant 16 : index
    %c15_50 = arith.constant 15 : index
    %73 = vector.load %arg36[%c16_49, %c15_50] : memref<288x256xbf16, #tpu.memory_space<vmem>>, vector<8x241xbf16>
    tpu.vector_store %arg36[%c16_49, %c15_50], %72 {strides = array<i32>} : memref<288x256xbf16, #tpu.memory_space<vmem>>, vector<8x241xbf16>,
    %74 = vector.extract_strided_slice %56 {offsets = [0, 0], sizes = [8, 255], strides = [1, 1]} : vector<8x256xbf16> to vector<8x255xbf16>
    %c0_51 = arith.constant 0 : index
    %c1_52 = arith.constant 1 : index
    %75 = vector.load %arg2[%c0_51, %c1_52] : memref<3x256xbf16, #tpu.memory_space<vmem>>, vector<1x255xbf16>
    %76 = vector.broadcast %75 : vector<1x255xbf16> to vector<8x255xbf16>
    %77 = arith.mulf %74, %76 : vector<8x255xbf16>
    %c24_53 = arith.constant 24 : index
    %c1_54 = arith.constant 1 : index
    %78 = vector.load %arg36[%c24_53, %c1_54] : memref<288x256xbf16, #tpu.memory_space<vmem>>, vector<8x255xbf16>
    tpu.vector_store %arg36[%c24_53, %c1_54], %77 {strides = array<i32>} : memref<288x256xbf16, #tpu.memory_space<vmem>>, vector<8x255xbf16>,
    %c1_55 = arith.constant 1 : index
    %c0_56 = arith.constant 0 : index
    %79 = vector.load %arg2[%c1_55, %c0_56] : memref<3x256xbf16, #tpu.memory_space<vmem>>, vector<1x256xbf16>
    %80 = vector.broadcast %79 : vector<1x256xbf16> to vector<8x256xbf16>
    %81 = arith.mulf %56, %80 : vector<8x256xbf16>
    %c32_57 = arith.constant 32 : index
    %c0_58 = arith.constant 0 : index
    %82 = vector.load %arg36[%c32_57, %c0_58] : memref<288x256xbf16, #tpu.memory_space<vmem>>, vector<8x256xbf16>
    tpu.vector_store %arg36[%c32_57, %c0_58], %81 {strides = array<i32>} : memref<288x256xbf16, #tpu.memory_space<vmem>>, vector<8x256xbf16>,
    %83 = vector.extract_strided_slice %56 {offsets = [0, 1], sizes = [8, 255], strides = [1, 1]} : vector<8x256xbf16> to vector<8x255xbf16>
    %c2_59 = arith.constant 2 : index
    %c0_60 = arith.constant 0 : index
    %84 = vector.load %arg2[%c2_59, %c0_60] : memref<3x256xbf16, #tpu.memory_space<vmem>>, vector<1x255xbf16>
    %85 = vector.broadcast %84 : vector<1x255xbf16> to vector<8x255xbf16>
    %86 = arith.mulf %83, %85 : vector<8x255xbf16>
    %c40 = arith.constant 40 : index
    %c0_61 = arith.constant 0 : index
    %87 = vector.load %arg36[%c40, %c0_61] : memref<288x256xbf16, #tpu.memory_space<vmem>>, vector<8x255xbf16>
    tpu.vector_store %arg36[%c40, %c0_61], %86 {strides = array<i32>} : memref<288x256xbf16, #tpu.memory_space<vmem>>, vector<8x255xbf16>,
    %88 = vector.extract_strided_slice %56 {offsets = [0, 15], sizes = [8, 241], strides = [1, 1]} : vector<8x256xbf16> to vector<8x241xbf16>
    %c0_62 = arith.constant 0 : index
    %c0_63 = arith.constant 0 : index
    %89 = vector.load %arg2[%c0_62, %c0_63] : memref<3x256xbf16, #tpu.memory_space<vmem>>, vector<1x241xbf16>
    %90 = vector.broadcast %89 : vector<1x241xbf16> to vector<8x241xbf16>
    %91 = arith.mulf %88, %90 : vector<8x241xbf16>
    %c48 = arith.constant 48 : index
    %c0_64 = arith.constant 0 : index
    %92 = vector.load %arg36[%c48, %c0_64] : memref<288x256xbf16, #tpu.memory_space<vmem>>, vector<8x241xbf16>
    tpu.vector_store %arg36[%c48, %c0_64], %91 {strides = array<i32>} : memref<288x256xbf16, #tpu.memory_space<vmem>>, vector<8x241xbf16>,
    %93 = vector.extract_strided_slice %56 {offsets = [0, 16], sizes = [8, 240], strides = [1, 1]} : vector<8x256xbf16> to vector<8x240xbf16>
    %c1_65 = arith.constant 1 : index
    %c0_66 = arith.constant 0 : index
    %94 = vector.load %arg2[%c1_65, %c0_66] : memref<3x256xbf16, #tpu.memory_space<vmem>>, vector<1x240xbf16>
    %95 = vector.broadcast %94 : vector<1x240xbf16> to vector<8x240xbf16>
    %96 = arith.mulf %93, %95 : vector<8x240xbf16>
    %c56 = arith.constant 56 : index
    %c0_67 = arith.constant 0 : index
    %97 = vector.load %arg36[%c56, %c0_67] : memref<288x256xbf16, #tpu.memory_space<vmem>>, vector<8x240xbf16>
    tpu.vector_store %arg36[%c56, %c0_67], %96 {strides = array<i32>} : memref<288x256xbf16, #tpu.memory_space<vmem>>, vector<8x240xbf16>,
    %98 = vector.extract_strided_slice %56 {offsets = [0, 17], sizes = [8, 239], strides = [1, 1]} : vector<8x256xbf16> to vector<8x239xbf16>
    %c2_68 = arith.constant 2 : index
    %c0_69 = arith.constant 0 : index
    %99 = vector.load %arg2[%c2_68, %c0_69] : memref<3x256xbf16, #tpu.memory_space<vmem>>, vector<1x239xbf16>
    %100 = vector.broadcast %99 : vector<1x239xbf16> to vector<8x239xbf16>
    %101 = arith.mulf %98, %100 : vector<8x239xbf16>
    %c64 = arith.constant 64 : index
    %c0_70 = arith.constant 0 : index
    %102 = vector.load %arg36[%c64, %c0_70] : memref<288x256xbf16, #tpu.memory_space<vmem>>, vector<8x239xbf16>
    tpu.vector_store %arg36[%c64, %c0_70], %101 {strides = array<i32>} : memref<288x256xbf16, #tpu.memory_space<vmem>>, vector<8x239xbf16>,
    %c0_71 = arith.constant 0 : index
    %c0_72 = arith.constant 0 : index
    %103 = vector.load %arg11[%c0_71, %c0_72] : memref<8x72xbf16, #tpu.memory_space<vmem>>, vector<8x72xbf16>
    %c0_73 = arith.constant 0 : index
    %c0_74 = arith.constant 0 : index
    %104 = vector.load %arg36[%c0_73, %c0_74] : memref<288x256xbf16, #tpu.memory_space<vmem>>, vector<72x256xbf16>
    %cst_75 = arith.constant dense<0.000000e+00> : vector<8x256xf32>
    %105 = tpu.matmul %103, %104, %cst_75 {dimension_numbers = #tpu.dot_dimension_numbers<[1], [0], [0], [1], [0, 0, 1, 1], [], []>} : vector<8x72xbf16>, vector<72x256xbf16>, vector<8x256xf32> -> vector<8x256xf32>
    %c0_76 = arith.constant 0 : index
    %c0_77 = arith.constant 0 : index
    %106 = vector.load %arg12[%c0_76, %c0_77] : memref<8x1xf32, #tpu.memory_space<vmem>>, vector<8x1xf32>
    %107 = vector.broadcast %106 : vector<8x1xf32> to vector<8x256xf32>
    %108 = arith.addf %105, %107 : vector<8x256xf32>
    %cst_78 = arith.constant 0.000000e+00 : f32
    %109 = vector.broadcast %cst_78 : f32 to vector<8x256xf32>
    %110 = arith.maximumf %108, %109 : vector<8x256xf32>
    %111 = arith.truncf %110 : vector<8x256xf32> to vector<8x256xbf16>
    %112 = vector.extract_strided_slice %111 {offsets = [0, 0], sizes = [8, 239], strides = [1, 1]} : vector<8x256xbf16> to vector<8x239xbf16>
    %113 = vector.extract_strided_slice %111 {offsets = [0, 1], sizes = [8, 239], strides = [1, 1]} : vector<8x256xbf16> to vector<8x239xbf16>
    %114 = arith.maximumf %112, %113 : vector<8x239xbf16>
    %115 = vector.extract_strided_slice %111 {offsets = [0, 16], sizes = [8, 239], strides = [1, 1]} : vector<8x256xbf16> to vector<8x239xbf16>
    %116 = vector.extract_strided_slice %111 {offsets = [0, 17], sizes = [8, 239], strides = [1, 1]} : vector<8x256xbf16> to vector<8x239xbf16>
    %117 = arith.maximumf %115, %116 : vector<8x239xbf16>
    %118 = arith.maximumf %114, %117 : vector<8x239xbf16>
    %c0_79 = arith.constant 0 : index
    %c0_80 = arith.constant 0 : index
    %119 = vector.load %arg5[%c0_79, %c0_80] : memref<239x64xbf16, #tpu.memory_space<vmem>>, vector<239x64xbf16>
    %cst_81 = arith.constant dense<0.000000e+00> : vector<8x64xf32>
    %120 = tpu.matmul %118, %119, %cst_81 {dimension_numbers = #tpu.dot_dimension_numbers<[1], [0], [0], [1], [0, 0, 1, 1], [], []>} : vector<8x239xbf16>, vector<239x64xbf16>, vector<8x64xf32> -> vector<8x64xf32>
    %121 = arith.truncf %120 : vector<8x64xf32> to vector<8x64xbf16>
    %cst_82 = arith.constant 0.000000e+00 : bf16
    %122 = vector.broadcast %cst_82 : bf16 to vector<72x64xbf16>
    %c0_83 = arith.constant 0 : index
    %c0_84 = arith.constant 0 : index
    %123 = vector.load %arg36[%c0_83, %c0_84] : memref<288x256xbf16, #tpu.memory_space<vmem>>, vector<72x64xbf16>
    tpu.vector_store %arg36[%c0_83, %c0_84], %122 {strides = array<i32>} : memref<288x256xbf16, #tpu.memory_space<vmem>>, vector<72x64xbf16>,
    %124 = vector.extract_strided_slice %121 {offsets = [0, 0], sizes = [8, 55], strides = [1, 1]} : vector<8x64xbf16> to vector<8x55xbf16>
    %c0_85 = arith.constant 0 : index
    %c9 = arith.constant 9 : index
    %125 = vector.load %arg3[%c0_85, %c9] : memref<3x64xbf16, #tpu.memory_space<vmem>>, vector<1x55xbf16>
    %126 = vector.broadcast %125 : vector<1x55xbf16> to vector<8x55xbf16>
    %127 = arith.mulf %124, %126 : vector<8x55xbf16>
    %c0_86 = arith.constant 0 : index
    %c9_87 = arith.constant 9 : index
    %128 = vector.load %arg36[%c0_86, %c9_87] : memref<288x256xbf16, #tpu.memory_space<vmem>>, vector<8x55xbf16>
    tpu.vector_store %arg36[%c0_86, %c9_87], %127 {strides = array<i32>} : memref<288x256xbf16, #tpu.memory_space<vmem>>, vector<8x55xbf16>,
    %129 = vector.extract_strided_slice %121 {offsets = [0, 0], sizes = [8, 56], strides = [1, 1]} : vector<8x64xbf16> to vector<8x56xbf16>
    %c1_88 = arith.constant 1 : index
    %c8_89 = arith.constant 8 : index
    %130 = vector.load %arg3[%c1_88, %c8_89] : memref<3x64xbf16, #tpu.memory_space<vmem>>, vector<1x56xbf16>
    %131 = vector.broadcast %130 : vector<1x56xbf16> to vector<8x56xbf16>
    %132 = arith.mulf %129, %131 : vector<8x56xbf16>
    %c8_90 = arith.constant 8 : index
    %c8_91 = arith.constant 8 : index
    %133 = vector.load %arg36[%c8_90, %c8_91] : memref<288x256xbf16, #tpu.memory_space<vmem>>, vector<8x56xbf16>
    tpu.vector_store %arg36[%c8_90, %c8_91], %132 {strides = array<i32>} : memref<288x256xbf16, #tpu.memory_space<vmem>>, vector<8x56xbf16>,
    %134 = vector.extract_strided_slice %121 {offsets = [0, 0], sizes = [8, 57], strides = [1, 1]} : vector<8x64xbf16> to vector<8x57xbf16>
    %c2_92 = arith.constant 2 : index
    %c7 = arith.constant 7 : index
    %135 = vector.load %arg3[%c2_92, %c7] : memref<3x64xbf16, #tpu.memory_space<vmem>>, vector<1x57xbf16>
    %136 = vector.broadcast %135 : vector<1x57xbf16> to vector<8x57xbf16>
    %137 = arith.mulf %134, %136 : vector<8x57xbf16>
    %c16_93 = arith.constant 16 : index
    %c7_94 = arith.constant 7 : index
    %138 = vector.load %arg36[%c16_93, %c7_94] : memref<288x256xbf16, #tpu.memory_space<vmem>>, vector<8x57xbf16>
    tpu.vector_store %arg36[%c16_93, %c7_94], %137 {strides = array<i32>} : memref<288x256xbf16, #tpu.memory_space<vmem>>, vector<8x57xbf16>,
    %139 = vector.extract_strided_slice %121 {offsets = [0, 0], sizes = [8, 63], strides = [1, 1]} : vector<8x64xbf16> to vector<8x63xbf16>
    %c0_95 = arith.constant 0 : index
    %c1_96 = arith.constant 1 : index
    %140 = vector.load %arg3[%c0_95, %c1_96] : memref<3x64xbf16, #tpu.memory_space<vmem>>, vector<1x63xbf16>
    %141 = vector.broadcast %140 : vector<1x63xbf16> to vector<8x63xbf16>
    %142 = arith.mulf %139, %141 : vector<8x63xbf16>
    %c24_97 = arith.constant 24 : index
    %c1_98 = arith.constant 1 : index
    %143 = vector.load %arg36[%c24_97, %c1_98] : memref<288x256xbf16, #tpu.memory_space<vmem>>, vector<8x63xbf16>
    tpu.vector_store %arg36[%c24_97, %c1_98], %142 {strides = array<i32>} : memref<288x256xbf16, #tpu.memory_space<vmem>>, vector<8x63xbf16>,
    %c1_99 = arith.constant 1 : index
    %c0_100 = arith.constant 0 : index
    %144 = vector.load %arg3[%c1_99, %c0_100] : memref<3x64xbf16, #tpu.memory_space<vmem>>, vector<1x64xbf16>
    %145 = vector.broadcast %144 : vector<1x64xbf16> to vector<8x64xbf16>
    %146 = arith.mulf %121, %145 : vector<8x64xbf16>
    %c32_101 = arith.constant 32 : index
    %c0_102 = arith.constant 0 : index
    %147 = vector.load %arg36[%c32_101, %c0_102] : memref<288x256xbf16, #tpu.memory_space<vmem>>, vector<8x64xbf16>
    tpu.vector_store %arg36[%c32_101, %c0_102], %146 {strides = array<i32>} : memref<288x256xbf16, #tpu.memory_space<vmem>>, vector<8x64xbf16>,
    %148 = vector.extract_strided_slice %121 {offsets = [0, 1], sizes = [8, 63], strides = [1, 1]} : vector<8x64xbf16> to vector<8x63xbf16>
    %c2_103 = arith.constant 2 : index
    %c0_104 = arith.constant 0 : index
    %149 = vector.load %arg3[%c2_103, %c0_104] : memref<3x64xbf16, #tpu.memory_space<vmem>>, vector<1x63xbf16>
    %150 = vector.broadcast %149 : vector<1x63xbf16> to vector<8x63xbf16>
    %151 = arith.mulf %148, %150 : vector<8x63xbf16>
    %c40_105 = arith.constant 40 : index
    %c0_106 = arith.constant 0 : index
    %152 = vector.load %arg36[%c40_105, %c0_106] : memref<288x256xbf16, #tpu.memory_space<vmem>>, vector<8x63xbf16>
    tpu.vector_store %arg36[%c40_105, %c0_106], %151 {strides = array<i32>} : memref<288x256xbf16, #tpu.memory_space<vmem>>, vector<8x63xbf16>,
    %153 = vector.extract_strided_slice %121 {offsets = [0, 7], sizes = [8, 57], strides = [1, 1]} : vector<8x64xbf16> to vector<8x57xbf16>
    %c0_107 = arith.constant 0 : index
    %c0_108 = arith.constant 0 : index
    %154 = vector.load %arg3[%c0_107, %c0_108] : memref<3x64xbf16, #tpu.memory_space<vmem>>, vector<1x57xbf16>
    %155 = vector.broadcast %154 : vector<1x57xbf16> to vector<8x57xbf16>
    %156 = arith.mulf %153, %155 : vector<8x57xbf16>
    %c48_109 = arith.constant 48 : index
    %c0_110 = arith.constant 0 : index
    %157 = vector.load %arg36[%c48_109, %c0_110] : memref<288x256xbf16, #tpu.memory_space<vmem>>, vector<8x57xbf16>
    tpu.vector_store %arg36[%c48_109, %c0_110], %156 {strides = array<i32>} : memref<288x256xbf16, #tpu.memory_space<vmem>>, vector<8x57xbf16>,
    %158 = vector.extract_strided_slice %121 {offsets = [0, 8], sizes = [8, 56], strides = [1, 1]} : vector<8x64xbf16> to vector<8x56xbf16>
    %c1_111 = arith.constant 1 : index
    %c0_112 = arith.constant 0 : index
    %159 = vector.load %arg3[%c1_111, %c0_112] : memref<3x64xbf16, #tpu.memory_space<vmem>>, vector<1x56xbf16>
    %160 = vector.broadcast %159 : vector<1x56xbf16> to vector<8x56xbf16>
    %161 = arith.mulf %158, %160 : vector<8x56xbf16>
    %c56_113 = arith.constant 56 : index
    %c0_114 = arith.constant 0 : index
    %162 = vector.load %arg36[%c56_113, %c0_114] : memref<288x256xbf16, #tpu.memory_space<vmem>>, vector<8x56xbf16>
    tpu.vector_store %arg36[%c56_113, %c0_114], %161 {strides = array<i32>} : memref<288x256xbf16, #tpu.memory_space<vmem>>, vector<8x56xbf16>,
    %163 = vector.extract_strided_slice %121 {offsets = [0, 9], sizes = [8, 55], strides = [1, 1]} : vector<8x64xbf16> to vector<8x55xbf16>
    %c2_115 = arith.constant 2 : index
    %c0_116 = arith.constant 0 : index
    %164 = vector.load %arg3[%c2_115, %c0_116] : memref<3x64xbf16, #tpu.memory_space<vmem>>, vector<1x55xbf16>
    %165 = vector.broadcast %164 : vector<1x55xbf16> to vector<8x55xbf16>
    %166 = arith.mulf %163, %165 : vector<8x55xbf16>
    %c64_117 = arith.constant 64 : index
    %c0_118 = arith.constant 0 : index
    %167 = vector.load %arg36[%c64_117, %c0_118] : memref<288x256xbf16, #tpu.memory_space<vmem>>, vector<8x55xbf16>
    tpu.vector_store %arg36[%c64_117, %c0_118], %166 {strides = array<i32>} : memref<288x256xbf16, #tpu.memory_space<vmem>>, vector<8x55xbf16>,
    %c0_119 = arith.constant 0 : index
    %c0_120 = arith.constant 0 : index
    %168 = vector.load %arg13[%c0_119, %c0_120] : memref<16x72xbf16, #tpu.memory_space<vmem>>, vector<16x72xbf16>
    %c0_121 = arith.constant 0 : index
    %c0_122 = arith.constant 0 : index
    %169 = vector.load %arg36[%c0_121, %c0_122] : memref<288x256xbf16, #tpu.memory_space<vmem>>, vector<72x64xbf16>
    %cst_123 = arith.constant dense<0.000000e+00> : vector<16x64xf32>
    %170 = tpu.matmul %168, %169, %cst_123 {dimension_numbers = #tpu.dot_dimension_numbers<[1], [0], [0], [1], [0, 0, 1, 1], [], []>} : vector<16x72xbf16>, vector<72x64xbf16>, vector<16x64xf32> -> vector<16x64xf32>
    %c0_124 = arith.constant 0 : index
    %c0_125 = arith.constant 0 : index
    %171 = vector.load %arg14[%c0_124, %c0_125] : memref<16x1xf32, #tpu.memory_space<vmem>>, vector<16x1xf32>
    %172 = vector.broadcast %171 : vector<16x1xf32> to vector<16x64xf32>
    %173 = arith.addf %170, %172 : vector<16x64xf32>
    %cst_126 = arith.constant 0.000000e+00 : f32
    %174 = vector.broadcast %cst_126 : f32 to vector<16x64xf32>
    %175 = arith.maximumf %173, %174 : vector<16x64xf32>
    %176 = arith.truncf %175 : vector<16x64xf32> to vector<16x64xbf16>
    %cst_127 = arith.constant 0.000000e+00 : bf16
    %177 = vector.broadcast %cst_127 : bf16 to vector<144x64xbf16>
    %c0_128 = arith.constant 0 : index
    %c0_129 = arith.constant 0 : index
    %178 = vector.load %arg36[%c0_128, %c0_129] : memref<288x256xbf16, #tpu.memory_space<vmem>>, vector<144x64xbf16>
    tpu.vector_store %arg36[%c0_128, %c0_129], %177 {strides = array<i32>} : memref<288x256xbf16, #tpu.memory_space<vmem>>, vector<144x64xbf16>,
    %179 = vector.extract_strided_slice %176 {offsets = [0, 0], sizes = [16, 55], strides = [1, 1]} : vector<16x64xbf16> to vector<16x55xbf16>
    %c0_130 = arith.constant 0 : index
    %c9_131 = arith.constant 9 : index
    %180 = vector.load %arg3[%c0_130, %c9_131] : memref<3x64xbf16, #tpu.memory_space<vmem>>, vector<1x55xbf16>
    %181 = vector.broadcast %180 : vector<1x55xbf16> to vector<16x55xbf16>
    %182 = arith.mulf %179, %181 : vector<16x55xbf16>
    %c0_132 = arith.constant 0 : index
    %c9_133 = arith.constant 9 : index
    %183 = vector.load %arg36[%c0_132, %c9_133] : memref<288x256xbf16, #tpu.memory_space<vmem>>, vector<16x55xbf16>
    tpu.vector_store %arg36[%c0_132, %c9_133], %182 {strides = array<i32>} : memref<288x256xbf16, #tpu.memory_space<vmem>>, vector<16x55xbf16>,
    %184 = vector.extract_strided_slice %176 {offsets = [0, 0], sizes = [16, 56], strides = [1, 1]} : vector<16x64xbf16> to vector<16x56xbf16>
    %c1_134 = arith.constant 1 : index
    %c8_135 = arith.constant 8 : index
    %185 = vector.load %arg3[%c1_134, %c8_135] : memref<3x64xbf16, #tpu.memory_space<vmem>>, vector<1x56xbf16>
    %186 = vector.broadcast %185 : vector<1x56xbf16> to vector<16x56xbf16>
    %187 = arith.mulf %184, %186 : vector<16x56xbf16>
    %c16_136 = arith.constant 16 : index
    %c8_137 = arith.constant 8 : index
    %188 = vector.load %arg36[%c16_136, %c8_137] : memref<288x256xbf16, #tpu.memory_space<vmem>>, vector<16x56xbf16>
    tpu.vector_store %arg36[%c16_136, %c8_137], %187 {strides = array<i32>} : memref<288x256xbf16, #tpu.memory_space<vmem>>, vector<16x56xbf16>,
    %189 = vector.extract_strided_slice %176 {offsets = [0, 0], sizes = [16, 57], strides = [1, 1]} : vector<16x64xbf16> to vector<16x57xbf16>
    %c2_138 = arith.constant 2 : index
    %c7_139 = arith.constant 7 : index
    %190 = vector.load %arg3[%c2_138, %c7_139] : memref<3x64xbf16, #tpu.memory_space<vmem>>, vector<1x57xbf16>
    %191 = vector.broadcast %190 : vector<1x57xbf16> to vector<16x57xbf16>
    %192 = arith.mulf %189, %191 : vector<16x57xbf16>
    %c32_140 = arith.constant 32 : index
    %c7_141 = arith.constant 7 : index
    %193 = vector.load %arg36[%c32_140, %c7_141] : memref<288x256xbf16, #tpu.memory_space<vmem>>, vector<16x57xbf16>
    tpu.vector_store %arg36[%c32_140, %c7_141], %192 {strides = array<i32>} : memref<288x256xbf16, #tpu.memory_space<vmem>>, vector<16x57xbf16>,
    %194 = vector.extract_strided_slice %176 {offsets = [0, 0], sizes = [16, 63], strides = [1, 1]} : vector<16x64xbf16> to vector<16x63xbf16>
    %c0_142 = arith.constant 0 : index
    %c1_143 = arith.constant 1 : index
    %195 = vector.load %arg3[%c0_142, %c1_143] : memref<3x64xbf16, #tpu.memory_space<vmem>>, vector<1x63xbf16>
    %196 = vector.broadcast %195 : vector<1x63xbf16> to vector<16x63xbf16>
    %197 = arith.mulf %194, %196 : vector<16x63xbf16>
    %c48_144 = arith.constant 48 : index
    %c1_145 = arith.constant 1 : index
    %198 = vector.load %arg36[%c48_144, %c1_145] : memref<288x256xbf16, #tpu.memory_space<vmem>>, vector<16x63xbf16>
    tpu.vector_store %arg36[%c48_144, %c1_145], %197 {strides = array<i32>} : memref<288x256xbf16, #tpu.memory_space<vmem>>, vector<16x63xbf16>,
    %c1_146 = arith.constant 1 : index
    %c0_147 = arith.constant 0 : index
    %199 = vector.load %arg3[%c1_146, %c0_147] : memref<3x64xbf16, #tpu.memory_space<vmem>>, vector<1x64xbf16>
    %200 = vector.broadcast %199 : vector<1x64xbf16> to vector<16x64xbf16>
    %201 = arith.mulf %176, %200 : vector<16x64xbf16>
    %c64_148 = arith.constant 64 : index
    %c0_149 = arith.constant 0 : index
    %202 = vector.load %arg36[%c64_148, %c0_149] : memref<288x256xbf16, #tpu.memory_space<vmem>>, vector<16x64xbf16>
    tpu.vector_store %arg36[%c64_148, %c0_149], %201 {strides = array<i32>} : memref<288x256xbf16, #tpu.memory_space<vmem>>, vector<16x64xbf16>,
    %203 = vector.extract_strided_slice %176 {offsets = [0, 1], sizes = [16, 63], strides = [1, 1]} : vector<16x64xbf16> to vector<16x63xbf16>
    %c2_150 = arith.constant 2 : index
    %c0_151 = arith.constant 0 : index
    %204 = vector.load %arg3[%c2_150, %c0_151] : memref<3x64xbf16, #tpu.memory_space<vmem>>, vector<1x63xbf16>
    %205 = vector.broadcast %204 : vector<1x63xbf16> to vector<16x63xbf16>
    %206 = arith.mulf %203, %205 : vector<16x63xbf16>
    %c80 = arith.constant 80 : index
    %c0_152 = arith.constant 0 : index
    %207 = vector.load %arg36[%c80, %c0_152] : memref<288x256xbf16, #tpu.memory_space<vmem>>, vector<16x63xbf16>
    tpu.vector_store %arg36[%c80, %c0_152], %206 {strides = array<i32>} : memref<288x256xbf16, #tpu.memory_space<vmem>>, vector<16x63xbf16>,
    %208 = vector.extract_strided_slice %176 {offsets = [0, 7], sizes = [16, 57], strides = [1, 1]} : vector<16x64xbf16> to vector<16x57xbf16>
    %c0_153 = arith.constant 0 : index
    %c0_154 = arith.constant 0 : index
    %209 = vector.load %arg3[%c0_153, %c0_154] : memref<3x64xbf16, #tpu.memory_space<vmem>>, vector<1x57xbf16>
    %210 = vector.broadcast %209 : vector<1x57xbf16> to vector<16x57xbf16>
    %211 = arith.mulf %208, %210 : vector<16x57xbf16>
    %c96 = arith.constant 96 : index
    %c0_155 = arith.constant 0 : index
    %212 = vector.load %arg36[%c96, %c0_155] : memref<288x256xbf16, #tpu.memory_space<vmem>>, vector<16x57xbf16>
    tpu.vector_store %arg36[%c96, %c0_155], %211 {strides = array<i32>} : memref<288x256xbf16, #tpu.memory_space<vmem>>, vector<16x57xbf16>,
    %213 = vector.extract_strided_slice %176 {offsets = [0, 8], sizes = [16, 56], strides = [1, 1]} : vector<16x64xbf16> to vector<16x56xbf16>
    %c1_156 = arith.constant 1 : index
    %c0_157 = arith.constant 0 : index
    %214 = vector.load %arg3[%c1_156, %c0_157] : memref<3x64xbf16, #tpu.memory_space<vmem>>, vector<1x56xbf16>
    %215 = vector.broadcast %214 : vector<1x56xbf16> to vector<16x56xbf16>
    %216 = arith.mulf %213, %215 : vector<16x56xbf16>
    %c112 = arith.constant 112 : index
    %c0_158 = arith.constant 0 : index
    %217 = vector.load %arg36[%c112, %c0_158] : memref<288x256xbf16, #tpu.memory_space<vmem>>, vector<16x56xbf16>
    tpu.vector_store %arg36[%c112, %c0_158], %216 {strides = array<i32>} : memref<288x256xbf16, #tpu.memory_space<vmem>>, vector<16x56xbf16>,
    %218 = vector.extract_strided_slice %176 {offsets = [0, 9], sizes = [16, 55], strides = [1, 1]} : vector<16x64xbf16> to vector<16x55xbf16>
    %c2_159 = arith.constant 2 : index
    %c0_160 = arith.constant 0 : index
    %219 = vector.load %arg3[%c2_159, %c0_160] : memref<3x64xbf16, #tpu.memory_space<vmem>>, vector<1x55xbf16>
    %220 = vector.broadcast %219 : vector<1x55xbf16> to vector<16x55xbf16>
    %221 = arith.mulf %218, %220 : vector<16x55xbf16>
    %c128 = arith.constant 128 : index
    %c0_161 = arith.constant 0 : index
    %222 = vector.load %arg36[%c128, %c0_161] : memref<288x256xbf16, #tpu.memory_space<vmem>>, vector<16x55xbf16>
    tpu.vector_store %arg36[%c128, %c0_161], %221 {strides = array<i32>} : memref<288x256xbf16, #tpu.memory_space<vmem>>, vector<16x55xbf16>,
    %c0_162 = arith.constant 0 : index
    %c0_163 = arith.constant 0 : index
    %223 = vector.load %arg15[%c0_162, %c0_163] : memref<16x144xbf16, #tpu.memory_space<vmem>>, vector<16x144xbf16>
    %c0_164 = arith.constant 0 : index
    %c0_165 = arith.constant 0 : index
    %224 = vector.load %arg36[%c0_164, %c0_165] : memref<288x256xbf16, #tpu.memory_space<vmem>>, vector<144x64xbf16>
    %cst_166 = arith.constant dense<0.000000e+00> : vector<16x64xf32>
    %225 = tpu.matmul %223, %224, %cst_166 {dimension_numbers = #tpu.dot_dimension_numbers<[1], [0], [0], [1], [0, 0, 1, 1], [], []>} : vector<16x144xbf16>, vector<144x64xbf16>, vector<16x64xf32> -> vector<16x64xf32>
    %c0_167 = arith.constant 0 : index
    %c0_168 = arith.constant 0 : index
    %226 = vector.load %arg16[%c0_167, %c0_168] : memref<16x1xf32, #tpu.memory_space<vmem>>, vector<16x1xf32>
    %227 = vector.broadcast %226 : vector<16x1xf32> to vector<16x64xf32>
    %228 = arith.addf %225, %227 : vector<16x64xf32>
    %cst_169 = arith.constant 0.000000e+00 : f32
    %229 = vector.broadcast %cst_169 : f32 to vector<16x64xf32>
    %230 = arith.maximumf %228, %229 : vector<16x64xf32>
    %231 = arith.truncf %230 : vector<16x64xf32> to vector<16x64xbf16>
    %232 = vector.extract_strided_slice %231 {offsets = [0, 0], sizes = [16, 55], strides = [1, 1]} : vector<16x64xbf16> to vector<16x55xbf16>
    %233 = vector.extract_strided_slice %231 {offsets = [0, 1], sizes = [16, 55], strides = [1, 1]} : vector<16x64xbf16> to vector<16x55xbf16>
    %234 = arith.maximumf %232, %233 : vector<16x55xbf16>
    %235 = vector.extract_strided_slice %231 {offsets = [0, 8], sizes = [16, 55], strides = [1, 1]} : vector<16x64xbf16> to vector<16x55xbf16>
    %236 = vector.extract_strided_slice %231 {offsets = [0, 9], sizes = [16, 55], strides = [1, 1]} : vector<16x64xbf16> to vector<16x55xbf16>
    %237 = arith.maximumf %235, %236 : vector<16x55xbf16>
    %238 = arith.maximumf %234, %237 : vector<16x55xbf16>
    %c0_170 = arith.constant 0 : index
    %c0_171 = arith.constant 0 : index
    %239 = vector.load %arg6[%c0_170, %c0_171] : memref<55x16xbf16, #tpu.memory_space<vmem>>, vector<55x16xbf16>
    %cst_172 = arith.constant dense<0.000000e+00> : vector<16x16xf32>
    %240 = tpu.matmul %238, %239, %cst_172 {dimension_numbers = #tpu.dot_dimension_numbers<[1], [0], [0], [1], [0, 0, 1, 1], [], []>} : vector<16x55xbf16>, vector<55x16xbf16>, vector<16x16xf32> -> vector<16x16xf32>
    %241 = arith.truncf %240 : vector<16x16xf32> to vector<16x16xbf16>
    %cst_173 = arith.constant 0.000000e+00 : bf16
    %242 = vector.broadcast %cst_173 : bf16 to vector<144x16xbf16>
    %c0_174 = arith.constant 0 : index
    %c0_175 = arith.constant 0 : index
    %243 = vector.load %arg36[%c0_174, %c0_175] : memref<288x256xbf16, #tpu.memory_space<vmem>>, vector<144x16xbf16>
    tpu.vector_store %arg36[%c0_174, %c0_175], %242 {strides = array<i32>} : memref<288x256xbf16, #tpu.memory_space<vmem>>, vector<144x16xbf16>,
    %244 = vector.extract_strided_slice %241 {offsets = [0, 0], sizes = [16, 11], strides = [1, 1]} : vector<16x16xbf16> to vector<16x11xbf16>
    %c0_176 = arith.constant 0 : index
    %c5 = arith.constant 5 : index
    %245 = vector.load %arg4[%c0_176, %c5] : memref<3x16xbf16, #tpu.memory_space<vmem>>, vector<1x11xbf16>
    %246 = vector.broadcast %245 : vector<1x11xbf16> to vector<16x11xbf16>
    %247 = arith.mulf %244, %246 : vector<16x11xbf16>
    %c0_177 = arith.constant 0 : index
    %c5_178 = arith.constant 5 : index
    %248 = vector.load %arg36[%c0_177, %c5_178] : memref<288x256xbf16, #tpu.memory_space<vmem>>, vector<16x11xbf16>
    tpu.vector_store %arg36[%c0_177, %c5_178], %247 {strides = array<i32>} : memref<288x256xbf16, #tpu.memory_space<vmem>>, vector<16x11xbf16>,
    %249 = vector.extract_strided_slice %241 {offsets = [0, 0], sizes = [16, 12], strides = [1, 1]} : vector<16x16xbf16> to vector<16x12xbf16>
    %c1_179 = arith.constant 1 : index
    %c4_180 = arith.constant 4 : index
    %250 = vector.load %arg4[%c1_179, %c4_180] : memref<3x16xbf16, #tpu.memory_space<vmem>>, vector<1x12xbf16>
    %251 = vector.broadcast %250 : vector<1x12xbf16> to vector<16x12xbf16>
    %252 = arith.mulf %249, %251 : vector<16x12xbf16>
    %c16_181 = arith.constant 16 : index
    %c4_182 = arith.constant 4 : index
    %253 = vector.load %arg36[%c16_181, %c4_182] : memref<288x256xbf16, #tpu.memory_space<vmem>>, vector<16x12xbf16>
    tpu.vector_store %arg36[%c16_181, %c4_182], %252 {strides = array<i32>} : memref<288x256xbf16, #tpu.memory_space<vmem>>, vector<16x12xbf16>,
    %254 = vector.extract_strided_slice %241 {offsets = [0, 0], sizes = [16, 13], strides = [1, 1]} : vector<16x16xbf16> to vector<16x13xbf16>
    %c2_183 = arith.constant 2 : index
    %c3 = arith.constant 3 : index
    %255 = vector.load %arg4[%c2_183, %c3] : memref<3x16xbf16, #tpu.memory_space<vmem>>, vector<1x13xbf16>
    %256 = vector.broadcast %255 : vector<1x13xbf16> to vector<16x13xbf16>
    %257 = arith.mulf %254, %256 : vector<16x13xbf16>
    %c32_184 = arith.constant 32 : index
    %c3_185 = arith.constant 3 : index
    %258 = vector.load %arg36[%c32_184, %c3_185] : memref<288x256xbf16, #tpu.memory_space<vmem>>, vector<16x13xbf16>
    tpu.vector_store %arg36[%c32_184, %c3_185], %257 {strides = array<i32>} : memref<288x256xbf16, #tpu.memory_space<vmem>>, vector<16x13xbf16>,
    %259 = vector.extract_strided_slice %241 {offsets = [0, 0], sizes = [16, 15], strides = [1, 1]} : vector<16x16xbf16> to vector<16x15xbf16>
    %c0_186 = arith.constant 0 : index
    %c1_187 = arith.constant 1 : index
    %260 = vector.load %arg4[%c0_186, %c1_187] : memref<3x16xbf16, #tpu.memory_space<vmem>>, vector<1x15xbf16>
    %261 = vector.broadcast %260 : vector<1x15xbf16> to vector<16x15xbf16>
    %262 = arith.mulf %259, %261 : vector<16x15xbf16>
    %c48_188 = arith.constant 48 : index
    %c1_189 = arith.constant 1 : index
    %263 = vector.load %arg36[%c48_188, %c1_189] : memref<288x256xbf16, #tpu.memory_space<vmem>>, vector<16x15xbf16>
    tpu.vector_store %arg36[%c48_188, %c1_189], %262 {strides = array<i32>} : memref<288x256xbf16, #tpu.memory_space<vmem>>, vector<16x15xbf16>,
    %c1_190 = arith.constant 1 : index
    %c0_191 = arith.constant 0 : index
    %264 = vector.load %arg4[%c1_190, %c0_191] : memref<3x16xbf16, #tpu.memory_space<vmem>>, vector<1x16xbf16>
    %265 = vector.broadcast %264 : vector<1x16xbf16> to vector<16x16xbf16>
    %266 = arith.mulf %241, %265 : vector<16x16xbf16>
    %c64_192 = arith.constant 64 : index
    %c0_193 = arith.constant 0 : index
    %267 = vector.load %arg36[%c64_192, %c0_193] : memref<288x256xbf16, #tpu.memory_space<vmem>>, vector<16x16xbf16>
    tpu.vector_store %arg36[%c64_192, %c0_193], %266 {strides = array<i32>} : memref<288x256xbf16, #tpu.memory_space<vmem>>, vector<16x16xbf16>,
    %268 = vector.extract_strided_slice %241 {offsets = [0, 1], sizes = [16, 15], strides = [1, 1]} : vector<16x16xbf16> to vector<16x15xbf16>
    %c2_194 = arith.constant 2 : index
    %c0_195 = arith.constant 0 : index
    %269 = vector.load %arg4[%c2_194, %c0_195] : memref<3x16xbf16, #tpu.memory_space<vmem>>, vector<1x15xbf16>
    %270 = vector.broadcast %269 : vector<1x15xbf16> to vector<16x15xbf16>
    %271 = arith.mulf %268, %270 : vector<16x15xbf16>
    %c80_196 = arith.constant 80 : index
    %c0_197 = arith.constant 0 : index
    %272 = vector.load %arg36[%c80_196, %c0_197] : memref<288x256xbf16, #tpu.memory_space<vmem>>, vector<16x15xbf16>
    tpu.vector_store %arg36[%c80_196, %c0_197], %271 {strides = array<i32>} : memref<288x256xbf16, #tpu.memory_space<vmem>>, vector<16x15xbf16>,
    %273 = vector.extract_strided_slice %241 {offsets = [0, 3], sizes = [16, 13], strides = [1, 1]} : vector<16x16xbf16> to vector<16x13xbf16>
    %c0_198 = arith.constant 0 : index
    %c0_199 = arith.constant 0 : index
    %274 = vector.load %arg4[%c0_198, %c0_199] : memref<3x16xbf16, #tpu.memory_space<vmem>>, vector<1x13xbf16>
    %275 = vector.broadcast %274 : vector<1x13xbf16> to vector<16x13xbf16>
    %276 = arith.mulf %273, %275 : vector<16x13xbf16>
    %c96_200 = arith.constant 96 : index
    %c0_201 = arith.constant 0 : index
    %277 = vector.load %arg36[%c96_200, %c0_201] : memref<288x256xbf16, #tpu.memory_space<vmem>>, vector<16x13xbf16>
    tpu.vector_store %arg36[%c96_200, %c0_201], %276 {strides = array<i32>} : memref<288x256xbf16, #tpu.memory_space<vmem>>, vector<16x13xbf16>,
    %278 = vector.extract_strided_slice %241 {offsets = [0, 4], sizes = [16, 12], strides = [1, 1]} : vector<16x16xbf16> to vector<16x12xbf16>
    %c1_202 = arith.constant 1 : index
    %c0_203 = arith.constant 0 : index
    %279 = vector.load %arg4[%c1_202, %c0_203] : memref<3x16xbf16, #tpu.memory_space<vmem>>, vector<1x12xbf16>
    %280 = vector.broadcast %279 : vector<1x12xbf16> to vector<16x12xbf16>
    %281 = arith.mulf %278, %280 : vector<16x12xbf16>
    %c112_204 = arith.constant 112 : index
    %c0_205 = arith.constant 0 : index
    %282 = vector.load %arg36[%c112_204, %c0_205] : memref<288x256xbf16, #tpu.memory_space<vmem>>, vector<16x12xbf16>
    tpu.vector_store %arg36[%c112_204, %c0_205], %281 {strides = array<i32>} : memref<288x256xbf16, #tpu.memory_space<vmem>>, vector<16x12xbf16>,
    %283 = vector.extract_strided_slice %241 {offsets = [0, 5], sizes = [16, 11], strides = [1, 1]} : vector<16x16xbf16> to vector<16x11xbf16>
    %c2_206 = arith.constant 2 : index
    %c0_207 = arith.constant 0 : index
    %284 = vector.load %arg4[%c2_206, %c0_207] : memref<3x16xbf16, #tpu.memory_space<vmem>>, vector<1x11xbf16>
    %285 = vector.broadcast %284 : vector<1x11xbf16> to vector<16x11xbf16>
    %286 = arith.mulf %283, %285 : vector<16x11xbf16>
    %c128_208 = arith.constant 128 : index
    %c0_209 = arith.constant 0 : index
    %287 = vector.load %arg36[%c128_208, %c0_209] : memref<288x256xbf16, #tpu.memory_space<vmem>>, vector<16x11xbf16>
    tpu.vector_store %arg36[%c128_208, %c0_209], %286 {strides = array<i32>} : memref<288x256xbf16, #tpu.memory_space<vmem>>, vector<16x11xbf16>,
    %c0_210 = arith.constant 0 : index
    %c0_211 = arith.constant 0 : index
    %288 = vector.load %arg17[%c0_210, %c0_211] : memref<32x144xbf16, #tpu.memory_space<vmem>>, vector<32x144xbf16>
    %c0_212 = arith.constant 0 : index
    %c0_213 = arith.constant 0 : index
    %289 = vector.load %arg36[%c0_212, %c0_213] : memref<288x256xbf16, #tpu.memory_space<vmem>>, vector<144x16xbf16>
    %cst_214 = arith.constant dense<0.000000e+00> : vector<32x16xf32>
    %290 = tpu.matmul %288, %289, %cst_214 {dimension_numbers = #tpu.dot_dimension_numbers<[1], [0], [0], [1], [0, 0, 1, 1], [], []>} : vector<32x144xbf16>, vector<144x16xbf16>, vector<32x16xf32> -> vector<32x16xf32>
    %c0_215 = arith.constant 0 : index
    %c0_216 = arith.constant 0 : index
    %291 = vector.load %arg18[%c0_215, %c0_216] : memref<32x1xf32, #tpu.memory_space<vmem>>, vector<32x1xf32>
    %292 = vector.broadcast %291 : vector<32x1xf32> to vector<32x16xf32>
    %293 = arith.addf %290, %292 : vector<32x16xf32>
    %cst_217 = arith.constant 0.000000e+00 : f32
    %294 = vector.broadcast %cst_217 : f32 to vector<32x16xf32>
    %295 = arith.maximumf %293, %294 : vector<32x16xf32>
    %296 = arith.truncf %295 : vector<32x16xf32> to vector<32x16xbf16>
    %cst_218 = arith.constant 0.000000e+00 : bf16
    %297 = vector.broadcast %cst_218 : bf16 to vector<288x16xbf16>
    %c0_219 = arith.constant 0 : index
    %c0_220 = arith.constant 0 : index
    %298 = vector.load %arg36[%c0_219, %c0_220] : memref<288x256xbf16, #tpu.memory_space<vmem>>, vector<288x16xbf16>
    tpu.vector_store %arg36[%c0_219, %c0_220], %297 {strides = array<i32>} : memref<288x256xbf16, #tpu.memory_space<vmem>>, vector<288x16xbf16>,
    %299 = vector.extract_strided_slice %296 {offsets = [0, 0], sizes = [32, 11], strides = [1, 1]} : vector<32x16xbf16> to vector<32x11xbf16>
    %c0_221 = arith.constant 0 : index
    %c5_222 = arith.constant 5 : index
    %300 = vector.load %arg4[%c0_221, %c5_222] : memref<3x16xbf16, #tpu.memory_space<vmem>>, vector<1x11xbf16>
    %301 = vector.broadcast %300 : vector<1x11xbf16> to vector<32x11xbf16>
    %302 = arith.mulf %299, %301 : vector<32x11xbf16>
    %c0_223 = arith.constant 0 : index
    %c5_224 = arith.constant 5 : index
    %303 = vector.load %arg36[%c0_223, %c5_224] : memref<288x256xbf16, #tpu.memory_space<vmem>>, vector<32x11xbf16>
    tpu.vector_store %arg36[%c0_223, %c5_224], %302 {strides = array<i32>} : memref<288x256xbf16, #tpu.memory_space<vmem>>, vector<32x11xbf16>,
    %304 = vector.extract_strided_slice %296 {offsets = [0, 0], sizes = [32, 12], strides = [1, 1]} : vector<32x16xbf16> to vector<32x12xbf16>
    %c1_225 = arith.constant 1 : index
    %c4_226 = arith.constant 4 : index
    %305 = vector.load %arg4[%c1_225, %c4_226] : memref<3x16xbf16, #tpu.memory_space<vmem>>, vector<1x12xbf16>
    %306 = vector.broadcast %305 : vector<1x12xbf16> to vector<32x12xbf16>
    %307 = arith.mulf %304, %306 : vector<32x12xbf16>
    %c32_227 = arith.constant 32 : index
    %c4_228 = arith.constant 4 : index
    %308 = vector.load %arg36[%c32_227, %c4_228] : memref<288x256xbf16, #tpu.memory_space<vmem>>, vector<32x12xbf16>
    tpu.vector_store %arg36[%c32_227, %c4_228], %307 {strides = array<i32>} : memref<288x256xbf16, #tpu.memory_space<vmem>>, vector<32x12xbf16>,
    %309 = vector.extract_strided_slice %296 {offsets = [0, 0], sizes = [32, 13], strides = [1, 1]} : vector<32x16xbf16> to vector<32x13xbf16>
    %c2_229 = arith.constant 2 : index
    %c3_230 = arith.constant 3 : index
    %310 = vector.load %arg4[%c2_229, %c3_230] : memref<3x16xbf16, #tpu.memory_space<vmem>>, vector<1x13xbf16>
    %311 = vector.broadcast %310 : vector<1x13xbf16> to vector<32x13xbf16>
    %312 = arith.mulf %309, %311 : vector<32x13xbf16>
    %c64_231 = arith.constant 64 : index
    %c3_232 = arith.constant 3 : index
    %313 = vector.load %arg36[%c64_231, %c3_232] : memref<288x256xbf16, #tpu.memory_space<vmem>>, vector<32x13xbf16>
    tpu.vector_store %arg36[%c64_231, %c3_232], %312 {strides = array<i32>} : memref<288x256xbf16, #tpu.memory_space<vmem>>, vector<32x13xbf16>,
    %314 = vector.extract_strided_slice %296 {offsets = [0, 0], sizes = [32, 15], strides = [1, 1]} : vector<32x16xbf16> to vector<32x15xbf16>
    %c0_233 = arith.constant 0 : index
    %c1_234 = arith.constant 1 : index
    %315 = vector.load %arg4[%c0_233, %c1_234] : memref<3x16xbf16, #tpu.memory_space<vmem>>, vector<1x15xbf16>
    %316 = vector.broadcast %315 : vector<1x15xbf16> to vector<32x15xbf16>
    %317 = arith.mulf %314, %316 : vector<32x15xbf16>
    %c96_235 = arith.constant 96 : index
    %c1_236 = arith.constant 1 : index
    %318 = vector.load %arg36[%c96_235, %c1_236] : memref<288x256xbf16, #tpu.memory_space<vmem>>, vector<32x15xbf16>
    tpu.vector_store %arg36[%c96_235, %c1_236], %317 {strides = array<i32>} : memref<288x256xbf16, #tpu.memory_space<vmem>>, vector<32x15xbf16>,
    %c1_237 = arith.constant 1 : index
    %c0_238 = arith.constant 0 : index
    %319 = vector.load %arg4[%c1_237, %c0_238] : memref<3x16xbf16, #tpu.memory_space<vmem>>, vector<1x16xbf16>
    %320 = vector.broadcast %319 : vector<1x16xbf16> to vector<32x16xbf16>
    %321 = arith.mulf %296, %320 : vector<32x16xbf16>
    %c128_239 = arith.constant 128 : index
    %c0_240 = arith.constant 0 : index
    %322 = vector.load %arg36[%c128_239, %c0_240] : memref<288x256xbf16, #tpu.memory_space<vmem>>, vector<32x16xbf16>
    tpu.vector_store %arg36[%c128_239, %c0_240], %321 {strides = array<i32>} : memref<288x256xbf16, #tpu.memory_space<vmem>>, vector<32x16xbf16>,
    %323 = vector.extract_strided_slice %296 {offsets = [0, 1], sizes = [32, 15], strides = [1, 1]} : vector<32x16xbf16> to vector<32x15xbf16>
    %c2_241 = arith.constant 2 : index
    %c0_242 = arith.constant 0 : index
    %324 = vector.load %arg4[%c2_241, %c0_242] : memref<3x16xbf16, #tpu.memory_space<vmem>>, vector<1x15xbf16>
    %325 = vector.broadcast %324 : vector<1x15xbf16> to vector<32x15xbf16>
    %326 = arith.mulf %323, %325 : vector<32x15xbf16>
    %c160 = arith.constant 160 : index
    %c0_243 = arith.constant 0 : index
    %327 = vector.load %arg36[%c160, %c0_243] : memref<288x256xbf16, #tpu.memory_space<vmem>>, vector<32x15xbf16>
    tpu.vector_store %arg36[%c160, %c0_243], %326 {strides = array<i32>} : memref<288x256xbf16, #tpu.memory_space<vmem>>, vector<32x15xbf16>,
    %328 = vector.extract_strided_slice %296 {offsets = [0, 3], sizes = [32, 13], strides = [1, 1]} : vector<32x16xbf16> to vector<32x13xbf16>
    %c0_244 = arith.constant 0 : index
    %c0_245 = arith.constant 0 : index
    %329 = vector.load %arg4[%c0_244, %c0_245] : memref<3x16xbf16, #tpu.memory_space<vmem>>, vector<1x13xbf16>
    %330 = vector.broadcast %329 : vector<1x13xbf16> to vector<32x13xbf16>
    %331 = arith.mulf %328, %330 : vector<32x13xbf16>
    %c192 = arith.constant 192 : index
    %c0_246 = arith.constant 0 : index
    %332 = vector.load %arg36[%c192, %c0_246] : memref<288x256xbf16, #tpu.memory_space<vmem>>, vector<32x13xbf16>
    tpu.vector_store %arg36[%c192, %c0_246], %331 {strides = array<i32>} : memref<288x256xbf16, #tpu.memory_space<vmem>>, vector<32x13xbf16>,
    %333 = vector.extract_strided_slice %296 {offsets = [0, 4], sizes = [32, 12], strides = [1, 1]} : vector<32x16xbf16> to vector<32x12xbf16>
    %c1_247 = arith.constant 1 : index
    %c0_248 = arith.constant 0 : index
    %334 = vector.load %arg4[%c1_247, %c0_248] : memref<3x16xbf16, #tpu.memory_space<vmem>>, vector<1x12xbf16>
    %335 = vector.broadcast %334 : vector<1x12xbf16> to vector<32x12xbf16>
    %336 = arith.mulf %333, %335 : vector<32x12xbf16>
    %c224 = arith.constant 224 : index
    %c0_249 = arith.constant 0 : index
    %337 = vector.load %arg36[%c224, %c0_249] : memref<288x256xbf16, #tpu.memory_space<vmem>>, vector<32x12xbf16>
    tpu.vector_store %arg36[%c224, %c0_249], %336 {strides = array<i32>} : memref<288x256xbf16, #tpu.memory_space<vmem>>, vector<32x12xbf16>,
    %338 = vector.extract_strided_slice %296 {offsets = [0, 5], sizes = [32, 11], strides = [1, 1]} : vector<32x16xbf16> to vector<32x11xbf16>
    %c2_250 = arith.constant 2 : index
    %c0_251 = arith.constant 0 : index
    %339 = vector.load %arg4[%c2_250, %c0_251] : memref<3x16xbf16, #tpu.memory_space<vmem>>, vector<1x11xbf16>
    %340 = vector.broadcast %339 : vector<1x11xbf16> to vector<32x11xbf16>
    %341 = arith.mulf %338, %340 : vector<32x11xbf16>
    %c256 = arith.constant 256 : index
    %c0_252 = arith.constant 0 : index
    %342 = vector.load %arg36[%c256, %c0_252] : memref<288x256xbf16, #tpu.memory_space<vmem>>, vector<32x11xbf16>
    tpu.vector_store %arg36[%c256, %c0_252], %341 {strides = array<i32>} : memref<288x256xbf16, #tpu.memory_space<vmem>>, vector<32x11xbf16>,
    %c0_253 = arith.constant 0 : index
    %c0_254 = arith.constant 0 : index
    %343 = vector.load %arg19[%c0_253, %c0_254] : memref<32x288xbf16, #tpu.memory_space<vmem>>, vector<32x288xbf16>
    %c0_255 = arith.constant 0 : index
    %c0_256 = arith.constant 0 : index
    %344 = vector.load %arg36[%c0_255, %c0_256] : memref<288x256xbf16, #tpu.memory_space<vmem>>, vector<288x16xbf16>
    %cst_257 = arith.constant dense<0.000000e+00> : vector<32x16xf32>
    %345 = tpu.matmul %343, %344, %cst_257 {dimension_numbers = #tpu.dot_dimension_numbers<[1], [0], [0], [1], [0, 0, 1, 1], [], []>} : vector<32x288xbf16>, vector<288x16xbf16>, vector<32x16xf32> -> vector<32x16xf32>
    %c0_258 = arith.constant 0 : index
    %c0_259 = arith.constant 0 : index
    %346 = vector.load %arg20[%c0_258, %c0_259] : memref<32x1xf32, #tpu.memory_space<vmem>>, vector<32x1xf32>
    %347 = vector.broadcast %346 : vector<32x1xf32> to vector<32x16xf32>
    %348 = arith.addf %345, %347 : vector<32x16xf32>
    %cst_260 = arith.constant 0.000000e+00 : f32
    %349 = vector.broadcast %cst_260 : f32 to vector<32x16xf32>
    %350 = arith.maximumf %348, %349 : vector<32x16xf32>
    %351 = arith.truncf %350 : vector<32x16xf32> to vector<32x16xbf16>
    %c0_261 = arith.constant 0 : index
    %c0_262 = arith.constant 0 : index
    %352 = vector.load %arg21[%c0_261, %c0_262] : memref<64x32xbf16, #tpu.memory_space<vmem>>, vector<64x32xbf16>
    %cst_263 = arith.constant dense<0.000000e+00> : vector<64x16xf32>
    %353 = tpu.matmul %352, %351, %cst_263 {dimension_numbers = #tpu.dot_dimension_numbers<[1], [0], [0], [1], [0, 0, 1, 1], [], []>} : vector<64x32xbf16>, vector<32x16xbf16>, vector<64x16xf32> -> vector<64x16xf32>
    %354 = arith.truncf %353 : vector<64x16xf32> to vector<64x16xbf16>
    %cst_264 = arith.constant 0.000000e+00 : f32
    %355 = vector.broadcast %cst_264 : f32 to vector<16x64xf32>
    %356 = vector.extract_strided_slice %354 {offsets = [0, 0], sizes = [16, 16], strides = [1, 1]} : vector<64x16xbf16> to vector<16x16xbf16>
    %c0_265 = arith.constant 0 : index
    %c0_266 = arith.constant 0 : index
    %357 = vector.load %arg7[%c0_265, %c0_266] : memref<64x64xbf16, #tpu.memory_space<vmem>>, vector<16x64xbf16>
    %cst_267 = arith.constant dense<0.000000e+00> : vector<16x64xf32>
    %358 = tpu.matmul %356, %357, %cst_267 {dimension_numbers = #tpu.dot_dimension_numbers<[1], [0], [0], [1], [0, 0, 1, 1], [], []>} : vector<16x16xbf16>, vector<16x64xbf16>, vector<16x64xf32> -> vector<16x64xf32>
    %359 = arith.addf %355, %358 : vector<16x64xf32>
    %360 = vector.extract_strided_slice %354 {offsets = [16, 0], sizes = [16, 16], strides = [1, 1]} : vector<64x16xbf16> to vector<16x16xbf16>
    %c16_268 = arith.constant 16 : index
    %c0_269 = arith.constant 0 : index
    %361 = vector.load %arg7[%c16_268, %c0_269] : memref<64x64xbf16, #tpu.memory_space<vmem>>, vector<16x64xbf16>
    %cst_270 = arith.constant dense<0.000000e+00> : vector<16x64xf32>
    %362 = tpu.matmul %360, %361, %cst_270 {dimension_numbers = #tpu.dot_dimension_numbers<[1], [0], [0], [1], [0, 0, 1, 1], [], []>} : vector<16x16xbf16>, vector<16x64xbf16>, vector<16x64xf32> -> vector<16x64xf32>
    %363 = arith.addf %359, %362 : vector<16x64xf32>
    %364 = vector.extract_strided_slice %354 {offsets = [32, 0], sizes = [16, 16], strides = [1, 1]} : vector<64x16xbf16> to vector<16x16xbf16>
    %c32_271 = arith.constant 32 : index
    %c0_272 = arith.constant 0 : index
    %365 = vector.load %arg7[%c32_271, %c0_272] : memref<64x64xbf16, #tpu.memory_space<vmem>>, vector<16x64xbf16>
    %cst_273 = arith.constant dense<0.000000e+00> : vector<16x64xf32>
    %366 = tpu.matmul %364, %365, %cst_273 {dimension_numbers = #tpu.dot_dimension_numbers<[1], [0], [0], [1], [0, 0, 1, 1], [], []>} : vector<16x16xbf16>, vector<16x64xbf16>, vector<16x64xf32> -> vector<16x64xf32>
    %367 = arith.addf %363, %366 : vector<16x64xf32>
    %368 = vector.extract_strided_slice %354 {offsets = [48, 0], sizes = [16, 16], strides = [1, 1]} : vector<64x16xbf16> to vector<16x16xbf16>
    %c48_274 = arith.constant 48 : index
    %c0_275 = arith.constant 0 : index
    %369 = vector.load %arg7[%c48_274, %c0_275] : memref<64x64xbf16, #tpu.memory_space<vmem>>, vector<16x64xbf16>
    %cst_276 = arith.constant dense<0.000000e+00> : vector<16x64xf32>
    %370 = tpu.matmul %368, %369, %cst_276 {dimension_numbers = #tpu.dot_dimension_numbers<[1], [0], [0], [1], [0, 0, 1, 1], [], []>} : vector<16x16xbf16>, vector<16x64xbf16>, vector<16x64xf32> -> vector<16x64xf32>
    %371 = arith.addf %367, %370 : vector<16x64xf32>
    %c0_277 = arith.constant 0 : index
    %c0_278 = arith.constant 0 : index
    %372 = vector.load %arg22[%c0_277, %c0_278] : memref<16x1xf32, #tpu.memory_space<vmem>>, vector<16x1xf32>
    %373 = vector.broadcast %372 : vector<16x1xf32> to vector<16x64xf32>
    %374 = arith.addf %371, %373 : vector<16x64xf32>
    %375 = arith.truncf %374 : vector<16x64xf32> to vector<16x64xbf16>
    %cst_279 = arith.constant 0.000000e+00 : bf16
    %376 = vector.broadcast %cst_279 : bf16 to vector<288x64xbf16>
    %c0_280 = arith.constant 0 : index
    %c0_281 = arith.constant 0 : index
    %377 = vector.load %arg36[%c0_280, %c0_281] : memref<288x256xbf16, #tpu.memory_space<vmem>>, vector<288x64xbf16>
    tpu.vector_store %arg36[%c0_280, %c0_281], %376 {strides = array<i32>} : memref<288x256xbf16, #tpu.memory_space<vmem>>, vector<288x64xbf16>,
    %378 = vector.extract_strided_slice %375 {offsets = [0, 0], sizes = [16, 55], strides = [1, 1]} : vector<16x64xbf16> to vector<16x55xbf16>
    %c0_282 = arith.constant 0 : index
    %c9_283 = arith.constant 9 : index
    %379 = vector.load %arg3[%c0_282, %c9_283] : memref<3x64xbf16, #tpu.memory_space<vmem>>, vector<1x55xbf16>
    %380 = vector.broadcast %379 : vector<1x55xbf16> to vector<16x55xbf16>
    %381 = arith.mulf %378, %380 : vector<16x55xbf16>
    %c0_284 = arith.constant 0 : index
    %c9_285 = arith.constant 9 : index
    %382 = vector.load %arg36[%c0_284, %c9_285] : memref<288x256xbf16, #tpu.memory_space<vmem>>, vector<16x55xbf16>
    tpu.vector_store %arg36[%c0_284, %c9_285], %381 {strides = array<i32>} : memref<288x256xbf16, #tpu.memory_space<vmem>>, vector<16x55xbf16>,
    %383 = vector.extract_strided_slice %375 {offsets = [0, 0], sizes = [16, 56], strides = [1, 1]} : vector<16x64xbf16> to vector<16x56xbf16>
    %c1_286 = arith.constant 1 : index
    %c8_287 = arith.constant 8 : index
    %384 = vector.load %arg3[%c1_286, %c8_287] : memref<3x64xbf16, #tpu.memory_space<vmem>>, vector<1x56xbf16>
    %385 = vector.broadcast %384 : vector<1x56xbf16> to vector<16x56xbf16>
    %386 = arith.mulf %383, %385 : vector<16x56xbf16>
    %c16_288 = arith.constant 16 : index
    %c8_289 = arith.constant 8 : index
    %387 = vector.load %arg36[%c16_288, %c8_289] : memref<288x256xbf16, #tpu.memory_space<vmem>>, vector<16x56xbf16>
    tpu.vector_store %arg36[%c16_288, %c8_289], %386 {strides = array<i32>} : memref<288x256xbf16, #tpu.memory_space<vmem>>, vector<16x56xbf16>,
    %388 = vector.extract_strided_slice %375 {offsets = [0, 0], sizes = [16, 57], strides = [1, 1]} : vector<16x64xbf16> to vector<16x57xbf16>
    %c2_290 = arith.constant 2 : index
    %c7_291 = arith.constant 7 : index
    %389 = vector.load %arg3[%c2_290, %c7_291] : memref<3x64xbf16, #tpu.memory_space<vmem>>, vector<1x57xbf16>
    %390 = vector.broadcast %389 : vector<1x57xbf16> to vector<16x57xbf16>
    %391 = arith.mulf %388, %390 : vector<16x57xbf16>
    %c32_292 = arith.constant 32 : index
    %c7_293 = arith.constant 7 : index
    %392 = vector.load %arg36[%c32_292, %c7_293] : memref<288x256xbf16, #tpu.memory_space<vmem>>, vector<16x57xbf16>
    tpu.vector_store %arg36[%c32_292, %c7_293], %391 {strides = array<i32>} : memref<288x256xbf16, #tpu.memory_space<vmem>>, vector<16x57xbf16>,
    %393 = vector.extract_strided_slice %375 {offsets = [0, 0], sizes = [16, 63], strides = [1, 1]} : vector<16x64xbf16> to vector<16x63xbf16>
    %c0_294 = arith.constant 0 : index
    %c1_295 = arith.constant 1 : index
    %394 = vector.load %arg3[%c0_294, %c1_295] : memref<3x64xbf16, #tpu.memory_space<vmem>>, vector<1x63xbf16>
    %395 = vector.broadcast %394 : vector<1x63xbf16> to vector<16x63xbf16>
    %396 = arith.mulf %393, %395 : vector<16x63xbf16>
    %c48_296 = arith.constant 48 : index
    %c1_297 = arith.constant 1 : index
    %397 = vector.load %arg36[%c48_296, %c1_297] : memref<288x256xbf16, #tpu.memory_space<vmem>>, vector<16x63xbf16>
    tpu.vector_store %arg36[%c48_296, %c1_297], %396 {strides = array<i32>} : memref<288x256xbf16, #tpu.memory_space<vmem>>, vector<16x63xbf16>,
    %c1_298 = arith.constant 1 : index
    %c0_299 = arith.constant 0 : index
    %398 = vector.load %arg3[%c1_298, %c0_299] : memref<3x64xbf16, #tpu.memory_space<vmem>>, vector<1x64xbf16>
    %399 = vector.broadcast %398 : vector<1x64xbf16> to vector<16x64xbf16>
    %400 = arith.mulf %375, %399 : vector<16x64xbf16>
    %c64_300 = arith.constant 64 : index
    %c0_301 = arith.constant 0 : index
    %401 = vector.load %arg36[%c64_300, %c0_301] : memref<288x256xbf16, #tpu.memory_space<vmem>>, vector<16x64xbf16>
    tpu.vector_store %arg36[%c64_300, %c0_301], %400 {strides = array<i32>} : memref<288x256xbf16, #tpu.memory_space<vmem>>, vector<16x64xbf16>,
    %402 = vector.extract_strided_slice %375 {offsets = [0, 1], sizes = [16, 63], strides = [1, 1]} : vector<16x64xbf16> to vector<16x63xbf16>
    %c2_302 = arith.constant 2 : index
    %c0_303 = arith.constant 0 : index
    %403 = vector.load %arg3[%c2_302, %c0_303] : memref<3x64xbf16, #tpu.memory_space<vmem>>, vector<1x63xbf16>
    %404 = vector.broadcast %403 : vector<1x63xbf16> to vector<16x63xbf16>
    %405 = arith.mulf %402, %404 : vector<16x63xbf16>
    %c80_304 = arith.constant 80 : index
    %c0_305 = arith.constant 0 : index
    %406 = vector.load %arg36[%c80_304, %c0_305] : memref<288x256xbf16, #tpu.memory_space<vmem>>, vector<16x63xbf16>
    tpu.vector_store %arg36[%c80_304, %c0_305], %405 {strides = array<i32>} : memref<288x256xbf16, #tpu.memory_space<vmem>>, vector<16x63xbf16>,
    %407 = vector.extract_strided_slice %375 {offsets = [0, 7], sizes = [16, 57], strides = [1, 1]} : vector<16x64xbf16> to vector<16x57xbf16>
    %c0_306 = arith.constant 0 : index
    %c0_307 = arith.constant 0 : index
    %408 = vector.load %arg3[%c0_306, %c0_307] : memref<3x64xbf16, #tpu.memory_space<vmem>>, vector<1x57xbf16>
    %409 = vector.broadcast %408 : vector<1x57xbf16> to vector<16x57xbf16>
    %410 = arith.mulf %407, %409 : vector<16x57xbf16>
    %c96_308 = arith.constant 96 : index
    %c0_309 = arith.constant 0 : index
    %411 = vector.load %arg36[%c96_308, %c0_309] : memref<288x256xbf16, #tpu.memory_space<vmem>>, vector<16x57xbf16>
    tpu.vector_store %arg36[%c96_308, %c0_309], %410 {strides = array<i32>} : memref<288x256xbf16, #tpu.memory_space<vmem>>, vector<16x57xbf16>,
    %412 = vector.extract_strided_slice %375 {offsets = [0, 8], sizes = [16, 56], strides = [1, 1]} : vector<16x64xbf16> to vector<16x56xbf16>
    %c1_310 = arith.constant 1 : index
    %c0_311 = arith.constant 0 : index
    %413 = vector.load %arg3[%c1_310, %c0_311] : memref<3x64xbf16, #tpu.memory_space<vmem>>, vector<1x56xbf16>
    %414 = vector.broadcast %413 : vector<1x56xbf16> to vector<16x56xbf16>
    %415 = arith.mulf %412, %414 : vector<16x56xbf16>
    %c112_312 = arith.constant 112 : index
    %c0_313 = arith.constant 0 : index
    %416 = vector.load %arg36[%c112_312, %c0_313] : memref<288x256xbf16, #tpu.memory_space<vmem>>, vector<16x56xbf16>
    tpu.vector_store %arg36[%c112_312, %c0_313], %415 {strides = array<i32>} : memref<288x256xbf16, #tpu.memory_space<vmem>>, vector<16x56xbf16>,
    %417 = vector.extract_strided_slice %375 {offsets = [0, 9], sizes = [16, 55], strides = [1, 1]} : vector<16x64xbf16> to vector<16x55xbf16>
    %c2_314 = arith.constant 2 : index
    %c0_315 = arith.constant 0 : index
    %418 = vector.load %arg3[%c2_314, %c0_315] : memref<3x64xbf16, #tpu.memory_space<vmem>>, vector<1x55xbf16>
    %419 = vector.broadcast %418 : vector<1x55xbf16> to vector<16x55xbf16>
    %420 = arith.mulf %417, %419 : vector<16x55xbf16>
    %c128_316 = arith.constant 128 : index
    %c0_317 = arith.constant 0 : index
    %421 = vector.load %arg36[%c128_316, %c0_317] : memref<288x256xbf16, #tpu.memory_space<vmem>>, vector<16x55xbf16>
    tpu.vector_store %arg36[%c128_316, %c0_317], %420 {strides = array<i32>} : memref<288x256xbf16, #tpu.memory_space<vmem>>, vector<16x55xbf16>,
    %422 = vector.extract_strided_slice %231 {offsets = [0, 0], sizes = [16, 55], strides = [1, 1]} : vector<16x64xbf16> to vector<16x55xbf16>
    %c0_318 = arith.constant 0 : index
    %c9_319 = arith.constant 9 : index
    %423 = vector.load %arg3[%c0_318, %c9_319] : memref<3x64xbf16, #tpu.memory_space<vmem>>, vector<1x55xbf16>
    %424 = vector.broadcast %423 : vector<1x55xbf16> to vector<16x55xbf16>
    %425 = arith.mulf %422, %424 : vector<16x55xbf16>
    %c144 = arith.constant 144 : index
    %c9_320 = arith.constant 9 : index
    %426 = vector.load %arg36[%c144, %c9_320] : memref<288x256xbf16, #tpu.memory_space<vmem>>, vector<16x55xbf16>
    tpu.vector_store %arg36[%c144, %c9_320], %425 {strides = array<i32>} : memref<288x256xbf16, #tpu.memory_space<vmem>>, vector<16x55xbf16>,
    %427 = vector.extract_strided_slice %231 {offsets = [0, 0], sizes = [16, 56], strides = [1, 1]} : vector<16x64xbf16> to vector<16x56xbf16>
    %c1_321 = arith.constant 1 : index
    %c8_322 = arith.constant 8 : index
    %428 = vector.load %arg3[%c1_321, %c8_322] : memref<3x64xbf16, #tpu.memory_space<vmem>>, vector<1x56xbf16>
    %429 = vector.broadcast %428 : vector<1x56xbf16> to vector<16x56xbf16>
    %430 = arith.mulf %427, %429 : vector<16x56xbf16>
    %c160_323 = arith.constant 160 : index
    %c8_324 = arith.constant 8 : index
    %431 = vector.load %arg36[%c160_323, %c8_324] : memref<288x256xbf16, #tpu.memory_space<vmem>>, vector<16x56xbf16>
    tpu.vector_store %arg36[%c160_323, %c8_324], %430 {strides = array<i32>} : memref<288x256xbf16, #tpu.memory_space<vmem>>, vector<16x56xbf16>,
    %432 = vector.extract_strided_slice %231 {offsets = [0, 0], sizes = [16, 57], strides = [1, 1]} : vector<16x64xbf16> to vector<16x57xbf16>
    %c2_325 = arith.constant 2 : index
    %c7_326 = arith.constant 7 : index
    %433 = vector.load %arg3[%c2_325, %c7_326] : memref<3x64xbf16, #tpu.memory_space<vmem>>, vector<1x57xbf16>
    %434 = vector.broadcast %433 : vector<1x57xbf16> to vector<16x57xbf16>
    %435 = arith.mulf %432, %434 : vector<16x57xbf16>
    %c176 = arith.constant 176 : index
    %c7_327 = arith.constant 7 : index
    %436 = vector.load %arg36[%c176, %c7_327] : memref<288x256xbf16, #tpu.memory_space<vmem>>, vector<16x57xbf16>
    tpu.vector_store %arg36[%c176, %c7_327], %435 {strides = array<i32>} : memref<288x256xbf16, #tpu.memory_space<vmem>>, vector<16x57xbf16>,
    %437 = vector.extract_strided_slice %231 {offsets = [0, 0], sizes = [16, 63], strides = [1, 1]} : vector<16x64xbf16> to vector<16x63xbf16>
    %c0_328 = arith.constant 0 : index
    %c1_329 = arith.constant 1 : index
    %438 = vector.load %arg3[%c0_328, %c1_329] : memref<3x64xbf16, #tpu.memory_space<vmem>>, vector<1x63xbf16>
    %439 = vector.broadcast %438 : vector<1x63xbf16> to vector<16x63xbf16>
    %440 = arith.mulf %437, %439 : vector<16x63xbf16>
    %c192_330 = arith.constant 192 : index
    %c1_331 = arith.constant 1 : index
    %441 = vector.load %arg36[%c192_330, %c1_331] : memref<288x256xbf16, #tpu.memory_space<vmem>>, vector<16x63xbf16>
    tpu.vector_store %arg36[%c192_330, %c1_331], %440 {strides = array<i32>} : memref<288x256xbf16, #tpu.memory_space<vmem>>, vector<16x63xbf16>,
    %c1_332 = arith.constant 1 : index
    %c0_333 = arith.constant 0 : index
    %442 = vector.load %arg3[%c1_332, %c0_333] : memref<3x64xbf16, #tpu.memory_space<vmem>>, vector<1x64xbf16>
    %443 = vector.broadcast %442 : vector<1x64xbf16> to vector<16x64xbf16>
    %444 = arith.mulf %231, %443 : vector<16x64xbf16>
    %c208 = arith.constant 208 : index
    %c0_334 = arith.constant 0 : index
    %445 = vector.load %arg36[%c208, %c0_334] : memref<288x256xbf16, #tpu.memory_space<vmem>>, vector<16x64xbf16>
    tpu.vector_store %arg36[%c208, %c0_334], %444 {strides = array<i32>} : memref<288x256xbf16, #tpu.memory_space<vmem>>, vector<16x64xbf16>,
    %446 = vector.extract_strided_slice %231 {offsets = [0, 1], sizes = [16, 63], strides = [1, 1]} : vector<16x64xbf16> to vector<16x63xbf16>
    %c2_335 = arith.constant 2 : index
    %c0_336 = arith.constant 0 : index
    %447 = vector.load %arg3[%c2_335, %c0_336] : memref<3x64xbf16, #tpu.memory_space<vmem>>, vector<1x63xbf16>
    %448 = vector.broadcast %447 : vector<1x63xbf16> to vector<16x63xbf16>
    %449 = arith.mulf %446, %448 : vector<16x63xbf16>
    %c224_337 = arith.constant 224 : index
    %c0_338 = arith.constant 0 : index
    %450 = vector.load %arg36[%c224_337, %c0_338] : memref<288x256xbf16, #tpu.memory_space<vmem>>, vector<16x63xbf16>
    tpu.vector_store %arg36[%c224_337, %c0_338], %449 {strides = array<i32>} : memref<288x256xbf16, #tpu.memory_space<vmem>>, vector<16x63xbf16>,
    %451 = vector.extract_strided_slice %231 {offsets = [0, 7], sizes = [16, 57], strides = [1, 1]} : vector<16x64xbf16> to vector<16x57xbf16>
    %c0_339 = arith.constant 0 : index
    %c0_340 = arith.constant 0 : index
    %452 = vector.load %arg3[%c0_339, %c0_340] : memref<3x64xbf16, #tpu.memory_space<vmem>>, vector<1x57xbf16>
    %453 = vector.broadcast %452 : vector<1x57xbf16> to vector<16x57xbf16>
    %454 = arith.mulf %451, %453 : vector<16x57xbf16>
    %c240 = arith.constant 240 : index
    %c0_341 = arith.constant 0 : index
    %455 = vector.load %arg36[%c240, %c0_341] : memref<288x256xbf16, #tpu.memory_space<vmem>>, vector<16x57xbf16>
    tpu.vector_store %arg36[%c240, %c0_341], %454 {strides = array<i32>} : memref<288x256xbf16, #tpu.memory_space<vmem>>, vector<16x57xbf16>,
    %456 = vector.extract_strided_slice %231 {offsets = [0, 8], sizes = [16, 56], strides = [1, 1]} : vector<16x64xbf16> to vector<16x56xbf16>
    %c1_342 = arith.constant 1 : index
    %c0_343 = arith.constant 0 : index
    %457 = vector.load %arg3[%c1_342, %c0_343] : memref<3x64xbf16, #tpu.memory_space<vmem>>, vector<1x56xbf16>
    %458 = vector.broadcast %457 : vector<1x56xbf16> to vector<16x56xbf16>
    %459 = arith.mulf %456, %458 : vector<16x56xbf16>
    %c256_344 = arith.constant 256 : index
    %c0_345 = arith.constant 0 : index
    %460 = vector.load %arg36[%c256_344, %c0_345] : memref<288x256xbf16, #tpu.memory_space<vmem>>, vector<16x56xbf16>
    tpu.vector_store %arg36[%c256_344, %c0_345], %459 {strides = array<i32>} : memref<288x256xbf16, #tpu.memory_space<vmem>>, vector<16x56xbf16>,
    %461 = vector.extract_strided_slice %231 {offsets = [0, 9], sizes = [16, 55], strides = [1, 1]} : vector<16x64xbf16> to vector<16x55xbf16>
    %c2_346 = arith.constant 2 : index
    %c0_347 = arith.constant 0 : index
    %462 = vector.load %arg3[%c2_346, %c0_347] : memref<3x64xbf16, #tpu.memory_space<vmem>>, vector<1x55xbf16>
    %463 = vector.broadcast %462 : vector<1x55xbf16> to vector<16x55xbf16>
    %464 = arith.mulf %461, %463 : vector<16x55xbf16>
    %c272 = arith.constant 272 : index
    %c0_348 = arith.constant 0 : index
    %465 = vector.load %arg36[%c272, %c0_348] : memref<288x256xbf16, #tpu.memory_space<vmem>>, vector<16x55xbf16>
    tpu.vector_store %arg36[%c272, %c0_348], %464 {strides = array<i32>} : memref<288x256xbf16, #tpu.memory_space<vmem>>, vector<16x55xbf16>,
    %c0_349 = arith.constant 0 : index
    %c0_350 = arith.constant 0 : index
    %466 = vector.load %arg23[%c0_349, %c0_350] : memref<16x288xbf16, #tpu.memory_space<vmem>>, vector<16x288xbf16>
    %c0_351 = arith.constant 0 : index
    %c0_352 = arith.constant 0 : index
    %467 = vector.load %arg36[%c0_351, %c0_352] : memref<288x256xbf16, #tpu.memory_space<vmem>>, vector<288x64xbf16>
    %cst_353 = arith.constant dense<0.000000e+00> : vector<16x64xf32>
    %468 = tpu.matmul %466, %467, %cst_353 {dimension_numbers = #tpu.dot_dimension_numbers<[1], [0], [0], [1], [0, 0, 1, 1], [], []>} : vector<16x288xbf16>, vector<288x64xbf16>, vector<16x64xf32> -> vector<16x64xf32>
    %c0_354 = arith.constant 0 : index
    %c0_355 = arith.constant 0 : index
    %469 = vector.load %arg24[%c0_354, %c0_355] : memref<16x1xf32, #tpu.memory_space<vmem>>, vector<16x1xf32>
    %470 = vector.broadcast %469 : vector<16x1xf32> to vector<16x64xf32>
    %471 = arith.addf %468, %470 : vector<16x64xf32>
    %cst_356 = arith.constant 0.000000e+00 : f32
    %472 = vector.broadcast %cst_356 : f32 to vector<16x64xf32>
    %473 = arith.maximumf %471, %472 : vector<16x64xf32>
    %474 = arith.truncf %473 : vector<16x64xf32> to vector<16x64xbf16>
    %cst_357 = arith.constant 0.000000e+00 : bf16
    %475 = vector.broadcast %cst_357 : bf16 to vector<144x64xbf16>
    %c0_358 = arith.constant 0 : index
    %c0_359 = arith.constant 0 : index
    %476 = vector.load %arg36[%c0_358, %c0_359] : memref<288x256xbf16, #tpu.memory_space<vmem>>, vector<144x64xbf16>
    tpu.vector_store %arg36[%c0_358, %c0_359], %475 {strides = array<i32>} : memref<288x256xbf16, #tpu.memory_space<vmem>>, vector<144x64xbf16>,
    %477 = vector.extract_strided_slice %474 {offsets = [0, 0], sizes = [16, 55], strides = [1, 1]} : vector<16x64xbf16> to vector<16x55xbf16>
    %c0_360 = arith.constant 0 : index
    %c9_361 = arith.constant 9 : index
    %478 = vector.load %arg3[%c0_360, %c9_361] : memref<3x64xbf16, #tpu.memory_space<vmem>>, vector<1x55xbf16>
    %479 = vector.broadcast %478 : vector<1x55xbf16> to vector<16x55xbf16>
    %480 = arith.mulf %477, %479 : vector<16x55xbf16>
    %c0_362 = arith.constant 0 : index
    %c9_363 = arith.constant 9 : index
    %481 = vector.load %arg36[%c0_362, %c9_363] : memref<288x256xbf16, #tpu.memory_space<vmem>>, vector<16x55xbf16>
    tpu.vector_store %arg36[%c0_362, %c9_363], %480 {strides = array<i32>} : memref<288x256xbf16, #tpu.memory_space<vmem>>, vector<16x55xbf16>,
    %482 = vector.extract_strided_slice %474 {offsets = [0, 0], sizes = [16, 56], strides = [1, 1]} : vector<16x64xbf16> to vector<16x56xbf16>
    %c1_364 = arith.constant 1 : index
    %c8_365 = arith.constant 8 : index
    %483 = vector.load %arg3[%c1_364, %c8_365] : memref<3x64xbf16, #tpu.memory_space<vmem>>, vector<1x56xbf16>
    %484 = vector.broadcast %483 : vector<1x56xbf16> to vector<16x56xbf16>
    %485 = arith.mulf %482, %484 : vector<16x56xbf16>
    %c16_366 = arith.constant 16 : index
    %c8_367 = arith.constant 8 : index
    %486 = vector.load %arg36[%c16_366, %c8_367] : memref<288x256xbf16, #tpu.memory_space<vmem>>, vector<16x56xbf16>
    tpu.vector_store %arg36[%c16_366, %c8_367], %485 {strides = array<i32>} : memref<288x256xbf16, #tpu.memory_space<vmem>>, vector<16x56xbf16>,
    %487 = vector.extract_strided_slice %474 {offsets = [0, 0], sizes = [16, 57], strides = [1, 1]} : vector<16x64xbf16> to vector<16x57xbf16>
    %c2_368 = arith.constant 2 : index
    %c7_369 = arith.constant 7 : index
    %488 = vector.load %arg3[%c2_368, %c7_369] : memref<3x64xbf16, #tpu.memory_space<vmem>>, vector<1x57xbf16>
    %489 = vector.broadcast %488 : vector<1x57xbf16> to vector<16x57xbf16>
    %490 = arith.mulf %487, %489 : vector<16x57xbf16>
    %c32_370 = arith.constant 32 : index
    %c7_371 = arith.constant 7 : index
    %491 = vector.load %arg36[%c32_370, %c7_371] : memref<288x256xbf16, #tpu.memory_space<vmem>>, vector<16x57xbf16>
    tpu.vector_store %arg36[%c32_370, %c7_371], %490 {strides = array<i32>} : memref<288x256xbf16, #tpu.memory_space<vmem>>, vector<16x57xbf16>,
    %492 = vector.extract_strided_slice %474 {offsets = [0, 0], sizes = [16, 63], strides = [1, 1]} : vector<16x64xbf16> to vector<16x63xbf16>
    %c0_372 = arith.constant 0 : index
    %c1_373 = arith.constant 1 : index
    %493 = vector.load %arg3[%c0_372, %c1_373] : memref<3x64xbf16, #tpu.memory_space<vmem>>, vector<1x63xbf16>
    %494 = vector.broadcast %493 : vector<1x63xbf16> to vector<16x63xbf16>
    %495 = arith.mulf %492, %494 : vector<16x63xbf16>
    %c48_374 = arith.constant 48 : index
    %c1_375 = arith.constant 1 : index
    %496 = vector.load %arg36[%c48_374, %c1_375] : memref<288x256xbf16, #tpu.memory_space<vmem>>, vector<16x63xbf16>
    tpu.vector_store %arg36[%c48_374, %c1_375], %495 {strides = array<i32>} : memref<288x256xbf16, #tpu.memory_space<vmem>>, vector<16x63xbf16>,
    %c1_376 = arith.constant 1 : index
    %c0_377 = arith.constant 0 : index
    %497 = vector.load %arg3[%c1_376, %c0_377] : memref<3x64xbf16, #tpu.memory_space<vmem>>, vector<1x64xbf16>
    %498 = vector.broadcast %497 : vector<1x64xbf16> to vector<16x64xbf16>
    %499 = arith.mulf %474, %498 : vector<16x64xbf16>
    %c64_378 = arith.constant 64 : index
    %c0_379 = arith.constant 0 : index
    %500 = vector.load %arg36[%c64_378, %c0_379] : memref<288x256xbf16, #tpu.memory_space<vmem>>, vector<16x64xbf16>
    tpu.vector_store %arg36[%c64_378, %c0_379], %499 {strides = array<i32>} : memref<288x256xbf16, #tpu.memory_space<vmem>>, vector<16x64xbf16>,
    %501 = vector.extract_strided_slice %474 {offsets = [0, 1], sizes = [16, 63], strides = [1, 1]} : vector<16x64xbf16> to vector<16x63xbf16>
    %c2_380 = arith.constant 2 : index
    %c0_381 = arith.constant 0 : index
    %502 = vector.load %arg3[%c2_380, %c0_381] : memref<3x64xbf16, #tpu.memory_space<vmem>>, vector<1x63xbf16>
    %503 = vector.broadcast %502 : vector<1x63xbf16> to vector<16x63xbf16>
    %504 = arith.mulf %501, %503 : vector<16x63xbf16>
    %c80_382 = arith.constant 80 : index
    %c0_383 = arith.constant 0 : index
    %505 = vector.load %arg36[%c80_382, %c0_383] : memref<288x256xbf16, #tpu.memory_space<vmem>>, vector<16x63xbf16>
    tpu.vector_store %arg36[%c80_382, %c0_383], %504 {strides = array<i32>} : memref<288x256xbf16, #tpu.memory_space<vmem>>, vector<16x63xbf16>,
    %506 = vector.extract_strided_slice %474 {offsets = [0, 7], sizes = [16, 57], strides = [1, 1]} : vector<16x64xbf16> to vector<16x57xbf16>
    %c0_384 = arith.constant 0 : index
    %c0_385 = arith.constant 0 : index
    %507 = vector.load %arg3[%c0_384, %c0_385] : memref<3x64xbf16, #tpu.memory_space<vmem>>, vector<1x57xbf16>
    %508 = vector.broadcast %507 : vector<1x57xbf16> to vector<16x57xbf16>
    %509 = arith.mulf %506, %508 : vector<16x57xbf16>
    %c96_386 = arith.constant 96 : index
    %c0_387 = arith.constant 0 : index
    %510 = vector.load %arg36[%c96_386, %c0_387] : memref<288x256xbf16, #tpu.memory_space<vmem>>, vector<16x57xbf16>
    tpu.vector_store %arg36[%c96_386, %c0_387], %509 {strides = array<i32>} : memref<288x256xbf16, #tpu.memory_space<vmem>>, vector<16x57xbf16>,
    %511 = vector.extract_strided_slice %474 {offsets = [0, 8], sizes = [16, 56], strides = [1, 1]} : vector<16x64xbf16> to vector<16x56xbf16>
    %c1_388 = arith.constant 1 : index
    %c0_389 = arith.constant 0 : index
    %512 = vector.load %arg3[%c1_388, %c0_389] : memref<3x64xbf16, #tpu.memory_space<vmem>>, vector<1x56xbf16>
    %513 = vector.broadcast %512 : vector<1x56xbf16> to vector<16x56xbf16>
    %514 = arith.mulf %511, %513 : vector<16x56xbf16>
    %c112_390 = arith.constant 112 : index
    %c0_391 = arith.constant 0 : index
    %515 = vector.load %arg36[%c112_390, %c0_391] : memref<288x256xbf16, #tpu.memory_space<vmem>>, vector<16x56xbf16>
    tpu.vector_store %arg36[%c112_390, %c0_391], %514 {strides = array<i32>} : memref<288x256xbf16, #tpu.memory_space<vmem>>, vector<16x56xbf16>,
    %516 = vector.extract_strided_slice %474 {offsets = [0, 9], sizes = [16, 55], strides = [1, 1]} : vector<16x64xbf16> to vector<16x55xbf16>
    %c2_392 = arith.constant 2 : index
    %c0_393 = arith.constant 0 : index
    %517 = vector.load %arg3[%c2_392, %c0_393] : memref<3x64xbf16, #tpu.memory_space<vmem>>, vector<1x55xbf16>
    %518 = vector.broadcast %517 : vector<1x55xbf16> to vector<16x55xbf16>
    %519 = arith.mulf %516, %518 : vector<16x55xbf16>
    %c128_394 = arith.constant 128 : index
    %c0_395 = arith.constant 0 : index
    %520 = vector.load %arg36[%c128_394, %c0_395] : memref<288x256xbf16, #tpu.memory_space<vmem>>, vector<16x55xbf16>
    tpu.vector_store %arg36[%c128_394, %c0_395], %519 {strides = array<i32>} : memref<288x256xbf16, #tpu.memory_space<vmem>>, vector<16x55xbf16>,
    %c0_396 = arith.constant 0 : index
    %c0_397 = arith.constant 0 : index
    %521 = vector.load %arg25[%c0_396, %c0_397] : memref<16x144xbf16, #tpu.memory_space<vmem>>, vector<16x144xbf16>
    %c0_398 = arith.constant 0 : index
    %c0_399 = arith.constant 0 : index
    %522 = vector.load %arg36[%c0_398, %c0_399] : memref<288x256xbf16, #tpu.memory_space<vmem>>, vector<144x64xbf16>
    %cst_400 = arith.constant dense<0.000000e+00> : vector<16x64xf32>
    %523 = tpu.matmul %521, %522, %cst_400 {dimension_numbers = #tpu.dot_dimension_numbers<[1], [0], [0], [1], [0, 0, 1, 1], [], []>} : vector<16x144xbf16>, vector<144x64xbf16>, vector<16x64xf32> -> vector<16x64xf32>
    %c0_401 = arith.constant 0 : index
    %c0_402 = arith.constant 0 : index
    %524 = vector.load %arg26[%c0_401, %c0_402] : memref<16x1xf32, #tpu.memory_space<vmem>>, vector<16x1xf32>
    %525 = vector.broadcast %524 : vector<16x1xf32> to vector<16x64xf32>
    %526 = arith.addf %523, %525 : vector<16x64xf32>
    %cst_403 = arith.constant 0.000000e+00 : f32
    %527 = vector.broadcast %cst_403 : f32 to vector<16x64xf32>
    %528 = arith.maximumf %526, %527 : vector<16x64xf32>
    %529 = arith.truncf %528 : vector<16x64xf32> to vector<16x64xbf16>
    %c0_404 = arith.constant 0 : index
    %c0_405 = arith.constant 0 : index
    %530 = vector.load %arg27[%c0_404, %c0_405] : memref<32x16xbf16, #tpu.memory_space<vmem>>, vector<32x16xbf16>
    %cst_406 = arith.constant dense<0.000000e+00> : vector<32x64xf32>
    %531 = tpu.matmul %530, %529, %cst_406 {dimension_numbers = #tpu.dot_dimension_numbers<[1], [0], [0], [1], [0, 0, 1, 1], [], []>} : vector<32x16xbf16>, vector<16x64xbf16>, vector<32x64xf32> -> vector<32x64xf32>
    %532 = arith.truncf %531 : vector<32x64xf32> to vector<32x64xbf16>
    %cst_407 = arith.constant 0.000000e+00 : f32
    %533 = vector.broadcast %cst_407 : f32 to vector<8x256xf32>
    %534 = vector.extract_strided_slice %532 {offsets = [0, 0], sizes = [8, 64], strides = [1, 1]} : vector<32x64xbf16> to vector<8x64xbf16>
    %c0_408 = arith.constant 0 : index
    %c0_409 = arith.constant 0 : index
    %535 = vector.load %arg8[%c0_408, %c0_409] : memref<256x256xbf16, #tpu.memory_space<vmem>>, vector<64x256xbf16>
    %cst_410 = arith.constant dense<0.000000e+00> : vector<8x256xf32>
    %536 = tpu.matmul %534, %535, %cst_410 {dimension_numbers = #tpu.dot_dimension_numbers<[1], [0], [0], [1], [0, 0, 1, 1], [], []>} : vector<8x64xbf16>, vector<64x256xbf16>, vector<8x256xf32> -> vector<8x256xf32>
    %537 = arith.addf %533, %536 : vector<8x256xf32>
    %538 = vector.extract_strided_slice %532 {offsets = [8, 0], sizes = [8, 64], strides = [1, 1]} : vector<32x64xbf16> to vector<8x64xbf16>
    %c64_411 = arith.constant 64 : index
    %c0_412 = arith.constant 0 : index
    %539 = vector.load %arg8[%c64_411, %c0_412] : memref<256x256xbf16, #tpu.memory_space<vmem>>, vector<64x256xbf16>
    %cst_413 = arith.constant dense<0.000000e+00> : vector<8x256xf32>
    %540 = tpu.matmul %538, %539, %cst_413 {dimension_numbers = #tpu.dot_dimension_numbers<[1], [0], [0], [1], [0, 0, 1, 1], [], []>} : vector<8x64xbf16>, vector<64x256xbf16>, vector<8x256xf32> -> vector<8x256xf32>
    %541 = arith.addf %537, %540 : vector<8x256xf32>
    %542 = vector.extract_strided_slice %532 {offsets = [16, 0], sizes = [8, 64], strides = [1, 1]} : vector<32x64xbf16> to vector<8x64xbf16>
    %c128_414 = arith.constant 128 : index
    %c0_415 = arith.constant 0 : index
    %543 = vector.load %arg8[%c128_414, %c0_415] : memref<256x256xbf16, #tpu.memory_space<vmem>>, vector<64x256xbf16>
    %cst_416 = arith.constant dense<0.000000e+00> : vector<8x256xf32>
    %544 = tpu.matmul %542, %543, %cst_416 {dimension_numbers = #tpu.dot_dimension_numbers<[1], [0], [0], [1], [0, 0, 1, 1], [], []>} : vector<8x64xbf16>, vector<64x256xbf16>, vector<8x256xf32> -> vector<8x256xf32>
    %545 = arith.addf %541, %544 : vector<8x256xf32>
    %546 = vector.extract_strided_slice %532 {offsets = [24, 0], sizes = [8, 64], strides = [1, 1]} : vector<32x64xbf16> to vector<8x64xbf16>
    %c192_417 = arith.constant 192 : index
    %c0_418 = arith.constant 0 : index
    %547 = vector.load %arg8[%c192_417, %c0_418] : memref<256x256xbf16, #tpu.memory_space<vmem>>, vector<64x256xbf16>
    %cst_419 = arith.constant dense<0.000000e+00> : vector<8x256xf32>
    %548 = tpu.matmul %546, %547, %cst_419 {dimension_numbers = #tpu.dot_dimension_numbers<[1], [0], [0], [1], [0, 0, 1, 1], [], []>} : vector<8x64xbf16>, vector<64x256xbf16>, vector<8x256xf32> -> vector<8x256xf32>
    %549 = arith.addf %545, %548 : vector<8x256xf32>
    %c0_420 = arith.constant 0 : index
    %c0_421 = arith.constant 0 : index
    %550 = vector.load %arg28[%c0_420, %c0_421] : memref<8x1xf32, #tpu.memory_space<vmem>>, vector<8x1xf32>
    %551 = vector.broadcast %550 : vector<8x1xf32> to vector<8x256xf32>
    %552 = arith.addf %549, %551 : vector<8x256xf32>
    %553 = arith.truncf %552 : vector<8x256xf32> to vector<8x256xbf16>
    %cst_422 = arith.constant 0.000000e+00 : bf16
    %554 = vector.broadcast %cst_422 : bf16 to vector<144x256xbf16>
    %c0_423 = arith.constant 0 : index
    %c0_424 = arith.constant 0 : index
    %555 = vector.load %arg36[%c0_423, %c0_424] : memref<288x256xbf16, #tpu.memory_space<vmem>>, vector<144x256xbf16>
    tpu.vector_store %arg36[%c0_423, %c0_424], %554 {strides = array<i32>} : memref<288x256xbf16, #tpu.memory_space<vmem>>, vector<144x256xbf16>,
    %556 = vector.extract_strided_slice %553 {offsets = [0, 0], sizes = [8, 239], strides = [1, 1]} : vector<8x256xbf16> to vector<8x239xbf16>
    %c0_425 = arith.constant 0 : index
    %c17_426 = arith.constant 17 : index
    %557 = vector.load %arg2[%c0_425, %c17_426] : memref<3x256xbf16, #tpu.memory_space<vmem>>, vector<1x239xbf16>
    %558 = vector.broadcast %557 : vector<1x239xbf16> to vector<8x239xbf16>
    %559 = arith.mulf %556, %558 : vector<8x239xbf16>
    %c0_427 = arith.constant 0 : index
    %c17_428 = arith.constant 17 : index
    %560 = vector.load %arg36[%c0_427, %c17_428] : memref<288x256xbf16, #tpu.memory_space<vmem>>, vector<8x239xbf16>
    tpu.vector_store %arg36[%c0_427, %c17_428], %559 {strides = array<i32>} : memref<288x256xbf16, #tpu.memory_space<vmem>>, vector<8x239xbf16>,
    %561 = vector.extract_strided_slice %553 {offsets = [0, 0], sizes = [8, 240], strides = [1, 1]} : vector<8x256xbf16> to vector<8x240xbf16>
    %c1_429 = arith.constant 1 : index
    %c16_430 = arith.constant 16 : index
    %562 = vector.load %arg2[%c1_429, %c16_430] : memref<3x256xbf16, #tpu.memory_space<vmem>>, vector<1x240xbf16>
    %563 = vector.broadcast %562 : vector<1x240xbf16> to vector<8x240xbf16>
    %564 = arith.mulf %561, %563 : vector<8x240xbf16>
    %c8_431 = arith.constant 8 : index
    %c16_432 = arith.constant 16 : index
    %565 = vector.load %arg36[%c8_431, %c16_432] : memref<288x256xbf16, #tpu.memory_space<vmem>>, vector<8x240xbf16>
    tpu.vector_store %arg36[%c8_431, %c16_432], %564 {strides = array<i32>} : memref<288x256xbf16, #tpu.memory_space<vmem>>, vector<8x240xbf16>,
    %566 = vector.extract_strided_slice %553 {offsets = [0, 0], sizes = [8, 241], strides = [1, 1]} : vector<8x256xbf16> to vector<8x241xbf16>
    %c2_433 = arith.constant 2 : index
    %c15_434 = arith.constant 15 : index
    %567 = vector.load %arg2[%c2_433, %c15_434] : memref<3x256xbf16, #tpu.memory_space<vmem>>, vector<1x241xbf16>
    %568 = vector.broadcast %567 : vector<1x241xbf16> to vector<8x241xbf16>
    %569 = arith.mulf %566, %568 : vector<8x241xbf16>
    %c16_435 = arith.constant 16 : index
    %c15_436 = arith.constant 15 : index
    %570 = vector.load %arg36[%c16_435, %c15_436] : memref<288x256xbf16, #tpu.memory_space<vmem>>, vector<8x241xbf16>
    tpu.vector_store %arg36[%c16_435, %c15_436], %569 {strides = array<i32>} : memref<288x256xbf16, #tpu.memory_space<vmem>>, vector<8x241xbf16>,
    %571 = vector.extract_strided_slice %553 {offsets = [0, 0], sizes = [8, 255], strides = [1, 1]} : vector<8x256xbf16> to vector<8x255xbf16>
    %c0_437 = arith.constant 0 : index
    %c1_438 = arith.constant 1 : index
    %572 = vector.load %arg2[%c0_437, %c1_438] : memref<3x256xbf16, #tpu.memory_space<vmem>>, vector<1x255xbf16>
    %573 = vector.broadcast %572 : vector<1x255xbf16> to vector<8x255xbf16>
    %574 = arith.mulf %571, %573 : vector<8x255xbf16>
    %c24_439 = arith.constant 24 : index
    %c1_440 = arith.constant 1 : index
    %575 = vector.load %arg36[%c24_439, %c1_440] : memref<288x256xbf16, #tpu.memory_space<vmem>>, vector<8x255xbf16>
    tpu.vector_store %arg36[%c24_439, %c1_440], %574 {strides = array<i32>} : memref<288x256xbf16, #tpu.memory_space<vmem>>, vector<8x255xbf16>,
    %c1_441 = arith.constant 1 : index
    %c0_442 = arith.constant 0 : index
    %576 = vector.load %arg2[%c1_441, %c0_442] : memref<3x256xbf16, #tpu.memory_space<vmem>>, vector<1x256xbf16>
    %577 = vector.broadcast %576 : vector<1x256xbf16> to vector<8x256xbf16>
    %578 = arith.mulf %553, %577 : vector<8x256xbf16>
    %c32_443 = arith.constant 32 : index
    %c0_444 = arith.constant 0 : index
    %579 = vector.load %arg36[%c32_443, %c0_444] : memref<288x256xbf16, #tpu.memory_space<vmem>>, vector<8x256xbf16>
    tpu.vector_store %arg36[%c32_443, %c0_444], %578 {strides = array<i32>} : memref<288x256xbf16, #tpu.memory_space<vmem>>, vector<8x256xbf16>,
    %580 = vector.extract_strided_slice %553 {offsets = [0, 1], sizes = [8, 255], strides = [1, 1]} : vector<8x256xbf16> to vector<8x255xbf16>
    %c2_445 = arith.constant 2 : index
    %c0_446 = arith.constant 0 : index
    %581 = vector.load %arg2[%c2_445, %c0_446] : memref<3x256xbf16, #tpu.memory_space<vmem>>, vector<1x255xbf16>
    %582 = vector.broadcast %581 : vector<1x255xbf16> to vector<8x255xbf16>
    %583 = arith.mulf %580, %582 : vector<8x255xbf16>
    %c40_447 = arith.constant 40 : index
    %c0_448 = arith.constant 0 : index
    %584 = vector.load %arg36[%c40_447, %c0_448] : memref<288x256xbf16, #tpu.memory_space<vmem>>, vector<8x255xbf16>
    tpu.vector_store %arg36[%c40_447, %c0_448], %583 {strides = array<i32>} : memref<288x256xbf16, #tpu.memory_space<vmem>>, vector<8x255xbf16>,
    %585 = vector.extract_strided_slice %553 {offsets = [0, 15], sizes = [8, 241], strides = [1, 1]} : vector<8x256xbf16> to vector<8x241xbf16>
    %c0_449 = arith.constant 0 : index
    %c0_450 = arith.constant 0 : index
    %586 = vector.load %arg2[%c0_449, %c0_450] : memref<3x256xbf16, #tpu.memory_space<vmem>>, vector<1x241xbf16>
    %587 = vector.broadcast %586 : vector<1x241xbf16> to vector<8x241xbf16>
    %588 = arith.mulf %585, %587 : vector<8x241xbf16>
    %c48_451 = arith.constant 48 : index
    %c0_452 = arith.constant 0 : index
    %589 = vector.load %arg36[%c48_451, %c0_452] : memref<288x256xbf16, #tpu.memory_space<vmem>>, vector<8x241xbf16>
    tpu.vector_store %arg36[%c48_451, %c0_452], %588 {strides = array<i32>} : memref<288x256xbf16, #tpu.memory_space<vmem>>, vector<8x241xbf16>,
    %590 = vector.extract_strided_slice %553 {offsets = [0, 16], sizes = [8, 240], strides = [1, 1]} : vector<8x256xbf16> to vector<8x240xbf16>
    %c1_453 = arith.constant 1 : index
    %c0_454 = arith.constant 0 : index
    %591 = vector.load %arg2[%c1_453, %c0_454] : memref<3x256xbf16, #tpu.memory_space<vmem>>, vector<1x240xbf16>
    %592 = vector.broadcast %591 : vector<1x240xbf16> to vector<8x240xbf16>
    %593 = arith.mulf %590, %592 : vector<8x240xbf16>
    %c56_455 = arith.constant 56 : index
    %c0_456 = arith.constant 0 : index
    %594 = vector.load %arg36[%c56_455, %c0_456] : memref<288x256xbf16, #tpu.memory_space<vmem>>, vector<8x240xbf16>
    tpu.vector_store %arg36[%c56_455, %c0_456], %593 {strides = array<i32>} : memref<288x256xbf16, #tpu.memory_space<vmem>>, vector<8x240xbf16>,
    %595 = vector.extract_strided_slice %553 {offsets = [0, 17], sizes = [8, 239], strides = [1, 1]} : vector<8x256xbf16> to vector<8x239xbf16>
    %c2_457 = arith.constant 2 : index
    %c0_458 = arith.constant 0 : index
    %596 = vector.load %arg2[%c2_457, %c0_458] : memref<3x256xbf16, #tpu.memory_space<vmem>>, vector<1x239xbf16>
    %597 = vector.broadcast %596 : vector<1x239xbf16> to vector<8x239xbf16>
    %598 = arith.mulf %595, %597 : vector<8x239xbf16>
    %c64_459 = arith.constant 64 : index
    %c0_460 = arith.constant 0 : index
    %599 = vector.load %arg36[%c64_459, %c0_460] : memref<288x256xbf16, #tpu.memory_space<vmem>>, vector<8x239xbf16>
    tpu.vector_store %arg36[%c64_459, %c0_460], %598 {strides = array<i32>} : memref<288x256xbf16, #tpu.memory_space<vmem>>, vector<8x239xbf16>,
    %600 = vector.extract_strided_slice %111 {offsets = [0, 0], sizes = [8, 239], strides = [1, 1]} : vector<8x256xbf16> to vector<8x239xbf16>
    %c0_461 = arith.constant 0 : index
    %c17_462 = arith.constant 17 : index
    %601 = vector.load %arg2[%c0_461, %c17_462] : memref<3x256xbf16, #tpu.memory_space<vmem>>, vector<1x239xbf16>
    %602 = vector.broadcast %601 : vector<1x239xbf16> to vector<8x239xbf16>
    %603 = arith.mulf %600, %602 : vector<8x239xbf16>
    %c72 = arith.constant 72 : index
    %c17_463 = arith.constant 17 : index
    %604 = vector.load %arg36[%c72, %c17_463] : memref<288x256xbf16, #tpu.memory_space<vmem>>, vector<8x239xbf16>
    tpu.vector_store %arg36[%c72, %c17_463], %603 {strides = array<i32>} : memref<288x256xbf16, #tpu.memory_space<vmem>>, vector<8x239xbf16>,
    %605 = vector.extract_strided_slice %111 {offsets = [0, 0], sizes = [8, 240], strides = [1, 1]} : vector<8x256xbf16> to vector<8x240xbf16>
    %c1_464 = arith.constant 1 : index
    %c16_465 = arith.constant 16 : index
    %606 = vector.load %arg2[%c1_464, %c16_465] : memref<3x256xbf16, #tpu.memory_space<vmem>>, vector<1x240xbf16>
    %607 = vector.broadcast %606 : vector<1x240xbf16> to vector<8x240xbf16>
    %608 = arith.mulf %605, %607 : vector<8x240xbf16>
    %c80_466 = arith.constant 80 : index
    %c16_467 = arith.constant 16 : index
    %609 = vector.load %arg36[%c80_466, %c16_467] : memref<288x256xbf16, #tpu.memory_space<vmem>>, vector<8x240xbf16>
    tpu.vector_store %arg36[%c80_466, %c16_467], %608 {strides = array<i32>} : memref<288x256xbf16, #tpu.memory_space<vmem>>, vector<8x240xbf16>,
    %610 = vector.extract_strided_slice %111 {offsets = [0, 0], sizes = [8, 241], strides = [1, 1]} : vector<8x256xbf16> to vector<8x241xbf16>
    %c2_468 = arith.constant 2 : index
    %c15_469 = arith.constant 15 : index
    %611 = vector.load %arg2[%c2_468, %c15_469] : memref<3x256xbf16, #tpu.memory_space<vmem>>, vector<1x241xbf16>
    %612 = vector.broadcast %611 : vector<1x241xbf16> to vector<8x241xbf16>
    %613 = arith.mulf %610, %612 : vector<8x241xbf16>
    %c88 = arith.constant 88 : index
    %c15_470 = arith.constant 15 : index
    %614 = vector.load %arg36[%c88, %c15_470] : memref<288x256xbf16, #tpu.memory_space<vmem>>, vector<8x241xbf16>
    tpu.vector_store %arg36[%c88, %c15_470], %613 {strides = array<i32>} : memref<288x256xbf16, #tpu.memory_space<vmem>>, vector<8x241xbf16>,
    %615 = vector.extract_strided_slice %111 {offsets = [0, 0], sizes = [8, 255], strides = [1, 1]} : vector<8x256xbf16> to vector<8x255xbf16>
    %c0_471 = arith.constant 0 : index
    %c1_472 = arith.constant 1 : index
    %616 = vector.load %arg2[%c0_471, %c1_472] : memref<3x256xbf16, #tpu.memory_space<vmem>>, vector<1x255xbf16>
    %617 = vector.broadcast %616 : vector<1x255xbf16> to vector<8x255xbf16>
    %618 = arith.mulf %615, %617 : vector<8x255xbf16>
    %c96_473 = arith.constant 96 : index
    %c1_474 = arith.constant 1 : index
    %619 = vector.load %arg36[%c96_473, %c1_474] : memref<288x256xbf16, #tpu.memory_space<vmem>>, vector<8x255xbf16>
    tpu.vector_store %arg36[%c96_473, %c1_474], %618 {strides = array<i32>} : memref<288x256xbf16, #tpu.memory_space<vmem>>, vector<8x255xbf16>,
    %c1_475 = arith.constant 1 : index
    %c0_476 = arith.constant 0 : index
    %620 = vector.load %arg2[%c1_475, %c0_476] : memref<3x256xbf16, #tpu.memory_space<vmem>>, vector<1x256xbf16>
    %621 = vector.broadcast %620 : vector<1x256xbf16> to vector<8x256xbf16>
    %622 = arith.mulf %111, %621 : vector<8x256xbf16>
    %c104 = arith.constant 104 : index
    %c0_477 = arith.constant 0 : index
    %623 = vector.load %arg36[%c104, %c0_477] : memref<288x256xbf16, #tpu.memory_space<vmem>>, vector<8x256xbf16>
    tpu.vector_store %arg36[%c104, %c0_477], %622 {strides = array<i32>} : memref<288x256xbf16, #tpu.memory_space<vmem>>, vector<8x256xbf16>,
    %624 = vector.extract_strided_slice %111 {offsets = [0, 1], sizes = [8, 255], strides = [1, 1]} : vector<8x256xbf16> to vector<8x255xbf16>
    %c2_478 = arith.constant 2 : index
    %c0_479 = arith.constant 0 : index
    %625 = vector.load %arg2[%c2_478, %c0_479] : memref<3x256xbf16, #tpu.memory_space<vmem>>, vector<1x255xbf16>
    %626 = vector.broadcast %625 : vector<1x255xbf16> to vector<8x255xbf16>
    %627 = arith.mulf %624, %626 : vector<8x255xbf16>
    %c112_480 = arith.constant 112 : index
    %c0_481 = arith.constant 0 : index
    %628 = vector.load %arg36[%c112_480, %c0_481] : memref<288x256xbf16, #tpu.memory_space<vmem>>, vector<8x255xbf16>
    tpu.vector_store %arg36[%c112_480, %c0_481], %627 {strides = array<i32>} : memref<288x256xbf16, #tpu.memory_space<vmem>>, vector<8x255xbf16>,
    %629 = vector.extract_strided_slice %111 {offsets = [0, 15], sizes = [8, 241], strides = [1, 1]} : vector<8x256xbf16> to vector<8x241xbf16>
    %c0_482 = arith.constant 0 : index
    %c0_483 = arith.constant 0 : index
    %630 = vector.load %arg2[%c0_482, %c0_483] : memref<3x256xbf16, #tpu.memory_space<vmem>>, vector<1x241xbf16>
    %631 = vector.broadcast %630 : vector<1x241xbf16> to vector<8x241xbf16>
    %632 = arith.mulf %629, %631 : vector<8x241xbf16>
    %c120 = arith.constant 120 : index
    %c0_484 = arith.constant 0 : index
    %633 = vector.load %arg36[%c120, %c0_484] : memref<288x256xbf16, #tpu.memory_space<vmem>>, vector<8x241xbf16>
    tpu.vector_store %arg36[%c120, %c0_484], %632 {strides = array<i32>} : memref<288x256xbf16, #tpu.memory_space<vmem>>, vector<8x241xbf16>,
    %634 = vector.extract_strided_slice %111 {offsets = [0, 16], sizes = [8, 240], strides = [1, 1]} : vector<8x256xbf16> to vector<8x240xbf16>
    %c1_485 = arith.constant 1 : index
    %c0_486 = arith.constant 0 : index
    %635 = vector.load %arg2[%c1_485, %c0_486] : memref<3x256xbf16, #tpu.memory_space<vmem>>, vector<1x240xbf16>
    %636 = vector.broadcast %635 : vector<1x240xbf16> to vector<8x240xbf16>
    %637 = arith.mulf %634, %636 : vector<8x240xbf16>
    %c128_487 = arith.constant 128 : index
    %c0_488 = arith.constant 0 : index
    %638 = vector.load %arg36[%c128_487, %c0_488] : memref<288x256xbf16, #tpu.memory_space<vmem>>, vector<8x240xbf16>
    tpu.vector_store %arg36[%c128_487, %c0_488], %637 {strides = array<i32>} : memref<288x256xbf16, #tpu.memory_space<vmem>>, vector<8x240xbf16>,
    %639 = vector.extract_strided_slice %111 {offsets = [0, 17], sizes = [8, 239], strides = [1, 1]} : vector<8x256xbf16> to vector<8x239xbf16>
    %c2_489 = arith.constant 2 : index
    %c0_490 = arith.constant 0 : index
    %640 = vector.load %arg2[%c2_489, %c0_490] : memref<3x256xbf16, #tpu.memory_space<vmem>>, vector<1x239xbf16>
    %641 = vector.broadcast %640 : vector<1x239xbf16> to vector<8x239xbf16>
    %642 = arith.mulf %639, %641 : vector<8x239xbf16>
    %c136 = arith.constant 136 : index
    %c0_491 = arith.constant 0 : index
    %643 = vector.load %arg36[%c136, %c0_491] : memref<288x256xbf16, #tpu.memory_space<vmem>>, vector<8x239xbf16>
    tpu.vector_store %arg36[%c136, %c0_491], %642 {strides = array<i32>} : memref<288x256xbf16, #tpu.memory_space<vmem>>, vector<8x239xbf16>,
    %c0_492 = arith.constant 0 : index
    %c0_493 = arith.constant 0 : index
    %644 = vector.load %arg29[%c0_492, %c0_493] : memref<8x144xbf16, #tpu.memory_space<vmem>>, vector<8x144xbf16>
    %c0_494 = arith.constant 0 : index
    %c0_495 = arith.constant 0 : index
    %645 = vector.load %arg36[%c0_494, %c0_495] : memref<288x256xbf16, #tpu.memory_space<vmem>>, vector<144x256xbf16>
    %cst_496 = arith.constant dense<0.000000e+00> : vector<8x256xf32>
    %646 = tpu.matmul %644, %645, %cst_496 {dimension_numbers = #tpu.dot_dimension_numbers<[1], [0], [0], [1], [0, 0, 1, 1], [], []>} : vector<8x144xbf16>, vector<144x256xbf16>, vector<8x256xf32> -> vector<8x256xf32>
    %c0_497 = arith.constant 0 : index
    %c0_498 = arith.constant 0 : index
    %647 = vector.load %arg30[%c0_497, %c0_498] : memref<8x1xf32, #tpu.memory_space<vmem>>, vector<8x1xf32>
    %648 = vector.broadcast %647 : vector<8x1xf32> to vector<8x256xf32>
    %649 = arith.addf %646, %648 : vector<8x256xf32>
    %cst_499 = arith.constant 0.000000e+00 : f32
    %650 = vector.broadcast %cst_499 : f32 to vector<8x256xf32>
    %651 = arith.maximumf %649, %650 : vector<8x256xf32>
    %652 = arith.truncf %651 : vector<8x256xf32> to vector<8x256xbf16>
    %cst_500 = arith.constant 0.000000e+00 : bf16
    %653 = vector.broadcast %cst_500 : bf16 to vector<72x256xbf16>
    %c0_501 = arith.constant 0 : index
    %c0_502 = arith.constant 0 : index
    %654 = vector.load %arg36[%c0_501, %c0_502] : memref<288x256xbf16, #tpu.memory_space<vmem>>, vector<72x256xbf16>
    tpu.vector_store %arg36[%c0_501, %c0_502], %653 {strides = array<i32>} : memref<288x256xbf16, #tpu.memory_space<vmem>>, vector<72x256xbf16>,
    %655 = vector.extract_strided_slice %652 {offsets = [0, 0], sizes = [8, 239], strides = [1, 1]} : vector<8x256xbf16> to vector<8x239xbf16>
    %c0_503 = arith.constant 0 : index
    %c17_504 = arith.constant 17 : index
    %656 = vector.load %arg2[%c0_503, %c17_504] : memref<3x256xbf16, #tpu.memory_space<vmem>>, vector<1x239xbf16>
    %657 = vector.broadcast %656 : vector<1x239xbf16> to vector<8x239xbf16>
    %658 = arith.mulf %655, %657 : vector<8x239xbf16>
    %c0_505 = arith.constant 0 : index
    %c17_506 = arith.constant 17 : index
    %659 = vector.load %arg36[%c0_505, %c17_506] : memref<288x256xbf16, #tpu.memory_space<vmem>>, vector<8x239xbf16>
    tpu.vector_store %arg36[%c0_505, %c17_506], %658 {strides = array<i32>} : memref<288x256xbf16, #tpu.memory_space<vmem>>, vector<8x239xbf16>,
    %660 = vector.extract_strided_slice %652 {offsets = [0, 0], sizes = [8, 240], strides = [1, 1]} : vector<8x256xbf16> to vector<8x240xbf16>
    %c1_507 = arith.constant 1 : index
    %c16_508 = arith.constant 16 : index
    %661 = vector.load %arg2[%c1_507, %c16_508] : memref<3x256xbf16, #tpu.memory_space<vmem>>, vector<1x240xbf16>
    %662 = vector.broadcast %661 : vector<1x240xbf16> to vector<8x240xbf16>
    %663 = arith.mulf %660, %662 : vector<8x240xbf16>
    %c8_509 = arith.constant 8 : index
    %c16_510 = arith.constant 16 : index
    %664 = vector.load %arg36[%c8_509, %c16_510] : memref<288x256xbf16, #tpu.memory_space<vmem>>, vector<8x240xbf16>
    tpu.vector_store %arg36[%c8_509, %c16_510], %663 {strides = array<i32>} : memref<288x256xbf16, #tpu.memory_space<vmem>>, vector<8x240xbf16>,
    %665 = vector.extract_strided_slice %652 {offsets = [0, 0], sizes = [8, 241], strides = [1, 1]} : vector<8x256xbf16> to vector<8x241xbf16>
    %c2_511 = arith.constant 2 : index
    %c15_512 = arith.constant 15 : index
    %666 = vector.load %arg2[%c2_511, %c15_512] : memref<3x256xbf16, #tpu.memory_space<vmem>>, vector<1x241xbf16>
    %667 = vector.broadcast %666 : vector<1x241xbf16> to vector<8x241xbf16>
    %668 = arith.mulf %665, %667 : vector<8x241xbf16>
    %c16_513 = arith.constant 16 : index
    %c15_514 = arith.constant 15 : index
    %669 = vector.load %arg36[%c16_513, %c15_514] : memref<288x256xbf16, #tpu.memory_space<vmem>>, vector<8x241xbf16>
    tpu.vector_store %arg36[%c16_513, %c15_514], %668 {strides = array<i32>} : memref<288x256xbf16, #tpu.memory_space<vmem>>, vector<8x241xbf16>,
    %670 = vector.extract_strided_slice %652 {offsets = [0, 0], sizes = [8, 255], strides = [1, 1]} : vector<8x256xbf16> to vector<8x255xbf16>
    %c0_515 = arith.constant 0 : index
    %c1_516 = arith.constant 1 : index
    %671 = vector.load %arg2[%c0_515, %c1_516] : memref<3x256xbf16, #tpu.memory_space<vmem>>, vector<1x255xbf16>
    %672 = vector.broadcast %671 : vector<1x255xbf16> to vector<8x255xbf16>
    %673 = arith.mulf %670, %672 : vector<8x255xbf16>
    %c24_517 = arith.constant 24 : index
    %c1_518 = arith.constant 1 : index
    %674 = vector.load %arg36[%c24_517, %c1_518] : memref<288x256xbf16, #tpu.memory_space<vmem>>, vector<8x255xbf16>
    tpu.vector_store %arg36[%c24_517, %c1_518], %673 {strides = array<i32>} : memref<288x256xbf16, #tpu.memory_space<vmem>>, vector<8x255xbf16>,
    %c1_519 = arith.constant 1 : index
    %c0_520 = arith.constant 0 : index
    %675 = vector.load %arg2[%c1_519, %c0_520] : memref<3x256xbf16, #tpu.memory_space<vmem>>, vector<1x256xbf16>
    %676 = vector.broadcast %675 : vector<1x256xbf16> to vector<8x256xbf16>
    %677 = arith.mulf %652, %676 : vector<8x256xbf16>
    %c32_521 = arith.constant 32 : index
    %c0_522 = arith.constant 0 : index
    %678 = vector.load %arg36[%c32_521, %c0_522] : memref<288x256xbf16, #tpu.memory_space<vmem>>, vector<8x256xbf16>
    tpu.vector_store %arg36[%c32_521, %c0_522], %677 {strides = array<i32>} : memref<288x256xbf16, #tpu.memory_space<vmem>>, vector<8x256xbf16>,
    %679 = vector.extract_strided_slice %652 {offsets = [0, 1], sizes = [8, 255], strides = [1, 1]} : vector<8x256xbf16> to vector<8x255xbf16>
    %c2_523 = arith.constant 2 : index
    %c0_524 = arith.constant 0 : index
    %680 = vector.load %arg2[%c2_523, %c0_524] : memref<3x256xbf16, #tpu.memory_space<vmem>>, vector<1x255xbf16>
    %681 = vector.broadcast %680 : vector<1x255xbf16> to vector<8x255xbf16>
    %682 = arith.mulf %679, %681 : vector<8x255xbf16>
    %c40_525 = arith.constant 40 : index
    %c0_526 = arith.constant 0 : index
    %683 = vector.load %arg36[%c40_525, %c0_526] : memref<288x256xbf16, #tpu.memory_space<vmem>>, vector<8x255xbf16>
    tpu.vector_store %arg36[%c40_525, %c0_526], %682 {strides = array<i32>} : memref<288x256xbf16, #tpu.memory_space<vmem>>, vector<8x255xbf16>,
    %684 = vector.extract_strided_slice %652 {offsets = [0, 15], sizes = [8, 241], strides = [1, 1]} : vector<8x256xbf16> to vector<8x241xbf16>
    %c0_527 = arith.constant 0 : index
    %c0_528 = arith.constant 0 : index
    %685 = vector.load %arg2[%c0_527, %c0_528] : memref<3x256xbf16, #tpu.memory_space<vmem>>, vector<1x241xbf16>
    %686 = vector.broadcast %685 : vector<1x241xbf16> to vector<8x241xbf16>
    %687 = arith.mulf %684, %686 : vector<8x241xbf16>
    %c48_529 = arith.constant 48 : index
    %c0_530 = arith.constant 0 : index
    %688 = vector.load %arg36[%c48_529, %c0_530] : memref<288x256xbf16, #tpu.memory_space<vmem>>, vector<8x241xbf16>
    tpu.vector_store %arg36[%c48_529, %c0_530], %687 {strides = array<i32>} : memref<288x256xbf16, #tpu.memory_space<vmem>>, vector<8x241xbf16>,
    %689 = vector.extract_strided_slice %652 {offsets = [0, 16], sizes = [8, 240], strides = [1, 1]} : vector<8x256xbf16> to vector<8x240xbf16>
    %c1_531 = arith.constant 1 : index
    %c0_532 = arith.constant 0 : index
    %690 = vector.load %arg2[%c1_531, %c0_532] : memref<3x256xbf16, #tpu.memory_space<vmem>>, vector<1x240xbf16>
    %691 = vector.broadcast %690 : vector<1x240xbf16> to vector<8x240xbf16>
    %692 = arith.mulf %689, %691 : vector<8x240xbf16>
    %c56_533 = arith.constant 56 : index
    %c0_534 = arith.constant 0 : index
    %693 = vector.load %arg36[%c56_533, %c0_534] : memref<288x256xbf16, #tpu.memory_space<vmem>>, vector<8x240xbf16>
    tpu.vector_store %arg36[%c56_533, %c0_534], %692 {strides = array<i32>} : memref<288x256xbf16, #tpu.memory_space<vmem>>, vector<8x240xbf16>,
    %694 = vector.extract_strided_slice %652 {offsets = [0, 17], sizes = [8, 239], strides = [1, 1]} : vector<8x256xbf16> to vector<8x239xbf16>
    %c2_535 = arith.constant 2 : index
    %c0_536 = arith.constant 0 : index
    %695 = vector.load %arg2[%c2_535, %c0_536] : memref<3x256xbf16, #tpu.memory_space<vmem>>, vector<1x239xbf16>
    %696 = vector.broadcast %695 : vector<1x239xbf16> to vector<8x239xbf16>
    %697 = arith.mulf %694, %696 : vector<8x239xbf16>
    %c64_537 = arith.constant 64 : index
    %c0_538 = arith.constant 0 : index
    %698 = vector.load %arg36[%c64_537, %c0_538] : memref<288x256xbf16, #tpu.memory_space<vmem>>, vector<8x239xbf16>
    tpu.vector_store %arg36[%c64_537, %c0_538], %697 {strides = array<i32>} : memref<288x256xbf16, #tpu.memory_space<vmem>>, vector<8x239xbf16>,
    %c0_539 = arith.constant 0 : index
    %c0_540 = arith.constant 0 : index
    %699 = vector.load %arg31[%c0_539, %c0_540] : memref<8x72xbf16, #tpu.memory_space<vmem>>, vector<8x72xbf16>
    %c0_541 = arith.constant 0 : index
    %c0_542 = arith.constant 0 : index
    %700 = vector.load %arg36[%c0_541, %c0_542] : memref<288x256xbf16, #tpu.memory_space<vmem>>, vector<72x256xbf16>
    %cst_543 = arith.constant dense<0.000000e+00> : vector<8x256xf32>
    %701 = tpu.matmul %699, %700, %cst_543 {dimension_numbers = #tpu.dot_dimension_numbers<[1], [0], [0], [1], [0, 0, 1, 1], [], []>} : vector<8x72xbf16>, vector<72x256xbf16>, vector<8x256xf32> -> vector<8x256xf32>
    %c0_544 = arith.constant 0 : index
    %c0_545 = arith.constant 0 : index
    %702 = vector.load %arg32[%c0_544, %c0_545] : memref<8x1xf32, #tpu.memory_space<vmem>>, vector<8x1xf32>
    %703 = vector.broadcast %702 : vector<8x1xf32> to vector<8x256xf32>
    %704 = arith.addf %701, %703 : vector<8x256xf32>
    %cst_546 = arith.constant 0.000000e+00 : f32
    %705 = vector.broadcast %cst_546 : f32 to vector<8x256xf32>
    %706 = arith.maximumf %704, %705 : vector<8x256xf32>
    %707 = arith.truncf %706 : vector<8x256xf32> to vector<8x256xbf16>
    %c0_547 = arith.constant 0 : index
    %c0_548 = arith.constant 0 : index
    %708 = vector.load %arg33[%c0_547, %c0_548] : memref<3x8xbf16, #tpu.memory_space<vmem>>, vector<3x8xbf16>
    %cst_549 = arith.constant dense<0.000000e+00> : vector<3x256xf32>
    %709 = tpu.matmul %708, %707, %cst_549 {dimension_numbers = #tpu.dot_dimension_numbers<[1], [0], [0], [1], [0, 0, 1, 1], [], []>} : vector<3x8xbf16>, vector<8x256xbf16>, vector<3x256xf32> -> vector<3x256xf32>
    %c0_550 = arith.constant 0 : index
    %c0_551 = arith.constant 0 : index
    %710 = vector.load %arg34[%c0_550, %c0_551] : memref<3x1xf32, #tpu.memory_space<vmem>>, vector<3x1xf32>
    %711 = vector.broadcast %710 : vector<3x1xf32> to vector<3x256xf32>
    %712 = arith.addf %709, %711 : vector<3x256xf32>
    %cst_552 = arith.constant dense<0xFF800000> : vector<256xf32>
    %713 = vector.multi_reduction <maximumf>, %712, %cst_552 [0] : vector<3x256xf32> to vector<256xf32>
    %714 = vector.shape_cast %713 : vector<256xf32> to vector<1x256xf32>
    %715 = vector.broadcast %714 : vector<1x256xf32> to vector<3x256xf32>
    %716 = arith.subf %712, %715 : vector<3x256xf32>
    %717 = math.exp %716 : vector<3x256xf32>
    %cst_553 = arith.constant dense<0.000000e+00> : vector<256xf32>
    %718 = vector.multi_reduction <add>, %717, %cst_553 [0] : vector<3x256xf32> to vector<256xf32>
    %719 = vector.shape_cast %718 : vector<256xf32> to vector<1x256xf32>
    %720 = tpu.reciprocal %719 {approx = true} : vector<1x256xf32> -> vector<1x256xf32>
    %721 = vector.broadcast %720 : vector<1x256xf32> to vector<3x256xf32>
    %722 = arith.mulf %717, %721 : vector<3x256xf32>
    %c0_554 = arith.constant 0 : index
    %c0_555 = arith.constant 0 : index
    %c0_556 = arith.constant 0 : index
    %723 = vector.load %arg35[%c0_554, %c0_555, %c0_556] : memref<1x3x256xf32, #tpu.memory_space<vmem>>, vector<1x3x256xf32>
    %724 = vector.shape_cast %723 : vector<1x3x256xf32> to vector<3x256xf32>
    %725 = vector.shape_cast %722 : vector<3x256xf32> to vector<1x3x256xf32>
    tpu.vector_store %arg35[%c0_554, %c0_555, %c0_556], %725 {strides = array<i32>} : memref<1x3x256xf32, #tpu.memory_space<vmem>>, vector<1x3x256xf32>,
    return
  }
  func.func @transform_0(%arg0: i32) -> (i32, i32, i32) {
    %c0_i32 = arith.constant 0 : i32
    %c0_i32_0 = arith.constant 0 : i32
    %c0_i32_1 = arith.constant 0 : i32
    return %arg0, %c0_i32, %c0_i32_0 : i32, i32, i32
  }
  func.func @transform_1(%arg0: i32) -> (i32, i32) {
    %c0_i32 = arith.constant 0 : i32
    %c0_i32_0 = arith.constant 0 : i32
    %c0_i32_1 = arith.constant 0 : i32
    return %c0_i32, %c0_i32_0 : i32, i32
  }
  func.func @transform_2(%arg0: i32) -> (i32, i32) {
    %c0_i32 = arith.constant 0 : i32
    %c0_i32_0 = arith.constant 0 : i32
    %c0_i32_1 = arith.constant 0 : i32
    return %c0_i32, %c0_i32_0 : i32, i32
  }
  func.func @transform_3(%arg0: i32) -> (i32, i32) {
    %c0_i32 = arith.constant 0 : i32
    %c0_i32_0 = arith.constant 0 : i32
    %c0_i32_1 = arith.constant 0 : i32
    return %c0_i32, %c0_i32_0 : i32, i32
  }
  func.func @transform_4(%arg0: i32) -> (i32, i32) {
    %c0_i32 = arith.constant 0 : i32
    %c0_i32_0 = arith.constant 0 : i32
    %c0_i32_1 = arith.constant 0 : i32
    return %c0_i32, %c0_i32_0 : i32, i32
  }
  func.func @transform_5(%arg0: i32) -> (i32, i32) {
    %c0_i32 = arith.constant 0 : i32
    %c0_i32_0 = arith.constant 0 : i32
    %c0_i32_1 = arith.constant 0 : i32
    return %c0_i32, %c0_i32_0 : i32, i32
  }
  func.func @transform_6(%arg0: i32) -> (i32, i32) {
    %c0_i32 = arith.constant 0 : i32
    %c0_i32_0 = arith.constant 0 : i32
    %c0_i32_1 = arith.constant 0 : i32
    return %c0_i32, %c0_i32_0 : i32, i32
  }
  func.func @transform_7(%arg0: i32) -> (i32, i32) {
    %c0_i32 = arith.constant 0 : i32
    %c0_i32_0 = arith.constant 0 : i32
    %c0_i32_1 = arith.constant 0 : i32
    return %c0_i32, %c0_i32_0 : i32, i32
  }
  func.func @transform_8(%arg0: i32) -> (i32, i32) {
    %c0_i32 = arith.constant 0 : i32
    %c0_i32_0 = arith.constant 0 : i32
    %c0_i32_1 = arith.constant 0 : i32
    return %c0_i32, %c0_i32_0 : i32, i32
  }
  func.func @transform_9(%arg0: i32) -> (i32, i32) {
    %c0_i32 = arith.constant 0 : i32
    %c0_i32_0 = arith.constant 0 : i32
    %c0_i32_1 = arith.constant 0 : i32
    return %c0_i32, %c0_i32_0 : i32, i32
  }
  func.func @transform_10(%arg0: i32) -> (i32, i32) {
    %c0_i32 = arith.constant 0 : i32
    %c0_i32_0 = arith.constant 0 : i32
    %c0_i32_1 = arith.constant 0 : i32
    return %c0_i32, %c0_i32_0 : i32, i32
  }
  func.func @transform_11(%arg0: i32) -> (i32, i32) {
    %c0_i32 = arith.constant 0 : i32
    %c0_i32_0 = arith.constant 0 : i32
    %c0_i32_1 = arith.constant 0 : i32
    return %c0_i32, %c0_i32_0 : i32, i32
  }
  func.func @transform_12(%arg0: i32) -> (i32, i32) {
    %c0_i32 = arith.constant 0 : i32
    %c0_i32_0 = arith.constant 0 : i32
    %c0_i32_1 = arith.constant 0 : i32
    return %c0_i32, %c0_i32_0 : i32, i32
  }
  func.func @transform_13(%arg0: i32) -> (i32, i32) {
    %c0_i32 = arith.constant 0 : i32
    %c0_i32_0 = arith.constant 0 : i32
    %c0_i32_1 = arith.constant 0 : i32
    return %c0_i32, %c0_i32_0 : i32, i32
  }
  func.func @transform_14(%arg0: i32) -> (i32, i32) {
    %c0_i32 = arith.constant 0 : i32
    %c0_i32_0 = arith.constant 0 : i32
    %c0_i32_1 = arith.constant 0 : i32
    return %c0_i32, %c0_i32_0 : i32, i32
  }
  func.func @transform_15(%arg0: i32) -> (i32, i32) {
    %c0_i32 = arith.constant 0 : i32
    %c0_i32_0 = arith.constant 0 : i32
    %c0_i32_1 = arith.constant 0 : i32
    return %c0_i32, %c0_i32_0 : i32, i32
  }
  func.func @transform_16(%arg0: i32) -> (i32, i32) {
    %c0_i32 = arith.constant 0 : i32
    %c0_i32_0 = arith.constant 0 : i32
    %c0_i32_1 = arith.constant 0 : i32
    return %c0_i32, %c0_i32_0 : i32, i32
  }
  func.func @transform_17(%arg0: i32) -> (i32, i32) {
    %c0_i32 = arith.constant 0 : i32
    %c0_i32_0 = arith.constant 0 : i32
    %c0_i32_1 = arith.constant 0 : i32
    return %c0_i32, %c0_i32_0 : i32, i32
  }
  func.func @transform_18(%arg0: i32) -> (i32, i32) {
    %c0_i32 = arith.constant 0 : i32
    %c0_i32_0 = arith.constant 0 : i32
    %c0_i32_1 = arith.constant 0 : i32
    return %c0_i32, %c0_i32_0 : i32, i32
  }
  func.func @transform_19(%arg0: i32) -> (i32, i32) {
    %c0_i32 = arith.constant 0 : i32
    %c0_i32_0 = arith.constant 0 : i32
    %c0_i32_1 = arith.constant 0 : i32
    return %c0_i32, %c0_i32_0 : i32, i32
  }
  func.func @transform_20(%arg0: i32) -> (i32, i32) {
    %c0_i32 = arith.constant 0 : i32
    %c0_i32_0 = arith.constant 0 : i32
    %c0_i32_1 = arith.constant 0 : i32
    return %c0_i32, %c0_i32_0 : i32, i32
  }
  func.func @transform_21(%arg0: i32) -> (i32, i32) {
    %c0_i32 = arith.constant 0 : i32
    %c0_i32_0 = arith.constant 0 : i32
    %c0_i32_1 = arith.constant 0 : i32
    return %c0_i32, %c0_i32_0 : i32, i32
  }
  func.func @transform_22(%arg0: i32) -> (i32, i32) {
    %c0_i32 = arith.constant 0 : i32
    %c0_i32_0 = arith.constant 0 : i32
    %c0_i32_1 = arith.constant 0 : i32
    return %c0_i32, %c0_i32_0 : i32, i32
  }
  func.func @transform_23(%arg0: i32) -> (i32, i32) {
    %c0_i32 = arith.constant 0 : i32
    %c0_i32_0 = arith.constant 0 : i32
    %c0_i32_1 = arith.constant 0 : i32
    return %c0_i32, %c0_i32_0 : i32, i32
  }
  func.func @transform_24(%arg0: i32) -> (i32, i32) {
    %c0_i32 = arith.constant 0 : i32
    %c0_i32_0 = arith.constant 0 : i32
    %c0_i32_1 = arith.constant 0 : i32
    return %c0_i32, %c0_i32_0 : i32, i32
  }
  func.func @transform_25(%arg0: i32) -> (i32, i32) {
    %c0_i32 = arith.constant 0 : i32
    %c0_i32_0 = arith.constant 0 : i32
    %c0_i32_1 = arith.constant 0 : i32
    return %c0_i32, %c0_i32_0 : i32, i32
  }
  func.func @transform_26(%arg0: i32) -> (i32, i32) {
    %c0_i32 = arith.constant 0 : i32
    %c0_i32_0 = arith.constant 0 : i32
    %c0_i32_1 = arith.constant 0 : i32
    return %c0_i32, %c0_i32_0 : i32, i32
  }
  func.func @transform_27(%arg0: i32) -> (i32, i32) {
    %c0_i32 = arith.constant 0 : i32
    %c0_i32_0 = arith.constant 0 : i32
    %c0_i32_1 = arith.constant 0 : i32
    return %c0_i32, %c0_i32_0 : i32, i32
  }
  func.func @transform_28(%arg0: i32) -> (i32, i32) {
    %c0_i32 = arith.constant 0 : i32
    %c0_i32_0 = arith.constant 0 : i32
    %c0_i32_1 = arith.constant 0 : i32
    return %c0_i32, %c0_i32_0 : i32, i32
  }
  func.func @transform_29(%arg0: i32) -> (i32, i32) {
    %c0_i32 = arith.constant 0 : i32
    %c0_i32_0 = arith.constant 0 : i32
    %c0_i32_1 = arith.constant 0 : i32
    return %c0_i32, %c0_i32_0 : i32, i32
  }
  func.func @transform_30(%arg0: i32) -> (i32, i32) {
    %c0_i32 = arith.constant 0 : i32
    %c0_i32_0 = arith.constant 0 : i32
    %c0_i32_1 = arith.constant 0 : i32
    return %c0_i32, %c0_i32_0 : i32, i32
  }
  func.func @transform_31(%arg0: i32) -> (i32, i32) {
    %c0_i32 = arith.constant 0 : i32
    %c0_i32_0 = arith.constant 0 : i32
    %c0_i32_1 = arith.constant 0 : i32
    return %c0_i32, %c0_i32_0 : i32, i32
  }
  func.func @transform_32(%arg0: i32) -> (i32, i32) {
    %c0_i32 = arith.constant 0 : i32
    %c0_i32_0 = arith.constant 0 : i32
    %c0_i32_1 = arith.constant 0 : i32
    return %c0_i32, %c0_i32_0 : i32, i32
  }
  func.func @transform_33(%arg0: i32) -> (i32, i32) {
    %c0_i32 = arith.constant 0 : i32
    %c0_i32_0 = arith.constant 0 : i32
    %c0_i32_1 = arith.constant 0 : i32
    return %c0_i32, %c0_i32_0 : i32, i32
  }
  func.func @transform_34(%arg0: i32) -> (i32, i32, i32) {
    %c0_i32 = arith.constant 0 : i32
    %c0_i32_0 = arith.constant 0 : i32
    %c0_i32_1 = arith.constant 0 : i32
    return %arg0, %c0_i32, %c0_i32_0 : i32, i32, i32
  }
}

</mosaic_0001>

<llo_original>
// kernel: encoder_decoder_forward.1
$region0: #{encoder_decoder_forward.1}
  #allocation0 [shape = 'u32[]', space=smem, size = 0x4, offset = 0x4, fixed_abs, tag = 'smem constant byte address 0x4 - core index']
  #allocation1 [shape = 'u32[144,128]{1,0:T(1,128)}', space=vmem, size = 0x12000, scoped, tag = 'internal scratch']
  #allocation2 [shape = 'bf16[288,256]{1,0:T(8,128)(2,1)}', space=vmem, size = 0x24000, scoped, tag = 'scratch operand']
  %s0 = inlined_call_operand.smem [shape: u32[35], index: -1, kind: input, shape index: {}]
  %s1 = sld [smem:[%s0]]
  %s2 = scalar_lea.smem %s0, 1
  %s3 = sld [smem:[%s2]]
  %s4 = scalar_lea.smem %s0, 2
  %s5 = sld [smem:[%s4]]
  %s6 = scalar_lea.smem %s0, 3
  %s7 = sld [smem:[%s6]]
  %s8 = scalar_lea.smem %s0, 4
  %s9 = sld [smem:[%s8]]
  %s10 = scalar_lea.smem %s0, 5
  %s11 = sld [smem:[%s10]]
  %s12 = scalar_lea.smem %s0, 6
  %s13 = sld [smem:[%s12]]
  %s14 = scalar_lea.smem %s0, 7
  %s15 = sld [smem:[%s14]]
  %s16 = scalar_lea.smem %s0, 8
  %s17 = sld [smem:[%s16]]
  %s18 = scalar_lea.smem %s0, 9
  %s19 = sld [smem:[%s18]]
  %s20 = scalar_lea.smem %s0, 10
  %s21 = sld [smem:[%s20]]
  %s22 = scalar_lea.smem %s0, 11
  %s23 = sld [smem:[%s22]]
  %s24 = scalar_lea.smem %s0, 12
  %s25 = sld [smem:[%s24]]
  %s26 = scalar_lea.smem %s0, 13
  %s27 = sld [smem:[%s26]]
  %s28 = scalar_lea.smem %s0, 14
  %s29 = sld [smem:[%s28]]
  %s30 = scalar_lea.smem %s0, 15
  %s31 = sld [smem:[%s30]]
  %s32 = scalar_lea.smem %s0, 16
  %s33 = sld [smem:[%s32]]
  %s34 = scalar_lea.smem %s0, 17
  %s35 = sld [smem:[%s34]]
  %s36 = scalar_lea.smem %s0, 18
  %s37 = sld [smem:[%s36]]
  %s38 = scalar_lea.smem %s0, 19
  %s39 = sld [smem:[%s38]]
  %s40 = scalar_lea.smem %s0, 20
  %s41 = sld [smem:[%s40]]
  %s42 = scalar_lea.smem %s0, 21
  %s43 = sld [smem:[%s42]]
  %s44 = scalar_lea.smem %s0, 22
  %s45 = sld [smem:[%s44]]
  %s46 = scalar_lea.smem %s0, 23
  %s47 = sld [smem:[%s46]]
  %s48 = scalar_lea.smem %s0, 24
  %s49 = sld [smem:[%s48]]
  %s50 = scalar_lea.smem %s0, 25
  %s51 = sld [smem:[%s50]]
  %s52 = scalar_lea.smem %s0, 26
  %s53 = sld [smem:[%s52]]
  %s54 = scalar_lea.smem %s0, 27
  %s55 = sld [smem:[%s54]]
  %s56 = scalar_lea.smem %s0, 28
  %s57 = sld [smem:[%s56]]
  %s58 = scalar_lea.smem %s0, 29
  %s59 = sld [smem:[%s58]]
  %s60 = scalar_lea.smem %s0, 30
  %s61 = sld [smem:[%s60]]
  %s62 = scalar_lea.smem %s0, 31
  %s63 = sld [smem:[%s62]]
  %s64 = scalar_lea.smem %s0, 32
  %s65 = sld [smem:[%s64]]
  %s66 = scalar_lea.smem %s0, 33
  %s67 = sld [smem:[%s66]]
  %s68 = scalar_lea.smem %s0, 34
  %s69 = sld [smem:[%s68]]
  %s70 = sld [smem:[#allocation0]]
  $region285: #{encoder_decoder_forward.1} parent=0
    _
  %s72 = ssub.s32 1, %s70
  %s73 = scalar_select 0, %s72, %s70
  $region1: #{encoder_decoder_forward.1} parent=0
    #allocation3 [shape = 'u8[1024]{0}', space=vmem, size = 0x400, scoped, tag = 'input window, operand 2, single buffered']
    #allocation4 [shape = 's32[2]{0}', space=sflag, size = 0x8, scoped, tag = 'scoped memory for encoder_decoder_forward.1']
    #allocation5 [shape = 'u8[1024]{0}', space=vmem, size = 0x400, scoped, tag = 'input window, operand 3, single buffered']
    #allocation6 [shape = 's32[1]{0}', space=sflag, size = 0x4, scoped, tag = 'scoped memory for encoder_decoder_forward.1']
    #allocation7 [shape = 'u8[61440]{0}', space=vmem, size = 0xf000, scoped, tag = 'input window, operand 4, single buffered']
    #allocation8 [shape = 'u8[14336]{0}', space=vmem, size = 0x3800, scoped, tag = 'input window, operand 5, single buffered']
    #allocation9 [shape = 's32[1]{0}', space=sflag, size = 0x4, scoped, tag = 'scoped memory for encoder_decoder_forward.1']
    #allocation10 [shape = 'u8[16384]{0}', space=vmem, size = 0x4000, scoped, tag = 'input window, operand 6, single buffered']
    #allocation11 [shape = 'u8[2048]{0}', space=vmem, size = 0x800, scoped, tag = 'input window, operand 8, single buffered']
    #allocation12 [shape = 's32[1]{0}', space=sflag, size = 0x4, scoped, tag = 'scoped memory for encoder_decoder_forward.1']
    #allocation13 [shape = 'u8[4096]{0}', space=vmem, size = 0x1000, scoped, tag = 'input window, operand 9, single buffered']
    #allocation14 [shape = 'u8[2048]{0}', space=vmem, size = 0x800, scoped, tag = 'input window, operand 10, single buffered']
    #allocation15 [shape = 's32[1]{0}', space=sflag, size = 0x4, scoped, tag = 'scoped memory for encoder_decoder_forward.1']
    #allocation16 [shape = 'u8[4096]{0}', space=vmem, size = 0x1000, scoped, tag = 'input window, operand 11, single buffered']
    #allocation17 [shape = 'u8[4096]{0}', space=vmem, size = 0x1000, scoped, tag = 'input window, operand 12, single buffered']
    #allocation18 [shape = 's32[1]{0}', space=sflag, size = 0x4, scoped, tag = 'scoped memory for encoder_decoder_forward.1']
    #allocation19 [shape = 'u8[8192]{0}', space=vmem, size = 0x2000, scoped, tag = 'input window, operand 14, single buffered']
    #allocation20 [shape = 'u8[8192]{0}', space=vmem, size = 0x2000, scoped, tag = 'input window, operand 15, single buffered']
    #allocation21 [shape = 's32[1]{0}', space=sflag, size = 0x4, scoped, tag = 'scoped memory for encoder_decoder_forward.1']
    #allocation22 [shape = 'u8[16384]{0}', space=vmem, size = 0x4000, scoped, tag = 'input window, operand 16, single buffered']
    #allocation23 [shape = 'u8[16384]{0}', space=vmem, size = 0x4000, scoped, tag = 'input window, operand 17, single buffered']
    #allocation24 [shape = 's32[1]{0}', space=sflag, size = 0x4, scoped, tag = 'scoped memory for encoder_decoder_forward.1']
    #allocation25 [shape = 'u8[16384]{0}', space=vmem, size = 0x4000, scoped, tag = 'input window, operand 19, single buffered']
    #allocation26 [shape = 'u8[16384]{0}', space=vmem, size = 0x4000, scoped, tag = 'input window, operand 20, single buffered']
    #allocation27 [shape = 's32[1]{0}', space=sflag, size = 0x4, scoped, tag = 'scoped memory for encoder_decoder_forward.1']
    #allocation28 [shape = 'u8[8192]{0}', space=vmem, size = 0x2000, scoped, tag = 'input window, operand 21, single buffered']
    #allocation29 [shape = 'u8[12288]{0}', space=vmem, size = 0x3000, scoped, tag = 'input window, operand 22, single buffered']
    #allocation30 [shape = 's32[1]{0}', space=sflag, size = 0x4, scoped, tag = 'scoped memory for encoder_decoder_forward.1']
    #allocation31 [shape = 'u8[8192]{0}', space=vmem, size = 0x2000, scoped, tag = 'input window, operand 23, single buffered']
    #allocation32 [shape = 'u8[8192]{0}', space=vmem, size = 0x2000, scoped, tag = 'input window, operand 24, single buffered']
    #allocation33 [shape = 's32[1]{0}', space=sflag, size = 0x4, scoped, tag = 'scoped memory for encoder_decoder_forward.1']
    #allocation34 [shape = 'u8[8192]{0}', space=vmem, size = 0x2000, scoped, tag = 'input window, operand 25, single buffered']
    #allocation35 [shape = 'u8[8192]{0}', space=vmem, size = 0x2000, scoped, tag = 'input window, operand 26, single buffered']
    #allocation36 [shape = 's32[1]{0}', space=sflag, size = 0x4, scoped, tag = 'scoped memory for encoder_decoder_forward.1']
    #allocation37 [shape = 'u8[4096]{0}', space=vmem, size = 0x1000, scoped, tag = 'input window, operand 27, single buffered']
    #allocation38 [shape = 'u8[4096]{0}', space=vmem, size = 0x1000, scoped, tag = 'input window, operand 28, single buffered']
    #allocation39 [shape = 's32[1]{0}', space=sflag, size = 0x4, scoped, tag = 'scoped memory for encoder_decoder_forward.1']
    #allocation40 [shape = 'u8[4096]{0}', space=vmem, size = 0x1000, scoped, tag = 'input window, operand 29, single buffered']
    #allocation41 [shape = 'u8[2048]{0}', space=vmem, size = 0x800, scoped, tag = 'input window, operand 30, single buffered']
    #allocation42 [shape = 's32[1]{0}', space=sflag, size = 0x4, scoped, tag = 'scoped memory for encoder_decoder_forward.1']
    #allocation43 [shape = 'u8[4096]{0}', space=vmem, size = 0x1000, scoped, tag = 'input window, operand 31, single buffered']
    #allocation44 [shape = 'u8[1024]{0}', space=vmem, size = 0x400, scoped, tag = 'input window, operand 32, single buffered']
    #allocation45 [shape = 's32[1]{0}', space=sflag, size = 0x4, scoped, tag = 'scoped memory for encoder_decoder_forward.1']
    #allocation46 [shape = 'u8[2048]{0}', space=vmem, size = 0x800, scoped, tag = 'input window, operand 33, single buffered']
    %74 = vsyncpa [#allocation4], 0
    %75 = vsyncpa [#allocation6], 0
    %76 = vsyncpa [#allocation9], 0
    %77 = vsyncpa [#allocation12], 0
    %78 = vsyncpa [#allocation15], 0
    %79 = vsyncpa [#allocation18], 0
    %80 = vsyncpa [#allocation21], 0
    %81 = vsyncpa [#allocation24], 0
    %82 = vsyncpa [#allocation27], 0
    %83 = vsyncpa [#allocation30], 0
    %84 = vsyncpa [#allocation33], 0
    %85 = vsyncpa [#allocation36], 0
    %86 = vsyncpa [#allocation39], 0
    %87 = vsyncpa [#allocation42], 0
    %88 = vsyncpa [#allocation45], 0
    loop: start=0, step=1, limit=4
    $region2: #{encoder_decoder_forward.1} parent=1 // loop_pre_header
      _
    $region3: #{encoder_decoder_forward.1} parent=1 // loop_header
      %s90 = sphi 0, %s94
      %p91 = scmp.ge.s32.totalorder %s90, 4
      %s100 = sphi 0, %s102
      %s103 = sphi 0, %s100
      %s104 = sphi 0, %s103
      %s120 = sphi 0, %s104
      %s124 = sphi 0, %s124
      %s126 = sphi 0, %s124
      %s127 = sphi 0, %s126
      %s141 = sphi 0, %s127
      %s145 = sphi 0, %s145
      %s147 = sphi 0, %s145
      %s148 = sphi 0, %s147
      %s162 = sphi 0, %s148
      %s166 = sphi 0, %s166
      %s168 = sphi 0, %s166
      %s169 = sphi 0, %s168
      %s183 = sphi 0, %s169
      %s187 = sphi 0, %s187
      %s189 = sphi 0, %s187
      %s190 = sphi 0, %s189
      %s204 = sphi 0, %s190
      %s208 = sphi 0, %s208
      %s210 = sphi 0, %s208
      %s211 = sphi 0, %s210
      %s225 = sphi 0, %s211
      %s229 = sphi 0, %s229
      %s231 = sphi 0, %s229
      %s232 = sphi 0, %s231
      %s246 = sphi 0, %s232
      %s250 = sphi 0, %s250
      %s252 = sphi 0, %s250
      %s253 = sphi 0, %s252
      %s267 = sphi 0, %s253
      %s271 = sphi 0, %s271
      %s273 = sphi 0, %s271
      %s274 = sphi 0, %s273
      %s288 = sphi 0, %s274
      %s292 = sphi 0, %s292
      %s294 = sphi 0, %s292
      %s295 = sphi 0, %s294
      %s309 = sphi 0, %s295
      %s313 = sphi 0, %s313
      %s315 = sphi 0, %s313
      %s316 = sphi 0, %s315
      %s330 = sphi 0, %s316
      %s334 = sphi 0, %s334
      %s336 = sphi 0, %s334
      %s337 = sphi 0, %s336
      %s351 = sphi 0, %s337
      %s355 = sphi 0, %s355
      %s357 = sphi 0, %s355
      %s358 = sphi 0, %s357
      %s372 = sphi 0, %s358
      %s376 = sphi 0, %s376
      %s378 = sphi 0, %s376
      %s379 = sphi 0, %s378
      %s393 = sphi 0, %s379
      %s397 = sphi 0, %s397
      %s399 = sphi 0, %s397
      %s400 = sphi 0, %s399
      %s414 = sphi 0, %s400
      %s418 = sphi 0, %s418
      %s420 = sphi 0, %s418
      %s421 = sphi 0, %s420
      %s435 = sphi 0, %s421
      %s439 = sphi 0, %s439
      %s441 = sphi 0, %s439
      %s442 = sphi 0, %s441
      %s456 = sphi 0, %s442
      %s460 = sphi 0, %s460
      %s462 = sphi 0, %s460
      %s463 = sphi 0, %s462
      %s477 = sphi 0, %s463
      %s481 = sphi 0, %s481
      %s483 = sphi 0, %s481
      %s484 = sphi 0, %s483
      %s498 = sphi 0, %s484
      %s502 = sphi 0, %s502
      %s504 = sphi 0, %s502
      %s505 = sphi 0, %s504
      %s519 = sphi 0, %s505
      %s523 = sphi 0, %s523
      %s525 = sphi 0, %s523
      %s526 = sphi 0, %s525
      %s540 = sphi 0, %s526
      %s544 = sphi 0, %s544
      %s546 = sphi 0, %s544
      %s547 = sphi 0, %s546
      %s561 = sphi 0, %s547
      %s565 = sphi 0, %s565
      %s567 = sphi 0, %s565
      %s568 = sphi 0, %s567
      %s582 = sphi 0, %s568
      %s586 = sphi 0, %s586
      %s588 = sphi 0, %s586
      %s589 = sphi 0, %s588
      %s603 = sphi 0, %s589
      %s607 = sphi 0, %s607
      %s609 = sphi 0, %s607
      %s610 = sphi 0, %s609
      %s624 = sphi 0, %s610
      %s628 = sphi 0, %s628
      %s630 = sphi 0, %s628
      %s631 = sphi 0, %s630
      %s645 = sphi 0, %s631
      %s649 = sphi 0, %s649
      %s651 = sphi 0, %s649
      %s652 = sphi 0, %s651
      %s666 = sphi 0, %s652
      %s670 = sphi 0, %s670
      %s672 = sphi 0, %s670
      %s673 = sphi 0, %s672
      %s687 = sphi 0, %s673
      %s691 = sphi 0, %s691
      %s693 = sphi 0, %s691
      %s694 = sphi 0, %s693
      %s708 = sphi 0, %s694
      %s712 = sphi 0, %s712
      %s714 = sphi 0, %s712
      %s715 = sphi 0, %s714
      %s729 = sphi 0, %s715
      %s733 = sphi 0, %s733
      %s735 = sphi 0, %s733
      %s736 = sphi 0, %s735
      %s750 = sphi 0, %s736
      %s754 = sphi 0, %s754
      %s756 = sphi 0, %s754
      %s757 = sphi 0, %s756
      %s771 = sphi 0, %s757
      %s775 = sphi 0, %s775
      %s777 = sphi 0, %s775
      %s778 = sphi 0, %s777
      %s792 = sphi 0, %s778
      %s796 = sphi 0, %s796
      %s798 = sphi 0, %s796
      %s799 = sphi 0, %s798
      %s813 = sphi 0, %s799
      %s819 = sphi 0, %s821
      %s822 = sphi 0, %s819
      %s823 = sphi 0, %s822
      %s839 = sphi 0, %s823
    $region4: #{encoder_decoder_forward.1} parent=1 // loop_header_branch
      %93 = sbr.rel (%p91) target = $region8
    $region5: #{encoder_decoder_forward.1} parent=1 // loop_body
      %s95 = ssub.s32 %s90, 1
      %s96 = ssub.s32 %s90, 2
      %s97 = sadd.s32 %s90, 1
      %s98 = ssub.s32 %s90, %s97
      %p99 = scmp.eq.s32.totalorder %s98, 0
      %s101 = sadd.s32 %s100, 1
      %s102 = scalar_select %p99, %s100, %s101
      %p105 = pneg %p99
      %p106 = scmp.eq.s32.totalorder %s90, 1
      %p107 = por %p105, %p106
      %p108 = scmp.ne.s32.totalorder %s100, %s103
      %p109 = scmp.eq.s32.totalorder %s90, 0
      %p110 = por %p108, %p109
      %p111 = scmp.ne.s32.totalorder %s100, %s103
      %p112 = scmp.eq.s32.totalorder %s95, 1
      %p113 = por %p111, %p112
      %p114 = scmp.ne.s32.totalorder %s103, %s104
      %p115 = scmp.eq.s32.totalorder %s95, 0
      %p116 = por %p114, %p115
      %p117 = scmp.ne.s32.totalorder %s103, %s104
      %p118 = scmp.eq.s32.totalorder %s96, 1
      %p119 = por %p117, %p118
      %p121 = scmp.ne.s32.totalorder %s104, %s120
      %p122 = scmp.eq.s32.totalorder %s96, 0
      %p123 = por %p121, %p122
      %s125 = sadd.s32 %s124, 1
      %p128 = scmp.eq.s32.totalorder %s90, 1
      %p129 = scmp.ne.s32.totalorder %s124, %s126
      %p130 = scmp.eq.s32.totalorder %s90, 0
      %p131 = por %p129, %p130
      %p132 = scmp.ne.s32.totalorder %s124, %s126
      %p133 = scmp.eq.s32.totalorder %s95, 1
      %p134 = por %p132, %p133
      %p135 = scmp.ne.s32.totalorder %s126, %s127
      %p136 = scmp.eq.s32.totalorder %s95, 0
      %p137 = por %p135, %p136
      %p138 = scmp.ne.s32.totalorder %s126, %s127
      %p139 = scmp.eq.s32.totalorder %s96, 1
      %p140 = por %p138, %p139
      %p142 = scmp.ne.s32.totalorder %s127, %s141
      %p143 = scmp.eq.s32.totalorder %s96, 0
      %p144 = por %p142, %p143
      %s146 = sadd.s32 %s145, 1
      %p149 = scmp.eq.s32.totalorder %s90, 1
      %p150 = scmp.ne.s32.totalorder %s145, %s147
      %p151 = scmp.eq.s32.totalorder %s90, 0
      %p152 = por %p150, %p151
      %p153 = scmp.ne.s32.totalorder %s145, %s147
      %p154 = scmp.eq.s32.totalorder %s95, 1
      %p155 = por %p153, %p154
      %p156 = scmp.ne.s32.totalorder %s147, %s148
      %p157 = scmp.eq.s32.totalorder %s95, 0
      %p158 = por %p156, %p157
      %p159 = scmp.ne.s32.totalorder %s147, %s148
      %p160 = scmp.eq.s32.totalorder %s96, 1
      %p161 = por %p159, %p160
      %p163 = scmp.ne.s32.totalorder %s148, %s162
      %p164 = scmp.eq.s32.totalorder %s96, 0
      %p165 = por %p163, %p164
      %s167 = sadd.s32 %s166, 1
      %p170 = scmp.eq.s32.totalorder %s90, 1
      %p171 = scmp.ne.s32.totalorder %s166, %s168
      %p172 = scmp.eq.s32.totalorder %s90, 0
      %p173 = por %p171, %p172
      %p174 = scmp.ne.s32.totalorder %s166, %s168
      %p175 = scmp.eq.s32.totalorder %s95, 1
      %p176 = por %p174, %p175
      %p177 = scmp.ne.s32.totalorder %s168, %s169
      %p178 = scmp.eq.s32.totalorder %s95, 0
      %p179 = por %p177, %p178
      %p180 = scmp.ne.s32.totalorder %s168, %s169
      %p181 = scmp.eq.s32.totalorder %s96, 1
      %p182 = por %p180, %p181
      %p184 = scmp.ne.s32.totalorder %s169, %s183
      %p185 = scmp.eq.s32.totalorder %s96, 0
      %p186 = por %p184, %p185
      %s188 = sadd.s32 %s187, 1
      %p191 = scmp.eq.s32.totalorder %s90, 1
      %p192 = scmp.ne.s32.totalorder %s187, %s189
      %p193 = scmp.eq.s32.totalorder %s90, 0
      %p194 = por %p192, %p193
      %p195 = scmp.ne.s32.totalorder %s187, %s189
      %p196 = scmp.eq.s32.totalorder %s95, 1
      %p197 = por %p195, %p196
      %p198 = scmp.ne.s32.totalorder %s189, %s190
      %p199 = scmp.eq.s32.totalorder %s95, 0
      %p200 = por %p198, %p199
      %p201 = scmp.ne.s32.totalorder %s189, %s190
      %p202 = scmp.eq.s32.totalorder %s96, 1
      %p203 = por %p201, %p202
      %p205 = scmp.ne.s32.totalorder %s190, %s204
      %p206 = scmp.eq.s32.totalorder %s96, 0
      %p207 = por %p205, %p206
      %s209 = sadd.s32 %s208, 1
      %p212 = scmp.eq.s32.totalorder %s90, 1
      %p213 = scmp.ne.s32.totalorder %s208, %s210
      %p214 = scmp.eq.s32.totalorder %s90, 0
      %p215 = por %p213, %p214
      %p216 = scmp.ne.s32.totalorder %s208, %s210
      %p217 = scmp.eq.s32.totalorder %s95, 1
      %p218 = por %p216, %p217
      %p219 = scmp.ne.s32.totalorder %s210, %s211
      %p220 = scmp.eq.s32.totalorder %s95, 0
      %p221 = por %p219, %p220
      %p222 = scmp.ne.s32.totalorder %s210, %s211
      %p223 = scmp.eq.s32.totalorder %s96, 1
      %p224 = por %p222, %p223
      %p226 = scmp.ne.s32.totalorder %s211, %s225
      %p227 = scmp.eq.s32.totalorder %s96, 0
      %p228 = por %p226, %p227
      %s230 = sadd.s32 %s229, 1
      %p233 = scmp.eq.s32.totalorder %s90, 1
      %p234 = scmp.ne.s32.totalorder %s229, %s231
      %p235 = scmp.eq.s32.totalorder %s90, 0
      %p236 = por %p234, %p235
      %p237 = scmp.ne.s32.totalorder %s229, %s231
      %p238 = scmp.eq.s32.totalorder %s95, 1
      %p239 = por %p237, %p238
      %p240 = scmp.ne.s32.totalorder %s231, %s232
      %p241 = scmp.eq.s32.totalorder %s95, 0
      %p242 = por %p240, %p241
      %p243 = scmp.ne.s32.totalorder %s231, %s232
      %p244 = scmp.eq.s32.totalorder %s96, 1
      %p245 = por %p243, %p244
      %p247 = scmp.ne.s32.totalorder %s232, %s246
      %p248 = scmp.eq.s32.totalorder %s96, 0
      %p249 = por %p247, %p248
      %s251 = sadd.s32 %s250, 1
      %p254 = scmp.eq.s32.totalorder %s90, 1
      %p255 = scmp.ne.s32.totalorder %s250, %s252
      %p256 = scmp.eq.s32.totalorder %s90, 0
      %p257 = por %p255, %p256
      %p258 = scmp.ne.s32.totalorder %s250, %s252
      %p259 = scmp.eq.s32.totalorder %s95, 1
      %p260 = por %p258, %p259
      %p261 = scmp.ne.s32.totalorder %s252, %s253
      %p262 = scmp.eq.s32.totalorder %s95, 0
      %p263 = por %p261, %p262
      %p264 = scmp.ne.s32.totalorder %s252, %s253
      %p265 = scmp.eq.s32.totalorder %s96, 1
      %p266 = por %p264, %p265
      %p268 = scmp.ne.s32.totalorder %s253, %s267
      %p269 = scmp.eq.s32.totalorder %s96, 0
      %p270 = por %p268, %p269
      %s272 = sadd.s32 %s271, 1
      %p275 = scmp.eq.s32.totalorder %s90, 1
      %p276 = scmp.ne.s32.totalorder %s271, %s273
      %p277 = scmp.eq.s32.totalorder %s90, 0
      %p278 = por %p276, %p277
      %p279 = scmp.ne.s32.totalorder %s271, %s273
      %p280 = scmp.eq.s32.totalorder %s95, 1
      %p281 = por %p279, %p280
      %p282 = scmp.ne.s32.totalorder %s273, %s274
      %p283 = scmp.eq.s32.totalorder %s95, 0
      %p284 = por %p282, %p283
      %p285 = scmp.ne.s32.totalorder %s273, %s274
      %p286 = scmp.eq.s32.totalorder %s96, 1
      %p287 = por %p285, %p286
      %p289 = scmp.ne.s32.totalorder %s274, %s288
      %p290 = scmp.eq.s32.totalorder %s96, 0
      %p291 = por %p289, %p290
      %s293 = sadd.s32 %s292, 1
      %p296 = scmp.eq.s32.totalorder %s90, 1
      %p297 = scmp.ne.s32.totalorder %s292, %s294
      %p298 = scmp.eq.s32.totalorder %s90, 0
      %p299 = por %p297, %p298
      %p300 = scmp.ne.s32.totalorder %s292, %s294
      %p301 = scmp.eq.s32.totalorder %s95, 1
      %p302 = por %p300, %p301
      %p303 = scmp.ne.s32.totalorder %s294, %s295
      %p304 = scmp.eq.s32.totalorder %s95, 0
      %p305 = por %p303, %p304
      %p306 = scmp.ne.s32.totalorder %s294, %s295
      %p307 = scmp.eq.s32.totalorder %s96, 1
      %p308 = por %p306, %p307
      %p310 = scmp.ne.s32.totalorder %s295, %s309
      %p311 = scmp.eq.s32.totalorder %s96, 0
      %p312 = por %p310, %p311
      %s314 = sadd.s32 %s313, 1
      %p317 = scmp.eq.s32.totalorder %s90, 1
      %p318 = scmp.ne.s32.totalorder %s313, %s315
      %p319 = scmp.eq.s32.totalorder %s90, 0
      %p320 = por %p318, %p319
      %p321 = scmp.ne.s32.totalorder %s313, %s315
      %p322 = scmp.eq.s32.totalorder %s95, 1
      %p323 = por %p321, %p322
      %p324 = scmp.ne.s32.totalorder %s315, %s316
      %p325 = scmp.eq.s32.totalorder %s95, 0
      %p326 = por %p324, %p325
      %p327 = scmp.ne.s32.totalorder %s315, %s316
      %p328 = scmp.eq.s32.totalorder %s96, 1
      %p329 = por %p327, %p328
      %p331 = scmp.ne.s32.totalorder %s316, %s330
      %p332 = scmp.eq.s32.totalorder %s96, 0
      %p333 = por %p331, %p332
      %s335 = sadd.s32 %s334, 1
      %p338 = scmp.eq.s32.totalorder %s90, 1
      %p339 = scmp.ne.s32.totalorder %s334, %s336
      %p340 = scmp.eq.s32.totalorder %s90, 0
      %p341 = por %p339, %p340
      %p342 = scmp.ne.s32.totalorder %s334, %s336
      %p343 = scmp.eq.s32.totalorder %s95, 1
      %p344 = por %p342, %p343
      %p345 = scmp.ne.s32.totalorder %s336, %s337
      %p346 = scmp.eq.s32.totalorder %s95, 0
      %p347 = por %p345, %p346
      %p348 = scmp.ne.s32.totalorder %s336, %s337
      %p349 = scmp.eq.s32.totalorder %s96, 1
      %p350 = por %p348, %p349
      %p352 = scmp.ne.s32.totalorder %s337, %s351
      %p353 = scmp.eq.s32.totalorder %s96, 0
      %p354 = por %p352, %p353
      %s356 = sadd.s32 %s355, 1
      %p359 = scmp.eq.s32.totalorder %s90, 1
      %p360 = scmp.ne.s32.totalorder %s355, %s357
      %p361 = scmp.eq.s32.totalorder %s90, 0
      %p362 = por %p360, %p361
      %p363 = scmp.ne.s32.totalorder %s355, %s357
      %p364 = scmp.eq.s32.totalorder %s95, 1
      %p365 = por %p363, %p364
      %p366 = scmp.ne.s32.totalorder %s357, %s358
      %p367 = scmp.eq.s32.totalorder %s95, 0
      %p368 = por %p366, %p367
      %p369 = scmp.ne.s32.totalorder %s357, %s358
      %p370 = scmp.eq.s32.totalorder %s96, 1
      %p371 = por %p369, %p370
      %p373 = scmp.ne.s32.totalorder %s358, %s372
      %p374 = scmp.eq.s32.totalorder %s96, 0
      %p375 = por %p373, %p374
      %s377 = sadd.s32 %s376, 1
      %p380 = scmp.eq.s32.totalorder %s90, 1
      %p381 = scmp.ne.s32.totalorder %s376, %s378
      %p382 = scmp.eq.s32.totalorder %s90, 0
      %p383 = por %p381, %p382
      %p384 = scmp.ne.s32.totalorder %s376, %s378
      %p385 = scmp.eq.s32.totalorder %s95, 1
      %p386 = por %p384, %p385
      %p387 = scmp.ne.s32.totalorder %s378, %s379
      %p388 = scmp.eq.s32.totalorder %s95, 0
      %p389 = por %p387, %p388
      %p390 = scmp.ne.s32.totalorder %s378, %s379
      %p391 = scmp.eq.s32.totalorder %s96, 1
      %p392 = por %p390, %p391
      %p394 = scmp.ne.s32.totalorder %s379, %s393
      %p395 = scmp.eq.s32.totalorder %s96, 0
      %p396 = por %p394, %p395
      %s398 = sadd.s32 %s397, 1
      %p401 = scmp.eq.s32.totalorder %s90, 1
      %p402 = scmp.ne.s32.totalorder %s397, %s399
      %p403 = scmp.eq.s32.totalorder %s90, 0
      %p404 = por %p402, %p403
      %p405 = scmp.ne.s32.totalorder %s397, %s399
      %p406 = scmp.eq.s32.totalorder %s95, 1
      %p407 = por %p405, %p406
      %p408 = scmp.ne.s32.totalorder %s399, %s400
      %p409 = scmp.eq.s32.totalorder %s95, 0
      %p410 = por %p408, %p409
      %p411 = scmp.ne.s32.totalorder %s399, %s400
      %p412 = scmp.eq.s32.totalorder %s96, 1
      %p413 = por %p411, %p412
      %p415 = scmp.ne.s32.totalorder %s400, %s414
      %p416 = scmp.eq.s32.totalorder %s96, 0
      %p417 = por %p415, %p416
      %s419 = sadd.s32 %s418, 1
      %p422 = scmp.eq.s32.totalorder %s90, 1
      %p423 = scmp.ne.s32.totalorder %s418, %s420
      %p424 = scmp.eq.s32.totalorder %s90, 0
      %p425 = por %p423, %p424
      %p426 = scmp.ne.s32.totalorder %s418, %s420
      %p427 = scmp.eq.s32.totalorder %s95, 1
      %p428 = por %p426, %p427
      %p429 = scmp.ne.s32.totalorder %s420, %s421
      %p430 = scmp.eq.s32.totalorder %s95, 0
      %p431 = por %p429, %p430
      %p432 = scmp.ne.s32.totalorder %s420, %s421
      %p433 = scmp.eq.s32.totalorder %s96, 1
      %p434 = por %p432, %p433
      %p436 = scmp.ne.s32.totalorder %s421, %s435
      %p437 = scmp.eq.s32.totalorder %s96, 0
      %p438 = por %p436, %p437
      %s440 = sadd.s32 %s439, 1
      %p443 = scmp.eq.s32.totalorder %s90, 1
      %p444 = scmp.ne.s32.totalorder %s439, %s441
      %p445 = scmp.eq.s32.totalorder %s90, 0
      %p446 = por %p444, %p445
      %p447 = scmp.ne.s32.totalorder %s439, %s441
      %p448 = scmp.eq.s32.totalorder %s95, 1
      %p449 = por %p447, %p448
      %p450 = scmp.ne.s32.totalorder %s441, %s442
      %p451 = scmp.eq.s32.totalorder %s95, 0
      %p452 = por %p450, %p451
      %p453 = scmp.ne.s32.totalorder %s441, %s442
      %p454 = scmp.eq.s32.totalorder %s96, 1
      %p455 = por %p453, %p454
      %p457 = scmp.ne.s32.totalorder %s442, %s456
      %p458 = scmp.eq.s32.totalorder %s96, 0
      %p459 = por %p457, %p458
      %s461 = sadd.s32 %s460, 1
      %p464 = scmp.eq.s32.totalorder %s90, 1
      %p465 = scmp.ne.s32.totalorder %s460, %s462
      %p466 = scmp.eq.s32.totalorder %s90, 0
      %p467 = por %p465, %p466
      %p468 = scmp.ne.s32.totalorder %s460, %s462
      %p469 = scmp.eq.s32.totalorder %s95, 1
      %p470 = por %p468, %p469
      %p471 = scmp.ne.s32.totalorder %s462, %s463
      %p472 = scmp.eq.s32.totalorder %s95, 0
      %p473 = por %p471, %p472
      %p474 = scmp.ne.s32.totalorder %s462, %s463
      %p475 = scmp.eq.s32.totalorder %s96, 1
      %p476 = por %p474, %p475
      %p478 = scmp.ne.s32.totalorder %s463, %s477
      %p479 = scmp.eq.s32.totalorder %s96, 0
      %p480 = por %p478, %p479
      %s482 = sadd.s32 %s481, 1
      %p485 = scmp.eq.s32.totalorder %s90, 1
      %p486 = scmp.ne.s32.totalorder %s481, %s483
      %p487 = scmp.eq.s32.totalorder %s90, 0
      %p488 = por %p486, %p487
      %p489 = scmp.ne.s32.totalorder %s481, %s483
      %p490 = scmp.eq.s32.totalorder %s95, 1
      %p491 = por %p489, %p490
      %p492 = scmp.ne.s32.totalorder %s483, %s484
      %p493 = scmp.eq.s32.totalorder %s95, 0
      %p494 = por %p492, %p493
      %p495 = scmp.ne.s32.totalorder %s483, %s484
      %p496 = scmp.eq.s32.totalorder %s96, 1
      %p497 = por %p495, %p496
      %p499 = scmp.ne.s32.totalorder %s484, %s498
      %p500 = scmp.eq.s32.totalorder %s96, 0
      %p501 = por %p499, %p500
      %s503 = sadd.s32 %s502, 1
      %p506 = scmp.eq.s32.totalorder %s90, 1
      %p507 = scmp.ne.s32.totalorder %s502, %s504
      %p508 = scmp.eq.s32.totalorder %s90, 0
      %p509 = por %p507, %p508
      %p510 = scmp.ne.s32.totalorder %s502, %s504
      %p511 = scmp.eq.s32.totalorder %s95, 1
      %p512 = por %p510, %p511
      %p513 = scmp.ne.s32.totalorder %s504, %s505
      %p514 = scmp.eq.s32.totalorder %s95, 0
      %p515 = por %p513, %p514
      %p516 = scmp.ne.s32.totalorder %s504, %s505
      %p517 = scmp.eq.s32.totalorder %s96, 1
      %p518 = por %p516, %p517
      %p520 = scmp.ne.s32.totalorder %s505, %s519
      %p521 = scmp.eq.s32.totalorder %s96, 0
      %p522 = por %p520, %p521
      %s524 = sadd.s32 %s523, 1
      %p527 = scmp.eq.s32.totalorder %s90, 1
      %p528 = scmp.ne.s32.totalorder %s523, %s525
      %p529 = scmp.eq.s32.totalorder %s90, 0
      %p530 = por %p528, %p529
      %p531 = scmp.ne.s32.totalorder %s523, %s525
      %p532 = scmp.eq.s32.totalorder %s95, 1
      %p533 = por %p531, %p532
      %p534 = scmp.ne.s32.totalorder %s525, %s526
      %p535 = scmp.eq.s32.totalorder %s95, 0
      %p536 = por %p534, %p535
      %p537 = scmp.ne.s32.totalorder %s525, %s526
      %p538 = scmp.eq.s32.totalorder %s96, 1
      %p539 = por %p537, %p538
      %p541 = scmp.ne.s32.totalorder %s526, %s540
      %p542 = scmp.eq.s32.totalorder %s96, 0
      %p543 = por %p541, %p542
      %s545 = sadd.s32 %s544, 1
      %p548 = scmp.eq.s32.totalorder %s90, 1
      %p549 = scmp.ne.s32.totalorder %s544, %s546
      %p550 = scmp.eq.s32.totalorder %s90, 0
      %p551 = por %p549, %p550
      %p552 = scmp.ne.s32.totalorder %s544, %s546
      %p553 = scmp.eq.s32.totalorder %s95, 1
      %p554 = por %p552, %p553
      %p555 = scmp.ne.s32.totalorder %s546, %s547
      %p556 = scmp.eq.s32.totalorder %s95, 0
      %p557 = por %p555, %p556
      %p558 = scmp.ne.s32.totalorder %s546, %s547
      %p559 = scmp.eq.s32.totalorder %s96, 1
      %p560 = por %p558, %p559
      %p562 = scmp.ne.s32.totalorder %s547, %s561
      %p563 = scmp.eq.s32.totalorder %s96, 0
      %p564 = por %p562, %p563
      %s566 = sadd.s32 %s565, 1
      %p569 = scmp.eq.s32.totalorder %s90, 1
      %p570 = scmp.ne.s32.totalorder %s565, %s567
      %p571 = scmp.eq.s32.totalorder %s90, 0
      %p572 = por %p570, %p571
      %p573 = scmp.ne.s32.totalorder %s565, %s567
      %p574 = scmp.eq.s32.totalorder %s95, 1
      %p575 = por %p573, %p574
      %p576 = scmp.ne.s32.totalorder %s567, %s568
      %p577 = scmp.eq.s32.totalorder %s95, 0
      %p578 = por %p576, %p577
      %p579 = scmp.ne.s32.totalorder %s567, %s568
      %p580 = scmp.eq.s32.totalorder %s96, 1
      %p581 = por %p579, %p580
      %p583 = scmp.ne.s32.totalorder %s568, %s582
      %p584 = scmp.eq.s32.totalorder %s96, 0
      %p585 = por %p583, %p584
      %s587 = sadd.s32 %s586, 1
      %p590 = scmp.eq.s32.totalorder %s90, 1
      %p591 = scmp.ne.s32.totalorder %s586, %s588
      %p592 = scmp.eq.s32.totalorder %s90, 0
      %p593 = por %p591, %p592
      %p594 = scmp.ne.s32.totalorder %s586, %s588
      %p595 = scmp.eq.s32.totalorder %s95, 1
      %p596 = por %p594, %p595
      %p597 = scmp.ne.s32.totalorder %s588, %s589
      %p598 = scmp.eq.s32.totalorder %s95, 0
      %p599 = por %p597, %p598
      %p600 = scmp.ne.s32.totalorder %s588, %s589
      %p601 = scmp.eq.s32.totalorder %s96, 1
      %p602 = por %p600, %p601
      %p604 = scmp.ne.s32.totalorder %s589, %s603
      %p605 = scmp.eq.s32.totalorder %s96, 0
      %p606 = por %p604, %p605
      %s608 = sadd.s32 %s607, 1
      %p611 = scmp.eq.s32.totalorder %s90, 1
      %p612 = scmp.ne.s32.totalorder %s607, %s609
      %p613 = scmp.eq.s32.totalorder %s90, 0
      %p614 = por %p612, %p613
      %p615 = scmp.ne.s32.totalorder %s607, %s609
      %p616 = scmp.eq.s32.totalorder %s95, 1
      %p617 = por %p615, %p616
      %p618 = scmp.ne.s32.totalorder %s609, %s610
      %p619 = scmp.eq.s32.totalorder %s95, 0
      %p620 = por %p618, %p619
      %p621 = scmp.ne.s32.totalorder %s609, %s610
      %p622 = scmp.eq.s32.totalorder %s96, 1
      %p623 = por %p621, %p622
      %p625 = scmp.ne.s32.totalorder %s610, %s624
      %p626 = scmp.eq.s32.totalorder %s96, 0
      %p627 = por %p625, %p626
      %s629 = sadd.s32 %s628, 1
      %p632 = scmp.eq.s32.totalorder %s90, 1
      %p633 = scmp.ne.s32.totalorder %s628, %s630
      %p634 = scmp.eq.s32.totalorder %s90, 0
      %p635 = por %p633, %p634
      %p636 = scmp.ne.s32.totalorder %s628, %s630
      %p637 = scmp.eq.s32.totalorder %s95, 1
      %p638 = por %p636, %p637
      %p639 = scmp.ne.s32.totalorder %s630, %s631
      %p640 = scmp.eq.s32.totalorder %s95, 0
      %p641 = por %p639, %p640
      %p642 = scmp.ne.s32.totalorder %s630, %s631
      %p643 = scmp.eq.s32.totalorder %s96, 1
      %p644 = por %p642, %p643
      %p646 = scmp.ne.s32.totalorder %s631, %s645
      %p647 = scmp.eq.s32.totalorder %s96, 0
      %p648 = por %p646, %p647
      %s650 = sadd.s32 %s649, 1
      %p653 = scmp.eq.s32.totalorder %s90, 1
      %p654 = scmp.ne.s32.totalorder %s649, %s651
      %p655 = scmp.eq.s32.totalorder %s90, 0
      %p656 = por %p654, %p655
      %p657 = scmp.ne.s32.totalorder %s649, %s651
      %p658 = scmp.eq.s32.totalorder %s95, 1
      %p659 = por %p657, %p658
      %p660 = scmp.ne.s32.totalorder %s651, %s652
      %p661 = scmp.eq.s32.totalorder %s95, 0
      %p662 = por %p660, %p661
      %p663 = scmp.ne.s32.totalorder %s651, %s652
      %p664 = scmp.eq.s32.totalorder %s96, 1
      %p665 = por %p663, %p664
      %p667 = scmp.ne.s32.totalorder %s652, %s666
      %p668 = scmp.eq.s32.totalorder %s96, 0
      %p669 = por %p667, %p668
      %s671 = sadd.s32 %s670, 1
      %p674 = scmp.eq.s32.totalorder %s90, 1
      %p675 = scmp.ne.s32.totalorder %s670, %s672
      %p676 = scmp.eq.s32.totalorder %s90, 0
      %p677 = por %p675, %p676
      %p678 = scmp.ne.s32.totalorder %s670, %s672
      %p679 = scmp.eq.s32.totalorder %s95, 1
      %p680 = por %p678, %p679
      %p681 = scmp.ne.s32.totalorder %s672, %s673
      %p682 = scmp.eq.s32.totalorder %s95, 0
      %p683 = por %p681, %p682
      %p684 = scmp.ne.s32.totalorder %s672, %s673
      %p685 = scmp.eq.s32.totalorder %s96, 1
      %p686 = por %p684, %p685
      %p688 = scmp.ne.s32.totalorder %s673, %s687
      %p689 = scmp.eq.s32.totalorder %s96, 0
      %p690 = por %p688, %p689
      %s692 = sadd.s32 %s691, 1
      %p695 = scmp.eq.s32.totalorder %s90, 1
      %p696 = scmp.ne.s32.totalorder %s691, %s693
      %p697 = scmp.eq.s32.totalorder %s90, 0
      %p698 = por %p696, %p697
      %p699 = scmp.ne.s32.totalorder %s691, %s693
      %p700 = scmp.eq.s32.totalorder %s95, 1
      %p701 = por %p699, %p700
      %p702 = scmp.ne.s32.totalorder %s693, %s694
      %p703 = scmp.eq.s32.totalorder %s95, 0
      %p704 = por %p702, %p703
      %p705 = scmp.ne.s32.totalorder %s693, %s694
      %p706 = scmp.eq.s32.totalorder %s96, 1
      %p707 = por %p705, %p706
      %p709 = scmp.ne.s32.totalorder %s694, %s708
      %p710 = scmp.eq.s32.totalorder %s96, 0
      %p711 = por %p709, %p710
      %s713 = sadd.s32 %s712, 1
      %p716 = scmp.eq.s32.totalorder %s90, 1
      %p717 = scmp.ne.s32.totalorder %s712, %s714
      %p718 = scmp.eq.s32.totalorder %s90, 0
      %p719 = por %p717, %p718
      %p720 = scmp.ne.s32.totalorder %s712, %s714
      %p721 = scmp.eq.s32.totalorder %s95, 1
      %p722 = por %p720, %p721
      %p723 = scmp.ne.s32.totalorder %s714, %s715
      %p724 = scmp.eq.s32.totalorder %s95, 0
      %p725 = por %p723, %p724
      %p726 = scmp.ne.s32.totalorder %s714, %s715
      %p727 = scmp.eq.s32.totalorder %s96, 1
      %p728 = por %p726, %p727
      %p730 = scmp.ne.s32.totalorder %s715, %s729
      %p731 = scmp.eq.s32.totalorder %s96, 0
      %p732 = por %p730, %p731
      %s734 = sadd.s32 %s733, 1
      %p737 = scmp.eq.s32.totalorder %s90, 1
      %p738 = scmp.ne.s32.totalorder %s733, %s735
      %p739 = scmp.eq.s32.totalorder %s90, 0
      %p740 = por %p738, %p739
      %p741 = scmp.ne.s32.totalorder %s733, %s735
      %p742 = scmp.eq.s32.totalorder %s95, 1
      %p743 = por %p741, %p742
      %p744 = scmp.ne.s32.totalorder %s735, %s736
      %p745 = scmp.eq.s32.totalorder %s95, 0
      %p746 = por %p744, %p745
      %p747 = scmp.ne.s32.totalorder %s735, %s736
      %p748 = scmp.eq.s32.totalorder %s96, 1
      %p749 = por %p747, %p748
      %p751 = scmp.ne.s32.totalorder %s736, %s750
      %p752 = scmp.eq.s32.totalorder %s96, 0
      %p753 = por %p751, %p752
      %s755 = sadd.s32 %s754, 1
      %p758 = scmp.eq.s32.totalorder %s90, 1
      %p759 = scmp.ne.s32.totalorder %s754, %s756
      %p760 = scmp.eq.s32.totalorder %s90, 0
      %p761 = por %p759, %p760
      %p762 = scmp.ne.s32.totalorder %s754, %s756
      %p763 = scmp.eq.s32.totalorder %s95, 1
      %p764 = por %p762, %p763
      %p765 = scmp.ne.s32.totalorder %s756, %s757
      %p766 = scmp.eq.s32.totalorder %s95, 0
      %p767 = por %p765, %p766
      %p768 = scmp.ne.s32.totalorder %s756, %s757
      %p769 = scmp.eq.s32.totalorder %s96, 1
      %p770 = por %p768, %p769
      %p772 = scmp.ne.s32.totalorder %s757, %s771
      %p773 = scmp.eq.s32.totalorder %s96, 0
      %p774 = por %p772, %p773
      %s776 = sadd.s32 %s775, 1
      %p779 = scmp.eq.s32.totalorder %s90, 1
      %p780 = scmp.ne.s32.totalorder %s775, %s777
      %p781 = scmp.eq.s32.totalorder %s90, 0
      %p782 = por %p780, %p781
      %p783 = scmp.ne.s32.totalorder %s775, %s777
      %p784 = scmp.eq.s32.totalorder %s95, 1
      %p785 = por %p783, %p784
      %p786 = scmp.ne.s32.totalorder %s777, %s778
      %p787 = scmp.eq.s32.totalorder %s95, 0
      %p788 = por %p786, %p787
      %p789 = scmp.ne.s32.totalorder %s777, %s778
      %p790 = scmp.eq.s32.totalorder %s96, 1
      %p791 = por %p789, %p790
      %p793 = scmp.ne.s32.totalorder %s778, %s792
      %p794 = scmp.eq.s32.totalorder %s96, 0
      %p795 = por %p793, %p794
      %s797 = sadd.s32 %s796, 1
      %p800 = scmp.eq.s32.totalorder %s90, 1
      %p801 = scmp.ne.s32.totalorder %s796, %s798
      %p802 = scmp.eq.s32.totalorder %s90, 0
      %p803 = por %p801, %p802
      %p804 = scmp.ne.s32.totalorder %s796, %s798
      %p805 = scmp.eq.s32.totalorder %s95, 1
      %p806 = por %p804, %p805
      %p807 = scmp.ne.s32.totalorder %s798, %s799
      %p808 = scmp.eq.s32.totalorder %s95, 0
      %p809 = por %p807, %p808
      %p810 = scmp.ne.s32.totalorder %s798, %s799
      %p811 = scmp.eq.s32.totalorder %s96, 1
      %p812 = por %p810, %p811
      %p814 = scmp.ne.s32.totalorder %s799, %s813
      %p815 = scmp.eq.s32.totalorder %s96, 0
      %p816 = por %p814, %p815
      %s817 = ssub.s32 %s90, %s97
      %p818 = scmp.eq.s32.totalorder %s817, 0
      %s820 = sadd.s32 %s819, 1
      %s821 = scalar_select %p818, %s819, %s820
      %p824 = pneg %p818
      %p825 = scmp.eq.s32.totalorder %s90, 1
      %p826 = por %p824, %p825
      %p827 = scmp.ne.s32.totalorder %s819, %s822
      %p828 = scmp.eq.s32.totalorder %s90, 0
      %p829 = por %p827, %p828
      %p830 = scmp.ne.s32.totalorder %s819, %s822
      %p831 = scmp.eq.s32.totalorder %s95, 1
      %p832 = por %p830, %p831
      %p833 = scmp.ne.s32.totalorder %s822, %s823
      %p834 = scmp.eq.s32.totalorder %s95, 0
      %p835 = por %p833, %p834
      %p836 = scmp.ne.s32.totalorder %s822, %s823
      %p837 = scmp.eq.s32.totalorder %s96, 1
      %p838 = por %p836, %p837
      %p840 = scmp.ne.s32.totalorder %s823, %s839
      %p841 = scmp.eq.s32.totalorder %s96, 0
      %p842 = por %p840, %p841
      %p843 = scmp.le.s32.totalorder 1, %s90
      %p844 = scmp.lt.s32.totalorder %s90, 3
      %p845 = pnand %p843, %p844
      %p846 = pneg %p845
      // Predicated region
      $region9: #{encoder_decoder_forward.1} parent=5 // pred_check
        _
      $region10: #{encoder_decoder_forward.1} parent=5 // pred_check_branch
        %848 = sbr.rel (%p845) target = $region12
      $region11: #{encoder_decoder_forward.1} parent=5 // pred_region
        %s849 = ssub.s32 %s90, 1
        // Predicated region
        $region13: #{encoder_decoder_forward.1} parent=11 // pred_check
          %p850 = pneg %p137
        $region14: #{encoder_decoder_forward.1} parent=11 // pred_check_branch
          %852 = sbr.rel (%p850) target = $region16
        $region15: #{encoder_decoder_forward.1} parent=11 // pred_region
          _
        $region16: #{encoder_decoder_forward.1} parent=11 // pred_fallthru
          _
        // Predicated region
        $region17: #{encoder_decoder_forward.1} parent=11 // pred_check
          %p853 = pneg %p158
        $region18: #{encoder_decoder_forward.1} parent=11 // pred_check_branch
          %855 = sbr.rel (%p853) target = $region20
        $region19: #{encoder_decoder_forward.1} parent=11 // pred_region
          %s857 = ssub.s32 32, 32
          %858 = vsyncadd [#allocation4], %s857
          %s860 = sshll.u32 [#allocation3], 4
          %s861 = int_to_ptr.vmem [resolvable:$true] %s860
          %863 = dma.hbm_to_vmem [thread:$0]  %s5, 32, %s861, [#allocation4]
        $region20: #{encoder_decoder_forward.1} parent=11 // pred_fallthru
          _
        // Predicated region
        $region21: #{encoder_decoder_forward.1} parent=11 // pred_check
          %p864 = pneg %p179
        $region22: #{encoder_decoder_forward.1} parent=11 // pred_check_branch
          %866 = sbr.rel (%p864) target = $region24
        $region23: #{encoder_decoder_forward.1} parent=11 // pred_region
          %s868 = ssub.s32 32, 32
          %869 = vsyncadd [#allocation6], %s868
          %s871 = sshll.u32 [#allocation5], 4
          %s872 = int_to_ptr.vmem [resolvable:$true] %s871
          %874 = dma.hbm_to_vmem [thread:$0]  %s7, 32, %s872, [#allocation6]
        $region24: #{encoder_decoder_forward.1} parent=11 // pred_fallthru
          _
        // Predicated region
        $region25: #{encoder_decoder_forward.1} parent=11 // pred_check
          %p875 = pneg %p200
        $region26: #{encoder_decoder_forward.1} parent=11 // pred_check_branch
          %877 = sbr.rel (%p875) target = $region28
        $region27: #{encoder_decoder_forward.1} parent=11 // pred_region
          %s879 = ssub.s32 1920, 1920
          %880 = vsyncadd [#allocation6], %s879
          %s881 = sshll.u32 [#allocation7], 4
          %s882 = int_to_ptr.vmem [resolvable:$true] %s881
          %887 = dma.hbm_to_vmem [thread:$0]  %s9, 1920, %s882, [#allocation6], 64, 64, 4
        $region28: #{encoder_decoder_forward.1} parent=11 // pred_fallthru
          _
        // Predicated region
        $region29: #{encoder_decoder_forward.1} parent=11 // pred_check
          %p888 = pneg %p221
        $region30: #{encoder_decoder_forward.1} parent=11 // pred_check_branch
          %890 = sbr.rel (%p888) target = $region32
        $region31: #{encoder_decoder_forward.1} parent=11 // pred_region
          %s892 = ssub.s32 448, 448
          %893 = vsyncadd [#allocation9], %s892
          %s894 = sshll.u32 [#allocation8], 4
          %s895 = int_to_ptr.vmem [resolvable:$true] %s894
          %900 = dma.hbm_to_vmem [thread:$0]  %s11, 448, %s895, [#allocation9], 64, 64, 4
        $region32: #{encoder_decoder_forward.1} parent=11 // pred_fallthru
          _
        // Predicated region
        $region33: #{encoder_decoder_forward.1} parent=11 // pred_check
          %p901 = pneg %p242
        $region34: #{encoder_decoder_forward.1} parent=11 // pred_check_branch
          %903 = sbr.rel (%p901) target = $region36
        $region35: #{encoder_decoder_forward.1} parent=11 // pred_region
          %s905 = ssub.s32 512, 512
          %906 = vsyncadd [#allocation9], %s905
          %s907 = sshll.u32 [#allocation10], 4
          %s908 = int_to_ptr.vmem [resolvable:$true] %s907
          %913 = dma.hbm_to_vmem [thread:$0]  %s13, 512, %s908, [#allocation9], 64, 64, 4
        $region36: #{encoder_decoder_forward.1} parent=11 // pred_fallthru
          _
        // Predicated region
        $region37: #{encoder_decoder_forward.1} parent=11 // pred_check
          %p914 = pneg %p263
        $region38: #{encoder_decoder_forward.1} parent=11 // pred_check_branch
          %916 = sbr.rel (%p914) target = $region40
        $region39: #{encoder_decoder_forward.1} parent=11 // pred_region
          _
        $region40: #{encoder_decoder_forward.1} parent=11 // pred_fallthru
          _
        // Predicated region
        $region41: #{encoder_decoder_forward.1} parent=11 // pred_check
          %p917 = pneg %p284
        $region42: #{encoder_decoder_forward.1} parent=11 // pred_check_branch
          %919 = sbr.rel (%p917) target = $region44
        $region43: #{encoder_decoder_forward.1} parent=11 // pred_region
          %s921 = ssub.s32 64, 64
          %922 = vsyncadd [#allocation12], %s921
          %s924 = sshll.u32 [#allocation11], 4
          %s925 = int_to_ptr.vmem [resolvable:$true] %s924
          %927 = dma.hbm_to_vmem [thread:$0]  %s17, 64, %s925, [#allocation12]
        $region44: #{encoder_decoder_forward.1} parent=11 // pred_fallthru
          _
        // Predicated region
        $region45: #{encoder_decoder_forward.1} parent=11 // pred_check
          %p928 = pneg %p305
        $region46: #{encoder_decoder_forward.1} parent=11 // pred_check_branch
          %930 = sbr.rel (%p928) target = $region48
        $region47: #{encoder_decoder_forward.1} parent=11 // pred_region
          %s932 = ssub.s32 128, 128
          %933 = vsyncadd [#allocation12], %s932
          %s935 = sshll.u32 [#allocation13], 4
          %s936 = int_to_ptr.vmem [resolvable:$true] %s935
          %938 = dma.hbm_to_vmem [thread:$0]  %s19, 128, %s936, [#allocation12]
        $region48: #{encoder_decoder_forward.1} parent=11 // pred_fallthru
          _
        // Predicated region
        $region49: #{encoder_decoder_forward.1} parent=11 // pred_check
          %p939 = pneg %p326
        $region50: #{encoder_decoder_forward.1} parent=11 // pred_check_branch
          %941 = sbr.rel (%p939) target = $region52
        $region51: #{encoder_decoder_forward.1} parent=11 // pred_region
          %s943 = ssub.s32 64, 64
          %944 = vsyncadd [#allocation15], %s943
          %s946 = sshll.u32 [#allocation14], 4
          %s947 = int_to_ptr.vmem [resolvable:$true] %s946
          %949 = dma.hbm_to_vmem [thread:$0]  %s21, 64, %s947, [#allocation15]
        $region52: #{encoder_decoder_forward.1} parent=11 // pred_fallthru
          _
        // Predicated region
        $region53: #{encoder_decoder_forward.1} parent=11 // pred_check
          %p950 = pneg %p347
        $region54: #{encoder_decoder_forward.1} parent=11 // pred_check_branch
          %952 = sbr.rel (%p950) target = $region56
        $region55: #{encoder_decoder_forward.1} parent=11 // pred_region
          %s954 = ssub.s32 128, 128
          %955 = vsyncadd [#allocation15], %s954
          %s957 = sshll.u32 [#allocation16], 4
          %s958 = int_to_ptr.vmem [resolvable:$true] %s957
          %960 = dma.hbm_to_vmem [thread:$0]  %s23, 128, %s958, [#allocation15]
        $region56: #{encoder_decoder_forward.1} parent=11 // pred_fallthru
          _
        // Predicated region
        $region57: #{encoder_decoder_forward.1} parent=11 // pred_check
          %p961 = pneg %p368
        $region58: #{encoder_decoder_forward.1} parent=11 // pred_check_branch
          %963 = sbr.rel (%p961) target = $region60
        $region59: #{encoder_decoder_forward.1} parent=11 // pred_region
          %s965 = ssub.s32 128, 128
          %966 = vsyncadd [#allocation18], %s965
          %s967 = sshll.u32 [#allocation17], 4
          %s968 = int_to_ptr.vmem [resolvable:$true] %s967
          %973 = dma.hbm_to_vmem [thread:$0]  %s25, 128, %s968, [#allocation18], 64, 64, 4
        $region60: #{encoder_decoder_forward.1} parent=11 // pred_fallthru
          _
        // Predicated region
        $region61: #{encoder_decoder_forward.1} parent=11 // pred_check
          %p974 = pneg %p389
        $region62: #{encoder_decoder_forward.1} parent=11 // pred_check_branch
          %976 = sbr.rel (%p974) target = $region64
        $region63: #{encoder_decoder_forward.1} parent=11 // pred_region
          _
        $region64: #{encoder_decoder_forward.1} parent=11 // pred_fallthru
          _
        // Predicated region
        $region65: #{encoder_decoder_forward.1} parent=11 // pred_check
          %p977 = pneg %p410
        $region66: #{encoder_decoder_forward.1} parent=11 // pred_check_branch
          %979 = sbr.rel (%p977) target = $region68
        $region67: #{encoder_decoder_forward.1} parent=11 // pred_region
          %s981 = ssub.s32 256, 256
          %982 = vsyncadd [#allocation18], %s981
          %s983 = sshll.u32 [#allocation19], 4
          %s984 = int_to_ptr.vmem [resolvable:$true] %s983
          %989 = dma.hbm_to_vmem [thread:$0]  %s29, 256, %s984, [#allocation18], 128, 128, 8
        $region68: #{encoder_decoder_forward.1} parent=11 // pred_fallthru
          _
        // Predicated region
        $region69: #{encoder_decoder_forward.1} parent=11 // pred_check
          %p990 = pneg %p431
        $region70: #{encoder_decoder_forward.1} parent=11 // pred_check_branch
          %992 = sbr.rel (%p990) target = $region72
        $region71: #{encoder_decoder_forward.1} parent=11 // pred_region
          %s994 = ssub.s32 256, 256
          %995 = vsyncadd [#allocation21], %s994
          %s996 = sshll.u32 [#allocation20], 4
          %s997 = int_to_ptr.vmem [resolvable:$true] %s996
          %1002 = dma.hbm_to_vmem [thread:$0]  %s31, 256, %s997, [#allocation21], 128, 128, 8
        $region72: #{encoder_decoder_forward.1} parent=11 // pred_fallthru
          _
        // Predicated region
        $region73: #{encoder_decoder_forward.1} parent=11 // pred_check
          %p1003 = pneg %p452
        $region74: #{encoder_decoder_forward.1} parent=11 // pred_check_branch
          %1005 = sbr.rel (%p1003) target = $region76
        $region75: #{encoder_decoder_forward.1} parent=11 // pred_region
          %s1007 = ssub.s32 512, 512
          %1008 = vsyncadd [#allocation21], %s1007
          %s1009 = sshll.u32 [#allocation22], 4
          %s1010 = int_to_ptr.vmem [resolvable:$true] %s1009
          %1015 = dma.hbm_to_vmem [thread:$0]  %s33, 512, %s1010, [#allocation21], 128, 128, 8
        $region76: #{encoder_decoder_forward.1} parent=11 // pred_fallthru
          _
        // Predicated region
        $region77: #{encoder_decoder_forward.1} parent=11 // pred_check
          %p1016 = pneg %p473
        $region78: #{encoder_decoder_forward.1} parent=11 // pred_check_branch
          %1018 = sbr.rel (%p1016) target = $region80
        $region79: #{encoder_decoder_forward.1} parent=11 // pred_region
          %s1020 = ssub.s32 512, 512
          %1021 = vsyncadd [#allocation24], %s1020
          %s1022 = sshll.u32 [#allocation23], 4
          %s1023 = int_to_ptr.vmem [resolvable:$true] %s1022
          %1028 = dma.hbm_to_vmem [thread:$0]  %s35, 512, %s1023, [#allocation24], 128, 128, 8
        $region80: #{encoder_decoder_forward.1} parent=11 // pred_fallthru
          _
        // Predicated region
        $region81: #{encoder_decoder_forward.1} parent=11 // pred_check
          %p1029 = pneg %p494
        $region82: #{encoder_decoder_forward.1} parent=11 // pred_check_branch
          %1031 = sbr.rel (%p1029) target = $region84
        $region83: #{encoder_decoder_forward.1} parent=11 // pred_region
          _
        $region84: #{encoder_decoder_forward.1} parent=11 // pred_fallthru
          _
        // Predicated region
        $region85: #{encoder_decoder_forward.1} parent=11 // pred_check
          %p1032 = pneg %p515
        $region86: #{encoder_decoder_forward.1} parent=11 // pred_check_branch
          %1034 = sbr.rel (%p1032) target = $region88
        $region87: #{encoder_decoder_forward.1} parent=11 // pred_region
          %s1036 = ssub.s32 512, 512
          %1037 = vsyncadd [#allocation24], %s1036
          %s1038 = sshll.u32 [#allocation25], 4
          %s1039 = int_to_ptr.vmem [resolvable:$true] %s1038
          %1044 = dma.hbm_to_vmem [thread:$0]  %s39, 512, %s1039, [#allocation24], 128, 128, 8
        $region88: #{encoder_decoder_forward.1} parent=11 // pred_fallthru
          _
        // Predicated region
        $region89: #{encoder_decoder_forward.1} parent=11 // pred_check
          %p1045 = pneg %p536
        $region90: #{encoder_decoder_forward.1} parent=11 // pred_check_branch
          %1047 = sbr.rel (%p1045) target = $region92
        $region91: #{encoder_decoder_forward.1} parent=11 // pred_region
          %s1049 = ssub.s32 512, 512
          %1050 = vsyncadd [#allocation27], %s1049
          %s1051 = sshll.u32 [#allocation26], 4
          %s1052 = int_to_ptr.vmem [resolvable:$true] %s1051
          %1057 = dma.hbm_to_vmem [thread:$0]  %s41, 512, %s1052, [#allocation27], 64, 64, 4
        $region92: #{encoder_decoder_forward.1} parent=11 // pred_fallthru
          _
        // Predicated region
        $region93: #{encoder_decoder_forward.1} parent=11 // pred_check
          %p1058 = pneg %p557
        $region94: #{encoder_decoder_forward.1} parent=11 // pred_check_branch
          %1060 = sbr.rel (%p1058) target = $region96
        $region95: #{encoder_decoder_forward.1} parent=11 // pred_region
          %s1062 = ssub.s32 256, 256
          %1063 = vsyncadd [#allocation27], %s1062
          %s1064 = sshll.u32 [#allocation28], 4
          %s1065 = int_to_ptr.vmem [resolvable:$true] %s1064
          %1070 = dma.hbm_to_vmem [thread:$0]  %s43, 256, %s1065, [#allocation27], 128, 128, 8
        $region96: #{encoder_decoder_forward.1} parent=11 // pred_fallthru
          _
        // Predicated region
        $region97: #{encoder_decoder_forward.1} parent=11 // pred_check
          %p1071 = pneg %p578
        $region98: #{encoder_decoder_forward.1} parent=11 // pred_check_branch
          %1073 = sbr.rel (%p1071) target = $region100
        $region99: #{encoder_decoder_forward.1} parent=11 // pred_region
          %s1075 = ssub.s32 384, 384
          %1076 = vsyncadd [#allocation30], %s1075
          %s1077 = sshll.u32 [#allocation29], 4
          %s1078 = int_to_ptr.vmem [resolvable:$true] %s1077
          %1083 = dma.hbm_to_vmem [thread:$0]  %s45, 384, %s1078, [#allocation30], 192, 192, 12
        $region100: #{encoder_decoder_forward.1} parent=11 // pred_fallthru
          _
        // Predicated region
        $region101: #{encoder_decoder_forward.1} parent=11 // pred_check
          %p1084 = pneg %p599
        $region102: #{encoder_decoder_forward.1} parent=11 // pred_check_branch
          %1086 = sbr.rel (%p1084) target = $region104
        $region103: #{encoder_decoder_forward.1} parent=11 // pred_region
          %s1088 = ssub.s32 256, 256
          %1089 = vsyncadd [#allocation30], %s1088
          %s1090 = sshll.u32 [#allocation31], 4
          %s1091 = int_to_ptr.vmem [resolvable:$true] %s1090
          %1096 = dma.hbm_to_vmem [thread:$0]  %s47, 256, %s1091, [#allocation30], 128, 128, 8
        $region104: #{encoder_decoder_forward.1} parent=11 // pred_fallthru
          _
        // Predicated region
        $region105: #{encoder_decoder_forward.1} parent=11 // pred_check
          %p1097 = pneg %p620
        $region106: #{encoder_decoder_forward.1} parent=11 // pred_check_branch
          %1099 = sbr.rel (%p1097) target = $region108
        $region107: #{encoder_decoder_forward.1} parent=11 // pred_region
          %s1101 = ssub.s32 256, 256
          %1102 = vsyncadd [#allocation33], %s1101
          %s1103 = sshll.u32 [#allocation32], 4
          %s1104 = int_to_ptr.vmem [resolvable:$true] %s1103
          %1109 = dma.hbm_to_vmem [thread:$0]  %s49, 256, %s1104, [#allocation33], 128, 128, 8
        $region108: #{encoder_decoder_forward.1} parent=11 // pred_fallthru
          _
        // Predicated region
        $region109: #{encoder_decoder_forward.1} parent=11 // pred_check
          %p1110 = pneg %p641
        $region110: #{encoder_decoder_forward.1} parent=11 // pred_check_branch
          %1112 = sbr.rel (%p1110) target = $region112
        $region111: #{encoder_decoder_forward.1} parent=11 // pred_region
          %s1114 = ssub.s32 256, 256
          %1115 = vsyncadd [#allocation33], %s1114
          %s1116 = sshll.u32 [#allocation34], 4
          %s1117 = int_to_ptr.vmem [resolvable:$true] %s1116
          %1122 = dma.hbm_to_vmem [thread:$0]  %s51, 256, %s1117, [#allocation33], 128, 128, 8
        $region112: #{encoder_decoder_forward.1} parent=11 // pred_fallthru
          _
        // Predicated region
        $region113: #{encoder_decoder_forward.1} parent=11 // pred_check
          %p1123 = pneg %p662
        $region114: #{encoder_decoder_forward.1} parent=11 // pred_check_branch
          %1125 = sbr.rel (%p1123) target = $region116
        $region115: #{encoder_decoder_forward.1} parent=11 // pred_region
          %s1127 = ssub.s32 256, 256
          %1128 = vsyncadd [#allocation36], %s1127
          %s1129 = sshll.u32 [#allocation35], 4
          %s1130 = int_to_ptr.vmem [resolvable:$true] %s1129
          %1135 = dma.hbm_to_vmem [thread:$0]  %s53, 256, %s1130, [#allocation36], 64, 64, 4
        $region116: #{encoder_decoder_forward.1} parent=11 // pred_fallthru
          _
        // Predicated region
        $region117: #{encoder_decoder_forward.1} parent=11 // pred_check
          %p1136 = pneg %p683
        $region118: #{encoder_decoder_forward.1} parent=11 // pred_check_branch
          %1138 = sbr.rel (%p1136) target = $region120
        $region119: #{encoder_decoder_forward.1} parent=11 // pred_region
          %s1140 = ssub.s32 128, 128
          %1141 = vsyncadd [#allocation36], %s1140
          %s1143 = sshll.u32 [#allocation37], 4
          %s1144 = int_to_ptr.vmem [resolvable:$true] %s1143
          %1146 = dma.hbm_to_vmem [thread:$0]  %s55, 128, %s1144, [#allocation36]
        $region120: #{encoder_decoder_forward.1} parent=11 // pred_fallthru
          _
        // Predicated region
        $region121: #{encoder_decoder_forward.1} parent=11 // pred_check
          %p1147 = pneg %p704
        $region122: #{encoder_decoder_forward.1} parent=11 // pred_check_branch
          %1149 = sbr.rel (%p1147) target = $region124
        $region123: #{encoder_decoder_forward.1} parent=11 // pred_region
          %s1151 = ssub.s32 128, 128
          %1152 = vsyncadd [#allocation39], %s1151
          %s1154 = sshll.u32 [#allocation38], 4
          %s1155 = int_to_ptr.vmem [resolvable:$true] %s1154
          %1157 = dma.hbm_to_vmem [thread:$0]  %s57, 128, %s1155, [#allocation39]
        $region124: #{encoder_decoder_forward.1} parent=11 // pred_fallthru
          _
        // Predicated region
        $region125: #{encoder_decoder_forward.1} parent=11 // pred_check
          %p1158 = pneg %p725
        $region126: #{encoder_decoder_forward.1} parent=11 // pred_check_branch
          %1160 = sbr.rel (%p1158) target = $region128
        $region127: #{encoder_decoder_forward.1} parent=11 // pred_region
          %s1162 = ssub.s32 128, 128
          %1163 = vsyncadd [#allocation39], %s1162
          %s1165 = sshll.u32 [#allocation40], 4
          %s1166 = int_to_ptr.vmem [resolvable:$true] %s1165
          %1168 = dma.hbm_to_vmem [thread:$0]  %s59, 128, %s1166, [#allocation39]
        $region128: #{encoder_decoder_forward.1} parent=11 // pred_fallthru
          _
        // Predicated region
        $region129: #{encoder_decoder_forward.1} parent=11 // pred_check
          %p1169 = pneg %p746
        $region130: #{encoder_decoder_forward.1} parent=11 // pred_check_branch
          %1171 = sbr.rel (%p1169) target = $region132
        $region131: #{encoder_decoder_forward.1} parent=11 // pred_region
          %s1173 = ssub.s32 64, 64
          %1174 = vsyncadd [#allocation42], %s1173
          %s1176 = sshll.u32 [#allocation41], 4
          %s1177 = int_to_ptr.vmem [resolvable:$true] %s1176
          %1179 = dma.hbm_to_vmem [thread:$0]  %s61, 64, %s1177, [#allocation42]
        $region132: #{encoder_decoder_forward.1} parent=11 // pred_fallthru
          _
        // Predicated region
        $region133: #{encoder_decoder_forward.1} parent=11 // pred_check
          %p1180 = pneg %p767
        $region134: #{encoder_decoder_forward.1} parent=11 // pred_check_branch
          %1182 = sbr.rel (%p1180) target = $region136
        $region135: #{encoder_decoder_forward.1} parent=11 // pred_region
          %s1184 = ssub.s32 128, 128
          %1185 = vsyncadd [#allocation42], %s1184
          %s1187 = sshll.u32 [#allocation43], 4
          %s1188 = int_to_ptr.vmem [resolvable:$true] %s1187
          %1190 = dma.hbm_to_vmem [thread:$0]  %s63, 128, %s1188, [#allocation42]
        $region136: #{encoder_decoder_forward.1} parent=11 // pred_fallthru
          _
        // Predicated region
        $region137: #{encoder_decoder_forward.1} parent=11 // pred_check
          %p1191 = pneg %p788
        $region138: #{encoder_decoder_forward.1} parent=11 // pred_check_branch
          %1193 = sbr.rel (%p1191) target = $region140
        $region139: #{encoder_decoder_forward.1} parent=11 // pred_region
          %s1195 = ssub.s32 32, 32
          %1196 = vsyncadd [#allocation45], %s1195
          %s1198 = sshll.u32 [#allocation44], 4
          %s1199 = int_to_ptr.vmem [resolvable:$true] %s1198
          %1201 = dma.hbm_to_vmem [thread:$0]  %s65, 32, %s1199, [#allocation45]
        $region140: #{encoder_decoder_forward.1} parent=11 // pred_fallthru
          _
        // Predicated region
        $region141: #{encoder_decoder_forward.1} parent=11 // pred_check
          %p1202 = pneg %p809
        $region142: #{encoder_decoder_forward.1} parent=11 // pred_check_branch
          %1204 = sbr.rel (%p1202) target = $region144
        $region143: #{encoder_decoder_forward.1} parent=11 // pred_region
          %s1206 = ssub.s32 64, 64
          %1207 = vsyncadd [#allocation45], %s1206
          %s1209 = sshll.u32 [#allocation46], 4
          %s1210 = int_to_ptr.vmem [resolvable:$true] %s1209
          %1212 = dma.hbm_to_vmem [thread:$0]  %s67, 64, %s1210, [#allocation45]
        $region144: #{encoder_decoder_forward.1} parent=11 // pred_fallthru
          _
      $region12: #{encoder_decoder_forward.1} parent=5 // pred_fallthru
        _
      %p1213 = scmp.lt.s32.totalorder %s90, 2
      // Predicated region
      $region145: #{encoder_decoder_forward.1} parent=5 // pred_check
        %p1214 = pneg %p1213
      $region146: #{encoder_decoder_forward.1} parent=5 // pred_check_branch
        %1216 = sbr.rel (%p1214) target = $region148
      $region147: #{encoder_decoder_forward.1} parent=5 // pred_region
        // Predicated region
        $region149: #{encoder_decoder_forward.1} parent=147 // pred_check
          %p1217 = pneg %p110
        $region150: #{encoder_decoder_forward.1} parent=147 // pred_check_branch
          %1219 = sbr.rel (%p1217) target = $region152
        $region151: #{encoder_decoder_forward.1} parent=147 // pred_region
          %p1220 = scmp.lt.s32.totalorder %s90, 1
          %s1221 = scalar_select %p1220, %s90, 1
          %s1222 = smul.addr %s1221, 2
          %s1223 = smul.addr %s1222, 2
          %s1224 = scalar_lea.vmem %s1, %s1223
        $region152: #{encoder_decoder_forward.1} parent=147 // pred_fallthru
          _
      $region148: #{encoder_decoder_forward.1} parent=5 // pred_fallthru
        _
      %p1225 = scmp.le.s32.totalorder 1, %s90
      %p1226 = scmp.lt.s32.totalorder %s90, 3
      %p1227 = pnand %p1225, %p1226
      %p1228 = pneg %p1227
      // Predicated region
      $region153: #{encoder_decoder_forward.1} parent=5 // pred_check
        _
      $region154: #{encoder_decoder_forward.1} parent=5 // pred_check_branch
        %1230 = sbr.rel (%p1227) target = $region156
      $region155: #{encoder_decoder_forward.1} parent=5 // pred_region
        %s1231 = ssub.s32 %s90, 1
        // Predicated region
        $region157: #{encoder_decoder_forward.1} parent=155 // pred_check
          %p1232 = pneg %p158
        $region158: #{encoder_decoder_forward.1} parent=155 // pred_check_branch
          %1234 = sbr.rel (%p1232) target = $region160
        $region159: #{encoder_decoder_forward.1} parent=155 // pred_region
          %1235 = dma.done [#allocation4], 32
        $region160: #{encoder_decoder_forward.1} parent=155 // pred_fallthru
          _
        // Predicated region
        $region161: #{encoder_decoder_forward.1} parent=155 // pred_check
          %p1236 = pneg %p179
        $region162: #{encoder_decoder_forward.1} parent=155 // pred_check_branch
          %1238 = sbr.rel (%p1236) target = $region164
        $region163: #{encoder_decoder_forward.1} parent=155 // pred_region
          %1239 = dma.done [#allocation6], 32
        $region164: #{encoder_decoder_forward.1} parent=155 // pred_fallthru
          _
        // Predicated region
        $region165: #{encoder_decoder_forward.1} parent=155 // pred_check
          %p1240 = pneg %p200
        $region166: #{encoder_decoder_forward.1} parent=155 // pred_check_branch
          %1242 = sbr.rel (%p1240) target = $region168
        $region167: #{encoder_decoder_forward.1} parent=155 // pred_region
          %1243 = dma.done [#allocation6], 1920
        $region168: #{encoder_decoder_forward.1} parent=155 // pred_fallthru
          _
        // Predicated region
        $region169: #{encoder_decoder_forward.1} parent=155 // pred_check
          %p1244 = pneg %p221
        $region170: #{encoder_decoder_forward.1} parent=155 // pred_check_branch
          %1246 = sbr.rel (%p1244) target = $region172
        $region171: #{encoder_decoder_forward.1} parent=155 // pred_region
          %1247 = dma.done [#allocation9], 448
        $region172: #{encoder_decoder_forward.1} parent=155 // pred_fallthru
          _
        // Predicated region
        $region173: #{encoder_decoder_forward.1} parent=155 // pred_check
          %p1248 = pneg %p242
        $region174: #{encoder_decoder_forward.1} parent=155 // pred_check_branch
          %1250 = sbr.rel (%p1248) target = $region176
        $region175: #{encoder_decoder_forward.1} parent=155 // pred_region
          %1251 = dma.done [#allocation9], 512
        $region176: #{encoder_decoder_forward.1} parent=155 // pred_fallthru
          _
        // Predicated region
        $region177: #{encoder_decoder_forward.1} parent=155 // pred_check
          %p1252 = pneg %p284
        $region178: #{encoder_decoder_forward.1} parent=155 // pred_check_branch
          %1254 = sbr.rel (%p1252) target = $region180
        $region179: #{encoder_decoder_forward.1} parent=155 // pred_region
          %1255 = dma.done [#allocation12], 64
        $region180: #{encoder_decoder_forward.1} parent=155 // pred_fallthru
          _
        // Predicated region
        $region181: #{encoder_decoder_forward.1} parent=155 // pred_check
          %p1256 = pneg %p305
        $region182: #{encoder_decoder_forward.1} parent=155 // pred_check_branch
          %1258 = sbr.rel (%p1256) target = $region184
        $region183: #{encoder_decoder_forward.1} parent=155 // pred_region
          %1259 = dma.done [#allocation12], 128
        $region184: #{encoder_decoder_forward.1} parent=155 // pred_fallthru
          _
        // Predicated region
        $region185: #{encoder_decoder_forward.1} parent=155 // pred_check
          %p1260 = pneg %p326
        $region186: #{encoder_decoder_forward.1} parent=155 // pred_check_branch
          %1262 = sbr.rel (%p1260) target = $region188
        $region187: #{encoder_decoder_forward.1} parent=155 // pred_region
          %1263 = dma.done [#allocation15], 64
        $region188: #{encoder_decoder_forward.1} parent=155 // pred_fallthru
          _
        // Predicated region
        $region189: #{encoder_decoder_forward.1} parent=155 // pred_check
          %p1264 = pneg %p347
        $region190: #{encoder_decoder_forward.1} parent=155 // pred_check_branch
          %1266 = sbr.rel (%p1264) target = $region192
        $region191: #{encoder_decoder_forward.1} parent=155 // pred_region
          %1267 = dma.done [#allocation15], 128
        $region192: #{encoder_decoder_forward.1} parent=155 // pred_fallthru
          _
        // Predicated region
        $region193: #{encoder_decoder_forward.1} parent=155 // pred_check
          %p1268 = pneg %p368
        $region194: #{encoder_decoder_forward.1} parent=155 // pred_check_branch
          %1270 = sbr.rel (%p1268) target = $region196
        $region195: #{encoder_decoder_forward.1} parent=155 // pred_region
          %1271 = dma.done [#allocation18], 128
        $region196: #{encoder_decoder_forward.1} parent=155 // pred_fallthru
          _
        // Predicated region
        $region197: #{encoder_decoder_forward.1} parent=155 // pred_check
          %p1272 = pneg %p410
        $region198: #{encoder_decoder_forward.1} parent=155 // pred_check_branch
          %1274 = sbr.rel (%p1272) target = $region200
        $region199: #{encoder_decoder_forward.1} parent=155 // pred_region
          %1275 = dma.done [#allocation18], 256
        $region200: #{encoder_decoder_forward.1} parent=155 // pred_fallthru
          _
        // Predicated region
        $region201: #{encoder_decoder_forward.1} parent=155 // pred_check
          %p1276 = pneg %p431
        $region202: #{encoder_decoder_forward.1} parent=155 // pred_check_branch
          %1278 = sbr.rel (%p1276) target = $region204
        $region203: #{encoder_decoder_forward.1} parent=155 // pred_region
          %1279 = dma.done [#allocation21], 256
        $region204: #{encoder_decoder_forward.1} parent=155 // pred_fallthru
          _
        // Predicated region
        $region205: #{encoder_decoder_forward.1} parent=155 // pred_check
          %p1280 = pneg %p452
        $region206: #{encoder_decoder_forward.1} parent=155 // pred_check_branch
          %1282 = sbr.rel (%p1280) target = $region208
        $region207: #{encoder_decoder_forward.1} parent=155 // pred_region
          %1283 = dma.done [#allocation21], 512
        $region208: #{encoder_decoder_forward.1} parent=155 // pred_fallthru
          _
        // Predicated region
        $region209: #{encoder_decoder_forward.1} parent=155 // pred_check
          %p1284 = pneg %p473
        $region210: #{encoder_decoder_forward.1} parent=155 // pred_check_branch
          %1286 = sbr.rel (%p1284) target = $region212
        $region211: #{encoder_decoder_forward.1} parent=155 // pred_region
          %1287 = dma.done [#allocation24], 512
        $region212: #{encoder_decoder_forward.1} parent=155 // pred_fallthru
          _
        // Predicated region
        $region213: #{encoder_decoder_forward.1} parent=155 // pred_check
          %p1288 = pneg %p515
        $region214: #{encoder_decoder_forward.1} parent=155 // pred_check_branch
          %1290 = sbr.rel (%p1288) target = $region216
        $region215: #{encoder_decoder_forward.1} parent=155 // pred_region
          %1291 = dma.done [#allocation24], 512
        $region216: #{encoder_decoder_forward.1} parent=155 // pred_fallthru
          _
        // Predicated region
        $region217: #{encoder_decoder_forward.1} parent=155 // pred_check
          %p1292 = pneg %p536
        $region218: #{encoder_decoder_forward.1} parent=155 // pred_check_branch
          %1294 = sbr.rel (%p1292) target = $region220
        $region219: #{encoder_decoder_forward.1} parent=155 // pred_region
          %1295 = dma.done [#allocation27], 512
        $region220: #{encoder_decoder_forward.1} parent=155 // pred_fallthru
          _
        // Predicated region
        $region221: #{encoder_decoder_forward.1} parent=155 // pred_check
          %p1296 = pneg %p557
        $region222: #{encoder_decoder_forward.1} parent=155 // pred_check_branch
          %1298 = sbr.rel (%p1296) target = $region224
        $region223: #{encoder_decoder_forward.1} parent=155 // pred_region
          %1299 = dma.done [#allocation27], 256
        $region224: #{encoder_decoder_forward.1} parent=155 // pred_fallthru
          _
        // Predicated region
        $region225: #{encoder_decoder_forward.1} parent=155 // pred_check
          %p1300 = pneg %p578
        $region226: #{encoder_decoder_forward.1} parent=155 // pred_check_branch
          %1302 = sbr.rel (%p1300) target = $region228
        $region227: #{encoder_decoder_forward.1} parent=155 // pred_region
          %1303 = dma.done [#allocation30], 384
        $region228: #{encoder_decoder_forward.1} parent=155 // pred_fallthru
          _
        // Predicated region
        $region229: #{encoder_decoder_forward.1} parent=155 // pred_check
          %p1304 = pneg %p599
        $region230: #{encoder_decoder_forward.1} parent=155 // pred_check_branch
          %1306 = sbr.rel (%p1304) target = $region232
        $region231: #{encoder_decoder_forward.1} parent=155 // pred_region
          %1307 = dma.done [#allocation30], 256
        $region232: #{encoder_decoder_forward.1} parent=155 // pred_fallthru
          _
        // Predicated region
        $region233: #{encoder_decoder_forward.1} parent=155 // pred_check
          %p1308 = pneg %p620
        $region234: #{encoder_decoder_forward.1} parent=155 // pred_check_branch
          %1310 = sbr.rel (%p1308) target = $region236
        $region235: #{encoder_decoder_forward.1} parent=155 // pred_region
          %1311 = dma.done [#allocation33], 256
        $region236: #{encoder_decoder_forward.1} parent=155 // pred_fallthru
          _
        // Predicated region
        $region237: #{encoder_decoder_forward.1} parent=155 // pred_check
          %p1312 = pneg %p641
        $region238: #{encoder_decoder_forward.1} parent=155 // pred_check_branch
          %1314 = sbr.rel (%p1312) target = $region240
        $region239: #{encoder_decoder_forward.1} parent=155 // pred_region
          %1315 = dma.done [#allocation33], 256
        $region240: #{encoder_decoder_forward.1} parent=155 // pred_fallthru
          _
        // Predicated region
        $region241: #{encoder_decoder_forward.1} parent=155 // pred_check
          %p1316 = pneg %p662
        $region242: #{encoder_decoder_forward.1} parent=155 // pred_check_branch
          %1318 = sbr.rel (%p1316) target = $region244
        $region243: #{encoder_decoder_forward.1} parent=155 // pred_region
          %1319 = dma.done [#allocation36], 256
        $region244: #{encoder_decoder_forward.1} parent=155 // pred_fallthru
          _
        // Predicated region
        $region245: #{encoder_decoder_forward.1} parent=155 // pred_check
          %p1320 = pneg %p683
        $region246: #{encoder_decoder_forward.1} parent=155 // pred_check_branch
          %1322 = sbr.rel (%p1320) target = $region248
        $region247: #{encoder_decoder_forward.1} parent=155 // pred_region
          %1323 = dma.done [#allocation36], 128
        $region248: #{encoder_decoder_forward.1} parent=155 // pred_fallthru
          _
        // Predicated region
        $region249: #{encoder_decoder_forward.1} parent=155 // pred_check
          %p1324 = pneg %p704
        $region250: #{encoder_decoder_forward.1} parent=155 // pred_check_branch
          %1326 = sbr.rel (%p1324) target = $region252
        $region251: #{encoder_decoder_forward.1} parent=155 // pred_region
          %1327 = dma.done [#allocation39], 128
        $region252: #{encoder_decoder_forward.1} parent=155 // pred_fallthru
          _
        // Predicated region
        $region253: #{encoder_decoder_forward.1} parent=155 // pred_check
          %p1328 = pneg %p725
        $region254: #{encoder_decoder_forward.1} parent=155 // pred_check_branch
          %1330 = sbr.rel (%p1328) target = $region256
        $region255: #{encoder_decoder_forward.1} parent=155 // pred_region
          %1331 = dma.done [#allocation39], 128
        $region256: #{encoder_decoder_forward.1} parent=155 // pred_fallthru
          _
        // Predicated region
        $region257: #{encoder_decoder_forward.1} parent=155 // pred_check
          %p1332 = pneg %p746
        $region258: #{encoder_decoder_forward.1} parent=155 // pred_check_branch
          %1334 = sbr.rel (%p1332) target = $region260
        $region259: #{encoder_decoder_forward.1} parent=155 // pred_region
          %1335 = dma.done [#allocation42], 64
        $region260: #{encoder_decoder_forward.1} parent=155 // pred_fallthru
          _
        // Predicated region
        $region261: #{encoder_decoder_forward.1} parent=155 // pred_check
          %p1336 = pneg %p767
        $region262: #{encoder_decoder_forward.1} parent=155 // pred_check_branch
          %1338 = sbr.rel (%p1336) target = $region264
        $region263: #{encoder_decoder_forward.1} parent=155 // pred_region
          %1339 = dma.done [#allocation42], 128
        $region264: #{encoder_decoder_forward.1} parent=155 // pred_fallthru
          _
        // Predicated region
        $region265: #{encoder_decoder_forward.1} parent=155 // pred_check
          %p1340 = pneg %p788
        $region266: #{encoder_decoder_forward.1} parent=155 // pred_check_branch
          %1342 = sbr.rel (%p1340) target = $region268
        $region267: #{encoder_decoder_forward.1} parent=155 // pred_region
          %1343 = dma.done [#allocation45], 32
        $region268: #{encoder_decoder_forward.1} parent=155 // pred_fallthru
          _
        // Predicated region
        $region269: #{encoder_decoder_forward.1} parent=155 // pred_check
          %p1344 = pneg %p809
        $region270: #{encoder_decoder_forward.1} parent=155 // pred_check_branch
          %1346 = sbr.rel (%p1344) target = $region272
        $region271: #{encoder_decoder_forward.1} parent=155 // pred_region
          %1347 = dma.done [#allocation45], 64
        $region272: #{encoder_decoder_forward.1} parent=155 // pred_fallthru
          _
        %p1348 = scmp.lt.s32.totalorder %s95, 1
        %s1349 = scalar_select %p1348, %s95, 1
        %s1350 = smul.addr %s1349, 2
        %s1351 = smul.addr %s1350, 2
        %s1352 = scalar_lea.vmem %s1, %s1351
        %p1353 = pneg %p116
        %p1354 = pneg %p113
        %p1355 = pneg %p137
        %p1356 = pneg %p134
        %p1357 = pneg %p158
        %p1358 = pneg %p155
        %p1359 = pneg %p179
        %p1360 = pneg %p176
        %p1361 = pneg %p200
        %p1362 = pneg %p197
        %p1363 = pneg %p221
        %p1364 = pneg %p218
        %p1365 = pneg %p242
        %p1366 = pneg %p239
        %p1367 = pneg %p263
        %p1368 = pneg %p260
        %p1369 = pneg %p284
        %p1370 = pneg %p281
        %p1371 = pneg %p305
        %p1372 = pneg %p302
        %p1373 = pneg %p326
        %p1374 = pneg %p323
        %p1375 = pneg %p347
        %p1376 = pneg %p344
        %p1377 = pneg %p368
        %p1378 = pneg %p365
        %p1379 = pneg %p389
        %p1380 = pneg %p386
        %p1381 = pneg %p410
        %p1382 = pneg %p407
        %p1383 = pneg %p431
        %p1384 = pneg %p428
        %p1385 = pneg %p452
        %p1386 = pneg %p449
        %p1387 = pneg %p473
        %p1388 = pneg %p470
        %p1389 = pneg %p494
        %p1390 = pneg %p491
        %p1391 = pneg %p515
        %p1392 = pneg %p512
        %p1393 = pneg %p536
        %p1394 = pneg %p533
        %p1395 = pneg %p557
        %p1396 = pneg %p554
        %p1397 = pneg %p578
        %p1398 = pneg %p575
        %p1399 = pneg %p599
        %p1400 = pneg %p596
        %p1401 = pneg %p620
        %p1402 = pneg %p617
        %p1403 = pneg %p641
        %p1404 = pneg %p638
        %p1405 = pneg %p662
        %p1406 = pneg %p659
        %p1407 = pneg %p683
        %p1408 = pneg %p680
        %p1409 = pneg %p704
        %p1410 = pneg %p701
        %p1411 = pneg %p725
        %p1412 = pneg %p722
        %p1413 = pneg %p746
        %p1414 = pneg %p743
        %p1415 = pneg %p767
        %p1416 = pneg %p764
        %p1417 = pneg %p788
        %p1418 = pneg %p785
        %p1419 = pneg %p809
        %p1420 = pneg %p806
        %p1421 = pneg %p835
        %p1422 = pneg %p832
        %p1423 = scmp.lt.s32.totalorder %s95, 1
        %s1424 = scalar_select %p1423, %s95, 1
        %s1425 = smul.addr %s1424, 2
        %s1426 = smul.addr %s1425, 4
        %s1427 = scalar_lea.vmem %s69, %s1426
        %p1428 = scmp.lt.s32.totalorder %s95, 1
        %s1429 = scalar_select %p1428, %s95, 1
        %s1430 = smul.addr %s1429, 2
        %s1431 = smul.addr %s1430, 2
        %s1432 = scalar_lea.vmem %s1, %s1431
        %p1433 = scmp.lt.s32.totalorder %s95, 1
        %s1434 = scalar_select %p1433, %s95, 1
        %s1435 = smul.addr %s1434, 2
        %s1436 = smul.addr %s1435, 4
        %s1437 = scalar_lea.vmem %s69, %s1436
        %v1439 = vld [vmem:[%s1432] sm:$0xf]
        %1440 = vst [vmem:[#allocation2] sm:$0xff] 0
        %1441 = vst [vmem:[#allocation2 + $0x8] sm:$0xff] 0
        %1442 = vst [vmem:[#allocation2 + $0x10] sm:$0xff] 0
        %1443 = vst [vmem:[#allocation2 + $0x18] sm:$0xff] 0
        %1444 = vst [vmem:[#allocation2 + $0x20] sm:$0x33] 0
        %v1445 = vld [vmem:[%s3] sm:$0x5]
        %v1448 = vunpack.c.l.s4 1983009808
        %v1449 = vunpack.c.0.s8 %v1448
        %v1450 = vlaneseq
        %v1451 = vshrl.u32 %v1450, 7
        %v1452 = vsub.s32 %v1449, %v1451
        %v1453 = vrot.slane %v1445, %v1452
        %v1454 = vcombine.high %v1453, %v1453
        %v1456 = vpack.i.b16 %v1453, %v1453
        %v1458 = vlaneseq
        %v1459 = vshrl.u32 %v1458, 7
        %v1460 = vsub.s32 0, %v1459
        %v1461 = vrot.slane %v1456, %v1460
        %v1463 = vpack.i.b16 %v1454, %v1454
        %v1465 = vlaneseq
        %v1466 = vshrl.u32 %v1465, 7
        %v1467 = vsub.s32 0, %v1466
        %v1468 = vrot.slane %v1463, %v1467
        %v1471 = vcombine.low %v1461, %v1468
        %v1473 = vunpack.c.l.s4 1983009808
        %v1474 = vunpack.c.0.s8 %v1473
        %v1475 = vlaneseq
        %v1476 = vshrl.u32 %v1475, 7
        %v1477 = vsub.s32 %v1474, %v1476
        %v1478 = vrot.slane %v1471, %v1477
        %1479 = vrot.lane.b32.xlu0 %v1478, 111
        %v1480 = vpop.permute.xlu0 %1479
        %v1481 = vrot.slane %v1480, 2
        %vm1482 = vcmask 908288
        %v1483 = vsel %vm1482, %v1480, %v1481
        %v1485 = vmul.bf16 %v1439, %v1483
        %v1488 = vunpack.c.l.s4 1983009808
        %v1489 = vunpack.c.0.s8 %v1488
        %v1490 = vlaneseq
        %v1491 = vshrl.u32 %v1490, 7
        %v1492 = vsub.s32 %v1489, %v1491
        %v1493 = vrot.slane %v1485, %v1492
        %1494 = vrot.lane.b32.xlu0 %v1493, 17
        %v1495 = vpop.permute.xlu0 %1494
        %v1496 = vrot.slane %v1495, 4
        %vm1497 = vcmask 138240
        %v1498 = vsel %vm1497, %v1496, %v1495
        %vm1500 = vcmask 1041544
        %vm1501 = vcmask 1045508
        %vm1502 = vmor %vm1501, %vm1500
        %1503 = vst.msk [vmem:[#allocation2] sm:$0x33] %vm1502, %v1498
        %v1504 = vld [vmem:[%s3] sm:$0x5]
        %v1507 = vunpack.c.l.s4 1983009808
        %v1508 = vunpack.c.0.s8 %v1507
        %v1509 = vlaneseq
        %v1510 = vshrl.u32 %v1509, 7
        %v1511 = vsub.s32 %v1508, %v1510
        %v1512 = vrot.slane %v1504, %v1511
        %v1513 = vcombine.high %v1512, %v1512
        %v1515 = vshrl.u32 %v1512, 16
        %v1516 = vpack.i.b16 %v1515, %v1515
        %v1518 = vlaneseq
        %v1519 = vshrl.u32 %v1518, 7
        %v1520 = vsub.s32 0, %v1519
        %v1521 = vrot.slane %v1516, %v1520
        %v1523 = vshrl.u32 %v1513, 16
        %v1524 = vpack.i.b16 %v1523, %v1523
        %v1526 = vlaneseq
        %v1527 = vshrl.u32 %v1526, 7
        %v1528 = vsub.s32 0, %v1527
        %v1529 = vrot.slane %v1524, %v1528
        %v1532 = vcombine.low %v1521, %v1529
        %v1534 = vunpack.c.l.s4 1983009808
        %v1535 = vunpack.c.0.s8 %v1534
        %v1536 = vlaneseq
        %v1537 = vshrl.u32 %v1536, 7
        %v1538 = vsub.s32 %v1535, %v1537
        %v1539 = vrot.slane %v1532, %v1538
        %1540 = vrot.lane.b32.xlu0 %v1539, 112
        %v1541 = vpop.permute.xlu0 %1540
        %v1542 = vrot.slane %v1541, 2
        %vm1543 = vcmask 916480
        %v1544 = vsel %vm1543, %v1541, %v1542
        %v1546 = vmul.bf16 %v1439, %v1544
        %v1548 = vcombine.low %v1546, %v1546
        %v1550 = vunpack.c.l.s4 1983009808
        %v1551 = vunpack.c.0.s8 %v1550
        %v1552 = vlaneseq
        %v1553 = vshrl.u32 %v1552, 7
        %v1554 = vsub.s32 %v1551, %v1553
        %v1555 = vrot.slane %v1548, %v1554
        %1556 = vrot.lane.b32.xlu0 %v1555, 16
        %v1557 = vpop.permute.xlu0 %1556
        %v1558 = vrot.slane %v1557, 4
        %vm1559 = vcmask 130048
        %v1560 = vsel %vm1559, %v1558, %v1557
        %vm1562 = vcmask 1043586
        %vm1563 = vcmask 1047558
        %vm1564 = vmor %vm1563, %vm1562
        %1565 = vst.msk [vmem:[#allocation2] sm:$0xcc] %vm1564, %v1560
        %v1566 = vld [vmem:[%s3] sm:$0xa]
        %v1569 = vunpack.c.l.s4 1983009808
        %v1570 = vunpack.c.0.s8 %v1569
        %v1571 = vlaneseq
        %v1572 = vshrl.u32 %v1571, 7
        %v1573 = vsub.s32 %v1570, %v1572
        %v1574 = vrot.slane %v1566, %v1573
        %v1575 = vcombine.high %v1574, %v1574
        %v1577 = vpack.i.b16 %v1574, %v1574
        %v1579 = vlaneseq
        %v1580 = vshrl.u32 %v1579, 7
        %v1581 = vsub.s32 1, %v1580
        %v1582 = vrot.slane %v1577, %v1581
        %v1584 = vpack.i.b16 %v1575, %v1575
        %v1586 = vlaneseq
        %v1587 = vshrl.u32 %v1586, 7
        %v1588 = vsub.s32 1, %v1587
        %v1589 = vrot.slane %v1584, %v1588
        %v1592 = vcombine.low %v1582, %v1589
        %v1594 = vunpack.c.l.s4 1983009808
        %v1595 = vunpack.c.0.s8 %v1594
        %v1596 = vlaneseq
        %v1597 = vshrl.u32 %v1596, 7
        %v1598 = vsub.s32 %v1595, %v1597
        %v1599 = vrot.slane %v1592, %v1598
        %1600 = vrot.lane.b32.xlu0 %v1599, 113
        %v1601 = vpop.permute.xlu0 %1600
        %v1602 = vrot.slane %v1601, 2
        %vm1603 = vcmask 924672
        %v1604 = vsel %vm1603, %v1601, %v1602
        %v1606 = vmul.bf16 %v1439, %v1604
        %v1609 = vunpack.c.l.s4 1983009808
        %v1610 = vunpack.c.0.s8 %v1609
        %v1611 = vlaneseq
        %v1612 = vshrl.u32 %v1611, 7
        %v1613 = vsub.s32 %v1610, %v1612
        %v1614 = vrot.slane %v1606, %v1613
        %1615 = vrot.lane.b32.xlu0 %v1614, 15
        %v1616 = vpop.permute.xlu0 %1615
        %v1617 = vrot.slane %v1616, 4
        %vm1618 = vcmask 121856
        %v1619 = vsel %vm1618, %v1617, %v1616
        %vm1621 = vcmask 1041528
        %vm1622 = vmor %vm1501, %vm1621
        %1623 = vst.msk [vmem:[#allocation2 + $0x8] sm:$0x33] %vm1622, %v1619
        %v1624 = vld [vmem:[%s3] sm:$0x5]
        %v1627 = vunpack.c.l.s4 1983009808
        %v1628 = vunpack.c.0.s8 %v1627
        %v1629 = vlaneseq
        %v1630 = vshrl.u32 %v1629, 7
        %v1631 = vsub.s32 %v1628, %v1630
        %v1632 = vrot.slane %v1624, %v1631
        %v1633 = vcombine.high %v1632, %v1632
        %v1635 = vpack.i.b16 %v1632, %v1632
        %v1637 = vlaneseq
        %v1638 = vshrl.u32 %v1637, 7
        %v1639 = vsub.s32 0, %v1638
        %v1640 = vrot.slane %v1635, %v1639
        %v1642 = vpack.i.b16 %v1633, %v1633
        %v1644 = vlaneseq
        %v1645 = vshrl.u32 %v1644, 7
        %v1646 = vsub.s32 0, %v1645
        %v1647 = vrot.slane %v1642, %v1646
        %v1650 = vcombine.low %v1640, %v1647
        %v1652 = vunpack.c.l.s4 1983009808
        %v1653 = vunpack.c.0.s8 %v1652
        %v1654 = vlaneseq
        %v1655 = vshrl.u32 %v1654, 7
        %v1656 = vsub.s32 %v1653, %v1655
        %v1657 = vrot.slane %v1650, %v1656
        %1658 = vrot.lane.b32.xlu0 %v1657, 127
        %v1659 = vpop.permute.xlu0 %1658
        %v1660 = vrot.slane %v1659, 2
        %vm1661 = vcmask 1039360
        %v1662 = vsel %vm1661, %v1659, %v1660
        %v1664 = vmul.bf16 %v1439, %v1662
        %v1666 = vcombine.low %v1664, %v1664
        %v1668 = vunpack.c.l.s4 1983009808
        %v1669 = vunpack.c.0.s8 %v1668
        %v1670 = vlaneseq
        %v1671 = vshrl.u32 %v1670, 7
        %v1672 = vsub.s32 %v1669, %v1671
        %v1673 = vrot.slane %v1666, %v1672
        %1674 = vrot.lane.b32.xlu0 %v1673, 1
        %v1675 = vpop.permute.xlu0 %1674
        %v1676 = vrot.slane %v1675, 4
        %vm1677 = vcmask 7168
        %v1678 = vsel %vm1677, %v1676, %v1675
        %vm1680 = vcmask 1043466
        %vm1681 = vmor %vm1563, %vm1680
        %1682 = vst.msk [vmem:[#allocation2 + $0x8] sm:$0xcc] %vm1681, %v1678
        %v1683 = vld [vmem:[%s3] sm:$0x5]
        %v1686 = vunpack.c.l.s4 1983009808
        %v1687 = vunpack.c.0.s8 %v1686
        %v1688 = vlaneseq
        %v1689 = vshrl.u32 %v1688, 7
        %v1690 = vsub.s32 %v1687, %v1689
        %v1691 = vrot.slane %v1683, %v1690
        %v1692 = vcombine.high %v1691, %v1691
        %v1694 = vshrl.u32 %v1691, 16
        %v1695 = vpack.i.b16 %v1694, %v1694
        %v1697 = vlaneseq
        %v1698 = vshrl.u32 %v1697, 7
        %v1699 = vsub.s32 0, %v1698
        %v1700 = vrot.slane %v1695, %v1699
        %v1702 = vshrl.u32 %v1692, 16
        %v1703 = vpack.i.b16 %v1702, %v1702
        %v1705 = vlaneseq
        %v1706 = vshrl.u32 %v1705, 7
        %v1707 = vsub.s32 0, %v1706
        %v1708 = vrot.slane %v1703, %v1707
        %v1711 = vcombine.low %v1700, %v1708
        %v1713 = vunpack.c.l.s4 1983009808
        %v1714 = vunpack.c.0.s8 %v1713
        %v1715 = vlaneseq
        %v1716 = vshrl.u32 %v1715, 7
        %v1717 = vsub.s32 %v1714, %v1716
        %v1718 = vrot.slane %v1711, %v1717
        %v1720 = vmul.bf16 %v1439, %v1718
        %v1723 = vunpack.c.l.s4 1983009808
        %v1724 = vunpack.c.0.s8 %v1723
        %v1725 = vlaneseq
        %v1726 = vshrl.u32 %v1725, 7
        %v1727 = vsub.s32 %v1724, %v1726
        %v1728 = vrot.slane %v1720, %v1727
        %1730 = vst [vmem:[#allocation2 + $0x10] sm:$0x33] %v1728
        %v1731 = vld [vmem:[%s3] sm:$0xa]
        %v1734 = vunpack.c.l.s4 1983009808
        %v1735 = vunpack.c.0.s8 %v1734
        %v1736 = vlaneseq
        %v1737 = vshrl.u32 %v1736, 7
        %v1738 = vsub.s32 %v1735, %v1737
        %v1739 = vrot.slane %v1731, %v1738
        %v1740 = vcombine.high %v1739, %v1739
        %v1742 = vpack.i.b16 %v1739, %v1739
        %v1744 = vlaneseq
        %v1745 = vshrl.u32 %v1744, 7
        %v1746 = vsub.s32 1, %v1745
        %v1747 = vrot.slane %v1742, %v1746
        %v1749 = vpack.i.b16 %v1740, %v1740
        %v1751 = vlaneseq
        %v1752 = vshrl.u32 %v1751, 7
        %v1753 = vsub.s32 1, %v1752
        %v1754 = vrot.slane %v1749, %v1753
        %v1757 = vcombine.low %v1747, %v1754
        %v1759 = vunpack.c.l.s4 1983009808
        %v1760 = vunpack.c.0.s8 %v1759
        %v1761 = vlaneseq
        %v1762 = vshrl.u32 %v1761, 7
        %v1763 = vsub.s32 %v1760, %v1762
        %v1764 = vrot.slane %v1757, %v1763
        %1765 = vrot.lane.b32.xlu0 %v1764, 1
        %v1766 = vpop.permute.xlu0 %1765
        %v1767 = vrot.slane %v1766, 6
        %v1768 = vsel %vm1677, %v1767, %v1766
        %v1770 = vmul.bf16 %v1439, %v1768
        %v1772 = vcombine.low %v1770, %v1770
        %v1774 = vunpack.c.l.s4 1983009808
        %v1775 = vunpack.c.0.s8 %v1774
        %v1776 = vlaneseq
        %v1777 = vshrl.u32 %v1776, 7
        %v1778 = vsub.s32 %v1775, %v1777
        %v1779 = vrot.slane %v1772, %v1778
        %1780 = vrot.lane.b32.xlu0 %v1779, 127
        %v1781 = vpop.permute.xlu0 %1780
        %v1782 = vrot.slane %v1781, 4
        %v1783 = vsel %vm1661, %v1781, %v1782
        %vm1785 = vcmask 1043458
        %vm1786 = vcmask 1039366
        %vm1787 = vmor %vm1786, %vm1785
        %1788 = vst.msk [vmem:[#allocation2 + $0x10] sm:$0xcc] %vm1787, %v1783
        %v1789 = vld [vmem:[%s3] sm:$0x5]
        %v1792 = vunpack.c.l.s4 1983009808
        %v1793 = vunpack.c.0.s8 %v1792
        %v1794 = vlaneseq
        %v1795 = vshrl.u32 %v1794, 7
        %v1796 = vsub.s32 %v1793, %v1795
        %v1797 = vrot.slane %v1789, %v1796
        %v1798 = vcombine.high %v1797, %v1797
        %v1800 = vpack.i.b16 %v1797, %v1797
        %v1802 = vlaneseq
        %v1803 = vshrl.u32 %v1802, 7
        %v1804 = vsub.s32 0, %v1803
        %v1805 = vrot.slane %v1800, %v1804
        %v1807 = vpack.i.b16 %v1798, %v1798
        %v1809 = vlaneseq
        %v1810 = vshrl.u32 %v1809, 7
        %v1811 = vsub.s32 0, %v1810
        %v1812 = vrot.slane %v1807, %v1811
        %v1815 = vcombine.low %v1805, %v1812
        %v1817 = vunpack.c.l.s4 1983009808
        %v1818 = vunpack.c.0.s8 %v1817
        %v1819 = vlaneseq
        %v1820 = vshrl.u32 %v1819, 7
        %v1821 = vsub.s32 %v1818, %v1820
        %v1822 = vrot.slane %v1815, %v1821
        %1823 = vrot.lane.b32.xlu0 %v1822, 15
        %v1824 = vpop.permute.xlu0 %1823
        %v1825 = vrot.slane %v1824, 6
        %v1826 = vsel %vm1618, %v1825, %v1824
        %v1828 = vmul.bf16 %v1439, %v1826
        %v1831 = vunpack.c.l.s4 1983009808
        %v1832 = vunpack.c.0.s8 %v1831
        %v1833 = vlaneseq
        %v1834 = vshrl.u32 %v1833, 7
        %v1835 = vsub.s32 %v1832, %v1834
        %v1836 = vrot.slane %v1828, %v1835
        %1837 = vrot.lane.b32.xlu0 %v1836, 113
        %v1838 = vpop.permute.xlu0 %1837
        %v1839 = vrot.slane %v1838, 4
        %v1840 = vsel %vm1603, %v1838, %v1839
        %vm1842 = vcmask 1041408
        %vm1843 = vcmask 922628
        %vm1844 = vmor %vm1843, %vm1842
        %1845 = vst.msk [vmem:[#allocation2 + $0x18] sm:$0x33] %vm1844, %v1840
        %v1846 = vld [vmem:[%s3] sm:$0x5]
        %v1849 = vunpack.c.l.s4 1983009808
        %v1850 = vunpack.c.0.s8 %v1849
        %v1851 = vlaneseq
        %v1852 = vshrl.u32 %v1851, 7
        %v1853 = vsub.s32 %v1850, %v1852
        %v1854 = vrot.slane %v1846, %v1853
        %v1855 = vcombine.high %v1854, %v1854
        %v1857 = vshrl.u32 %v1854, 16
        %v1858 = vpack.i.b16 %v1857, %v1857
        %v1860 = vlaneseq
        %v1861 = vshrl.u32 %v1860, 7
        %v1862 = vsub.s32 0, %v1861
        %v1863 = vrot.slane %v1858, %v1862
        %v1865 = vshrl.u32 %v1855, 16
        %v1866 = vpack.i.b16 %v1865, %v1865
        %v1868 = vlaneseq
        %v1869 = vshrl.u32 %v1868, 7
        %v1870 = vsub.s32 0, %v1869
        %v1871 = vrot.slane %v1866, %v1870
        %v1874 = vcombine.low %v1863, %v1871
        %v1876 = vunpack.c.l.s4 1983009808
        %v1877 = vunpack.c.0.s8 %v1876
        %v1878 = vlaneseq
        %v1879 = vshrl.u32 %v1878, 7
        %v1880 = vsub.s32 %v1877, %v1879
        %v1881 = vrot.slane %v1874, %v1880
        %1882 = vrot.lane.b32.xlu0 %v1881, 16
        %v1883 = vpop.permute.xlu0 %1882
        %v1884 = vrot.slane %v1883, 6
        %v1885 = vsel %vm1559, %v1884, %v1883
        %v1887 = vmul.bf16 %v1439, %v1885
        %v1889 = vcombine.low %v1887, %v1887
        %v1891 = vunpack.c.l.s4 1983009808
        %v1892 = vunpack.c.0.s8 %v1891
        %v1893 = vlaneseq
        %v1894 = vshrl.u32 %v1893, 7
        %v1895 = vsub.s32 %v1892, %v1894
        %v1896 = vrot.slane %v1889, %v1895
        %1897 = vrot.lane.b32.xlu0 %v1896, 112
        %v1898 = vpop.permute.xlu0 %1897
        %v1899 = vrot.slane %v1898, 4
        %v1900 = vsel %vm1543, %v1898, %v1899
        %vm1902 = vcmask 916486
        %vm1903 = vmor %vm1902, %vm1785
        %1904 = vst.msk [vmem:[#allocation2 + $0x18] sm:$0xcc] %vm1903, %v1900
        %v1905 = vld [vmem:[%s3] sm:$0xa]
        %v1908 = vunpack.c.l.s4 1983009808
        %v1909 = vunpack.c.0.s8 %v1908
        %v1910 = vlaneseq
        %v1911 = vshrl.u32 %v1910, 7
        %v1912 = vsub.s32 %v1909, %v1911
        %v1913 = vrot.slane %v1905, %v1912
        %v1914 = vcombine.high %v1913, %v1913
        %v1916 = vpack.i.b16 %v1913, %v1913
        %v1918 = vlaneseq
        %v1919 = vshrl.u32 %v1918, 7
        %v1920 = vsub.s32 1, %v1919
        %v1921 = vrot.slane %v1916, %v1920
        %v1923 = vpack.i.b16 %v1914, %v1914
        %v1925 = vlaneseq
        %v1926 = vshrl.u32 %v1925, 7
        %v1927 = vsub.s32 1, %v1926
        %v1928 = vrot.slane %v1923, %v1927
        %v1931 = vcombine.low %v1921, %v1928
        %v1933 = vunpack.c.l.s4 1983009808
        %v1934 = vunpack.c.0.s8 %v1933
        %v1935 = vlaneseq
        %v1936 = vshrl.u32 %v1935, 7
        %v1937 = vsub.s32 %v1934, %v1936
        %v1938 = vrot.slane %v1931, %v1937
        %1939 = vrot.lane.b32.xlu0 %v1938, 17
        %v1940 = vpop.permute.xlu0 %1939
        %v1941 = vrot.slane %v1940, 6
        %v1942 = vsel %vm1497, %v1941, %v1940
        %v1944 = vmul.bf16 %v1439, %v1942
        %v1947 = vunpack.c.l.s4 1983009808
        %v1948 = vunpack.c.0.s8 %v1947
        %v1949 = vlaneseq
        %v1950 = vshrl.u32 %v1949, 7
        %v1951 = vsub.s32 %v1948, %v1950
        %v1952 = vrot.slane %v1944, %v1951
        %1953 = vrot.lane.b32.xlu0 %v1952, 111
        %v1954 = vpop.permute.xlu0 %1953
        %v1955 = vrot.slane %v1954, 4
        %v1956 = vsel %vm1482, %v1954, %v1955
        %vm1958 = vcmask 906244
        %vm1959 = vmor %vm1958, %vm1842
        %1960 = vst.msk [vmem:[#allocation2 + $0x20] sm:$0x33] %vm1959, %v1956
        %v1961 = vld [vmem:[#allocation11] sm:$0xf]
        %v1962 = vld [vmem:[#allocation2] sm:$0xff]
        %v1963 = vld [vmem:[#allocation2 + $0x8] sm:$0xff]
        %v1964 = vld [vmem:[#allocation2 + $0x10] sm:$0xff]
        %v1965 = vld [vmem:[#allocation2 + $0x18] sm:$0xff]
        %v1966 = vld [vmem:[#allocation2 + $0x20] sm:$0x33]
        %v1967 = vld [vmem:[#allocation13] sm:$0xff]
        %1969 = vset.pattern.permute.xlu0 0
        %1970 = vperm.xlu0 %1969, %v1967
        %v1971 = vpop.permute.xlu0 %1970
        %v1978 = vunpack.c.l.b16 %v1962
        %v1979 = vunpack.c.h.b16 %v1962
        %v1980 = vunpack.c.l.b16 %v1963
        %v1981 = vunpack.c.h.b16 %v1963
        %v1982 = vunpack.c.l.b16 %v1964
        %v1983 = vunpack.c.h.b16 %v1964
        %v1984 = vunpack.c.l.b16 %v1965
        %v1985 = vunpack.c.h.b16 %v1965
        %v1986 = vunpack.c.l.b16 %v1966
        %v1987 = vunpack.c.h.b16 %v1966
        %v1988 = vpack.c.b16 %v1980, %v1978
        %v1989 = vpack.c.b16 %v1981, %v1979
        %v1990 = vpack.c.b16 %v1984, %v1982
        %v1991 = vpack.c.b16 %v1985, %v1983
        %v1992 = vpack.c.b16 %v1986, %v1986
        %v1993 = vpack.c.b16 %v1987, %v1987
        %vm1998 = vcmask 293888
        %v2000 = vsel %vm1998, %v1961, 0
        %v2003 = vsel %vm1842, %v1992, 0
        %v2006 = vsel %vm1842, %v1993, 0
        %2008 = vmatprep.subr.bf16.mxu0 0
        %2009 = vmatpush1.bf16.msra.mxu0 0
        %2010 = vmatprep.subr.bf16.mxu0 0
        %2011 = vmatpush1.bf16.msra.mxu0 0
        %2012 = vmatprep.subr.bf16.mxu0 0
        %2013 = vmatpush1.bf16.msra.mxu0 0
        %2014 = vmatprep.subr.bf16.mxu0 0
        %2015 = vmatpush1.bf16.msra.mxu0 0
        %2016 = vmatprep.subr.bf16.mxu0 0
        %2017 = vmatpush1.bf16.msra.mxu0 0
        %2018 = vmatprep.subr.bf16.mxu0 %v2006
        %2019 = vmatpush1.bf16.msra.mxu0 %v2003
        %2020 = vmatprep.subr.bf16.mxu0 %v1991
        %2021 = vmatpush1.bf16.msra.mxu0 %v1990
        %2022 = vmatprep.subr.bf16.mxu0 %v1989
        %2023 = vmatpush1.bf16.msra.mxu0 %v1988
        %2024 = vmatprep.subr.bf16.mxu0 0
        %2025 = vmatpush2.bf16.msra.mxu0 0
        %2026 = vmatprep.subr.bf16.mxu0 0
        %2027 = vmatpush2.bf16.msra.mxu0 0
        %2028 = vmatprep.subr.bf16.mxu0 0
        %2029 = vmatpush2.bf16.msra.mxu0 0
        %2030 = vmatprep.subr.bf16.mxu0 0
        %2031 = vmatpush2.bf16.msra.mxu0 0
        %2032 = vmatprep.subr.bf16.mxu0 0
        %2033 = vmatpush2.bf16.msra.mxu0 0
        %2034 = vmatprep.subr.bf16.mxu0 0
        %2035 = vmatpush2.bf16.msra.mxu0 0
        %2036 = vmatprep.subr.bf16.mxu0 0
        %2037 = vmatpush2.bf16.msra.mxu0 0
        %2038 = vmatprep.subr.bf16.mxu0 0
        %2039 = vmatpush2.bf16.msra.mxu0 0
        %2040 = vmatprep.mubr.bf16.mxu0 0
        %2041 = vmatmul.mubr.bf16.gmra.mxu0 %v2000
        %v2042 = vpop.f32.mrf.mxu0
        %v2043 = vadd.f32 %v1971, %v2042
        %v2044 = vpop.f32.mrf.mxu0
        %v2045 = vadd.f32 %v1971, %v2044
        %v2046 = vpop.f32.mrf.mxu0
        %v2047 = vpop.f32.mrf.mxu0
        %2048 = vdwg.mxu0
        %v2049 = vmax.f32 %v2043, 0.0
        %v2050 = vmax.f32 %v2045, 0.0
        %v2051 = vpack.c.bf16 %v2049, %v2049
        %v2052 = vpack.c.bf16 %v2050, %v2050
        %2053 = vst [vmem:[#allocation2] sm:$0xff] 0
        %2054 = vst [vmem:[#allocation2 + $0x8] sm:$0xff] 0
        %2055 = vst [vmem:[#allocation2 + $0x10] sm:$0xff] 0
        %2056 = vst [vmem:[#allocation2 + $0x18] sm:$0xff] 0
        %2057 = vst [vmem:[#allocation2 + $0x20] sm:$0xff] 0
        %2058 = vst [vmem:[#allocation2 + $0x28] sm:$0xff] 0
        %2059 = vst [vmem:[#allocation2 + $0x30] sm:$0xff] 0
        %2060 = vst [vmem:[#allocation2 + $0x38] sm:$0xff] 0
        %2061 = vst [vmem:[#allocation2 + $0x40] sm:$0xff] 0
        %v2062 = vld [vmem:[%s3] sm:$0x5]
        %v2065 = vunpack.c.l.s4 1983009808
        %v2066 = vunpack.c.0.s8 %v2065
        %v2067 = vlaneseq
        %v2068 = vshrl.u32 %v2067, 7
        %v2069 = vsub.s32 %v2066, %v2068
        %v2070 = vrot.slane %v2062, %v2069
        %v2071 = vcombine.high %v2070, %v2070
        %v2073 = vpack.i.b16 %v2070, %v2070
        %v2075 = vlaneseq
        %v2076 = vshrl.u32 %v2075, 7
        %v2077 = vsub.s32 0, %v2076
        %v2078 = vrot.slane %v2073, %v2077
        %v2080 = vpack.i.b16 %v2071, %v2071
        %v2082 = vlaneseq
        %v2083 = vshrl.u32 %v2082, 7
        %v2084 = vsub.s32 0, %v2083
        %v2085 = vrot.slane %v2080, %v2084
        %2088 = vrot.lane.b32.xlu0 %v2078, 111
        %v2089 = vpop.permute.xlu0 %2088
        %2090 = vrot.lane.b32.xlu0 %v2085, 111
        %v2091 = vpop.permute.xlu0 %2090
        %v2092 = vsel %vm1482, %v2089, %v2091
        %v2095 = vmul.bf16 %v2051, %v2092
        %v2096 = vmul.bf16 %v2052, %v2091
        %v2099 = vunpack.c.l.b16 %v2095
        %v2100 = vunpack.c.l.b16 %v2096
        %v2101 = vpack.c.b16 %v2100, %v2099
        %2102 = vrot.lane.b32.xlu0 %v2101, 17
        %v2103 = vpop.permute.xlu0 %2102
        %v2104 = vrot.slane %v2103, 4
        %v2105 = vsel %vm1497, %v2104, %v2103
        %vm2107 = vcmask 1043592
        %vm2108 = vcmask 1047556
        %vm2109 = vmor %vm2108, %vm2107
        %2110 = vst.msk [vmem:[#allocation2] sm:$0xff] %vm2109, %v2105
        %v2111 = vld [vmem:[%s3] sm:$0x5]
        %v2114 = vunpack.c.l.s4 1983009808
        %v2115 = vunpack.c.0.s8 %v2114
        %v2116 = vlaneseq
        %v2117 = vshrl.u32 %v2116, 7
        %v2118 = vsub.s32 %v2115, %v2117
        %v2119 = vrot.slane %v2111, %v2118
        %v2120 = vcombine.high %v2119, %v2119
        %v2122 = vshrl.u32 %v2119, 16
        %v2123 = vpack.i.b16 %v2122, %v2122
        %v2125 = vlaneseq
        %v2126 = vshrl.u32 %v2125, 7
        %v2127 = vsub.s32 0, %v2126
        %v2128 = vrot.slane %v2123, %v2127
        %v2130 = vshrl.u32 %v2120, 16
        %v2131 = vpack.i.b16 %v2130, %v2130
        %v2133 = vlaneseq
        %v2134 = vshrl.u32 %v2133, 7
        %v2135 = vsub.s32 0, %v2134
        %v2136 = vrot.slane %v2131, %v2135
        %2139 = vrot.lane.b32.xlu0 %v2128, 112
        %v2140 = vpop.permute.xlu0 %2139
        %2141 = vrot.lane.b32.xlu0 %v2136, 112
        %v2142 = vpop.permute.xlu0 %2141
        %v2143 = vsel %vm1543, %v2140, %v2142
        %v2146 = vmul.bf16 %v2051, %v2143
        %v2147 = vmul.bf16 %v2052, %v2142
        %v2150 = vunpack.c.l.b16 %v2146
        %v2151 = vunpack.c.l.b16 %v2147
        %v2152 = vpack.c.b16 %v2151, %v2150
        %2153 = vrot.lane.b32.xlu0 %v2152, 16
        %v2154 = vpop.permute.xlu0 %2153
        %v2155 = vrot.slane %v2154, 4
        %v2156 = vsel %vm1559, %v2155, %v2154
        %vm2158 = vcmask 1043584
        %vm2159 = vmor %vm2108, %vm2158
        %2160 = vst.msk [vmem:[#allocation2 + $0x8] sm:$0xff] %vm2159, %v2156
        %v2161 = vld [vmem:[%s3] sm:$0xa]
        %v2164 = vunpack.c.l.s4 1983009808
        %v2165 = vunpack.c.0.s8 %v2164
        %v2166 = vlaneseq
        %v2167 = vshrl.u32 %v2166, 7
        %v2168 = vsub.s32 %v2165, %v2167
        %v2169 = vrot.slane %v2161, %v2168
        %v2170 = vcombine.high %v2169, %v2169
        %v2172 = vpack.i.b16 %v2169, %v2169
        %v2174 = vlaneseq
        %v2175 = vshrl.u32 %v2174, 7
        %v2176 = vsub.s32 1, %v2175
        %v2177 = vrot.slane %v2172, %v2176
        %v2179 = vpack.i.b16 %v2170, %v2170
        %v2181 = vlaneseq
        %v2182 = vshrl.u32 %v2181, 7
        %v2183 = vsub.s32 1, %v2182
        %v2184 = vrot.slane %v2179, %v2183
        %2187 = vrot.lane.b32.xlu0 %v2177, 113
        %v2188 = vpop.permute.xlu0 %2187
        %2189 = vrot.lane.b32.xlu0 %v2184, 113
        %v2190 = vpop.permute.xlu0 %2189
        %v2191 = vsel %vm1603, %v2188, %v2190
        %v2194 = vmul.bf16 %v2051, %v2191
        %v2195 = vmul.bf16 %v2052, %v2190
        %v2198 = vunpack.c.l.b16 %v2194
        %v2199 = vunpack.c.l.b16 %v2195
        %v2200 = vpack.c.b16 %v2199, %v2198
        %2201 = vrot.lane.b32.xlu0 %v2200, 15
        %v2202 = vpop.permute.xlu0 %2201
        %v2203 = vrot.slane %v2202, 4
        %v2204 = vsel %vm1618, %v2203, %v2202
        %vm2206 = vcmask 1043576
        %vm2207 = vmor %vm2108, %vm2206
        %2208 = vst.msk [vmem:[#allocation2 + $0x10] sm:$0xff] %vm2207, %v2204
        %v2209 = vld [vmem:[%s3] sm:$0x5]
        %v2212 = vunpack.c.l.s4 1983009808
        %v2213 = vunpack.c.0.s8 %v2212
        %v2214 = vlaneseq
        %v2215 = vshrl.u32 %v2214, 7
        %v2216 = vsub.s32 %v2213, %v2215
        %v2217 = vrot.slane %v2209, %v2216
        %v2218 = vcombine.high %v2217, %v2217
        %v2220 = vpack.i.b16 %v2217, %v2217
        %v2222 = vlaneseq
        %v2223 = vshrl.u32 %v2222, 7
        %v2224 = vsub.s32 0, %v2223
        %v2225 = vrot.slane %v2220, %v2224
        %v2227 = vpack.i.b16 %v2218, %v2218
        %v2229 = vlaneseq
        %v2230 = vshrl.u32 %v2229, 7
        %v2231 = vsub.s32 0, %v2230
        %v2232 = vrot.slane %v2227, %v2231
        %2235 = vrot.lane.b32.xlu0 %v2225, 127
        %v2236 = vpop.permute.xlu0 %2235
        %2237 = vrot.lane.b32.xlu0 %v2232, 127
        %v2238 = vpop.permute.xlu0 %2237
        %v2239 = vsel %vm1661, %v2236, %v2238
        %v2242 = vmul.bf16 %v2051, %v2239
        %v2243 = vmul.bf16 %v2052, %v2238
        %v2246 = vunpack.c.l.b16 %v2242
        %v2247 = vunpack.c.l.b16 %v2243
        %v2248 = vpack.c.b16 %v2247, %v2246
        %2249 = vrot.lane.b32.xlu0 %v2248, 1
        %v2250 = vpop.permute.xlu0 %2249
        %v2251 = vrot.slane %v2250, 4
        %v2252 = vsel %vm1677, %v2251, %v2250
        %vm2254 = vcmask 1043464
        %vm2255 = vmor %vm2108, %vm2254
        %2256 = vst.msk [vmem:[#allocation2 + $0x18] sm:$0xff] %vm2255, %v2252
        %v2257 = vld [vmem:[%s3] sm:$0x5]
        %v2260 = vunpack.c.l.s4 1983009808
        %v2261 = vunpack.c.0.s8 %v2260
        %v2262 = vlaneseq
        %v2263 = vshrl.u32 %v2262, 7
        %v2264 = vsub.s32 %v2261, %v2263
        %v2265 = vrot.slane %v2257, %v2264
        %v2266 = vcombine.high %v2265, %v2265
        %v2268 = vshrl.u32 %v2265, 16
        %v2269 = vpack.i.b16 %v2268, %v2268
        %v2271 = vlaneseq
        %v2272 = vshrl.u32 %v2271, 7
        %v2273 = vsub.s32 0, %v2272
        %v2274 = vrot.slane %v2269, %v2273
        %v2276 = vshrl.u32 %v2266, 16
        %v2277 = vpack.i.b16 %v2276, %v2276
        %v2279 = vlaneseq
        %v2280 = vshrl.u32 %v2279, 7
        %v2281 = vsub.s32 0, %v2280
        %v2282 = vrot.slane %v2277, %v2281
        %v2283 = vmul.bf16 %v2051, %v2274
        %v2284 = vmul.bf16 %v2052, %v2282
        %v2287 = vunpack.c.l.b16 %v2283
        %v2288 = vunpack.c.l.b16 %v2284
        %v2289 = vpack.c.b16 %v2288, %v2287
        %2291 = vst [vmem:[#allocation2 + $0x20] sm:$0xff] %v2289
        %v2292 = vld [vmem:[%s3] sm:$0xa]
        %v2295 = vunpack.c.l.s4 1983009808
        %v2296 = vunpack.c.0.s8 %v2295
        %v2297 = vlaneseq
        %v2298 = vshrl.u32 %v2297, 7
        %v2299 = vsub.s32 %v2296, %v2298
        %v2300 = vrot.slane %v2292, %v2299
        %v2301 = vcombine.high %v2300, %v2300
        %v2303 = vpack.i.b16 %v2300, %v2300
        %v2305 = vlaneseq
        %v2306 = vshrl.u32 %v2305, 7
        %v2307 = vsub.s32 1, %v2306
        %v2308 = vrot.slane %v2303, %v2307
        %v2310 = vpack.i.b16 %v2301, %v2301
        %v2312 = vlaneseq
        %v2313 = vshrl.u32 %v2312, 7
        %v2314 = vsub.s32 1, %v2313
        %v2315 = vrot.slane %v2310, %v2314
        %2318 = vrot.lane.b32.xlu0 %v2308, 1
        %v2319 = vpop.permute.xlu0 %2318
        %2320 = vrot.lane.b32.xlu0 %v2315, 1
        %v2321 = vpop.permute.xlu0 %2320
        %v2322 = vsel %vm1677, %v2319, %v2321
        %v2325 = vmul.bf16 %v2051, %v2319
        %v2326 = vmul.bf16 %v2052, %v2322
        %v2329 = vunpack.c.l.b16 %v2325
        %v2330 = vunpack.c.l.b16 %v2326
        %v2331 = vpack.c.b16 %v2330, %v2329
        %2332 = vrot.lane.b32.xlu0 %v2331, 127
        %v2333 = vpop.permute.xlu0 %2332
        %v2334 = vrot.slane %v2333, 4
        %v2335 = vsel %vm1661, %v2333, %v2334
        %vm2337 = vcmask 1043456
        %vm2338 = vcmask 1039364
        %vm2339 = vmor %vm2338, %vm2337
        %2340 = vst.msk [vmem:[#allocation2 + $0x28] sm:$0xff] %vm2339, %v2335
        %v2341 = vld [vmem:[%s3] sm:$0x5]
        %v2344 = vunpack.c.l.s4 1983009808
        %v2345 = vunpack.c.0.s8 %v2344
        %v2346 = vlaneseq
        %v2347 = vshrl.u32 %v2346, 7
        %v2348 = vsub.s32 %v2345, %v2347
        %v2349 = vrot.slane %v2341, %v2348
        %v2350 = vcombine.high %v2349, %v2349
        %v2352 = vpack.i.b16 %v2349, %v2349
        %v2354 = vlaneseq
        %v2355 = vshrl.u32 %v2354, 7
        %v2356 = vsub.s32 0, %v2355
        %v2357 = vrot.slane %v2352, %v2356
        %v2359 = vpack.i.b16 %v2350, %v2350
        %v2361 = vlaneseq
        %v2362 = vshrl.u32 %v2361, 7
        %v2363 = vsub.s32 0, %v2362
        %v2364 = vrot.slane %v2359, %v2363
        %2367 = vrot.lane.b32.xlu0 %v2357, 15
        %v2368 = vpop.permute.xlu0 %2367
        %2369 = vrot.lane.b32.xlu0 %v2364, 15
        %v2370 = vpop.permute.xlu0 %2369
        %v2371 = vsel %vm1618, %v2368, %v2370
        %v2374 = vmul.bf16 %v2051, %v2368
        %v2375 = vmul.bf16 %v2052, %v2371
        %v2378 = vunpack.c.l.b16 %v2374
        %v2379 = vunpack.c.l.b16 %v2375
        %v2380 = vpack.c.b16 %v2379, %v2378
        %2381 = vrot.lane.b32.xlu0 %v2380, 113
        %v2382 = vpop.permute.xlu0 %2381
        %v2383 = vrot.slane %v2382, 4
        %v2384 = vsel %vm1603, %v2382, %v2383
        %vm2386 = vcmask 924676
        %vm2387 = vmor %vm2386, %vm2337
        %2388 = vst.msk [vmem:[#allocation2 + $0x30] sm:$0xff] %vm2387, %v2384
        %v2389 = vld [vmem:[%s3] sm:$0x5]
        %v2392 = vunpack.c.l.s4 1983009808
        %v2393 = vunpack.c.0.s8 %v2392
        %v2394 = vlaneseq
        %v2395 = vshrl.u32 %v2394, 7
        %v2396 = vsub.s32 %v2393, %v2395
        %v2397 = vrot.slane %v2389, %v2396
        %v2398 = vcombine.high %v2397, %v2397
        %v2400 = vshrl.u32 %v2397, 16
        %v2401 = vpack.i.b16 %v2400, %v2400
        %v2403 = vlaneseq
        %v2404 = vshrl.u32 %v2403, 7
        %v2405 = vsub.s32 0, %v2404
        %v2406 = vrot.slane %v2401, %v2405
        %v2408 = vshrl.u32 %v2398, 16
        %v2409 = vpack.i.b16 %v2408, %v2408
        %v2411 = vlaneseq
        %v2412 = vshrl.u32 %v2411, 7
        %v2413 = vsub.s32 0, %v2412
        %v2414 = vrot.slane %v2409, %v2413
        %2417 = vrot.lane.b32.xlu0 %v2406, 16
        %v2418 = vpop.permute.xlu0 %2417
        %2419 = vrot.lane.b32.xlu0 %v2414, 16
        %v2420 = vpop.permute.xlu0 %2419
        %v2421 = vsel %vm1559, %v2418, %v2420
        %v2424 = vmul.bf16 %v2051, %v2418
        %v2425 = vmul.bf16 %v2052, %v2421
        %v2428 = vunpack.c.l.b16 %v2424
        %v2429 = vunpack.c.l.b16 %v2425
        %v2430 = vpack.c.b16 %v2429, %v2428
        %2431 = vrot.lane.b32.xlu0 %v2430, 112
        %v2432 = vpop.permute.xlu0 %2431
        %v2433 = vrot.slane %v2432, 4
        %v2434 = vsel %vm1543, %v2432, %v2433
        %vm2436 = vcmask 916484
        %vm2437 = vmor %vm2436, %vm2337
        %2438 = vst.msk [vmem:[#allocation2 + $0x38] sm:$0xff] %vm2437, %v2434
        %v2439 = vld [vmem:[%s3] sm:$0xa]
        %v2442 = vunpack.c.l.s4 1983009808
        %v2443 = vunpack.c.0.s8 %v2442
        %v2444 = vlaneseq
        %v2445 = vshrl.u32 %v2444, 7
        %v2446 = vsub.s32 %v2443, %v2445
        %v2447 = vrot.slane %v2439, %v2446
        %v2448 = vcombine.high %v2447, %v2447
        %v2450 = vpack.i.b16 %v2447, %v2447
        %v2452 = vlaneseq
        %v2453 = vshrl.u32 %v2452, 7
        %v2454 = vsub.s32 1, %v2453
        %v2455 = vrot.slane %v2450, %v2454
        %v2457 = vpack.i.b16 %v2448, %v2448
        %v2459 = vlaneseq
        %v2460 = vshrl.u32 %v2459, 7
        %v2461 = vsub.s32 1, %v2460
        %v2462 = vrot.slane %v2457, %v2461
        %2465 = vrot.lane.b32.xlu0 %v2455, 17
        %v2466 = vpop.permute.xlu0 %2465
        %2467 = vrot.lane.b32.xlu0 %v2462, 17
        %v2468 = vpop.permute.xlu0 %2467
        %v2469 = vsel %vm1497, %v2466, %v2468
        %v2472 = vmul.bf16 %v2051, %v2466
        %v2473 = vmul.bf16 %v2052, %v2469
        %v2476 = vunpack.c.l.b16 %v2472
        %v2477 = vunpack.c.l.b16 %v2473
        %v2478 = vpack.c.b16 %v2477, %v2476
        %2479 = vrot.lane.b32.xlu0 %v2478, 111
        %v2480 = vpop.permute.xlu0 %2479
        %v2481 = vrot.slane %v2480, 4
        %v2482 = vsel %vm1482, %v2480, %v2481
        %vm2484 = vcmask 908292
        %vm2485 = vmor %vm2484, %vm2337
        %2486 = vst.msk [vmem:[#allocation2 + $0x40] sm:$0xff] %vm2485, %v2482
        %v2487 = vld [vmem:[#allocation14] sm:$0xf]
        %v2488 = vld [vmem:[#allocation2] sm:$0xff]
        %v2489 = vld [vmem:[#allocation2 + $0x8] sm:$0xff]
        %v2490 = vld [vmem:[#allocation2 + $0x10] sm:$0xff]
        %v2491 = vld [vmem:[#allocation2 + $0x18] sm:$0xff]
        %v2492 = vld [vmem:[#allocation2 + $0x20] sm:$0xff]
        %v2493 = vld [vmem:[#allocation2 + $0x28] sm:$0xff]
        %v2494 = vld [vmem:[#allocation2 + $0x30] sm:$0xff]
        %v2495 = vld [vmem:[#allocation2 + $0x38] sm:$0xff]
        %v2496 = vld [vmem:[#allocation2 + $0x40] sm:$0xff]
        %v2497 = vld [vmem:[#allocation16] sm:$0xff]
        %2499 = vset.pattern.permute.xlu0 0
        %2500 = vperm.xlu0 %2499, %v2497
        %v2501 = vpop.permute.xlu0 %2500
        %v2512 = vunpack.c.l.b16 %v2488
        %v2513 = vunpack.c.h.b16 %v2488
        %v2514 = vunpack.c.l.b16 %v2489
        %v2515 = vunpack.c.h.b16 %v2489
        %v2516 = vunpack.c.l.b16 %v2490
        %v2517 = vunpack.c.h.b16 %v2490
        %v2518 = vunpack.c.l.b16 %v2491
        %v2519 = vunpack.c.h.b16 %v2491
        %v2520 = vunpack.c.l.b16 %v2492
        %v2521 = vunpack.c.h.b16 %v2492
        %v2522 = vunpack.c.l.b16 %v2493
        %v2523 = vunpack.c.h.b16 %v2493
        %v2524 = vunpack.c.l.b16 %v2494
        %v2525 = vunpack.c.h.b16 %v2494
        %v2526 = vunpack.c.l.b16 %v2495
        %v2527 = vunpack.c.h.b16 %v2495
        %v2528 = vunpack.c.l.b16 %v2496
        %v2529 = vunpack.c.h.b16 %v2496
        %v2530 = vpack.c.b16 %v2514, %v2512
        %v2531 = vpack.c.b16 %v2515, %v2513
        %v2532 = vpack.c.b16 %v2518, %v2516
        %v2533 = vpack.c.b16 %v2519, %v2517
        %v2534 = vpack.c.b16 %v2522, %v2520
        %v2535 = vpack.c.b16 %v2523, %v2521
        %v2536 = vpack.c.b16 %v2526, %v2524
        %v2537 = vpack.c.b16 %v2527, %v2525
        %v2538 = vpack.c.b16 %v2528, %v2528
        %v2539 = vpack.c.b16 %v2529, %v2529
        %vm2548 = vcmask 588800
        %v2550 = vsel %vm2548, %v2487, 0
        %v2553 = vsel %vm2337, %v2538, 0
        %v2556 = vsel %vm2337, %v2539, 0
        %2558 = vmatprep.subr.bf16.mxu0 0
        %2559 = vmatpush1.bf16.msra.mxu0 0
        %2560 = vmatprep.subr.bf16.mxu0 0
        %2561 = vmatpush1.bf16.msra.mxu0 0
        %2562 = vmatprep.subr.bf16.mxu0 0
        %2563 = vmatpush1.bf16.msra.mxu0 0
        %2564 = vmatprep.subr.bf16.mxu0 %v2556
        %2565 = vmatpush1.bf16.msra.mxu0 %v2553
        %2566 = vmatprep.subr.bf16.mxu0 %v2537
        %2567 = vmatpush1.bf16.msra.mxu0 %v2536
        %2568 = vmatprep.subr.bf16.mxu0 %v2535
        %2569 = vmatpush1.bf16.msra.mxu0 %v2534
        %2570 = vmatprep.subr.bf16.mxu0 %v2533
        %2571 = vmatpush1.bf16.msra.mxu0 %v2532
        %2572 = vmatprep.subr.bf16.mxu0 %v2531
        %2573 = vmatpush1.bf16.msra.mxu0 %v2530
        %2574 = vmatprep.subr.bf16.mxu0 0
        %2575 = vmatpush2.bf16.msra.mxu0 0
        %2576 = vmatprep.subr.bf16.mxu0 0
        %2577 = vmatpush2.bf16.msra.mxu0 0
        %2578 = vmatprep.subr.bf16.mxu0 0
        %2579 = vmatpush2.bf16.msra.mxu0 0
        %2580 = vmatprep.subr.bf16.mxu0 0
        %2581 = vmatpush2.bf16.msra.mxu0 0
        %2582 = vmatprep.subr.bf16.mxu0 0
        %2583 = vmatpush2.bf16.msra.mxu0 0
        %2584 = vmatprep.subr.bf16.mxu0 0
        %2585 = vmatpush2.bf16.msra.mxu0 0
        %2586 = vmatprep.subr.bf16.mxu0 0
        %2587 = vmatpush2.bf16.msra.mxu0 0
        %2588 = vmatprep.subr.bf16.mxu0 0
        %2589 = vmatpush2.bf16.msra.mxu0 0
        %2590 = vmatprep.mubr.bf16.mxu0 0
        %2591 = vmatmul.mubr.bf16.gmra.mxu0 %v2550
        %v2592 = vpop.f32.mrf.mxu0
        %v2593 = vadd.f32 %v2501, %v2592
        %v2594 = vpop.f32.mrf.mxu0
        %v2595 = vadd.f32 %v2501, %v2594
        %v2596 = vpop.f32.mrf.mxu0
        %v2597 = vpop.f32.mrf.mxu0
        %2598 = vdwg.mxu0
        %v2599 = vmax.f32 %v2593, 0.0
        %v2600 = vmax.f32 %v2595, 0.0
        %v2601 = vpack.c.bf16 %v2599, %v2599
        %v2602 = vpack.c.bf16 %v2600, %v2600
        %2605 = vrot.lane.b32.xlu0 %v2601, 127
        %v2606 = vpop.permute.xlu0 %2605
        %2607 = vrot.lane.b32.xlu0 %v2602, 127
        %v2608 = vpop.permute.xlu0 %2607
        %v2609 = vsel %vm1661, %v2606, %v2608
        %v2612 = vmax.bf16 %v2601, %v2609
        %v2613 = vmax.bf16 %v2602, %v2608
        %2616 = vrot.lane.b32.xlu0 %v2612, 112
        %v2617 = vpop.permute.xlu0 %2616
        %2618 = vrot.lane.b32.xlu0 %v2613, 112
        %v2619 = vpop.permute.xlu0 %2618
        %v2620 = vsel %vm1543, %v2617, %v2619
        %v2623 = vmax.bf16 %v2612, %v2620
        %v2624 = vmax.bf16 %v2613, %v2619
        %v2625 = vld [vmem:[#allocation7] sm:$0xf]
        %v2626 = vld [vmem:[#allocation7 + $0x4] sm:$0xf]
        %v2627 = vld [vmem:[#allocation7 + $0x8] sm:$0xf]
        %v2628 = vld [vmem:[#allocation7 + $0xc] sm:$0xf]
        %v2629 = vld [vmem:[#allocation7 + $0x10] sm:$0xf]
        %v2630 = vld [vmem:[#allocation7 + $0x14] sm:$0xf]
        %v2631 = vld [vmem:[#allocation7 + $0x18] sm:$0xf]
        %v2632 = vld [vmem:[#allocation7 + $0x1c] sm:$0xf]
        %v2633 = vld [vmem:[#allocation7 + $0x20] sm:$0xf]
        %v2634 = vld [vmem:[#allocation7 + $0x24] sm:$0xf]
        %v2635 = vld [vmem:[#allocation7 + $0x28] sm:$0xf]
        %v2636 = vld [vmem:[#allocation7 + $0x2c] sm:$0xf]
        %v2637 = vld [vmem:[#allocation7 + $0x30] sm:$0xf]
        %v2638 = vld [vmem:[#allocation7 + $0x34] sm:$0xf]
        %v2639 = vld [vmem:[#allocation7 + $0x38] sm:$0xf]
        %v2640 = vld [vmem:[#allocation7 + $0x3c] sm:$0xf]
        %v2641 = vld [vmem:[#allocation7 + $0x40] sm:$0xf]
        %v2642 = vld [vmem:[#allocation7 + $0x44] sm:$0xf]
        %v2643 = vld [vmem:[#allocation7 + $0x48] sm:$0xf]
        %v2644 = vld [vmem:[#allocation7 + $0x4c] sm:$0xf]
        %v2645 = vld [vmem:[#allocation7 + $0x50] sm:$0xf]
        %v2646 = vld [vmem:[#allocation7 + $0x54] sm:$0xf]
        %v2647 = vld [vmem:[#allocation7 + $0x58] sm:$0xf]
        %v2648 = vld [vmem:[#allocation7 + $0x5c] sm:$0xf]
        %v2649 = vld [vmem:[#allocation7 + $0x60] sm:$0xf]
        %v2650 = vld [vmem:[#allocation7 + $0x64] sm:$0xf]
        %v2651 = vld [vmem:[#allocation7 + $0x68] sm:$0xf]
        %v2652 = vld [vmem:[#allocation7 + $0x6c] sm:$0xf]
        %v2653 = vld [vmem:[#allocation7 + $0x70] sm:$0xf]
        %v2654 = vld [vmem:[#allocation7 + $0x74] sm:$0xf]
        %v2685 = vunpack.c.l.b16 %v2625
        %v2686 = vunpack.c.l.b16 %v2626
        %v2687 = vunpack.c.l.b16 %v2627
        %v2688 = vunpack.c.l.b16 %v2628
        %v2689 = vunpack.c.l.b16 %v2629
        %v2690 = vunpack.c.l.b16 %v2630
        %v2691 = vunpack.c.l.b16 %v2631
        %v2692 = vunpack.c.l.b16 %v2632
        %v2693 = vunpack.c.l.b16 %v2633
        %v2694 = vunpack.c.l.b16 %v2634
        %v2695 = vunpack.c.l.b16 %v2635
        %v2696 = vunpack.c.l.b16 %v2636
        %v2697 = vunpack.c.l.b16 %v2637
        %v2698 = vunpack.c.l.b16 %v2638
        %v2699 = vunpack.c.l.b16 %v2639
        %v2700 = vunpack.c.l.b16 %v2640
        %v2701 = vunpack.c.l.b16 %v2641
        %v2702 = vunpack.c.l.b16 %v2642
        %v2703 = vunpack.c.l.b16 %v2643
        %v2704 = vunpack.c.l.b16 %v2644
        %v2705 = vunpack.c.l.b16 %v2645
        %v2706 = vunpack.c.l.b16 %v2646
        %v2707 = vunpack.c.l.b16 %v2647
        %v2708 = vunpack.c.l.b16 %v2648
        %v2709 = vunpack.c.l.b16 %v2649
        %v2710 = vunpack.c.l.b16 %v2650
        %v2711 = vunpack.c.l.b16 %v2651
        %v2712 = vunpack.c.l.b16 %v2652
        %v2713 = vunpack.c.l.b16 %v2653
        %v2714 = vunpack.c.l.b16 %v2654
        %v2715 = vpack.c.b16 %v2686, %v2685
        %v2716 = vpack.c.b16 %v2688, %v2687
        %v2717 = vpack.c.b16 %v2690, %v2689
        %v2718 = vpack.c.b16 %v2692, %v2691
        %v2719 = vpack.c.b16 %v2694, %v2693
        %v2720 = vpack.c.b16 %v2696, %v2695
        %v2721 = vpack.c.b16 %v2698, %v2697
        %v2722 = vpack.c.b16 %v2700, %v2699
        %v2723 = vpack.c.b16 %v2702, %v2701
        %v2724 = vpack.c.b16 %v2704, %v2703
        %v2725 = vpack.c.b16 %v2706, %v2705
        %v2726 = vpack.c.b16 %v2708, %v2707
        %v2727 = vpack.c.b16 %v2710, %v2709
        %v2728 = vpack.c.b16 %v2712, %v2711
        %v2729 = vpack.c.b16 %v2714, %v2713
        %vm2744 = vcmask 908288
        %v2746 = vsel %vm2744, %v2624, 0
        %vm2748 = vcmask 1046528
        %vm2749 = vcmask 1047552
        %v2750 = vsel %vm2748, 4294967295, 65535
        %v2751 = vsel %vm2749, %v2750, 0
        %v2753 = vand.u32 %v2729, %v2751
        %2755 = vmatprep.subr.bf16.mxu0 0
        %2756 = vmatpush1.bf16.msra.mxu0 %v2722
        %2757 = vmatprep.subr.bf16.mxu0 0
        %2758 = vmatpush1.bf16.msra.mxu0 %v2721
        %2759 = vmatprep.subr.bf16.mxu0 0
        %2760 = vmatpush1.bf16.msra.mxu0 %v2720
        %2761 = vmatprep.subr.bf16.mxu0 0
        %2762 = vmatpush1.bf16.msra.mxu0 %v2719
        %2763 = vmatprep.subr.bf16.mxu0 0
        %2764 = vmatpush1.bf16.msra.mxu0 %v2718
        %2765 = vmatprep.subr.bf16.mxu0 0
        %2766 = vmatpush1.bf16.msra.mxu0 %v2717
        %2767 = vmatprep.subr.bf16.mxu0 0
        %2768 = vmatpush1.bf16.msra.mxu0 %v2716
        %2769 = vmatprep.subr.bf16.mxu0 0
        %2770 = vmatpush1.bf16.msra.mxu0 %v2715
        %2771 = vmatprep.subr.bf16.mxu0 0
        %2772 = vmatpush2.bf16.msra.mxu0 0
        %2773 = vmatprep.subr.bf16.mxu0 0
        %2774 = vmatpush2.bf16.msra.mxu0 %v2753
        %2775 = vmatprep.subr.bf16.mxu0 0
        %2776 = vmatpush2.bf16.msra.mxu0 %v2728
        %2777 = vmatprep.subr.bf16.mxu0 0
        %2778 = vmatpush2.bf16.msra.mxu0 %v2727
        %2779 = vmatprep.subr.bf16.mxu0 0
        %2780 = vmatpush2.bf16.msra.mxu0 %v2726
        %2781 = vmatprep.subr.bf16.mxu0 0
        %2782 = vmatpush2.bf16.msra.mxu0 %v2725
        %2783 = vmatprep.subr.bf16.mxu0 0
        %2784 = vmatpush2.bf16.msra.mxu0 %v2724
        %2785 = vmatprep.subr.bf16.mxu0 0
        %2786 = vmatpush2.bf16.msra.mxu0 %v2723
        %2787 = vmatprep.mubr.bf16.mxu0 %v2746
        %2788 = vmatmul.mubr.bf16.gmra.mxu0 %v2623
        %v2789 = vpop.f32.mrf.mxu0
        %v2790 = vadd.f32 0.0, %v2789
        %v2791 = vpop.f32.mrf.mxu0
        %v2792 = vpop.f32.mrf.mxu0
        %v2793 = vpop.f32.mrf.mxu0
        %2794 = vdwg.mxu0
        %v2795 = vpack.c.bf16 %v2790, %v2790
        %vm2796 = vcmask 519168
        %2797 = vst.msk [vmem:[#allocation2] sm:$0xf] %vm2796, 0
        %2798 = vst.msk [vmem:[#allocation2 + $0x8] sm:$0xf] %vm2796, 0
        %2799 = vst.msk [vmem:[#allocation2 + $0x10] sm:$0xf] %vm2796, 0
        %2800 = vst.msk [vmem:[#allocation2 + $0x18] sm:$0xf] %vm2796, 0
        %2801 = vst.msk [vmem:[#allocation2 + $0x20] sm:$0xf] %vm2796, 0
        %2802 = vst.msk [vmem:[#allocation2 + $0x28] sm:$0xf] %vm2796, 0
        %2803 = vst.msk [vmem:[#allocation2 + $0x30] sm:$0xf] %vm2796, 0
        %2804 = vst.msk [vmem:[#allocation2 + $0x38] sm:$0xf] %vm2796, 0
        %2805 = vst.msk [vmem:[#allocation2 + $0x40] sm:$0xf] %vm2796, 0
        %v2806 = vld [vmem:[#allocation3] sm:$0x1]
        %v2808 = vpack.i.b16 %v2806, %v2806
        %v2810 = vlaneseq
        %v2811 = vshrl.u32 %v2810, 7
        %v2812 = vsub.s32 0, %v2811
        %v2813 = vrot.slane %v2808, %v2812
        %2815 = vrot.lane.b32.xlu0 %v2813, 119
        %v2816 = vpop.permute.xlu0 %2815
        %v2818 = vmul.bf16 %v2795, %v2816
        %v2820 = vunpack.c.l.b16 %v2818
        %v2821 = vpack.c.b16 %v2820, %v2820
        %2822 = vrot.lane.b32.xlu0 %v2821, 9
        %v2823 = vpop.permute.xlu0 %2822
        %vm2825 = vcmask 519240
        %2826 = vst.msk [vmem:[#allocation2] sm:$0xf] %vm2825, %v2823
        %v2827 = vld [vmem:[#allocation3] sm:$0x1]
        %v2829 = vshrl.u32 %v2827, 16
        %v2830 = vpack.i.b16 %v2829, %v2829
        %v2832 = vlaneseq
        %v2833 = vshrl.u32 %v2832, 7
        %v2834 = vsub.s32 0, %v2833
        %v2835 = vrot.slane %v2830, %v2834
        %2837 = vrot.lane.b32.xlu0 %v2835, 120
        %v2838 = vpop.permute.xlu0 %2837
        %v2840 = vmul.bf16 %v2795, %v2838
        %v2842 = vunpack.c.l.b16 %v2840
        %v2843 = vpack.c.b16 %v2842, %v2842
        %2844 = vrot.lane.b32.xlu0 %v2843, 8
        %v2845 = vpop.permute.xlu0 %2844
        %vm2847 = vcmask 519232
        %2848 = vst.msk [vmem:[#allocation2 + $0x8] sm:$0xf] %vm2847, %v2845
        %v2849 = vld [vmem:[#allocation3] sm:$0x2]
        %v2851 = vpack.i.b16 %v2849, %v2849
        %v2853 = vlaneseq
        %v2854 = vshrl.u32 %v2853, 7
        %v2855 = vsub.s32 1, %v2854
        %v2856 = vrot.slane %v2851, %v2855
        %2858 = vrot.lane.b32.xlu0 %v2856, 121
        %v2859 = vpop.permute.xlu0 %2858
        %v2861 = vmul.bf16 %v2795, %v2859
        %v2863 = vunpack.c.l.b16 %v2861
        %v2864 = vpack.c.b16 %v2863, %v2863
        %2865 = vrot.lane.b32.xlu0 %v2864, 7
        %v2866 = vpop.permute.xlu0 %2865
        %vm2868 = vcmask 519224
        %2869 = vst.msk [vmem:[#allocation2 + $0x10] sm:$0xf] %vm2868, %v2866
        %v2870 = vld [vmem:[#allocation3] sm:$0x1]
        %v2872 = vpack.i.b16 %v2870, %v2870
        %v2874 = vlaneseq
        %v2875 = vshrl.u32 %v2874, 7
        %v2876 = vsub.s32 0, %v2875
        %v2877 = vrot.slane %v2872, %v2876
        %2879 = vrot.lane.b32.xlu0 %v2877, 127
        %v2880 = vpop.permute.xlu0 %2879
        %v2882 = vmul.bf16 %v2795, %v2880
        %v2884 = vunpack.c.l.b16 %v2882
        %v2885 = vpack.c.b16 %v2884, %v2884
        %2886 = vrot.lane.b32.xlu0 %v2885, 1
        %v2887 = vpop.permute.xlu0 %2886
        %vm2889 = vcmask 519176
        %2890 = vst.msk [vmem:[#allocation2 + $0x18] sm:$0xf] %vm2889, %v2887
        %v2891 = vld [vmem:[#allocation3] sm:$0x1]
        %v2893 = vshrl.u32 %v2891, 16
        %v2894 = vpack.i.b16 %v2893, %v2893
        %v2896 = vlaneseq
        %v2897 = vshrl.u32 %v2896, 7
        %v2898 = vsub.s32 0, %v2897
        %v2899 = vrot.slane %v2894, %v2898
        %v2900 = vmul.bf16 %v2795, %v2899
        %2901 = vst.msk [vmem:[#allocation2 + $0x20] sm:$0xf] %vm2796, %v2900
        %v2902 = vld [vmem:[#allocation3] sm:$0x2]
        %v2904 = vpack.i.b16 %v2902, %v2902
        %v2906 = vlaneseq
        %v2907 = vshrl.u32 %v2906, 7
        %v2908 = vsub.s32 1, %v2907
        %v2909 = vrot.slane %v2904, %v2908
        %2911 = vrot.lane.b32.xlu0 %v2909, 1
        %v2912 = vpop.permute.xlu0 %2911
        %v2914 = vmul.bf16 %v2795, %v2912
        %v2916 = vunpack.c.l.b16 %v2914
        %v2917 = vpack.c.b16 %v2916, %v2916
        %2918 = vrot.lane.b32.xlu0 %v2917, 127
        %v2919 = vpop.permute.xlu0 %2918
        %vm2921 = vcmask 510976
        %2922 = vst.msk [vmem:[#allocation2 + $0x28] sm:$0xf] %vm2921, %v2919
        %v2923 = vld [vmem:[#allocation3] sm:$0x1]
        %v2925 = vpack.i.b16 %v2923, %v2923
        %v2927 = vlaneseq
        %v2928 = vshrl.u32 %v2927, 7
        %v2929 = vsub.s32 0, %v2928
        %v2930 = vrot.slane %v2925, %v2929
        %2932 = vrot.lane.b32.xlu0 %v2930, 7
        %v2933 = vpop.permute.xlu0 %2932
        %v2935 = vmul.bf16 %v2795, %v2933
        %v2937 = vunpack.c.l.b16 %v2935
        %v2938 = vpack.c.b16 %v2937, %v2937
        %2939 = vrot.lane.b32.xlu0 %v2938, 121
        %v2940 = vpop.permute.xlu0 %2939
        %vm2942 = vcmask 461824
        %2943 = vst.msk [vmem:[#allocation2 + $0x30] sm:$0xf] %vm2942, %v2940
        %v2944 = vld [vmem:[#allocation3] sm:$0x1]
        %v2946 = vshrl.u32 %v2944, 16
        %v2947 = vpack.i.b16 %v2946, %v2946
        %v2949 = vlaneseq
        %v2950 = vshrl.u32 %v2949, 7
        %v2951 = vsub.s32 0, %v2950
        %v2952 = vrot.slane %v2947, %v2951
        %2954 = vrot.lane.b32.xlu0 %v2952, 8
        %v2955 = vpop.permute.xlu0 %2954
        %v2957 = vmul.bf16 %v2795, %v2955
        %v2959 = vunpack.c.l.b16 %v2957
        %v2960 = vpack.c.b16 %v2959, %v2959
        %2961 = vrot.lane.b32.xlu0 %v2960, 120
        %v2962 = vpop.permute.xlu0 %2961
        %vm2964 = vcmask 453632
        %2965 = vst.msk [vmem:[#allocation2 + $0x38] sm:$0xf] %vm2964, %v2962
        %v2966 = vld [vmem:[#allocation3] sm:$0x2]
        %v2968 = vpack.i.b16 %v2966, %v2966
        %v2970 = vlaneseq
        %v2971 = vshrl.u32 %v2970, 7
        %v2972 = vsub.s32 1, %v2971
        %v2973 = vrot.slane %v2968, %v2972
        %2975 = vrot.lane.b32.xlu0 %v2973, 9
        %v2976 = vpop.permute.xlu0 %2975
        %v2978 = vmul.bf16 %v2795, %v2976
        %v2980 = vunpack.c.l.b16 %v2978
        %v2981 = vpack.c.b16 %v2980, %v2980
        %2982 = vrot.lane.b32.xlu0 %v2981, 119
        %v2983 = vpop.permute.xlu0 %2982
        %vm2985 = vcmask 445440
        %2986 = vst.msk [vmem:[#allocation2 + $0x40] sm:$0xf] %vm2985, %v2983
        %v2987 = vld [vmem:[#allocation17] sm:$0xf]
        %v2988 = vld [vmem:[#allocation17 + $0x4] sm:$0xf]
        %v2989 = vld [vmem:[#allocation2] sm:$0xf]
        %v2990 = vld [vmem:[#allocation2 + $0x8] sm:$0xf]
        %v2991 = vld [vmem:[#allocation2 + $0x10] sm:$0xf]
        %v2992 = vld [vmem:[#allocation2 + $0x18] sm:$0xf]
        %v2993 = vld [vmem:[#allocation2 + $0x20] sm:$0xf]
        %v2994 = vld [vmem:[#allocation2 + $0x28] sm:$0xf]
        %v2995 = vld [vmem:[#allocation2 + $0x30] sm:$0xf]
        %v2996 = vld [vmem:[#allocation2 + $0x38] sm:$0xf]
        %v2997 = vld [vmem:[#allocation2 + $0x40] sm:$0xf]
        %v2998 = vld [vmem:[%s27] sm:$0xff]
        %v2999 = vld [vmem:[%s27 + $0x8] sm:$0xff]
        %3001 = vset.pattern.permute.xlu0 0
        %3002 = vperm.xlu0 %3001, %v2998
        %v3003 = vpop.permute.xlu0 %3002
        %3006 = vset.pattern.permute.xlu0 0
        %3007 = vperm.xlu0 %3006, %v2999
        %v3008 = vpop.permute.xlu0 %3007
        %v3012 = vunpack.c.l.b16 %v2987
        %v3013 = vunpack.c.l.b16 %v2988
        %v3014 = vpack.c.b16 %v3013, %v3012
        %v3024 = vunpack.c.l.b16 %v2989
        %v3025 = vunpack.c.l.b16 %v2990
        %v3026 = vunpack.c.l.b16 %v2991
        %v3027 = vunpack.c.l.b16 %v2992
        %v3028 = vunpack.c.l.b16 %v2993
        %v3029 = vunpack.c.l.b16 %v2994
        %v3030 = vunpack.c.l.b16 %v2995
        %v3031 = vunpack.c.l.b16 %v2996
        %v3032 = vunpack.c.l.b16 %v2997
        %v3033 = vpack.c.b16 %v3025, %v3024
        %v3034 = vpack.c.b16 %v3027, %v3026
        %v3035 = vpack.c.b16 %v3029, %v3028
        %v3036 = vpack.c.b16 %v3031, %v3030
        %v3037 = vpack.c.b16 %v3032, %v3032
        %v3043 = vsel %vm2548, %v3014, 0
        %v3046 = vsel %vm2337, %v3037, 0
        %3048 = vmatprep.subr.bf16.mxu0 0
        %3049 = vmatpush1.bf16.msra.mxu0 0
        %3050 = vmatprep.subr.bf16.mxu0 0
        %3051 = vmatpush1.bf16.msra.mxu0 0
        %3052 = vmatprep.subr.bf16.mxu0 0
        %3053 = vmatpush1.bf16.msra.mxu0 0
        %3054 = vmatprep.subr.bf16.mxu0 0
        %3055 = vmatpush1.bf16.msra.mxu0 %v3046
        %3056 = vmatprep.subr.bf16.mxu0 0
        %3057 = vmatpush1.bf16.msra.mxu0 %v3036
        %3058 = vmatprep.subr.bf16.mxu0 0
        %3059 = vmatpush1.bf16.msra.mxu0 %v3035
        %3060 = vmatprep.subr.bf16.mxu0 0
        %3061 = vmatpush1.bf16.msra.mxu0 %v3034
        %3062 = vmatprep.subr.bf16.mxu0 0
        %3063 = vmatpush1.bf16.msra.mxu0 %v3033
        %3064 = vmatprep.subr.bf16.mxu0 0
        %3065 = vmatpush2.bf16.msra.mxu0 0
        %3066 = vmatprep.subr.bf16.mxu0 0
        %3067 = vmatpush2.bf16.msra.mxu0 0
        %3068 = vmatprep.subr.bf16.mxu0 0
        %3069 = vmatpush2.bf16.msra.mxu0 0
        %3070 = vmatprep.subr.bf16.mxu0 0
        %3071 = vmatpush2.bf16.msra.mxu0 0
        %3072 = vmatprep.subr.bf16.mxu0 0
        %3073 = vmatpush2.bf16.msra.mxu0 0
        %3074 = vmatprep.subr.bf16.mxu0 0
        %3075 = vmatpush2.bf16.msra.mxu0 0
        %3076 = vmatprep.subr.bf16.mxu0 0
        %3077 = vmatpush2.bf16.msra.mxu0 0
        %3078 = vmatprep.subr.bf16.mxu0 0
        %3079 = vmatpush2.bf16.msra.mxu0 0
        %3080 = vmatprep.mubr.bf16.mxu0 0
        %3081 = vmatmul.mubr.bf16.gmra.mxu0 %v3043
        %v3082 = vpop.f32.mrf.mxu0
        %v3083 = vadd.f32 %v3003, %v3082
        %v3084 = vpop.f32.mrf.mxu0
        %v3085 = vpop.f32.mrf.mxu0
        %v3086 = vadd.f32 %v3008, %v3085
        %v3087 = vpop.f32.mrf.mxu0
        %3088 = vdwg.mxu0
        %v3089 = vmax.f32 %v3083, 0.0
        %v3090 = vmax.f32 %v3086, 0.0
        %v3091 = vpack.c.bf16 %v3090, %v3089
        %3092 = vst.msk [vmem:[#allocation2] sm:$0xf] %vm2796, 0
        %3093 = vst.msk [vmem:[#allocation2 + $0x8] sm:$0xf] %vm2796, 0
        %3094 = vst.msk [vmem:[#allocation2 + $0x10] sm:$0xf] %vm2796, 0
        %3095 = vst.msk [vmem:[#allocation2 + $0x18] sm:$0xf] %vm2796, 0
        %3096 = vst.msk [vmem:[#allocation2 + $0x20] sm:$0xf] %vm2796, 0
        %3097 = vst.msk [vmem:[#allocation2 + $0x28] sm:$0xf] %vm2796, 0
        %3098 = vst.msk [vmem:[#allocation2 + $0x30] sm:$0xf] %vm2796, 0
        %3099 = vst.msk [vmem:[#allocation2 + $0x38] sm:$0xf] %vm2796, 0
        %3100 = vst.msk [vmem:[#allocation2 + $0x40] sm:$0xf] %vm2796, 0
        %3101 = vst.msk [vmem:[#allocation2 + $0x48] sm:$0xf] %vm2796, 0
        %3102 = vst.msk [vmem:[#allocation2 + $0x50] sm:$0xf] %vm2796, 0
        %3103 = vst.msk [vmem:[#allocation2 + $0x58] sm:$0xf] %vm2796, 0
        %3104 = vst.msk [vmem:[#allocation2 + $0x60] sm:$0xf] %vm2796, 0
        %3105 = vst.msk [vmem:[#allocation2 + $0x68] sm:$0xf] %vm2796, 0
        %3106 = vst.msk [vmem:[#allocation2 + $0x70] sm:$0xf] %vm2796, 0
        %3107 = vst.msk [vmem:[#allocation2 + $0x78] sm:$0xf] %vm2796, 0
        %3108 = vst.msk [vmem:[#allocation2 + $0x80] sm:$0xf] %vm2796, 0
        %3109 = vst.msk [vmem:[#allocation2 + $0x88] sm:$0xf] %vm2796, 0
        %v3110 = vld [vmem:[#allocation3] sm:$0x1]
        %v3112 = vpack.i.b16 %v3110, %v3110
        %v3114 = vlaneseq
        %v3115 = vshrl.u32 %v3114, 7
        %v3116 = vsub.s32 0, %v3115
        %v3117 = vrot.slane %v3112, %v3116
        %3119 = vrot.lane.b32.xlu0 %v3117, 119
        %v3120 = vpop.permute.xlu0 %3119
        %v3122 = vmul.bf16 %v3091, %v3120
        %v3124 = vunpack.c.l.b16 %v3122
        %v3125 = vunpack.c.h.b16 %v3122
        %v3126 = vpack.c.b16 %v3124, %v3124
        %v3127 = vpack.c.b16 %v3125, %v3125
        %3128 = vrot.lane.b32.xlu0 %v3126, 9
        %v3129 = vpop.permute.xlu0 %3128
        %3130 = vrot.lane.b32.xlu0 %v3127, 9
        %v3131 = vpop.permute.xlu0 %3130
        %3134 = vst.msk [vmem:[#allocation2] sm:$0xf] %vm2825, %v3129
        %3135 = vst.msk [vmem:[#allocation2 + $0x8] sm:$0xf] %vm2825, %v3131
        %v3136 = vld [vmem:[#allocation3] sm:$0x1]
        %v3138 = vshrl.u32 %v3136, 16
        %v3139 = vpack.i.b16 %v3138, %v3138
        %v3141 = vlaneseq
        %v3142 = vshrl.u32 %v3141, 7
        %v3143 = vsub.s32 0, %v3142
        %v3144 = vrot.slane %v3139, %v3143
        %3146 = vrot.lane.b32.xlu0 %v3144, 120
        %v3147 = vpop.permute.xlu0 %3146
        %v3149 = vmul.bf16 %v3091, %v3147
        %v3151 = vunpack.c.l.b16 %v3149
        %v3152 = vunpack.c.h.b16 %v3149
        %v3153 = vpack.c.b16 %v3151, %v3151
        %v3154 = vpack.c.b16 %v3152, %v3152
        %3155 = vrot.lane.b32.xlu0 %v3153, 8
        %v3156 = vpop.permute.xlu0 %3155
        %3157 = vrot.lane.b32.xlu0 %v3154, 8
        %v3158 = vpop.permute.xlu0 %3157
        %3161 = vst.msk [vmem:[#allocation2 + $0x10] sm:$0xf] %vm2847, %v3156
        %3162 = vst.msk [vmem:[#allocation2 + $0x18] sm:$0xf] %vm2847, %v3158
        %v3163 = vld [vmem:[#allocation3] sm:$0x2]
        %v3165 = vpack.i.b16 %v3163, %v3163
        %v3167 = vlaneseq
        %v3168 = vshrl.u32 %v3167, 7
        %v3169 = vsub.s32 1, %v3168
        %v3170 = vrot.slane %v3165, %v3169
        %3172 = vrot.lane.b32.xlu0 %v3170, 121
        %v3173 = vpop.permute.xlu0 %3172
        %v3175 = vmul.bf16 %v3091, %v3173
        %v3177 = vunpack.c.l.b16 %v3175
        %v3178 = vunpack.c.h.b16 %v3175
        %v3179 = vpack.c.b16 %v3177, %v3177
        %v3180 = vpack.c.b16 %v3178, %v3178
        %3181 = vrot.lane.b32.xlu0 %v3179, 7
        %v3182 = vpop.permute.xlu0 %3181
        %3183 = vrot.lane.b32.xlu0 %v3180, 7
        %v3184 = vpop.permute.xlu0 %3183
        %3187 = vst.msk [vmem:[#allocation2 + $0x20] sm:$0xf] %vm2868, %v3182
        %3188 = vst.msk [vmem:[#allocation2 + $0x28] sm:$0xf] %vm2868, %v3184
        %v3189 = vld [vmem:[#allocation3] sm:$0x1]
        %v3191 = vpack.i.b16 %v3189, %v3189
        %v3193 = vlaneseq
        %v3194 = vshrl.u32 %v3193, 7
        %v3195 = vsub.s32 0, %v3194
        %v3196 = vrot.slane %v3191, %v3195
        %3198 = vrot.lane.b32.xlu0 %v3196, 127
        %v3199 = vpop.permute.xlu0 %3198
        %v3201 = vmul.bf16 %v3091, %v3199
        %v3203 = vunpack.c.l.b16 %v3201
        %v3204 = vunpack.c.h.b16 %v3201
        %v3205 = vpack.c.b16 %v3203, %v3203
        %v3206 = vpack.c.b16 %v3204, %v3204
        %3207 = vrot.lane.b32.xlu0 %v3205, 1
        %v3208 = vpop.permute.xlu0 %3207
        %3209 = vrot.lane.b32.xlu0 %v3206, 1
        %v3210 = vpop.permute.xlu0 %3209
        %3213 = vst.msk [vmem:[#allocation2 + $0x30] sm:$0xf] %vm2889, %v3208
        %3214 = vst.msk [vmem:[#allocation2 + $0x38] sm:$0xf] %vm2889, %v3210
        %v3215 = vld [vmem:[#allocation3] sm:$0x1]
        %v3217 = vshrl.u32 %v3215, 16
        %v3218 = vpack.i.b16 %v3217, %v3217
        %v3220 = vlaneseq
        %v3221 = vshrl.u32 %v3220, 7
        %v3222 = vsub.s32 0, %v3221
        %v3223 = vrot.slane %v3218, %v3222
        %v3224 = vmul.bf16 %v3091, %v3223
        %v3226 = vunpack.c.l.b16 %v3224
        %v3227 = vunpack.c.h.b16 %v3224
        %v3228 = vpack.c.b16 %v3226, %v3226
        %v3229 = vpack.c.b16 %v3227, %v3227
        %3232 = vst.msk [vmem:[#allocation2 + $0x40] sm:$0xf] %vm2796, %v3228
        %3233 = vst.msk [vmem:[#allocation2 + $0x48] sm:$0xf] %vm2796, %v3229
        %v3234 = vld [vmem:[#allocation3] sm:$0x2]
        %v3236 = vpack.i.b16 %v3234, %v3234
        %v3238 = vlaneseq
        %v3239 = vshrl.u32 %v3238, 7
        %v3240 = vsub.s32 1, %v3239
        %v3241 = vrot.slane %v3236, %v3240
        %3243 = vrot.lane.b32.xlu0 %v3241, 1
        %v3244 = vpop.permute.xlu0 %3243
        %v3246 = vmul.bf16 %v3091, %v3244
        %v3248 = vunpack.c.l.b16 %v3246
        %v3249 = vunpack.c.h.b16 %v3246
        %v3250 = vpack.c.b16 %v3248, %v3248
        %v3251 = vpack.c.b16 %v3249, %v3249
        %3252 = vrot.lane.b32.xlu0 %v3250, 127
        %v3253 = vpop.permute.xlu0 %3252
        %3254 = vrot.lane.b32.xlu0 %v3251, 127
        %v3255 = vpop.permute.xlu0 %3254
        %3258 = vst.msk [vmem:[#allocation2 + $0x50] sm:$0xf] %vm2921, %v3253
        %3259 = vst.msk [vmem:[#allocation2 + $0x58] sm:$0xf] %vm2921, %v3255
        %v3260 = vld [vmem:[#allocation3] sm:$0x1]
        %v3262 = vpack.i.b16 %v3260, %v3260
        %v3264 = vlaneseq
        %v3265 = vshrl.u32 %v3264, 7
        %v3266 = vsub.s32 0, %v3265
        %v3267 = vrot.slane %v3262, %v3266
        %3269 = vrot.lane.b32.xlu0 %v3267, 7
        %v3270 = vpop.permute.xlu0 %3269
        %v3272 = vmul.bf16 %v3091, %v3270
        %v3274 = vunpack.c.l.b16 %v3272
        %v3275 = vunpack.c.h.b16 %v3272
        %v3276 = vpack.c.b16 %v3274, %v3274
        %v3277 = vpack.c.b16 %v3275, %v3275
        %3278 = vrot.lane.b32.xlu0 %v3276, 121
        %v3279 = vpop.permute.xlu0 %3278
        %3280 = vrot.lane.b32.xlu0 %v3277, 121
        %v3281 = vpop.permute.xlu0 %3280
        %3284 = vst.msk [vmem:[#allocation2 + $0x60] sm:$0xf] %vm2942, %v3279
        %3285 = vst.msk [vmem:[#allocation2 + $0x68] sm:$0xf] %vm2942, %v3281
        %v3286 = vld [vmem:[#allocation3] sm:$0x1]
        %v3288 = vshrl.u32 %v3286, 16
        %v3289 = vpack.i.b16 %v3288, %v3288
        %v3291 = vlaneseq
        %v3292 = vshrl.u32 %v3291, 7
        %v3293 = vsub.s32 0, %v3292
        %v3294 = vrot.slane %v3289, %v3293
        %3296 = vrot.lane.b32.xlu0 %v3294, 8
        %v3297 = vpop.permute.xlu0 %3296
        %v3299 = vmul.bf16 %v3091, %v3297
        %v3301 = vunpack.c.l.b16 %v3299
        %v3302 = vunpack.c.h.b16 %v3299
        %v3303 = vpack.c.b16 %v3301, %v3301
        %v3304 = vpack.c.b16 %v3302, %v3302
        %3305 = vrot.lane.b32.xlu0 %v3303, 120
        %v3306 = vpop.permute.xlu0 %3305
        %3307 = vrot.lane.b32.xlu0 %v3304, 120
        %v3308 = vpop.permute.xlu0 %3307
        %3311 = vst.msk [vmem:[#allocation2 + $0x70] sm:$0xf] %vm2964, %v3306
        %3312 = vst.msk [vmem:[#allocation2 + $0x78] sm:$0xf] %vm2964, %v3308
        %v3313 = vld [vmem:[#allocation3] sm:$0x2]
        %v3315 = vpack.i.b16 %v3313, %v3313
        %v3317 = vlaneseq
        %v3318 = vshrl.u32 %v3317, 7
        %v3319 = vsub.s32 1, %v3318
        %v3320 = vrot.slane %v3315, %v3319
        %3322 = vrot.lane.b32.xlu0 %v3320, 9
        %v3323 = vpop.permute.xlu0 %3322
        %v3325 = vmul.bf16 %v3091, %v3323
        %v3327 = vunpack.c.l.b16 %v3325
        %v3328 = vunpack.c.h.b16 %v3325
        %v3329 = vpack.c.b16 %v3327, %v3327
        %v3330 = vpack.c.b16 %v3328, %v3328
        %3331 = vrot.lane.b32.xlu0 %v3329, 119
        %v3332 = vpop.permute.xlu0 %3331
        %3333 = vrot.lane.b32.xlu0 %v3330, 119
        %v3334 = vpop.permute.xlu0 %3333
        %3337 = vst.msk [vmem:[#allocation2 + $0x80] sm:$0xf] %vm2985, %v3332
        %3338 = vst.msk [vmem:[#allocation2 + $0x88] sm:$0xf] %vm2985, %v3334
        %v3339 = vld [vmem:[#allocation19] sm:$0xff]
        %v3340 = vld [vmem:[#allocation19 + $0x8] sm:$0xff]
        %v3341 = vld [vmem:[#allocation2] sm:$0xf]
        %v3342 = vld [vmem:[#allocation2 + $0x8] sm:$0xf]
        %v3343 = vld [vmem:[#allocation2 + $0x10] sm:$0xf]
        %v3344 = vld [vmem:[#allocation2 + $0x18] sm:$0xf]
        %v3345 = vld [vmem:[#allocation2 + $0x20] sm:$0xf]
        %v3346 = vld [vmem:[#allocation2 + $0x28] sm:$0xf]
        %v3347 = vld [vmem:[#allocation2 + $0x30] sm:$0xf]
        %v3348 = vld [vmem:[#allocation2 + $0x38] sm:$0xf]
        %v3349 = vld [vmem:[#allocation2 + $0x40] sm:$0xf]
        %v3350 = vld [vmem:[#allocation2 + $0x48] sm:$0xf]
        %v3351 = vld [vmem:[#allocation2 + $0x50] sm:$0xf]
        %v3352 = vld [vmem:[#allocation2 + $0x58] sm:$0xf]
        %v3353 = vld [vmem:[#allocation2 + $0x60] sm:$0xf]
        %v3354 = vld [vmem:[#allocation2 + $0x68] sm:$0xf]
        %v3355 = vld [vmem:[#allocation2 + $0x70] sm:$0xf]
        %v3356 = vld [vmem:[#allocation2 + $0x78] sm:$0xf]
        %v3357 = vld [vmem:[#allocation2 + $0x80] sm:$0xf]
        %v3358 = vld [vmem:[#allocation2 + $0x88] sm:$0xf]
        %v3359 = vld [vmem:[#allocation20] sm:$0xff]
        %v3360 = vld [vmem:[#allocation20 + $0x8] sm:$0xff]
        %3362 = vset.pattern.permute.xlu0 0
        %3363 = vperm.xlu0 %3362, %v3359
        %v3364 = vpop.permute.xlu0 %3363
        %3367 = vset.pattern.permute.xlu0 0
        %3368 = vperm.xlu0 %3367, %v3360
        %v3369 = vpop.permute.xlu0 %3368
        %v3373 = vunpack.c.l.b16 %v3339
        %v3374 = vunpack.c.h.b16 %v3339
        %v3375 = vunpack.c.l.b16 %v3340
        %v3376 = vunpack.c.h.b16 %v3340
        %v3377 = vpack.c.b16 %v3375, %v3373
        %v3378 = vpack.c.b16 %v3376, %v3374
        %v3398 = vunpack.c.l.b16 %v3341
        %v3399 = vunpack.c.l.b16 %v3342
        %v3400 = vunpack.c.l.b16 %v3343
        %v3401 = vunpack.c.l.b16 %v3344
        %v3402 = vunpack.c.l.b16 %v3345
        %v3403 = vunpack.c.l.b16 %v3346
        %v3404 = vunpack.c.l.b16 %v3347
        %v3405 = vunpack.c.l.b16 %v3348
        %v3406 = vunpack.c.l.b16 %v3349
        %v3407 = vunpack.c.l.b16 %v3350
        %v3408 = vunpack.c.l.b16 %v3351
        %v3409 = vunpack.c.l.b16 %v3352
        %v3410 = vunpack.c.l.b16 %v3353
        %v3411 = vunpack.c.l.b16 %v3354
        %v3412 = vunpack.c.l.b16 %v3355
        %v3413 = vunpack.c.l.b16 %v3356
        %v3414 = vunpack.c.l.b16 %v3357
        %v3415 = vunpack.c.l.b16 %v3358
        %v3416 = vpack.c.b16 %v3399, %v3398
        %v3417 = vpack.c.b16 %v3401, %v3400
        %v3418 = vpack.c.b16 %v3403, %v3402
        %v3419 = vpack.c.b16 %v3405, %v3404
        %v3420 = vpack.c.b16 %v3407, %v3406
        %v3421 = vpack.c.b16 %v3409, %v3408
        %v3422 = vpack.c.b16 %v3411, %v3410
        %v3423 = vpack.c.b16 %v3413, %v3412
        %v3424 = vpack.c.b16 %v3415, %v3414
        %vm3434 = vcmask 130048
        %v3436 = vsel %vm3434, %v3378, 0
        %3438 = vmatprep.subr.bf16.mxu0 0
        %3439 = vmatpush1.bf16.msra.mxu0 %v3423
        %3440 = vmatprep.subr.bf16.mxu0 0
        %3441 = vmatpush1.bf16.msra.mxu0 %v3422
        %3442 = vmatprep.subr.bf16.mxu0 0
        %3443 = vmatpush1.bf16.msra.mxu0 %v3421
        %3444 = vmatprep.subr.bf16.mxu0 0
        %3445 = vmatpush1.bf16.msra.mxu0 %v3420
        %3446 = vmatprep.subr.bf16.mxu0 0
        %3447 = vmatpush1.bf16.msra.mxu0 %v3419
        %3448 = vmatprep.subr.bf16.mxu0 0
        %3449 = vmatpush1.bf16.msra.mxu0 %v3418
        %3450 = vmatprep.subr.bf16.mxu0 0
        %3451 = vmatpush1.bf16.msra.mxu0 %v3417
        %3452 = vmatprep.subr.bf16.mxu0 0
        %3453 = vmatpush1.bf16.msra.mxu0 %v3416
        %3454 = vmatprep.subr.bf16.mxu0 0
        %3455 = vmatpush2.bf16.msra.mxu0 0
        %3456 = vmatprep.subr.bf16.mxu0 0
        %3457 = vmatpush2.bf16.msra.mxu0 0
        %3458 = vmatprep.subr.bf16.mxu0 0
        %3459 = vmatpush2.bf16.msra.mxu0 0
        %3460 = vmatprep.subr.bf16.mxu0 0
        %3461 = vmatpush2.bf16.msra.mxu0 0
        %3462 = vmatprep.subr.bf16.mxu0 0
        %3463 = vmatpush2.bf16.msra.mxu0 0
        %3464 = vmatprep.subr.bf16.mxu0 0
        %3465 = vmatpush2.bf16.msra.mxu0 0
        %3466 = vmatprep.subr.bf16.mxu0 0
        %3467 = vmatpush2.bf16.msra.mxu0 0
        %3468 = vmatprep.subr.bf16.mxu0 0
        %3469 = vmatpush2.bf16.msra.mxu0 %v3424
        %3470 = vmatprep.mubr.bf16.mxu0 %v3436
        %3471 = vmatmul.mubr.bf16.gmra.mxu0 %v3377
        %v3472 = vpop.f32.mrf.mxu0
        %v3473 = vadd.f32 %v3364, %v3472
        %v3474 = vpop.f32.mrf.mxu0
        %v3475 = vpop.f32.mrf.mxu0
        %v3476 = vadd.f32 %v3369, %v3475
        %v3477 = vpop.f32.mrf.mxu0
        %3478 = vdwg.mxu0
        %v3479 = vmax.f32 %v3473, 0.0
        %v3480 = vmax.f32 %v3476, 0.0
        %v3481 = vpack.c.bf16 %v3480, %v3479
        %3483 = vrot.lane.b32.xlu0 %v3481, 127
        %v3484 = vpop.permute.xlu0 %3483
        %v3486 = vmax.bf16 %v3481, %v3484
        %3488 = vrot.lane.b32.xlu0 %v3486, 120
        %v3489 = vpop.permute.xlu0 %3488
        %v3491 = vmax.bf16 %v3486, %v3489
        %v3492 = vld [vmem:[#allocation8] sm:$0xf]
        %v3493 = vld [vmem:[#allocation8 + $0x4] sm:$0xf]
        %v3494 = vld [vmem:[#allocation8 + $0x8] sm:$0xf]
        %v3495 = vld [vmem:[#allocation8 + $0xc] sm:$0xf]
        %v3496 = vld [vmem:[#allocation8 + $0x10] sm:$0xf]
        %v3497 = vld [vmem:[#allocation8 + $0x14] sm:$0xf]
        %v3498 = vld [vmem:[#allocation8 + $0x18] sm:$0xf]
        %v3506 = vunpack.c.l.b16 %v3492
        %v3507 = vunpack.c.l.b16 %v3493
        %v3508 = vunpack.c.l.b16 %v3494
        %v3509 = vunpack.c.l.b16 %v3495
        %v3510 = vunpack.c.l.b16 %v3496
        %v3511 = vunpack.c.l.b16 %v3497
        %v3512 = vunpack.c.l.b16 %v3498
        %v3513 = vpack.c.b16 %v3507, %v3506
        %v3514 = vpack.c.b16 %v3509, %v3508
        %v3515 = vpack.c.b16 %v3511, %v3510
        %v3516 = vpack.c.b16 %v3512, %v3512
        %vm3520 = vcmask 449536
        %v3522 = vsel %vm3520, %v3491, 0
        %vm3524 = vcmask 1042432
        %v3525 = vsel %vm3524, 4294967295, 65535
        %v3526 = vsel %vm2337, %v3525, 0
        %v3528 = vand.u32 %v3516, %v3526
        %3530 = vmatprep.subr.bf16.mxu0 0
        %3531 = vmatpush1.bf16.msra.mxu0 0
        %3532 = vmatprep.subr.bf16.mxu0 0
        %3533 = vmatpush1.bf16.msra.mxu0 0
        %3534 = vmatprep.subr.bf16.mxu0 0
        %3535 = vmatpush1.bf16.msra.mxu0 0
        %3536 = vmatprep.subr.bf16.mxu0 0
        %3537 = vmatpush1.bf16.msra.mxu0 0
        %3538 = vmatprep.subr.bf16.mxu0 0
        %3539 = vmatpush1.bf16.msra.mxu0 %v3528
        %3540 = vmatprep.subr.bf16.mxu0 0
        %3541 = vmatpush1.bf16.msra.mxu0 %v3515
        %3542 = vmatprep.subr.bf16.mxu0 0
        %3543 = vmatpush1.bf16.msra.mxu0 %v3514
        %3544 = vmatprep.subr.bf16.mxu0 0
        %3545 = vmatpush1.bf16.msra.mxu0 %v3513
        %3546 = vmatprep.subr.bf16.mxu0 0
        %3547 = vmatpush2.bf16.msra.mxu0 0
        %3548 = vmatprep.subr.bf16.mxu0 0
        %3549 = vmatpush2.bf16.msra.mxu0 0
        %3550 = vmatprep.subr.bf16.mxu0 0
        %3551 = vmatpush2.bf16.msra.mxu0 0
        %3552 = vmatprep.subr.bf16.mxu0 0
        %3553 = vmatpush2.bf16.msra.mxu0 0
        %3554 = vmatprep.subr.bf16.mxu0 0
        %3555 = vmatpush2.bf16.msra.mxu0 0
        %3556 = vmatprep.subr.bf16.mxu0 0
        %3557 = vmatpush2.bf16.msra.mxu0 0
        %3558 = vmatprep.subr.bf16.mxu0 0
        %3559 = vmatpush2.bf16.msra.mxu0 0
        %3560 = vmatprep.subr.bf16.mxu0 0
        %3561 = vmatpush2.bf16.msra.mxu0 0
        %3562 = vmatprep.mubr.bf16.mxu0 0
        %3563 = vmatmul.mubr.bf16.gmra.mxu0 %v3522
        %v3564 = vpop.f32.mrf.mxu0
        %v3565 = vadd.f32 0.0, %v3564
        %v3566 = vpop.f32.mrf.mxu0
        %v3567 = vpop.f32.mrf.mxu0
        %v3568 = vadd.f32 0.0, %v3567
        %v3569 = vpop.f32.mrf.mxu0
        %3570 = vdwg.mxu0
        %v3571 = vpack.c.bf16 %v3568, %v3565
        %vm3572 = vcmask 125952
        %3573 = vst.msk [vmem:[#allocation2] sm:$0xf] %vm3572, 0
        %3574 = vst.msk [vmem:[#allocation2 + $0x8] sm:$0xf] %vm3572, 0
        %3575 = vst.msk [vmem:[#allocation2 + $0x10] sm:$0xf] %vm3572, 0
        %3576 = vst.msk [vmem:[#allocation2 + $0x18] sm:$0xf] %vm3572, 0
        %3577 = vst.msk [vmem:[#allocation2 + $0x20] sm:$0xf] %vm3572, 0
        %3578 = vst.msk [vmem:[#allocation2 + $0x28] sm:$0xf] %vm3572, 0
        %3579 = vst.msk [vmem:[#allocation2 + $0x30] sm:$0xf] %vm3572, 0
        %3580 = vst.msk [vmem:[#allocation2 + $0x38] sm:$0xf] %vm3572, 0
        %3581 = vst.msk [vmem:[#allocation2 + $0x40] sm:$0xf] %vm3572, 0
        %3582 = vst.msk [vmem:[#allocation2 + $0x48] sm:$0xf] %vm3572, 0
        %3583 = vst.msk [vmem:[#allocation2 + $0x50] sm:$0xf] %vm3572, 0
        %3584 = vst.msk [vmem:[#allocation2 + $0x58] sm:$0xf] %vm3572, 0
        %3585 = vst.msk [vmem:[#allocation2 + $0x60] sm:$0xf] %vm3572, 0
        %3586 = vst.msk [vmem:[#allocation2 + $0x68] sm:$0xf] %vm3572, 0
        %3587 = vst.msk [vmem:[#allocation2 + $0x70] sm:$0xf] %vm3572, 0
        %3588 = vst.msk [vmem:[#allocation2 + $0x78] sm:$0xf] %vm3572, 0
        %3589 = vst.msk [vmem:[#allocation2 + $0x80] sm:$0xf] %vm3572, 0
        %3590 = vst.msk [vmem:[#allocation2 + $0x88] sm:$0xf] %vm3572, 0
        %v3591 = vld [vmem:[#allocation5] sm:$0x1]
        %v3593 = vpack.i.b16 %v3591, %v3591
        %v3595 = vlaneseq
        %v3596 = vshrl.u32 %v3595, 7
        %v3597 = vsub.s32 0, %v3596
        %v3598 = vrot.slane %v3593, %v3597
        %3600 = vrot.lane.b32.xlu0 %v3598, 123
        %v3601 = vpop.permute.xlu0 %3600
        %v3603 = vmul.bf16 %v3571, %v3601
        %v3605 = vunpack.c.l.b16 %v3603
        %v3606 = vunpack.c.h.b16 %v3603
        %v3607 = vpack.c.b16 %v3605, %v3605
        %v3608 = vpack.c.b16 %v3606, %v3606
        %3609 = vrot.lane.b32.xlu0 %v3607, 5
        %v3610 = vpop.permute.xlu0 %3609
        %3611 = vrot.lane.b32.xlu0 %v3608, 5
        %v3612 = vpop.permute.xlu0 %3611
        %vm3615 = vcmask 125992
        %3616 = vst.msk [vmem:[#allocation2] sm:$0xf] %vm3615, %v3610
        %3617 = vst.msk [vmem:[#allocation2 + $0x8] sm:$0xf] %vm3615, %v3612
        %v3618 = vld [vmem:[#allocation5] sm:$0x1]
        %v3620 = vshrl.u32 %v3618, 16
        %v3621 = vpack.i.b16 %v3620, %v3620
        %v3623 = vlaneseq
        %v3624 = vshrl.u32 %v3623, 7
        %v3625 = vsub.s32 0, %v3624
        %v3626 = vrot.slane %v3621, %v3625
        %3628 = vrot.lane.b32.xlu0 %v3626, 124
        %v3629 = vpop.permute.xlu0 %3628
        %v3631 = vmul.bf16 %v3571, %v3629
        %v3633 = vunpack.c.l.b16 %v3631
        %v3634 = vunpack.c.h.b16 %v3631
        %v3635 = vpack.c.b16 %v3633, %v3633
        %v3636 = vpack.c.b16 %v3634, %v3634
        %3637 = vrot.lane.b32.xlu0 %v3635, 4
        %v3638 = vpop.permute.xlu0 %3637
        %3639 = vrot.lane.b32.xlu0 %v3636, 4
        %v3640 = vpop.permute.xlu0 %3639
        %vm3643 = vcmask 125984
        %3644 = vst.msk [vmem:[#allocation2 + $0x10] sm:$0xf] %vm3643, %v3638
        %3645 = vst.msk [vmem:[#allocation2 + $0x18] sm:$0xf] %vm3643, %v3640
        %v3646 = vld [vmem:[#allocation5] sm:$0x2]
        %v3648 = vpack.i.b16 %v3646, %v3646
        %v3650 = vlaneseq
        %v3651 = vshrl.u32 %v3650, 7
        %v3652 = vsub.s32 1, %v3651
        %v3653 = vrot.slane %v3648, %v3652
        %3655 = vrot.lane.b32.xlu0 %v3653, 125
        %v3656 = vpop.permute.xlu0 %3655
        %v3658 = vmul.bf16 %v3571, %v3656
        %v3660 = vunpack.c.l.b16 %v3658
        %v3661 = vunpack.c.h.b16 %v3658
        %v3662 = vpack.c.b16 %v3660, %v3660
        %v3663 = vpack.c.b16 %v3661, %v3661
        %3664 = vrot.lane.b32.xlu0 %v3662, 3
        %v3665 = vpop.permute.xlu0 %3664
        %3666 = vrot.lane.b32.xlu0 %v3663, 3
        %v3667 = vpop.permute.xlu0 %3666
        %vm3670 = vcmask 125976
        %3671 = vst.msk [vmem:[#allocation2 + $0x20] sm:$0xf] %vm3670, %v3665
        %3672 = vst.msk [vmem:[#allocation2 + $0x28] sm:$0xf] %vm3670, %v3667
        %v3673 = vld [vmem:[#allocation5] sm:$0x1]
        %v3675 = vpack.i.b16 %v3673, %v3673
        %v3677 = vlaneseq
        %v3678 = vshrl.u32 %v3677, 7
        %v3679 = vsub.s32 0, %v3678
        %v3680 = vrot.slane %v3675, %v3679
        %3682 = vrot.lane.b32.xlu0 %v3680, 127
        %v3683 = vpop.permute.xlu0 %3682
        %v3685 = vmul.bf16 %v3571, %v3683
        %v3687 = vunpack.c.l.b16 %v3685
        %v3688 = vunpack.c.h.b16 %v3685
        %v3689 = vpack.c.b16 %v3687, %v3687
        %v3690 = vpack.c.b16 %v3688, %v3688
        %3691 = vrot.lane.b32.xlu0 %v3689, 1
        %v3692 = vpop.permute.xlu0 %3691
        %3693 = vrot.lane.b32.xlu0 %v3690, 1
        %v3694 = vpop.permute.xlu0 %3693
        %vm3697 = vcmask 125960
        %3698 = vst.msk [vmem:[#allocation2 + $0x30] sm:$0xf] %vm3697, %v3692
        %3699 = vst.msk [vmem:[#allocation2 + $0x38] sm:$0xf] %vm3697, %v3694
        %v3700 = vld [vmem:[#allocation5] sm:$0x1]
        %v3702 = vshrl.u32 %v3700, 16
        %v3703 = vpack.i.b16 %v3702, %v3702
        %v3705 = vlaneseq
        %v3706 = vshrl.u32 %v3705, 7
        %v3707 = vsub.s32 0, %v3706
        %v3708 = vrot.slane %v3703, %v3707
        %v3709 = vmul.bf16 %v3571, %v3708
        %v3711 = vunpack.c.l.b16 %v3709
        %v3712 = vunpack.c.h.b16 %v3709
        %v3713 = vpack.c.b16 %v3711, %v3711
        %v3714 = vpack.c.b16 %v3712, %v3712
        %3717 = vst.msk [vmem:[#allocation2 + $0x40] sm:$0xf] %vm3572, %v3713
        %3718 = vst.msk [vmem:[#allocation2 + $0x48] sm:$0xf] %vm3572, %v3714
        %v3719 = vld [vmem:[#allocation5] sm:$0x2]
        %v3721 = vpack.i.b16 %v3719, %v3719
        %v3723 = vlaneseq
        %v3724 = vshrl.u32 %v3723, 7
        %v3725 = vsub.s32 1, %v3724
        %v3726 = vrot.slane %v3721, %v3725
        %3728 = vrot.lane.b32.xlu0 %v3726, 1
        %v3729 = vpop.permute.xlu0 %3728
        %v3731 = vmul.bf16 %v3571, %v3729
        %v3733 = vunpack.c.l.b16 %v3731
        %v3734 = vunpack.c.h.b16 %v3731
        %v3735 = vpack.c.b16 %v3733, %v3733
        %v3736 = vpack.c.b16 %v3734, %v3734
        %3737 = vrot.lane.b32.xlu0 %v3735, 127
        %v3738 = vpop.permute.xlu0 %3737
        %3739 = vrot.lane.b32.xlu0 %v3736, 127
        %v3740 = vpop.permute.xlu0 %3739
        %vm3743 = vcmask 117760
        %3744 = vst.msk [vmem:[#allocation2 + $0x50] sm:$0xf] %vm3743, %v3738
        %3745 = vst.msk [vmem:[#allocation2 + $0x58] sm:$0xf] %vm3743, %v3740
        %v3746 = vld [vmem:[#allocation5] sm:$0x1]
        %v3748 = vpack.i.b16 %v3746, %v3746
        %v3750 = vlaneseq
        %v3751 = vshrl.u32 %v3750, 7
        %v3752 = vsub.s32 0, %v3751
        %v3753 = vrot.slane %v3748, %v3752
        %3755 = vrot.lane.b32.xlu0 %v3753, 3
        %v3756 = vpop.permute.xlu0 %3755
        %v3758 = vmul.bf16 %v3571, %v3756
        %v3760 = vunpack.c.l.b16 %v3758
        %v3761 = vunpack.c.h.b16 %v3758
        %v3762 = vpack.c.b16 %v3760, %v3760
        %v3763 = vpack.c.b16 %v3761, %v3761
        %3764 = vrot.lane.b32.xlu0 %v3762, 125
        %v3765 = vpop.permute.xlu0 %3764
        %3766 = vrot.lane.b32.xlu0 %v3763, 125
        %v3767 = vpop.permute.xlu0 %3766
        %vm3770 = vcmask 101376
        %3771 = vst.msk [vmem:[#allocation2 + $0x60] sm:$0xf] %vm3770, %v3765
        %3772 = vst.msk [vmem:[#allocation2 + $0x68] sm:$0xf] %vm3770, %v3767
        %v3773 = vld [vmem:[#allocation5] sm:$0x1]
        %v3775 = vshrl.u32 %v3773, 16
        %v3776 = vpack.i.b16 %v3775, %v3775
        %v3778 = vlaneseq
        %v3779 = vshrl.u32 %v3778, 7
        %v3780 = vsub.s32 0, %v3779
        %v3781 = vrot.slane %v3776, %v3780
        %3783 = vrot.lane.b32.xlu0 %v3781, 4
        %v3784 = vpop.permute.xlu0 %3783
        %v3786 = vmul.bf16 %v3571, %v3784
        %v3788 = vunpack.c.l.b16 %v3786
        %v3789 = vunpack.c.h.b16 %v3786
        %v3790 = vpack.c.b16 %v3788, %v3788
        %v3791 = vpack.c.b16 %v3789, %v3789
        %3792 = vrot.lane.b32.xlu0 %v3790, 124
        %v3793 = vpop.permute.xlu0 %3792
        %3794 = vrot.lane.b32.xlu0 %v3791, 124
        %v3795 = vpop.permute.xlu0 %3794
        %vm3798 = vcmask 93184
        %3799 = vst.msk [vmem:[#allocation2 + $0x70] sm:$0xf] %vm3798, %v3793
        %3800 = vst.msk [vmem:[#allocation2 + $0x78] sm:$0xf] %vm3798, %v3795
        %v3801 = vld [vmem:[#allocation5] sm:$0x2]
        %v3803 = vpack.i.b16 %v3801, %v3801
        %v3805 = vlaneseq
        %v3806 = vshrl.u32 %v3805, 7
        %v3807 = vsub.s32 1, %v3806
        %v3808 = vrot.slane %v3803, %v3807
        %3810 = vrot.lane.b32.xlu0 %v3808, 5
        %v3811 = vpop.permute.xlu0 %3810
        %v3813 = vmul.bf16 %v3571, %v3811
        %v3815 = vunpack.c.l.b16 %v3813
        %v3816 = vunpack.c.h.b16 %v3813
        %v3817 = vpack.c.b16 %v3815, %v3815
        %v3818 = vpack.c.b16 %v3816, %v3816
        %3819 = vrot.lane.b32.xlu0 %v3817, 123
        %v3820 = vpop.permute.xlu0 %3819
        %3821 = vrot.lane.b32.xlu0 %v3818, 123
        %v3822 = vpop.permute.xlu0 %3821
        %vm3825 = vcmask 84992
        %3826 = vst.msk [vmem:[#allocation2 + $0x80] sm:$0xf] %vm3825, %v3820
        %3827 = vst.msk [vmem:[#allocation2 + $0x88] sm:$0xf] %vm3825, %v3822
        %v3828 = vld [vmem:[#allocation22] sm:$0xff]
        %v3829 = vld [vmem:[#allocation22 + $0x8] sm:$0xff]
        %v3830 = vld [vmem:[#allocation22 + $0x10] sm:$0xff]
        %v3831 = vld [vmem:[#allocation22 + $0x18] sm:$0xff]
        %v3832 = vld [vmem:[#allocation2] sm:$0xf]
        %v3833 = vld [vmem:[#allocation2 + $0x8] sm:$0xf]
        %v3834 = vld [vmem:[#allocation2 + $0x10] sm:$0xf]
        %v3835 = vld [vmem:[#allocation2 + $0x18] sm:$0xf]
        %v3836 = vld [vmem:[#allocation2 + $0x20] sm:$0xf]
        %v3837 = vld [vmem:[#allocation2 + $0x28] sm:$0xf]
        %v3838 = vld [vmem:[#allocation2 + $0x30] sm:$0xf]
        %v3839 = vld [vmem:[#allocation2 + $0x38] sm:$0xf]
        %v3840 = vld [vmem:[#allocation2 + $0x40] sm:$0xf]
        %v3841 = vld [vmem:[#allocation2 + $0x48] sm:$0xf]
        %v3842 = vld [vmem:[#allocation2 + $0x50] sm:$0xf]
        %v3843 = vld [vmem:[#allocation2 + $0x58] sm:$0xf]
        %v3844 = vld [vmem:[#allocation2 + $0x60] sm:$0xf]
        %v3845 = vld [vmem:[#allocation2 + $0x68] sm:$0xf]
        %v3846 = vld [vmem:[#allocation2 + $0x70] sm:$0xf]
        %v3847 = vld [vmem:[#allocation2 + $0x78] sm:$0xf]
        %v3848 = vld [vmem:[#allocation2 + $0x80] sm:$0xf]
        %v3849 = vld [vmem:[#allocation2 + $0x88] sm:$0xf]
        %v3850 = vld [vmem:[#allocation23] sm:$0xff]
        %v3851 = vld [vmem:[#allocation23 + $0x8] sm:$0xff]
        %v3852 = vld [vmem:[#allocation23 + $0x10] sm:$0xff]
        %v3853 = vld [vmem:[#allocation23 + $0x18] sm:$0xff]
        %3855 = vset.pattern.permute.xlu0 0
        %3856 = vperm.xlu0 %3855, %v3850
        %v3857 = vpop.permute.xlu0 %3856
        %3860 = vset.pattern.permute.xlu0 0
        %3861 = vperm.xlu0 %3860, %v3851
        %v3862 = vpop.permute.xlu0 %3861
        %3865 = vset.pattern.permute.xlu0 0
        %3866 = vperm.xlu0 %3865, %v3852
        %v3867 = vpop.permute.xlu0 %3866
        %3870 = vset.pattern.permute.xlu0 0
        %3871 = vperm.xlu0 %3870, %v3853
        %v3872 = vpop.permute.xlu0 %3871
        %v3878 = vunpack.c.l.b16 %v3828
        %v3879 = vunpack.c.h.b16 %v3828
        %v3880 = vunpack.c.l.b16 %v3829
        %v3881 = vunpack.c.h.b16 %v3829
        %v3882 = vunpack.c.l.b16 %v3830
        %v3883 = vunpack.c.h.b16 %v3830
        %v3884 = vunpack.c.l.b16 %v3831
        %v3885 = vunpack.c.h.b16 %v3831
        %v3886 = vpack.c.b16 %v3880, %v3878
        %v3887 = vpack.c.b16 %v3881, %v3879
        %v3888 = vpack.c.b16 %v3884, %v3882
        %v3889 = vpack.c.b16 %v3885, %v3883
        %v3910 = vunpack.c.l.b16 %v3832
        %v3911 = vunpack.c.l.b16 %v3833
        %v3912 = vunpack.c.l.b16 %v3834
        %v3913 = vunpack.c.l.b16 %v3835
        %v3914 = vunpack.c.l.b16 %v3836
        %v3915 = vunpack.c.l.b16 %v3837
        %v3916 = vunpack.c.l.b16 %v3838
        %v3917 = vunpack.c.l.b16 %v3839
        %v3918 = vunpack.c.l.b16 %v3840
        %v3919 = vunpack.c.l.b16 %v3841
        %v3920 = vunpack.c.l.b16 %v3842
        %v3921 = vunpack.c.l.b16 %v3843
        %v3922 = vunpack.c.l.b16 %v3844
        %v3923 = vunpack.c.l.b16 %v3845
        %v3924 = vunpack.c.l.b16 %v3846
        %v3925 = vunpack.c.l.b16 %v3847
        %v3926 = vunpack.c.l.b16 %v3848
        %v3927 = vunpack.c.l.b16 %v3849
        %v3928 = vpack.c.b16 %v3911, %v3910
        %v3929 = vpack.c.b16 %v3913, %v3912
        %v3930 = vpack.c.b16 %v3915, %v3914
        %v3931 = vpack.c.b16 %v3917, %v3916
        %v3932 = vpack.c.b16 %v3919, %v3918
        %v3933 = vpack.c.b16 %v3921, %v3920
        %v3934 = vpack.c.b16 %v3923, %v3922
        %v3935 = vpack.c.b16 %v3925, %v3924
        %v3936 = vpack.c.b16 %v3927, %v3926
        %v3947 = vsel %vm3434, %v3887, 0
        %v3950 = vsel %vm3434, %v3889, 0
        %3952 = vmatprep.subr.bf16.mxu0 0
        %3953 = vmatpush1.bf16.msra.mxu0 %v3935
        %3954 = vmatprep.subr.bf16.mxu0 0
        %3955 = vmatpush1.bf16.msra.mxu0 %v3934
        %3956 = vmatprep.subr.bf16.mxu0 0
        %3957 = vmatpush1.bf16.msra.mxu0 %v3933
        %3958 = vmatprep.subr.bf16.mxu0 0
        %3959 = vmatpush1.bf16.msra.mxu0 %v3932
        %3960 = vmatprep.subr.bf16.mxu0 0
        %3961 = vmatpush1.bf16.msra.mxu0 %v3931
        %3962 = vmatprep.subr.bf16.mxu0 0
        %3963 = vmatpush1.bf16.msra.mxu0 %v3930
        %3964 = vmatprep.subr.bf16.mxu0 0
        %3965 = vmatpush1.bf16.msra.mxu0 %v3929
        %3966 = vmatprep.subr.bf16.mxu0 0
        %3967 = vmatpush1.bf16.msra.mxu0 %v3928
        %3968 = vmatprep.subr.bf16.mxu0 0
        %3969 = vmatpush2.bf16.msra.mxu0 0
        %3970 = vmatprep.subr.bf16.mxu0 0
        %3971 = vmatpush2.bf16.msra.mxu0 0
        %3972 = vmatprep.subr.bf16.mxu0 0
        %3973 = vmatpush2.bf16.msra.mxu0 0
        %3974 = vmatprep.subr.bf16.mxu0 0
        %3975 = vmatpush2.bf16.msra.mxu0 0
        %3976 = vmatprep.subr.bf16.mxu0 0
        %3977 = vmatpush2.bf16.msra.mxu0 0
        %3978 = vmatprep.subr.bf16.mxu0 0
        %3979 = vmatpush2.bf16.msra.mxu0 0
        %3980 = vmatprep.subr.bf16.mxu0 0
        %3981 = vmatpush2.bf16.msra.mxu0 0
        %3982 = vmatprep.subr.bf16.mxu0 0
        %3983 = vmatpush2.bf16.msra.mxu0 %v3936
        %3984 = vmatprep.mubr.bf16.mxu0 %v3947
        %3985 = vmatmul.mubr.bf16.gmra.mxu0 %v3886
        %v3986 = vpop.f32.mrf.mxu0
        %v3987 = vadd.f32 %v3857, %v3986
        %v3988 = vpop.f32.mrf.mxu0
        %v3989 = vpop.f32.mrf.mxu0
        %v3990 = vadd.f32 %v3862, %v3989
        %v3991 = vpop.f32.mrf.mxu0
        %3992 = vmatprep.mubr.bf16.mxu0 %v3950
        %3993 = vmatmul.mubr.bf16.gmra.mxu0 %v3888
        %v3994 = vpop.f32.mrf.mxu0
        %v3995 = vadd.f32 %v3867, %v3994
        %v3996 = vpop.f32.mrf.mxu0
        %v3997 = vpop.f32.mrf.mxu0
        %v3998 = vadd.f32 %v3872, %v3997
        %v3999 = vpop.f32.mrf.mxu0
        %4000 = vdwg.mxu0
        %v4001 = vmax.f32 %v3987, 0.0
        %v4002 = vmax.f32 %v3990, 0.0
        %v4003 = vmax.f32 %v3995, 0.0
        %v4004 = vmax.f32 %v3998, 0.0
        %v4005 = vpack.c.bf16 %v4002, %v4001
        %v4006 = vpack.c.bf16 %v4004, %v4003
        %4007 = vst.msk [vmem:[#allocation2] sm:$0xf] %vm3572, 0
        %4008 = vst.msk [vmem:[#allocation2 + $0x8] sm:$0xf] %vm3572, 0
        %4009 = vst.msk [vmem:[#allocation2 + $0x10] sm:$0xf] %vm3572, 0
        %4010 = vst.msk [vmem:[#allocation2 + $0x18] sm:$0xf] %vm3572, 0
        %4011 = vst.msk [vmem:[#allocation2 + $0x20] sm:$0xf] %vm3572, 0
        %4012 = vst.msk [vmem:[#allocation2 + $0x28] sm:$0xf] %vm3572, 0
        %4013 = vst.msk [vmem:[#allocation2 + $0x30] sm:$0xf] %vm3572, 0
        %4014 = vst.msk [vmem:[#allocation2 + $0x38] sm:$0xf] %vm3572, 0
        %4015 = vst.msk [vmem:[#allocation2 + $0x40] sm:$0xf] %vm3572, 0
        %4016 = vst.msk [vmem:[#allocation2 + $0x48] sm:$0xf] %vm3572, 0
        %4017 = vst.msk [vmem:[#allocation2 + $0x50] sm:$0xf] %vm3572, 0
        %4018 = vst.msk [vmem:[#allocation2 + $0x58] sm:$0xf] %vm3572, 0
        %4019 = vst.msk [vmem:[#allocation2 + $0x60] sm:$0xf] %vm3572, 0
        %4020 = vst.msk [vmem:[#allocation2 + $0x68] sm:$0xf] %vm3572, 0
        %4021 = vst.msk [vmem:[#allocation2 + $0x70] sm:$0xf] %vm3572, 0
        %4022 = vst.msk [vmem:[#allocation2 + $0x78] sm:$0xf] %vm3572, 0
        %4023 = vst.msk [vmem:[#allocation2 + $0x80] sm:$0xf] %vm3572, 0
        %4024 = vst.msk [vmem:[#allocation2 + $0x88] sm:$0xf] %vm3572, 0
        %4025 = vst.msk [vmem:[#allocation2 + $0x90] sm:$0xf] %vm3572, 0
        %4026 = vst.msk [vmem:[#allocation2 + $0x98] sm:$0xf] %vm3572, 0
        %4027 = vst.msk [vmem:[#allocation2 + $0xa0] sm:$0xf] %vm3572, 0
        %4028 = vst.msk [vmem:[#allocation2 + $0xa8] sm:$0xf] %vm3572, 0
        %4029 = vst.msk [vmem:[#allocation2 + $0xb0] sm:$0xf] %vm3572, 0
        %4030 = vst.msk [vmem:[#allocation2 + $0xb8] sm:$0xf] %vm3572, 0
        %4031 = vst.msk [vmem:[#allocation2 + $0xc0] sm:$0xf] %vm3572, 0
        %4032 = vst.msk [vmem:[#allocation2 + $0xc8] sm:$0xf] %vm3572, 0
        %4033 = vst.msk [vmem:[#allocation2 + $0xd0] sm:$0xf] %vm3572, 0
        %4034 = vst.msk [vmem:[#allocation2 + $0xd8] sm:$0xf] %vm3572, 0
        %4035 = vst.msk [vmem:[#allocation2 + $0xe0] sm:$0xf] %vm3572, 0
        %4036 = vst.msk [vmem:[#allocation2 + $0xe8] sm:$0xf] %vm3572, 0
        %4037 = vst.msk [vmem:[#allocation2 + $0xf0] sm:$0xf] %vm3572, 0
        %4038 = vst.msk [vmem:[#allocation2 + $0xf8] sm:$0xf] %vm3572, 0
        %4039 = vst.msk [vmem:[#allocation2 + $0x100] sm:$0xf] %vm3572, 0
        %4040 = vst.msk [vmem:[#allocation2 + $0x108] sm:$0xf] %vm3572, 0
        %4041 = vst.msk [vmem:[#allocation2 + $0x110] sm:$0xf] %vm3572, 0
        %4042 = vst.msk [vmem:[#allocation2 + $0x118] sm:$0xf] %vm3572, 0
        %v4043 = vld [vmem:[#allocation5] sm:$0x1]
        %v4045 = vpack.i.b16 %v4043, %v4043
        %v4047 = vlaneseq
        %v4048 = vshrl.u32 %v4047, 7
        %v4049 = vsub.s32 0, %v4048
        %v4050 = vrot.slane %v4045, %v4049
        %4052 = vrot.lane.b32.xlu0 %v4050, 123
        %v4053 = vpop.permute.xlu0 %4052
        %v4055 = vmul.bf16 %v4005, %v4053
        %v4056 = vmul.bf16 %v4006, %v4053
        %v4059 = vunpack.c.l.b16 %v4055
        %v4060 = vunpack.c.h.b16 %v4055
        %v4061 = vunpack.c.l.b16 %v4056
        %v4062 = vunpack.c.h.b16 %v4056
        %v4063 = vpack.c.b16 %v4059, %v4059
        %v4064 = vpack.c.b16 %v4060, %v4060
        %v4065 = vpack.c.b16 %v4061, %v4061
        %v4066 = vpack.c.b16 %v4062, %v4062
        %4067 = vrot.lane.b32.xlu0 %v4063, 5
        %v4068 = vpop.permute.xlu0 %4067
        %4069 = vrot.lane.b32.xlu0 %v4064, 5
        %v4070 = vpop.permute.xlu0 %4069
        %4071 = vrot.lane.b32.xlu0 %v4065, 5
        %v4072 = vpop.permute.xlu0 %4071
        %4073 = vrot.lane.b32.xlu0 %v4066, 5
        %v4074 = vpop.permute.xlu0 %4073
        %4079 = vst.msk [vmem:[#allocation2] sm:$0xf] %vm3615, %v4068
        %4080 = vst.msk [vmem:[#allocation2 + $0x8] sm:$0xf] %vm3615, %v4070
        %4081 = vst.msk [vmem:[#allocation2 + $0x10] sm:$0xf] %vm3615, %v4072
        %4082 = vst.msk [vmem:[#allocation2 + $0x18] sm:$0xf] %vm3615, %v4074
        %v4083 = vld [vmem:[#allocation5] sm:$0x1]
        %v4085 = vshrl.u32 %v4083, 16
        %v4086 = vpack.i.b16 %v4085, %v4085
        %v4088 = vlaneseq
        %v4089 = vshrl.u32 %v4088, 7
        %v4090 = vsub.s32 0, %v4089
        %v4091 = vrot.slane %v4086, %v4090
        %4093 = vrot.lane.b32.xlu0 %v4091, 124
        %v4094 = vpop.permute.xlu0 %4093
        %v4096 = vmul.bf16 %v4005, %v4094
        %v4097 = vmul.bf16 %v4006, %v4094
        %v4100 = vunpack.c.l.b16 %v4096
        %v4101 = vunpack.c.h.b16 %v4096
        %v4102 = vunpack.c.l.b16 %v4097
        %v4103 = vunpack.c.h.b16 %v4097
        %v4104 = vpack.c.b16 %v4100, %v4100
        %v4105 = vpack.c.b16 %v4101, %v4101
        %v4106 = vpack.c.b16 %v4102, %v4102
        %v4107 = vpack.c.b16 %v4103, %v4103
        %4108 = vrot.lane.b32.xlu0 %v4104, 4
        %v4109 = vpop.permute.xlu0 %4108
        %4110 = vrot.lane.b32.xlu0 %v4105, 4
        %v4111 = vpop.permute.xlu0 %4110
        %4112 = vrot.lane.b32.xlu0 %v4106, 4
        %v4113 = vpop.permute.xlu0 %4112
        %4114 = vrot.lane.b32.xlu0 %v4107, 4
        %v4115 = vpop.permute.xlu0 %4114
        %4120 = vst.msk [vmem:[#allocation2 + $0x20] sm:$0xf] %vm3643, %v4109
        %4121 = vst.msk [vmem:[#allocation2 + $0x28] sm:$0xf] %vm3643, %v4111
        %4122 = vst.msk [vmem:[#allocation2 + $0x30] sm:$0xf] %vm3643, %v4113
        %4123 = vst.msk [vmem:[#allocation2 + $0x38] sm:$0xf] %vm3643, %v4115
        %v4124 = vld [vmem:[#allocation5] sm:$0x2]
        %v4126 = vpack.i.b16 %v4124, %v4124
        %v4128 = vlaneseq
        %v4129 = vshrl.u32 %v4128, 7
        %v4130 = vsub.s32 1, %v4129
        %v4131 = vrot.slane %v4126, %v4130
        %4133 = vrot.lane.b32.xlu0 %v4131, 125
        %v4134 = vpop.permute.xlu0 %4133
        %v4136 = vmul.bf16 %v4005, %v4134
        %v4137 = vmul.bf16 %v4006, %v4134
        %v4140 = vunpack.c.l.b16 %v4136
        %v4141 = vunpack.c.h.b16 %v4136
        %v4142 = vunpack.c.l.b16 %v4137
        %v4143 = vunpack.c.h.b16 %v4137
        %v4144 = vpack.c.b16 %v4140, %v4140
        %v4145 = vpack.c.b16 %v4141, %v4141
        %v4146 = vpack.c.b16 %v4142, %v4142
        %v4147 = vpack.c.b16 %v4143, %v4143
        %4148 = vrot.lane.b32.xlu0 %v4144, 3
        %v4149 = vpop.permute.xlu0 %4148
        %4150 = vrot.lane.b32.xlu0 %v4145, 3
        %v4151 = vpop.permute.xlu0 %4150
        %4152 = vrot.lane.b32.xlu0 %v4146, 3
        %v4153 = vpop.permute.xlu0 %4152
        %4154 = vrot.lane.b32.xlu0 %v4147, 3
        %v4155 = vpop.permute.xlu0 %4154
        %4160 = vst.msk [vmem:[#allocation2 + $0x40] sm:$0xf] %vm3670, %v4149
        %4161 = vst.msk [vmem:[#allocation2 + $0x48] sm:$0xf] %vm3670, %v4151
        %4162 = vst.msk [vmem:[#allocation2 + $0x50] sm:$0xf] %vm3670, %v4153
        %4163 = vst.msk [vmem:[#allocation2 + $0x58] sm:$0xf] %vm3670, %v4155
        %v4164 = vld [vmem:[#allocation5] sm:$0x1]
        %v4166 = vpack.i.b16 %v4164, %v4164
        %v4168 = vlaneseq
        %v4169 = vshrl.u32 %v4168, 7
        %v4170 = vsub.s32 0, %v4169
        %v4171 = vrot.slane %v4166, %v4170
        %4173 = vrot.lane.b32.xlu0 %v4171, 127
        %v4174 = vpop.permute.xlu0 %4173
        %v4176 = vmul.bf16 %v4005, %v4174
        %v4177 = vmul.bf16 %v4006, %v4174
        %v4180 = vunpack.c.l.b16 %v4176
        %v4181 = vunpack.c.h.b16 %v4176
        %v4182 = vunpack.c.l.b16 %v4177
        %v4183 = vunpack.c.h.b16 %v4177
        %v4184 = vpack.c.b16 %v4180, %v4180
        %v4185 = vpack.c.b16 %v4181, %v4181
        %v4186 = vpack.c.b16 %v4182, %v4182
        %v4187 = vpack.c.b16 %v4183, %v4183
        %4188 = vrot.lane.b32.xlu0 %v4184, 1
        %v4189 = vpop.permute.xlu0 %4188
        %4190 = vrot.lane.b32.xlu0 %v4185, 1
        %v4191 = vpop.permute.xlu0 %4190
        %4192 = vrot.lane.b32.xlu0 %v4186, 1
        %v4193 = vpop.permute.xlu0 %4192
        %4194 = vrot.lane.b32.xlu0 %v4187, 1
        %v4195 = vpop.permute.xlu0 %4194
        %4200 = vst.msk [vmem:[#allocation2 + $0x60] sm:$0xf] %vm3697, %v4189
        %4201 = vst.msk [vmem:[#allocation2 + $0x68] sm:$0xf] %vm3697, %v4191
        %4202 = vst.msk [vmem:[#allocation2 + $0x70] sm:$0xf] %vm3697, %v4193
        %4203 = vst.msk [vmem:[#allocation2 + $0x78] sm:$0xf] %vm3697, %v4195
        %v4204 = vld [vmem:[#allocation5] sm:$0x1]
        %v4206 = vshrl.u32 %v4204, 16
        %v4207 = vpack.i.b16 %v4206, %v4206
        %v4209 = vlaneseq
        %v4210 = vshrl.u32 %v4209, 7
        %v4211 = vsub.s32 0, %v4210
        %v4212 = vrot.slane %v4207, %v4211
        %v4213 = vmul.bf16 %v4005, %v4212
        %v4214 = vmul.bf16 %v4006, %v4212
        %v4217 = vunpack.c.l.b16 %v4213
        %v4218 = vunpack.c.h.b16 %v4213
        %v4219 = vunpack.c.l.b16 %v4214
        %v4220 = vunpack.c.h.b16 %v4214
        %v4221 = vpack.c.b16 %v4217, %v4217
        %v4222 = vpack.c.b16 %v4218, %v4218
        %v4223 = vpack.c.b16 %v4219, %v4219
        %v4224 = vpack.c.b16 %v4220, %v4220
        %4229 = vst.msk [vmem:[#allocation2 + $0x80] sm:$0xf] %vm3572, %v4221
        %4230 = vst.msk [vmem:[#allocation2 + $0x88] sm:$0xf] %vm3572, %v4222
        %4231 = vst.msk [vmem:[#allocation2 + $0x90] sm:$0xf] %vm3572, %v4223
        %4232 = vst.msk [vmem:[#allocation2 + $0x98] sm:$0xf] %vm3572, %v4224
        %v4233 = vld [vmem:[#allocation5] sm:$0x2]
        %v4235 = vpack.i.b16 %v4233, %v4233
        %v4237 = vlaneseq
        %v4238 = vshrl.u32 %v4237, 7
        %v4239 = vsub.s32 1, %v4238
        %v4240 = vrot.slane %v4235, %v4239
        %4242 = vrot.lane.b32.xlu0 %v4240, 1
        %v4243 = vpop.permute.xlu0 %4242
        %v4245 = vmul.bf16 %v4005, %v4243
        %v4246 = vmul.bf16 %v4006, %v4243
        %v4249 = vunpack.c.l.b16 %v4245
        %v4250 = vunpack.c.h.b16 %v4245
        %v4251 = vunpack.c.l.b16 %v4246
        %v4252 = vunpack.c.h.b16 %v4246
        %v4253 = vpack.c.b16 %v4249, %v4249
        %v4254 = vpack.c.b16 %v4250, %v4250
        %v4255 = vpack.c.b16 %v4251, %v4251
        %v4256 = vpack.c.b16 %v4252, %v4252
        %4257 = vrot.lane.b32.xlu0 %v4253, 127
        %v4258 = vpop.permute.xlu0 %4257
        %4259 = vrot.lane.b32.xlu0 %v4254, 127
        %v4260 = vpop.permute.xlu0 %4259
        %4261 = vrot.lane.b32.xlu0 %v4255, 127
        %v4262 = vpop.permute.xlu0 %4261
        %4263 = vrot.lane.b32.xlu0 %v4256, 127
        %v4264 = vpop.permute.xlu0 %4263
        %4269 = vst.msk [vmem:[#allocation2 + $0xa0] sm:$0xf] %vm3743, %v4258
        %4270 = vst.msk [vmem:[#allocation2 + $0xa8] sm:$0xf] %vm3743, %v4260
        %4271 = vst.msk [vmem:[#allocation2 + $0xb0] sm:$0xf] %vm3743, %v4262
        %4272 = vst.msk [vmem:[#allocation2 + $0xb8] sm:$0xf] %vm3743, %v4264
        %v4273 = vld [vmem:[#allocation5] sm:$0x1]
        %v4275 = vpack.i.b16 %v4273, %v4273
        %v4277 = vlaneseq
        %v4278 = vshrl.u32 %v4277, 7
        %v4279 = vsub.s32 0, %v4278
        %v4280 = vrot.slane %v4275, %v4279
        %4282 = vrot.lane.b32.xlu0 %v4280, 3
        %v4283 = vpop.permute.xlu0 %4282
        %v4285 = vmul.bf16 %v4005, %v4283
        %v4286 = vmul.bf16 %v4006, %v4283
        %v4289 = vunpack.c.l.b16 %v4285
        %v4290 = vunpack.c.h.b16 %v4285
        %v4291 = vunpack.c.l.b16 %v4286
        %v4292 = vunpack.c.h.b16 %v4286
        %v4293 = vpack.c.b16 %v4289, %v4289
        %v4294 = vpack.c.b16 %v4290, %v4290
        %v4295 = vpack.c.b16 %v4291, %v4291
        %v4296 = vpack.c.b16 %v4292, %v4292
        %4297 = vrot.lane.b32.xlu0 %v4293, 125
        %v4298 = vpop.permute.xlu0 %4297
        %4299 = vrot.lane.b32.xlu0 %v4294, 125
        %v4300 = vpop.permute.xlu0 %4299
        %4301 = vrot.lane.b32.xlu0 %v4295, 125
        %v4302 = vpop.permute.xlu0 %4301
        %4303 = vrot.lane.b32.xlu0 %v4296, 125
        %v4304 = vpop.permute.xlu0 %4303
        %4309 = vst.msk [vmem:[#allocation2 + $0xc0] sm:$0xf] %vm3770, %v4298
        %4310 = vst.msk [vmem:[#allocation2 + $0xc8] sm:$0xf] %vm3770, %v4300
        %4311 = vst.msk [vmem:[#allocation2 + $0xd0] sm:$0xf] %vm3770, %v4302
        %4312 = vst.msk [vmem:[#allocation2 + $0xd8] sm:$0xf] %vm3770, %v4304
        %v4313 = vld [vmem:[#allocation5] sm:$0x1]
        %v4315 = vshrl.u32 %v4313, 16
        %v4316 = vpack.i.b16 %v4315, %v4315
        %v4318 = vlaneseq
        %v4319 = vshrl.u32 %v4318, 7
        %v4320 = vsub.s32 0, %v4319
        %v4321 = vrot.slane %v4316, %v4320
        %4323 = vrot.lane.b32.xlu0 %v4321, 4
        %v4324 = vpop.permute.xlu0 %4323
        %v4326 = vmul.bf16 %v4005, %v4324
        %v4327 = vmul.bf16 %v4006, %v4324
        %v4330 = vunpack.c.l.b16 %v4326
        %v4331 = vunpack.c.h.b16 %v4326
        %v4332 = vunpack.c.l.b16 %v4327
        %v4333 = vunpack.c.h.b16 %v4327
        %v4334 = vpack.c.b16 %v4330, %v4330
        %v4335 = vpack.c.b16 %v4331, %v4331
        %v4336 = vpack.c.b16 %v4332, %v4332
        %v4337 = vpack.c.b16 %v4333, %v4333
        %4338 = vrot.lane.b32.xlu0 %v4334, 124
        %v4339 = vpop.permute.xlu0 %4338
        %4340 = vrot.lane.b32.xlu0 %v4335, 124
        %v4341 = vpop.permute.xlu0 %4340
        %4342 = vrot.lane.b32.xlu0 %v4336, 124
        %v4343 = vpop.permute.xlu0 %4342
        %4344 = vrot.lane.b32.xlu0 %v4337, 124
        %v4345 = vpop.permute.xlu0 %4344
        %4350 = vst.msk [vmem:[#allocation2 + $0xe0] sm:$0xf] %vm3798, %v4339
        %4351 = vst.msk [vmem:[#allocation2 + $0xe8] sm:$0xf] %vm3798, %v4341
        %4352 = vst.msk [vmem:[#allocation2 + $0xf0] sm:$0xf] %vm3798, %v4343
        %4353 = vst.msk [vmem:[#allocation2 + $0xf8] sm:$0xf] %vm3798, %v4345
        %v4354 = vld [vmem:[#allocation5] sm:$0x2]
        %v4356 = vpack.i.b16 %v4354, %v4354
        %v4358 = vlaneseq
        %v4359 = vshrl.u32 %v4358, 7
        %v4360 = vsub.s32 1, %v4359
        %v4361 = vrot.slane %v4356, %v4360
        %4363 = vrot.lane.b32.xlu0 %v4361, 5
        %v4364 = vpop.permute.xlu0 %4363
        %v4366 = vmul.bf16 %v4005, %v4364
        %v4367 = vmul.bf16 %v4006, %v4364
        %v4370 = vunpack.c.l.b16 %v4366
        %v4371 = vunpack.c.h.b16 %v4366
        %v4372 = vunpack.c.l.b16 %v4367
        %v4373 = vunpack.c.h.b16 %v4367
        %v4374 = vpack.c.b16 %v4370, %v4370
        %v4375 = vpack.c.b16 %v4371, %v4371
        %v4376 = vpack.c.b16 %v4372, %v4372
        %v4377 = vpack.c.b16 %v4373, %v4373
        %4378 = vrot.lane.b32.xlu0 %v4374, 123
        %v4379 = vpop.permute.xlu0 %4378
        %4380 = vrot.lane.b32.xlu0 %v4375, 123
        %v4381 = vpop.permute.xlu0 %4380
        %4382 = vrot.lane.b32.xlu0 %v4376, 123
        %v4383 = vpop.permute.xlu0 %4382
        %4384 = vrot.lane.b32.xlu0 %v4377, 123
        %v4385 = vpop.permute.xlu0 %4384
        %4390 = vst.msk [vmem:[#allocation2 + $0x100] sm:$0xf] %vm3825, %v4379
        %4391 = vst.msk [vmem:[#allocation2 + $0x108] sm:$0xf] %vm3825, %v4381
        %4392 = vst.msk [vmem:[#allocation2 + $0x110] sm:$0xf] %vm3825, %v4383
        %4393 = vst.msk [vmem:[#allocation2 + $0x118] sm:$0xf] %vm3825, %v4385
        %v4394 = vld [vmem:[%s37] sm:$0xff]
        %v4395 = vld [vmem:[%s37 + $0x8] sm:$0xf]
        %v4396 = vld [vmem:[%s37 + $0xc] sm:$0xff]
        %v4397 = vld [vmem:[%s37 + $0x14] sm:$0xf]
        %v4398 = vld [vmem:[%s37 + $0x18] sm:$0xff]
        %v4399 = vld [vmem:[%s37 + $0x20] sm:$0xf]
        %v4400 = vld [vmem:[%s37 + $0x24] sm:$0xff]
        %v4401 = vld [vmem:[%s37 + $0x2c] sm:$0xf]
        %v4402 = vld [vmem:[#allocation2] sm:$0xf]
        %v4403 = vld [vmem:[#allocation2 + $0x8] sm:$0xf]
        %v4404 = vld [vmem:[#allocation2 + $0x10] sm:$0xf]
        %v4405 = vld [vmem:[#allocation2 + $0x18] sm:$0xf]
        %v4406 = vld [vmem:[#allocation2 + $0x20] sm:$0xf]
        %v4407 = vld [vmem:[#allocation2 + $0x28] sm:$0xf]
        %v4408 = vld [vmem:[#allocation2 + $0x30] sm:$0xf]
        %v4409 = vld [vmem:[#allocation2 + $0x38] sm:$0xf]
        %v4410 = vld [vmem:[#allocation2 + $0x40] sm:$0xf]
        %v4411 = vld [vmem:[#allocation2 + $0x48] sm:$0xf]
        %v4412 = vld [vmem:[#allocation2 + $0x50] sm:$0xf]
        %v4413 = vld [vmem:[#allocation2 + $0x58] sm:$0xf]
        %v4414 = vld [vmem:[#allocation2 + $0x60] sm:$0xf]
        %v4415 = vld [vmem:[#allocation2 + $0x68] sm:$0xf]
        %v4416 = vld [vmem:[#allocation2 + $0x70] sm:$0xf]
        %v4417 = vld [vmem:[#allocation2 + $0x78] sm:$0xf]
        %v4418 = vld [vmem:[#allocation2 + $0x80] sm:$0xf]
        %v4419 = vld [vmem:[#allocation2 + $0x88] sm:$0xf]
        %v4420 = vld [vmem:[#allocation2 + $0x90] sm:$0xf]
        %v4421 = vld [vmem:[#allocation2 + $0x98] sm:$0xf]
        %v4422 = vld [vmem:[#allocation2 + $0xa0] sm:$0xf]
        %v4423 = vld [vmem:[#allocation2 + $0xa8] sm:$0xf]
        %v4424 = vld [vmem:[#allocation2 + $0xb0] sm:$0xf]
        %v4425 = vld [vmem:[#allocation2 + $0xb8] sm:$0xf]
        %v4426 = vld [vmem:[#allocation2 + $0xc0] sm:$0xf]
        %v4427 = vld [vmem:[#allocation2 + $0xc8] sm:$0xf]
        %v4428 = vld [vmem:[#allocation2 + $0xd0] sm:$0xf]
        %v4429 = vld [vmem:[#allocation2 + $0xd8] sm:$0xf]
        %v4430 = vld [vmem:[#allocation2 + $0xe0] sm:$0xf]
        %v4431 = vld [vmem:[#allocation2 + $0xe8] sm:$0xf]
        %v4432 = vld [vmem:[#allocation2 + $0xf0] sm:$0xf]
        %v4433 = vld [vmem:[#allocation2 + $0xf8] sm:$0xf]
        %v4434 = vld [vmem:[#allocation2 + $0x100] sm:$0xf]
        %v4435 = vld [vmem:[#allocation2 + $0x108] sm:$0xf]
        %v4436 = vld [vmem:[#allocation2 + $0x110] sm:$0xf]
        %v4437 = vld [vmem:[#allocation2 + $0x118] sm:$0xf]
        %v4438 = vld [vmem:[#allocation25] sm:$0xff]
        %v4439 = vld [vmem:[#allocation25 + $0x8] sm:$0xff]
        %v4440 = vld [vmem:[#allocation25 + $0x10] sm:$0xff]
        %v4441 = vld [vmem:[#allocation25 + $0x18] sm:$0xff]
        %4443 = vset.pattern.permute.xlu0 0
        %4444 = vperm.xlu0 %4443, %v4438
        %v4445 = vpop.permute.xlu0 %4444
        %4448 = vset.pattern.permute.xlu0 0
        %4449 = vperm.xlu0 %4448, %v4439
        %v4450 = vpop.permute.xlu0 %4449
        %4453 = vset.pattern.permute.xlu0 0
        %4454 = vperm.xlu0 %4453, %v4440
        %v4455 = vpop.permute.xlu0 %4454
        %4458 = vset.pattern.permute.xlu0 0
        %4459 = vperm.xlu0 %4458, %v4441
        %v4460 = vpop.permute.xlu0 %4459
        %v4470 = vunpack.c.l.b16 %v4394
        %v4471 = vunpack.c.h.b16 %v4394
        %v4472 = vunpack.c.l.b16 %v4395
        %v4473 = vunpack.c.l.b16 %v4396
        %v4474 = vunpack.c.h.b16 %v4396
        %v4475 = vunpack.c.l.b16 %v4397
        %v4476 = vunpack.c.l.b16 %v4398
        %v4477 = vunpack.c.h.b16 %v4398
        %v4478 = vunpack.c.l.b16 %v4399
        %v4479 = vunpack.c.l.b16 %v4400
        %v4480 = vunpack.c.h.b16 %v4400
        %v4481 = vunpack.c.l.b16 %v4401
        %v4482 = vpack.c.b16 %v4473, %v4470
        %v4483 = vpack.c.b16 %v4474, %v4471
        %v4484 = vpack.c.b16 %v4475, %v4472
        %v4485 = vpack.c.b16 %v4479, %v4476
        %v4486 = vpack.c.b16 %v4480, %v4477
        %v4487 = vpack.c.b16 %v4481, %v4478
        %v4528 = vunpack.c.l.b16 %v4402
        %v4529 = vunpack.c.l.b16 %v4403
        %v4530 = vunpack.c.l.b16 %v4404
        %v4531 = vunpack.c.l.b16 %v4405
        %v4532 = vunpack.c.l.b16 %v4406
        %v4533 = vunpack.c.l.b16 %v4407
        %v4534 = vunpack.c.l.b16 %v4408
        %v4535 = vunpack.c.l.b16 %v4409
        %v4536 = vunpack.c.l.b16 %v4410
        %v4537 = vunpack.c.l.b16 %v4411
        %v4538 = vunpack.c.l.b16 %v4412
        %v4539 = vunpack.c.l.b16 %v4413
        %v4540 = vunpack.c.l.b16 %v4414
        %v4541 = vunpack.c.l.b16 %v4415
        %v4542 = vunpack.c.l.b16 %v4416
        %v4543 = vunpack.c.l.b16 %v4417
        %v4544 = vunpack.c.l.b16 %v4418
        %v4545 = vunpack.c.l.b16 %v4419
        %v4546 = vunpack.c.l.b16 %v4420
        %v4547 = vunpack.c.l.b16 %v4421
        %v4548 = vunpack.c.l.b16 %v4422
        %v4549 = vunpack.c.l.b16 %v4423
        %v4550 = vunpack.c.l.b16 %v4424
        %v4551 = vunpack.c.l.b16 %v4425
        %v4552 = vunpack.c.l.b16 %v4426
        %v4553 = vunpack.c.l.b16 %v4427
        %v4554 = vunpack.c.l.b16 %v4428
        %v4555 = vunpack.c.l.b16 %v4429
        %v4556 = vunpack.c.l.b16 %v4430
        %v4557 = vunpack.c.l.b16 %v4431
        %v4558 = vunpack.c.l.b16 %v4432
        %v4559 = vunpack.c.l.b16 %v4433
        %v4560 = vunpack.c.l.b16 %v4434
        %v4561 = vunpack.c.l.b16 %v4435
        %v4562 = vunpack.c.l.b16 %v4436
        %v4563 = vunpack.c.l.b16 %v4437
        %v4564 = vpack.c.b16 %v4529, %v4528
        %v4565 = vpack.c.b16 %v4531, %v4530
        %v4566 = vpack.c.b16 %v4533, %v4532
        %v4567 = vpack.c.b16 %v4535, %v4534
        %v4568 = vpack.c.b16 %v4537, %v4536
        %v4569 = vpack.c.b16 %v4539, %v4538
        %v4570 = vpack.c.b16 %v4541, %v4540
        %v4571 = vpack.c.b16 %v4543, %v4542
        %v4572 = vpack.c.b16 %v4545, %v4544
        %v4573 = vpack.c.b16 %v4547, %v4546
        %v4574 = vpack.c.b16 %v4549, %v4548
        %v4575 = vpack.c.b16 %v4551, %v4550
        %v4576 = vpack.c.b16 %v4553, %v4552
        %v4577 = vpack.c.b16 %v4555, %v4554
        %v4578 = vpack.c.b16 %v4557, %v4556
        %v4579 = vpack.c.b16 %v4559, %v4558
        %v4580 = vpack.c.b16 %v4561, %v4560
        %v4581 = vpack.c.b16 %v4563, %v4562
        %vm4600 = vcmask 261120
        %v4602 = vsel %vm4600, %v4484, 0
        %v4605 = vsel %vm4600, %v4487, 0
        %4607 = vmatprep.subr.bf16.mxu0 0
        %4608 = vmatpush1.bf16.msra.mxu0 %v4571
        %4609 = vmatprep.subr.bf16.mxu0 0
        %4610 = vmatpush1.bf16.msra.mxu0 %v4570
        %4611 = vmatprep.subr.bf16.mxu0 0
        %4612 = vmatpush1.bf16.msra.mxu0 %v4569
        %4613 = vmatprep.subr.bf16.mxu0 0
        %4614 = vmatpush1.bf16.msra.mxu0 %v4568
        %4615 = vmatprep.subr.bf16.mxu0 0
        %4616 = vmatpush1.bf16.msra.mxu0 %v4567
        %4617 = vmatprep.subr.bf16.mxu0 0
        %4618 = vmatpush1.bf16.msra.mxu0 %v4566
        %4619 = vmatprep.subr.bf16.mxu0 0
        %4620 = vmatpush1.bf16.msra.mxu0 %v4565
        %4621 = vmatprep.subr.bf16.mxu0 0
        %4622 = vmatpush1.bf16.msra.mxu0 %v4564
        %4623 = vmatprep.subr.bf16.mxu0 0
        %4624 = vmatpush2.bf16.msra.mxu0 %v4579
        %4625 = vmatprep.subr.bf16.mxu0 0
        %4626 = vmatpush2.bf16.msra.mxu0 %v4578
        %4627 = vmatprep.subr.bf16.mxu0 0
        %4628 = vmatpush2.bf16.msra.mxu0 %v4577
        %4629 = vmatprep.subr.bf16.mxu0 0
        %4630 = vmatpush2.bf16.msra.mxu0 %v4576
        %4631 = vmatprep.subr.bf16.mxu0 0
        %4632 = vmatpush2.bf16.msra.mxu0 %v4575
        %4633 = vmatprep.subr.bf16.mxu0 0
        %4634 = vmatpush2.bf16.msra.mxu0 %v4574
        %4635 = vmatprep.subr.bf16.mxu0 0
        %4636 = vmatpush2.bf16.msra.mxu0 %v4573
        %4637 = vmatprep.subr.bf16.mxu0 0
        %4638 = vmatpush2.bf16.msra.mxu0 %v4572
        %4639 = vmatprep.mubr.bf16.mxu0 %v4483
        %4640 = vmatmul.mubr.bf16.gmra.mxu0 %v4482
        %v4641 = vpop.f32.mrf.mxu0
        %v4642 = vadd.f32 %v4445, %v4641
        %v4643 = vpop.f32.mrf.mxu0
        %v4644 = vpop.f32.mrf.mxu0
        %v4645 = vadd.f32 %v4450, %v4644
        %v4646 = vpop.f32.mrf.mxu0
        %4647 = vmatprep.mubr.bf16.mxu0 %v4486
        %4648 = vmatmul.mubr.bf16.gmra.mxu0 %v4485
        %v4649 = vpop.f32.mrf.mxu0
        %v4650 = vadd.f32 %v4455, %v4649
        %v4651 = vpop.f32.mrf.mxu0
        %v4652 = vpop.f32.mrf.mxu0
        %v4653 = vadd.f32 %v4460, %v4652
        %v4654 = vpop.f32.mrf.mxu0
        %4655 = vdwg.mxu0
        %4656 = vmatprep.subr.bf16.mxu0 0
        %4657 = vmatpush1.bf16.msra.mxu0 0
        %4658 = vmatprep.subr.bf16.mxu0 0
        %4659 = vmatpush1.bf16.msra.mxu0 0
        %4660 = vmatprep.subr.bf16.mxu0 0
        %4661 = vmatpush1.bf16.msra.mxu0 0
        %4662 = vmatprep.subr.bf16.mxu0 0
        %4663 = vmatpush1.bf16.msra.mxu0 0
        %4664 = vmatprep.subr.bf16.mxu0 0
        %4665 = vmatpush1.bf16.msra.mxu0 0
        %4666 = vmatprep.subr.bf16.mxu0 0
        %4667 = vmatpush1.bf16.msra.mxu0 0
        %4668 = vmatprep.subr.bf16.mxu0 0
        %4669 = vmatpush1.bf16.msra.mxu0 %v4581
        %4670 = vmatprep.subr.bf16.mxu0 0
        %4671 = vmatpush1.bf16.msra.mxu0 %v4580
        %4672 = vmatprep.subr.bf16.mxu0 0
        %4673 = vmatpush2.bf16.msra.mxu0 0
        %4674 = vmatprep.subr.bf16.mxu0 0
        %4675 = vmatpush2.bf16.msra.mxu0 0
        %4676 = vmatprep.subr.bf16.mxu0 0
        %4677 = vmatpush2.bf16.msra.mxu0 0
        %4678 = vmatprep.subr.bf16.mxu0 0
        %4679 = vmatpush2.bf16.msra.mxu0 0
        %4680 = vmatprep.subr.bf16.mxu0 0
        %4681 = vmatpush2.bf16.msra.mxu0 0
        %4682 = vmatprep.subr.bf16.mxu0 0
        %4683 = vmatpush2.bf16.msra.mxu0 0
        %4684 = vmatprep.subr.bf16.mxu0 0
        %4685 = vmatpush2.bf16.msra.mxu0 0
        %4686 = vmatprep.subr.bf16.mxu0 0
        %4687 = vmatpush2.bf16.msra.mxu0 0
        %4688 = vmatprep.mubr.bf16.mxu0 0
        %4689 = vmatmul.mubr.bf16.gmra.mxu0 %v4602
        %v4690 = vpop.f32.mrf.mxu0
        %v4691 = vadd.f32 %v4642, %v4690
        %v4692 = vpop.f32.mrf.mxu0
        %v4693 = vpop.f32.mrf.mxu0
        %v4694 = vadd.f32 %v4645, %v4693
        %v4695 = vpop.f32.mrf.mxu0
        %4696 = vmatprep.mubr.bf16.mxu0 0
        %4697 = vmatmul.mubr.bf16.gmra.mxu0 %v4605
        %v4698 = vpop.f32.mrf.mxu0
        %v4699 = vadd.f32 %v4650, %v4698
        %v4700 = vpop.f32.mrf.mxu0
        %v4701 = vpop.f32.mrf.mxu0
        %v4702 = vadd.f32 %v4653, %v4701
        %v4703 = vpop.f32.mrf.mxu0
        %4704 = vdwg.mxu0
        %v4705 = vmax.f32 %v4691, 0.0
        %v4706 = vmax.f32 %v4694, 0.0
        %v4707 = vmax.f32 %v4699, 0.0
        %v4708 = vmax.f32 %v4702, 0.0
        %v4709 = vpack.c.bf16 %v4706, %v4705
        %v4710 = vpack.c.bf16 %v4708, %v4707
        %v4711 = vld [vmem:[#allocation26] sm:$0xf]
        %v4712 = vld [vmem:[#allocation26 + $0x4] sm:$0xf]
        %v4713 = vld [vmem:[#allocation26 + $0x8] sm:$0xf]
        %v4714 = vld [vmem:[#allocation26 + $0xc] sm:$0xf]
        %v4715 = vld [vmem:[#allocation26 + $0x10] sm:$0xf]
        %v4716 = vld [vmem:[#allocation26 + $0x14] sm:$0xf]
        %v4717 = vld [vmem:[#allocation26 + $0x18] sm:$0xf]
        %v4718 = vld [vmem:[#allocation26 + $0x1c] sm:$0xf]
        %v4727 = vunpack.c.l.b16 %v4711
        %v4728 = vunpack.c.l.b16 %v4712
        %v4729 = vunpack.c.l.b16 %v4713
        %v4730 = vunpack.c.l.b16 %v4714
        %v4731 = vunpack.c.l.b16 %v4715
        %v4732 = vunpack.c.l.b16 %v4716
        %v4733 = vunpack.c.l.b16 %v4717
        %v4734 = vunpack.c.l.b16 %v4718
        %v4735 = vpack.c.b16 %v4728, %v4727
        %v4736 = vpack.c.b16 %v4730, %v4729
        %v4737 = vpack.c.b16 %v4732, %v4731
        %v4738 = vpack.c.b16 %v4734, %v4733
        %v4740 = vsel %vm4600, %v4735, 0
        %v4743 = vsel %vm4600, %v4736, 0
        %v4746 = vsel %vm4600, %v4737, 0
        %v4749 = vsel %vm4600, %v4738, 0
        %4751 = vmatprep.subr.bf16.mxu0 0
        %4752 = vmatpush1.bf16.msra.mxu0 0
        %4753 = vmatprep.subr.bf16.mxu0 0
        %4754 = vmatpush1.bf16.msra.mxu0 0
        %4755 = vmatprep.subr.bf16.mxu0 0
        %4756 = vmatpush1.bf16.msra.mxu0 0
        %4757 = vmatprep.subr.bf16.mxu0 0
        %4758 = vmatpush1.bf16.msra.mxu0 0
        %4759 = vmatprep.subr.bf16.mxu0 0
        %4760 = vmatpush1.bf16.msra.mxu0 0
        %4761 = vmatprep.subr.bf16.mxu0 0
        %4762 = vmatpush1.bf16.msra.mxu0 0
        %4763 = vmatprep.subr.bf16.mxu0 0
        %4764 = vmatpush1.bf16.msra.mxu0 %v4710
        %4765 = vmatprep.subr.bf16.mxu0 0
        %4766 = vmatpush1.bf16.msra.mxu0 %v4709
        %4767 = vmatprep.subr.bf16.mxu0 0
        %4768 = vmatpush2.bf16.msra.mxu0 0
        %4769 = vmatprep.subr.bf16.mxu0 0
        %4770 = vmatpush2.bf16.msra.mxu0 0
        %4771 = vmatprep.subr.bf16.mxu0 0
        %4772 = vmatpush2.bf16.msra.mxu0 0
        %4773 = vmatprep.subr.bf16.mxu0 0
        %4774 = vmatpush2.bf16.msra.mxu0 0
        %4775 = vmatprep.subr.bf16.mxu0 0
        %4776 = vmatpush2.bf16.msra.mxu0 0
        %4777 = vmatprep.subr.bf16.mxu0 0
        %4778 = vmatpush2.bf16.msra.mxu0 0
        %4779 = vmatprep.subr.bf16.mxu0 0
        %4780 = vmatpush2.bf16.msra.mxu0 0
        %4781 = vmatprep.subr.bf16.mxu0 0
        %4782 = vmatpush2.bf16.msra.mxu0 0
        %4783 = vmatprep.mubr.bf16.mxu0 0
        %4784 = vmatmul.mubr.bf16.gmra.mxu0 %v4740
        %v4785 = vpop.f32.mrf.mxu0
        %v4786 = vadd.f32 0.0, %v4785
        %v4787 = vpop.f32.mrf.mxu0
        %v4788 = vpop.f32.mrf.mxu0
        %v4789 = vadd.f32 0.0, %v4788
        %v4790 = vpop.f32.mrf.mxu0
        %4791 = vmatprep.mubr.bf16.mxu0 0
        %4792 = vmatmul.mubr.bf16.gmra.mxu0 %v4743
        %v4793 = vpop.f32.mrf.mxu0
        %v4794 = vadd.f32 0.0, %v4793
        %v4795 = vpop.f32.mrf.mxu0
        %v4796 = vpop.f32.mrf.mxu0
        %v4797 = vadd.f32 0.0, %v4796
        %v4798 = vpop.f32.mrf.mxu0
        %4799 = vmatprep.mubr.bf16.mxu0 0
        %4800 = vmatmul.mubr.bf16.gmra.mxu0 %v4746
        %v4801 = vpop.f32.mrf.mxu0
        %v4802 = vadd.f32 0.0, %v4801
        %v4803 = vpop.f32.mrf.mxu0
        %v4804 = vpop.f32.mrf.mxu0
        %v4805 = vadd.f32 0.0, %v4804
        %v4806 = vpop.f32.mrf.mxu0
        %4807 = vmatprep.mubr.bf16.mxu0 0
        %4808 = vmatmul.mubr.bf16.gmra.mxu0 %v4749
        %v4809 = vpop.f32.mrf.mxu0
        %v4810 = vadd.f32 0.0, %v4809
        %v4811 = vpop.f32.mrf.mxu0
        %v4812 = vpop.f32.mrf.mxu0
        %v4813 = vadd.f32 0.0, %v4812
        %v4814 = vpop.f32.mrf.mxu0
        %4815 = vdwg.mxu0
        %v4816 = vpack.c.bf16 %v4789, %v4786
        %v4817 = vpack.c.bf16 %v4797, %v4794
        %v4818 = vpack.c.bf16 %v4805, %v4802
        %v4819 = vpack.c.bf16 %v4813, %v4810
        %v4820 = vld [vmem:[#allocation10] sm:$0xf]
        %v4821 = vld [vmem:[#allocation10 + $0x4] sm:$0xf]
        %v4822 = vld [vmem:[#allocation10 + $0x8] sm:$0xf]
        %v4823 = vld [vmem:[#allocation10 + $0xc] sm:$0xf]
        %v4826 = vunpack.c.l.b16 %v4822
        %v4827 = vunpack.c.l.b16 %v4823
        %v4828 = vpack.c.b16 %v4827, %v4826
        %v4831 = vsel %vm3434, %v4817, 0
        %4833 = vmatprep.subr.bf16.mxu0 0
        %4834 = vmatpush1.bf16.msra.mxu0 0
        %4835 = vmatprep.subr.bf16.mxu0 0
        %4836 = vmatpush1.bf16.msra.mxu0 0
        %4837 = vmatprep.subr.bf16.mxu0 0
        %4838 = vmatpush1.bf16.msra.mxu0 0
        %4839 = vmatprep.subr.bf16.mxu0 0
        %4840 = vmatpush1.bf16.msra.mxu0 0
        %4841 = vmatprep.subr.bf16.mxu0 0
        %4842 = vmatpush1.bf16.msra.mxu0 0
        %4843 = vmatprep.subr.bf16.mxu0 0
        %4844 = vmatpush1.bf16.msra.mxu0 0
        %4845 = vmatprep.subr.bf16.mxu0 0
        %4846 = vmatpush1.bf16.msra.mxu0 0
        %4847 = vmatprep.subr.bf16.mxu0 0
        %4848 = vmatpush1.bf16.msra.mxu0 %v4828
        %4849 = vmatprep.subr.bf16.mxu0 0
        %4850 = vmatpush2.bf16.msra.mxu0 0
        %4851 = vmatprep.subr.bf16.mxu0 0
        %4852 = vmatpush2.bf16.msra.mxu0 0
        %4853 = vmatprep.subr.bf16.mxu0 0
        %4854 = vmatpush2.bf16.msra.mxu0 0
        %4855 = vmatprep.subr.bf16.mxu0 0
        %4856 = vmatpush2.bf16.msra.mxu0 0
        %4857 = vmatprep.subr.bf16.mxu0 0
        %4858 = vmatpush2.bf16.msra.mxu0 0
        %4859 = vmatprep.subr.bf16.mxu0 0
        %4860 = vmatpush2.bf16.msra.mxu0 0
        %4861 = vmatprep.subr.bf16.mxu0 0
        %4862 = vmatpush2.bf16.msra.mxu0 0
        %4863 = vmatprep.subr.bf16.mxu0 0
        %4864 = vmatpush2.bf16.msra.mxu0 0
        %4865 = vmatprep.mubr.bf16.mxu0 0
        %4866 = vmatmul.mubr.bf16.gmra.mxu0 %v4831
        %v4867 = vpop.f32.mrf.mxu0
        %v4868 = vadd.f32 0.0, %v4867
        %v4869 = vpop.f32.mrf.mxu0
        %v4870 = vpop.f32.mrf.mxu0
        %v4871 = vadd.f32 0.0, %v4870
        %v4872 = vpop.f32.mrf.mxu0
        %4873 = vdwg.mxu0
        %v4876 = vunpack.c.l.b16 %v4820
        %v4877 = vunpack.c.l.b16 %v4821
        %v4878 = vpack.c.b16 %v4877, %v4876
        %v4881 = vsel %vm3434, %v4816, 0
        %4883 = vmatprep.subr.bf16.mxu0 0
        %4884 = vmatpush1.bf16.msra.mxu0 0
        %4885 = vmatprep.subr.bf16.mxu0 0
        %4886 = vmatpush1.bf16.msra.mxu0 0
        %4887 = vmatprep.subr.bf16.mxu0 0
        %4888 = vmatpush1.bf16.msra.mxu0 0
        %4889 = vmatprep.subr.bf16.mxu0 0
        %4890 = vmatpush1.bf16.msra.mxu0 0
        %4891 = vmatprep.subr.bf16.mxu0 0
        %4892 = vmatpush1.bf16.msra.mxu0 0
        %4893 = vmatprep.subr.bf16.mxu0 0
        %4894 = vmatpush1.bf16.msra.mxu0 0
        %4895 = vmatprep.subr.bf16.mxu0 0
        %4896 = vmatpush1.bf16.msra.mxu0 0
        %4897 = vmatprep.subr.bf16.mxu0 0
        %4898 = vmatpush1.bf16.msra.mxu0 %v4878
        %4899 = vmatprep.subr.bf16.mxu0 0
        %4900 = vmatpush2.bf16.msra.mxu0 0
        %4901 = vmatprep.subr.bf16.mxu0 0
        %4902 = vmatpush2.bf16.msra.mxu0 0
        %4903 = vmatprep.subr.bf16.mxu0 0
        %4904 = vmatpush2.bf16.msra.mxu0 0
        %4905 = vmatprep.subr.bf16.mxu0 0
        %4906 = vmatpush2.bf16.msra.mxu0 0
        %4907 = vmatprep.subr.bf16.mxu0 0
        %4908 = vmatpush2.bf16.msra.mxu0 0
        %4909 = vmatprep.subr.bf16.mxu0 0
        %4910 = vmatpush2.bf16.msra.mxu0 0
        %4911 = vmatprep.subr.bf16.mxu0 0
        %4912 = vmatpush2.bf16.msra.mxu0 0
        %4913 = vmatprep.subr.bf16.mxu0 0
        %4914 = vmatpush2.bf16.msra.mxu0 0
        %4915 = vmatprep.mubr.bf16.mxu0 0
        %4916 = vmatmul.mubr.bf16.gmra.mxu0 %v4881
        %v4917 = vpop.f32.mrf.mxu0
        %v4918 = vadd.f32 %v4868, %v4917
        %v4919 = vpop.f32.mrf.mxu0
        %v4920 = vpop.f32.mrf.mxu0
        %v4921 = vadd.f32 %v4871, %v4920
        %v4922 = vpop.f32.mrf.mxu0
        %4923 = vdwg.mxu0
        %v4924 = vld [vmem:[#allocation10 + $0x10] sm:$0xf]
        %v4925 = vld [vmem:[#allocation10 + $0x14] sm:$0xf]
        %v4928 = vunpack.c.l.b16 %v4924
        %v4929 = vunpack.c.l.b16 %v4925
        %v4930 = vpack.c.b16 %v4929, %v4928
        %v4933 = vsel %vm3434, %v4818, 0
        %4935 = vmatprep.subr.bf16.mxu0 0
        %4936 = vmatpush1.bf16.msra.mxu0 0
        %4937 = vmatprep.subr.bf16.mxu0 0
        %4938 = vmatpush1.bf16.msra.mxu0 0
        %4939 = vmatprep.subr.bf16.mxu0 0
        %4940 = vmatpush1.bf16.msra.mxu0 0
        %4941 = vmatprep.subr.bf16.mxu0 0
        %4942 = vmatpush1.bf16.msra.mxu0 0
        %4943 = vmatprep.subr.bf16.mxu0 0
        %4944 = vmatpush1.bf16.msra.mxu0 0
        %4945 = vmatprep.subr.bf16.mxu0 0
        %4946 = vmatpush1.bf16.msra.mxu0 0
        %4947 = vmatprep.subr.bf16.mxu0 0
        %4948 = vmatpush1.bf16.msra.mxu0 0
        %4949 = vmatprep.subr.bf16.mxu0 0
        %4950 = vmatpush1.bf16.msra.mxu0 %v4930
        %4951 = vmatprep.subr.bf16.mxu0 0
        %4952 = vmatpush2.bf16.msra.mxu0 0
        %4953 = vmatprep.subr.bf16.mxu0 0
        %4954 = vmatpush2.bf16.msra.mxu0 0
        %4955 = vmatprep.subr.bf16.mxu0 0
        %4956 = vmatpush2.bf16.msra.mxu0 0
        %4957 = vmatprep.subr.bf16.mxu0 0
        %4958 = vmatpush2.bf16.msra.mxu0 0
        %4959 = vmatprep.subr.bf16.mxu0 0
        %4960 = vmatpush2.bf16.msra.mxu0 0
        %4961 = vmatprep.subr.bf16.mxu0 0
        %4962 = vmatpush2.bf16.msra.mxu0 0
        %4963 = vmatprep.subr.bf16.mxu0 0
        %4964 = vmatpush2.bf16.msra.mxu0 0
        %4965 = vmatprep.subr.bf16.mxu0 0
        %4966 = vmatpush2.bf16.msra.mxu0 0
        %4967 = vmatprep.mubr.bf16.mxu0 0
        %4968 = vmatmul.mubr.bf16.gmra.mxu0 %v4933
        %v4969 = vpop.f32.mrf.mxu0
        %v4970 = vadd.f32 0.0, %v4969
        %v4971 = vpop.f32.mrf.mxu0
        %v4972 = vpop.f32.mrf.mxu0
        %v4973 = vadd.f32 0.0, %v4972
        %v4974 = vpop.f32.mrf.mxu0
        %4975 = vdwg.mxu0
        %v4976 = vadd.f32 %v4918, %v4970
        %v4977 = vadd.f32 %v4921, %v4973
        %v4978 = vld [vmem:[#allocation10 + $0x18] sm:$0xf]
        %v4979 = vld [vmem:[#allocation10 + $0x1c] sm:$0xf]
        %v4982 = vunpack.c.l.b16 %v4978
        %v4983 = vunpack.c.l.b16 %v4979
        %v4984 = vpack.c.b16 %v4983, %v4982
        %v4987 = vsel %vm3434, %v4819, 0
        %4989 = vmatprep.subr.bf16.mxu0 0
        %4990 = vmatpush1.bf16.msra.mxu0 0
        %4991 = vmatprep.subr.bf16.mxu0 0
        %4992 = vmatpush1.bf16.msra.mxu0 0
        %4993 = vmatprep.subr.bf16.mxu0 0
        %4994 = vmatpush1.bf16.msra.mxu0 0
        %4995 = vmatprep.subr.bf16.mxu0 0
        %4996 = vmatpush1.bf16.msra.mxu0 0
        %4997 = vmatprep.subr.bf16.mxu0 0
        %4998 = vmatpush1.bf16.msra.mxu0 0
        %4999 = vmatprep.subr.bf16.mxu0 0
        %5000 = vmatpush1.bf16.msra.mxu0 0
        %5001 = vmatprep.subr.bf16.mxu0 0
        %5002 = vmatpush1.bf16.msra.mxu0 0
        %5003 = vmatprep.subr.bf16.mxu0 0
        %5004 = vmatpush1.bf16.msra.mxu0 %v4984
        %5005 = vmatprep.subr.bf16.mxu0 0
        %5006 = vmatpush2.bf16.msra.mxu0 0
        %5007 = vmatprep.subr.bf16.mxu0 0
        %5008 = vmatpush2.bf16.msra.mxu0 0
        %5009 = vmatprep.subr.bf16.mxu0 0
        %5010 = vmatpush2.bf16.msra.mxu0 0
        %5011 = vmatprep.subr.bf16.mxu0 0
        %5012 = vmatpush2.bf16.msra.mxu0 0
        %5013 = vmatprep.subr.bf16.mxu0 0
        %5014 = vmatpush2.bf16.msra.mxu0 0
        %5015 = vmatprep.subr.bf16.mxu0 0
        %5016 = vmatpush2.bf16.msra.mxu0 0
        %5017 = vmatprep.subr.bf16.mxu0 0
        %5018 = vmatpush2.bf16.msra.mxu0 0
        %5019 = vmatprep.subr.bf16.mxu0 0
        %5020 = vmatpush2.bf16.msra.mxu0 0
        %5021 = vmatprep.mubr.bf16.mxu0 0
        %5022 = vmatmul.mubr.bf16.gmra.mxu0 %v4987
        %v5023 = vpop.f32.mrf.mxu0
        %v5024 = vadd.f32 0.0, %v5023
        %v5025 = vpop.f32.mrf.mxu0
        %v5026 = vpop.f32.mrf.mxu0
        %v5027 = vadd.f32 0.0, %v5026
        %v5028 = vpop.f32.mrf.mxu0
        %5029 = vdwg.mxu0
        %v5030 = vadd.f32 %v4976, %v5024
        %v5031 = vadd.f32 %v4977, %v5027
        %v5032 = vld [vmem:[#allocation28] sm:$0xff]
        %v5033 = vld [vmem:[#allocation28 + $0x8] sm:$0xff]
        %5035 = vset.pattern.permute.xlu0 0
        %5036 = vperm.xlu0 %5035, %v5032
        %v5037 = vpop.permute.xlu0 %5036
        %5040 = vset.pattern.permute.xlu0 0
        %5041 = vperm.xlu0 %5040, %v5033
        %v5042 = vpop.permute.xlu0 %5041
        %v5044 = vadd.f32 %v5030, %v5037
        %v5045 = vadd.f32 %v5031, %v5042
        %v5046 = vpack.c.bf16 %v5045, %v5044
        %5047 = vst.msk [vmem:[#allocation2] sm:$0xf] %vm2796, 0
        %5048 = vst.msk [vmem:[#allocation2 + $0x8] sm:$0xf] %vm2796, 0
        %5049 = vst.msk [vmem:[#allocation2 + $0x10] sm:$0xf] %vm2796, 0
        %5050 = vst.msk [vmem:[#allocation2 + $0x18] sm:$0xf] %vm2796, 0
        %5051 = vst.msk [vmem:[#allocation2 + $0x20] sm:$0xf] %vm2796, 0
        %5052 = vst.msk [vmem:[#allocation2 + $0x28] sm:$0xf] %vm2796, 0
        %5053 = vst.msk [vmem:[#allocation2 + $0x30] sm:$0xf] %vm2796, 0
        %5054 = vst.msk [vmem:[#allocation2 + $0x38] sm:$0xf] %vm2796, 0
        %5055 = vst.msk [vmem:[#allocation2 + $0x40] sm:$0xf] %vm2796, 0
        %5056 = vst.msk [vmem:[#allocation2 + $0x48] sm:$0xf] %vm2796, 0
        %5057 = vst.msk [vmem:[#allocation2 + $0x50] sm:$0xf] %vm2796, 0
        %5058 = vst.msk [vmem:[#allocation2 + $0x58] sm:$0xf] %vm2796, 0
        %5059 = vst.msk [vmem:[#allocation2 + $0x60] sm:$0xf] %vm2796, 0
        %5060 = vst.msk [vmem:[#allocation2 + $0x68] sm:$0xf] %vm2796, 0
        %5061 = vst.msk [vmem:[#allocation2 + $0x70] sm:$0xf] %vm2796, 0
        %5062 = vst.msk [vmem:[#allocation2 + $0x78] sm:$0xf] %vm2796, 0
        %5063 = vst.msk [vmem:[#allocation2 + $0x80] sm:$0xf] %vm2796, 0
        %5064 = vst.msk [vmem:[#allocation2 + $0x88] sm:$0xf] %vm2796, 0
        %5065 = vst.msk [vmem:[#allocation2 + $0x90] sm:$0xf] %vm2796, 0
        %5066 = vst.msk [vmem:[#allocation2 + $0x98] sm:$0xf] %vm2796, 0
        %5067 = vst.msk [vmem:[#allocation2 + $0xa0] sm:$0xf] %vm2796, 0
        %5068 = vst.msk [vmem:[#allocation2 + $0xa8] sm:$0xf] %vm2796, 0
        %5069 = vst.msk [vmem:[#allocation2 + $0xb0] sm:$0xf] %vm2796, 0
        %5070 = vst.msk [vmem:[#allocation2 + $0xb8] sm:$0xf] %vm2796, 0
        %5071 = vst.msk [vmem:[#allocation2 + $0xc0] sm:$0xf] %vm2796, 0
        %5072 = vst.msk [vmem:[#allocation2 + $0xc8] sm:$0xf] %vm2796, 0
        %5073 = vst.msk [vmem:[#allocation2 + $0xd0] sm:$0xf] %vm2796, 0
        %5074 = vst.msk [vmem:[#allocation2 + $0xd8] sm:$0xf] %vm2796, 0
        %5075 = vst.msk [vmem:[#allocation2 + $0xe0] sm:$0xf] %vm2796, 0
        %5076 = vst.msk [vmem:[#allocation2 + $0xe8] sm:$0xf] %vm2796, 0
        %5077 = vst.msk [vmem:[#allocation2 + $0xf0] sm:$0xf] %vm2796, 0
        %5078 = vst.msk [vmem:[#allocation2 + $0xf8] sm:$0xf] %vm2796, 0
        %5079 = vst.msk [vmem:[#allocation2 + $0x100] sm:$0xf] %vm2796, 0
        %5080 = vst.msk [vmem:[#allocation2 + $0x108] sm:$0xf] %vm2796, 0
        %5081 = vst.msk [vmem:[#allocation2 + $0x110] sm:$0xf] %vm2796, 0
        %5082 = vst.msk [vmem:[#allocation2 + $0x118] sm:$0xf] %vm2796, 0
        %v5083 = vld [vmem:[#allocation3] sm:$0x1]
        %v5085 = vpack.i.b16 %v5083, %v5083
        %v5087 = vlaneseq
        %v5088 = vshrl.u32 %v5087, 7
        %v5089 = vsub.s32 0, %v5088
        %v5090 = vrot.slane %v5085, %v5089
        %5092 = vrot.lane.b32.xlu0 %v5090, 119
        %v5093 = vpop.permute.xlu0 %5092
        %v5095 = vmul.bf16 %v5046, %v5093
        %v5097 = vunpack.c.l.b16 %v5095
        %v5098 = vunpack.c.h.b16 %v5095
        %v5099 = vpack.c.b16 %v5097, %v5097
        %v5100 = vpack.c.b16 %v5098, %v5098
        %5101 = vrot.lane.b32.xlu0 %v5099, 9
        %v5102 = vpop.permute.xlu0 %5101
        %5103 = vrot.lane.b32.xlu0 %v5100, 9
        %v5104 = vpop.permute.xlu0 %5103
        %5107 = vst.msk [vmem:[#allocation2] sm:$0xf] %vm2825, %v5102
        %5108 = vst.msk [vmem:[#allocation2 + $0x8] sm:$0xf] %vm2825, %v5104
        %v5109 = vld [vmem:[#allocation3] sm:$0x1]
        %v5111 = vshrl.u32 %v5109, 16
        %v5112 = vpack.i.b16 %v5111, %v5111
        %v5114 = vlaneseq
        %v5115 = vshrl.u32 %v5114, 7
        %v5116 = vsub.s32 0, %v5115
        %v5117 = vrot.slane %v5112, %v5116
        %5119 = vrot.lane.b32.xlu0 %v5117, 120
        %v5120 = vpop.permute.xlu0 %5119
        %v5122 = vmul.bf16 %v5046, %v5120
        %v5124 = vunpack.c.l.b16 %v5122
        %v5125 = vunpack.c.h.b16 %v5122
        %v5126 = vpack.c.b16 %v5124, %v5124
        %v5127 = vpack.c.b16 %v5125, %v5125
        %5128 = vrot.lane.b32.xlu0 %v5126, 8
        %v5129 = vpop.permute.xlu0 %5128
        %5130 = vrot.lane.b32.xlu0 %v5127, 8
        %v5131 = vpop.permute.xlu0 %5130
        %5134 = vst.msk [vmem:[#allocation2 + $0x10] sm:$0xf] %vm2847, %v5129
        %5135 = vst.msk [vmem:[#allocation2 + $0x18] sm:$0xf] %vm2847, %v5131
        %v5136 = vld [vmem:[#allocation3] sm:$0x2]
        %v5138 = vpack.i.b16 %v5136, %v5136
        %v5140 = vlaneseq
        %v5141 = vshrl.u32 %v5140, 7
        %v5142 = vsub.s32 1, %v5141
        %v5143 = vrot.slane %v5138, %v5142
        %5145 = vrot.lane.b32.xlu0 %v5143, 121
        %v5146 = vpop.permute.xlu0 %5145
        %v5148 = vmul.bf16 %v5046, %v5146
        %v5150 = vunpack.c.l.b16 %v5148
        %v5151 = vunpack.c.h.b16 %v5148
        %v5152 = vpack.c.b16 %v5150, %v5150
        %v5153 = vpack.c.b16 %v5151, %v5151
        %5154 = vrot.lane.b32.xlu0 %v5152, 7
        %v5155 = vpop.permute.xlu0 %5154
        %5156 = vrot.lane.b32.xlu0 %v5153, 7
        %v5157 = vpop.permute.xlu0 %5156
        %5160 = vst.msk [vmem:[#allocation2 + $0x20] sm:$0xf] %vm2868, %v5155
        %5161 = vst.msk [vmem:[#allocation2 + $0x28] sm:$0xf] %vm2868, %v5157
        %v5162 = vld [vmem:[#allocation3] sm:$0x1]
        %v5164 = vpack.i.b16 %v5162, %v5162
        %v5166 = vlaneseq
        %v5167 = vshrl.u32 %v5166, 7
        %v5168 = vsub.s32 0, %v5167
        %v5169 = vrot.slane %v5164, %v5168
        %5171 = vrot.lane.b32.xlu0 %v5169, 127
        %v5172 = vpop.permute.xlu0 %5171
        %v5174 = vmul.bf16 %v5046, %v5172
        %v5176 = vunpack.c.l.b16 %v5174
        %v5177 = vunpack.c.h.b16 %v5174
        %v5178 = vpack.c.b16 %v5176, %v5176
        %v5179 = vpack.c.b16 %v5177, %v5177
        %5180 = vrot.lane.b32.xlu0 %v5178, 1
        %v5181 = vpop.permute.xlu0 %5180
        %5182 = vrot.lane.b32.xlu0 %v5179, 1
        %v5183 = vpop.permute.xlu0 %5182
        %5186 = vst.msk [vmem:[#allocation2 + $0x30] sm:$0xf] %vm2889, %v5181
        %5187 = vst.msk [vmem:[#allocation2 + $0x38] sm:$0xf] %vm2889, %v5183
        %v5188 = vld [vmem:[#allocation3] sm:$0x1]
        %v5190 = vshrl.u32 %v5188, 16
        %v5191 = vpack.i.b16 %v5190, %v5190
        %v5193 = vlaneseq
        %v5194 = vshrl.u32 %v5193, 7
        %v5195 = vsub.s32 0, %v5194
        %v5196 = vrot.slane %v5191, %v5195
        %v5197 = vmul.bf16 %v5046, %v5196
        %v5199 = vunpack.c.l.b16 %v5197
        %v5200 = vunpack.c.h.b16 %v5197
        %v5201 = vpack.c.b16 %v5199, %v5199
        %v5202 = vpack.c.b16 %v5200, %v5200
        %5205 = vst.msk [vmem:[#allocation2 + $0x40] sm:$0xf] %vm2796, %v5201
        %5206 = vst.msk [vmem:[#allocation2 + $0x48] sm:$0xf] %vm2796, %v5202
        %v5207 = vld [vmem:[#allocation3] sm:$0x2]
        %v5209 = vpack.i.b16 %v5207, %v5207
        %v5211 = vlaneseq
        %v5212 = vshrl.u32 %v5211, 7
        %v5213 = vsub.s32 1, %v5212
        %v5214 = vrot.slane %v5209, %v5213
        %5216 = vrot.lane.b32.xlu0 %v5214, 1
        %v5217 = vpop.permute.xlu0 %5216
        %v5219 = vmul.bf16 %v5046, %v5217
        %v5221 = vunpack.c.l.b16 %v5219
        %v5222 = vunpack.c.h.b16 %v5219
        %v5223 = vpack.c.b16 %v5221, %v5221
        %v5224 = vpack.c.b16 %v5222, %v5222
        %5225 = vrot.lane.b32.xlu0 %v5223, 127
        %v5226 = vpop.permute.xlu0 %5225
        %5227 = vrot.lane.b32.xlu0 %v5224, 127
        %v5228 = vpop.permute.xlu0 %5227
        %5231 = vst.msk [vmem:[#allocation2 + $0x50] sm:$0xf] %vm2921, %v5226
        %5232 = vst.msk [vmem:[#allocation2 + $0x58] sm:$0xf] %vm2921, %v5228
        %v5233 = vld [vmem:[#allocation3] sm:$0x1]
        %v5235 = vpack.i.b16 %v5233, %v5233
        %v5237 = vlaneseq
        %v5238 = vshrl.u32 %v5237, 7
        %v5239 = vsub.s32 0, %v5238
        %v5240 = vrot.slane %v5235, %v5239
        %5242 = vrot.lane.b32.xlu0 %v5240, 7
        %v5243 = vpop.permute.xlu0 %5242
        %v5245 = vmul.bf16 %v5046, %v5243
        %v5247 = vunpack.c.l.b16 %v5245
        %v5248 = vunpack.c.h.b16 %v5245
        %v5249 = vpack.c.b16 %v5247, %v5247
        %v5250 = vpack.c.b16 %v5248, %v5248
        %5251 = vrot.lane.b32.xlu0 %v5249, 121
        %v5252 = vpop.permute.xlu0 %5251
        %5253 = vrot.lane.b32.xlu0 %v5250, 121
        %v5254 = vpop.permute.xlu0 %5253
        %5257 = vst.msk [vmem:[#allocation2 + $0x60] sm:$0xf] %vm2942, %v5252
        %5258 = vst.msk [vmem:[#allocation2 + $0x68] sm:$0xf] %vm2942, %v5254
        %v5259 = vld [vmem:[#allocation3] sm:$0x1]
        %v5261 = vshrl.u32 %v5259, 16
        %v5262 = vpack.i.b16 %v5261, %v5261
        %v5264 = vlaneseq
        %v5265 = vshrl.u32 %v5264, 7
        %v5266 = vsub.s32 0, %v5265
        %v5267 = vrot.slane %v5262, %v5266
        %5269 = vrot.lane.b32.xlu0 %v5267, 8
        %v5270 = vpop.permute.xlu0 %5269
        %v5272 = vmul.bf16 %v5046, %v5270
        %v5274 = vunpack.c.l.b16 %v5272
        %v5275 = vunpack.c.h.b16 %v5272
        %v5276 = vpack.c.b16 %v5274, %v5274
        %v5277 = vpack.c.b16 %v5275, %v5275
        %5278 = vrot.lane.b32.xlu0 %v5276, 120
        %v5279 = vpop.permute.xlu0 %5278
        %5280 = vrot.lane.b32.xlu0 %v5277, 120
        %v5281 = vpop.permute.xlu0 %5280
        %5284 = vst.msk [vmem:[#allocation2 + $0x70] sm:$0xf] %vm2964, %v5279
        %5285 = vst.msk [vmem:[#allocation2 + $0x78] sm:$0xf] %vm2964, %v5281
        %v5286 = vld [vmem:[#allocation3] sm:$0x2]
        %v5288 = vpack.i.b16 %v5286, %v5286
        %v5290 = vlaneseq
        %v5291 = vshrl.u32 %v5290, 7
        %v5292 = vsub.s32 1, %v5291
        %v5293 = vrot.slane %v5288, %v5292
        %5295 = vrot.lane.b32.xlu0 %v5293, 9
        %v5296 = vpop.permute.xlu0 %5295
        %v5298 = vmul.bf16 %v5046, %v5296
        %v5300 = vunpack.c.l.b16 %v5298
        %v5301 = vunpack.c.h.b16 %v5298
        %v5302 = vpack.c.b16 %v5300, %v5300
        %v5303 = vpack.c.b16 %v5301, %v5301
        %5304 = vrot.lane.b32.xlu0 %v5302, 119
        %v5305 = vpop.permute.xlu0 %5304
        %5306 = vrot.lane.b32.xlu0 %v5303, 119
        %v5307 = vpop.permute.xlu0 %5306
        %5310 = vst.msk [vmem:[#allocation2 + $0x80] sm:$0xf] %vm2985, %v5305
        %5311 = vst.msk [vmem:[#allocation2 + $0x88] sm:$0xf] %vm2985, %v5307
        %v5312 = vld [vmem:[#allocation3] sm:$0x1]
        %v5314 = vpack.i.b16 %v5312, %v5312
        %v5316 = vlaneseq
        %v5317 = vshrl.u32 %v5316, 7
        %v5318 = vsub.s32 0, %v5317
        %v5319 = vrot.slane %v5314, %v5318
        %5321 = vrot.lane.b32.xlu0 %v5319, 119
        %v5322 = vpop.permute.xlu0 %5321
        %v5324 = vmul.bf16 %v3481, %v5322
        %v5326 = vunpack.c.l.b16 %v5324
        %v5327 = vunpack.c.h.b16 %v5324
        %v5328 = vpack.c.b16 %v5326, %v5326
        %v5329 = vpack.c.b16 %v5327, %v5327
        %5330 = vrot.lane.b32.xlu0 %v5328, 9
        %v5331 = vpop.permute.xlu0 %5330
        %5332 = vrot.lane.b32.xlu0 %v5329, 9
        %v5333 = vpop.permute.xlu0 %5332
        %5336 = vst.msk [vmem:[#allocation2 + $0x90] sm:$0xf] %vm2825, %v5331
        %5337 = vst.msk [vmem:[#allocation2 + $0x98] sm:$0xf] %vm2825, %v5333
        %v5338 = vld [vmem:[#allocation3] sm:$0x1]
        %v5340 = vshrl.u32 %v5338, 16
        %v5341 = vpack.i.b16 %v5340, %v5340
        %v5343 = vlaneseq
        %v5344 = vshrl.u32 %v5343, 7
        %v5345 = vsub.s32 0, %v5344
        %v5346 = vrot.slane %v5341, %v5345
        %5348 = vrot.lane.b32.xlu0 %v5346, 120
        %v5349 = vpop.permute.xlu0 %5348
        %v5351 = vmul.bf16 %v3481, %v5349
        %v5353 = vunpack.c.l.b16 %v5351
        %v5354 = vunpack.c.h.b16 %v5351
        %v5355 = vpack.c.b16 %v5353, %v5353
        %v5356 = vpack.c.b16 %v5354, %v5354
        %5357 = vrot.lane.b32.xlu0 %v5355, 8
        %v5358 = vpop.permute.xlu0 %5357
        %5359 = vrot.lane.b32.xlu0 %v5356, 8
        %v5360 = vpop.permute.xlu0 %5359
        %5363 = vst.msk [vmem:[#allocation2 + $0xa0] sm:$0xf] %vm2847, %v5358
        %5364 = vst.msk [vmem:[#allocation2 + $0xa8] sm:$0xf] %vm2847, %v5360
        %v5365 = vld [vmem:[#allocation3] sm:$0x2]
        %v5367 = vpack.i.b16 %v5365, %v5365
        %v5369 = vlaneseq
        %v5370 = vshrl.u32 %v5369, 7
        %v5371 = vsub.s32 1, %v5370
        %v5372 = vrot.slane %v5367, %v5371
        %5374 = vrot.lane.b32.xlu0 %v5372, 121
        %v5375 = vpop.permute.xlu0 %5374
        %v5377 = vmul.bf16 %v3481, %v5375
        %v5379 = vunpack.c.l.b16 %v5377
        %v5380 = vunpack.c.h.b16 %v5377
        %v5381 = vpack.c.b16 %v5379, %v5379
        %v5382 = vpack.c.b16 %v5380, %v5380
        %5383 = vrot.lane.b32.xlu0 %v5381, 7
        %v5384 = vpop.permute.xlu0 %5383
        %5385 = vrot.lane.b32.xlu0 %v5382, 7
        %v5386 = vpop.permute.xlu0 %5385
        %5389 = vst.msk [vmem:[#allocation2 + $0xb0] sm:$0xf] %vm2868, %v5384
        %5390 = vst.msk [vmem:[#allocation2 + $0xb8] sm:$0xf] %vm2868, %v5386
        %v5391 = vld [vmem:[#allocation3] sm:$0x1]
        %v5393 = vpack.i.b16 %v5391, %v5391
        %v5395 = vlaneseq
        %v5396 = vshrl.u32 %v5395, 7
        %v5397 = vsub.s32 0, %v5396
        %v5398 = vrot.slane %v5393, %v5397
        %5400 = vrot.lane.b32.xlu0 %v5398, 127
        %v5401 = vpop.permute.xlu0 %5400
        %v5403 = vmul.bf16 %v3481, %v5401
        %v5405 = vunpack.c.l.b16 %v5403
        %v5406 = vunpack.c.h.b16 %v5403
        %v5407 = vpack.c.b16 %v5405, %v5405
        %v5408 = vpack.c.b16 %v5406, %v5406
        %5409 = vrot.lane.b32.xlu0 %v5407, 1
        %v5410 = vpop.permute.xlu0 %5409
        %5411 = vrot.lane.b32.xlu0 %v5408, 1
        %v5412 = vpop.permute.xlu0 %5411
        %5415 = vst.msk [vmem:[#allocation2 + $0xc0] sm:$0xf] %vm2889, %v5410
        %5416 = vst.msk [vmem:[#allocation2 + $0xc8] sm:$0xf] %vm2889, %v5412
        %v5417 = vld [vmem:[#allocation3] sm:$0x1]
        %v5419 = vshrl.u32 %v5417, 16
        %v5420 = vpack.i.b16 %v5419, %v5419
        %v5422 = vlaneseq
        %v5423 = vshrl.u32 %v5422, 7
        %v5424 = vsub.s32 0, %v5423
        %v5425 = vrot.slane %v5420, %v5424
        %v5426 = vmul.bf16 %v3481, %v5425
        %v5428 = vunpack.c.l.b16 %v5426
        %v5429 = vunpack.c.h.b16 %v5426
        %v5430 = vpack.c.b16 %v5428, %v5428
        %v5431 = vpack.c.b16 %v5429, %v5429
        %5434 = vst.msk [vmem:[#allocation2 + $0xd0] sm:$0xf] %vm2796, %v5430
        %5435 = vst.msk [vmem:[#allocation2 + $0xd8] sm:$0xf] %vm2796, %v5431
        %v5436 = vld [vmem:[#allocation3] sm:$0x2]
        %v5438 = vpack.i.b16 %v5436, %v5436
        %v5440 = vlaneseq
        %v5441 = vshrl.u32 %v5440, 7
        %v5442 = vsub.s32 1, %v5441
        %v5443 = vrot.slane %v5438, %v5442
        %5445 = vrot.lane.b32.xlu0 %v5443, 1
        %v5446 = vpop.permute.xlu0 %5445
        %v5448 = vmul.bf16 %v3481, %v5446
        %v5450 = vunpack.c.l.b16 %v5448
        %v5451 = vunpack.c.h.b16 %v5448
        %v5452 = vpack.c.b16 %v5450, %v5450
        %v5453 = vpack.c.b16 %v5451, %v5451
        %5454 = vrot.lane.b32.xlu0 %v5452, 127
        %v5455 = vpop.permute.xlu0 %5454
        %5456 = vrot.lane.b32.xlu0 %v5453, 127
        %v5457 = vpop.permute.xlu0 %5456
        %5460 = vst.msk [vmem:[#allocation2 + $0xe0] sm:$0xf] %vm2921, %v5455
        %5461 = vst.msk [vmem:[#allocation2 + $0xe8] sm:$0xf] %vm2921, %v5457
        %v5462 = vld [vmem:[#allocation3] sm:$0x1]
        %v5464 = vpack.i.b16 %v5462, %v5462
        %v5466 = vlaneseq
        %v5467 = vshrl.u32 %v5466, 7
        %v5468 = vsub.s32 0, %v5467
        %v5469 = vrot.slane %v5464, %v5468
        %5471 = vrot.lane.b32.xlu0 %v5469, 7
        %v5472 = vpop.permute.xlu0 %5471
        %v5474 = vmul.bf16 %v3481, %v5472
        %v5476 = vunpack.c.l.b16 %v5474
        %v5477 = vunpack.c.h.b16 %v5474
        %v5478 = vpack.c.b16 %v5476, %v5476
        %v5479 = vpack.c.b16 %v5477, %v5477
        %5480 = vrot.lane.b32.xlu0 %v5478, 121
        %v5481 = vpop.permute.xlu0 %5480
        %5482 = vrot.lane.b32.xlu0 %v5479, 121
        %v5483 = vpop.permute.xlu0 %5482
        %5486 = vst.msk [vmem:[#allocation2 + $0xf0] sm:$0xf] %vm2942, %v5481
        %5487 = vst.msk [vmem:[#allocation2 + $0xf8] sm:$0xf] %vm2942, %v5483
        %v5488 = vld [vmem:[#allocation3] sm:$0x1]
        %v5490 = vshrl.u32 %v5488, 16
        %v5491 = vpack.i.b16 %v5490, %v5490
        %v5493 = vlaneseq
        %v5494 = vshrl.u32 %v5493, 7
        %v5495 = vsub.s32 0, %v5494
        %v5496 = vrot.slane %v5491, %v5495
        %5498 = vrot.lane.b32.xlu0 %v5496, 8
        %v5499 = vpop.permute.xlu0 %5498
        %v5501 = vmul.bf16 %v3481, %v5499
        %v5503 = vunpack.c.l.b16 %v5501
        %v5504 = vunpack.c.h.b16 %v5501
        %v5505 = vpack.c.b16 %v5503, %v5503
        %v5506 = vpack.c.b16 %v5504, %v5504
        %5507 = vrot.lane.b32.xlu0 %v5505, 120
        %v5508 = vpop.permute.xlu0 %5507
        %5509 = vrot.lane.b32.xlu0 %v5506, 120
        %v5510 = vpop.permute.xlu0 %5509
        %5513 = vst.msk [vmem:[#allocation2 + $0x100] sm:$0xf] %vm2964, %v5508
        %5514 = vst.msk [vmem:[#allocation2 + $0x108] sm:$0xf] %vm2964, %v5510
        %v5515 = vld [vmem:[#allocation3] sm:$0x2]
        %v5517 = vpack.i.b16 %v5515, %v5515
        %v5519 = vlaneseq
        %v5520 = vshrl.u32 %v5519, 7
        %v5521 = vsub.s32 1, %v5520
        %v5522 = vrot.slane %v5517, %v5521
        %5524 = vrot.lane.b32.xlu0 %v5522, 9
        %v5525 = vpop.permute.xlu0 %5524
        %v5527 = vmul.bf16 %v3481, %v5525
        %v5529 = vunpack.c.l.b16 %v5527
        %v5530 = vunpack.c.h.b16 %v5527
        %v5531 = vpack.c.b16 %v5529, %v5529
        %v5532 = vpack.c.b16 %v5530, %v5530
        %5533 = vrot.lane.b32.xlu0 %v5531, 119
        %v5534 = vpop.permute.xlu0 %5533
        %5535 = vrot.lane.b32.xlu0 %v5532, 119
        %v5536 = vpop.permute.xlu0 %5535
        %5539 = vst.msk [vmem:[#allocation2 + $0x110] sm:$0xf] %vm2985, %v5534
        %5540 = vst.msk [vmem:[#allocation2 + $0x118] sm:$0xf] %vm2985, %v5536
        %v5541 = vld [vmem:[#allocation29] sm:$0xff]
        %v5542 = vld [vmem:[#allocation29 + $0x8] sm:$0xf]
        %v5543 = vld [vmem:[#allocation29 + $0xc] sm:$0xff]
        %v5544 = vld [vmem:[#allocation29 + $0x14] sm:$0xf]
        %v5545 = vld [vmem:[#allocation2] sm:$0xf]
        %v5546 = vld [vmem:[#allocation2 + $0x8] sm:$0xf]
        %v5547 = vld [vmem:[#allocation2 + $0x10] sm:$0xf]
        %v5548 = vld [vmem:[#allocation2 + $0x18] sm:$0xf]
        %v5549 = vld [vmem:[#allocation2 + $0x20] sm:$0xf]
        %v5550 = vld [vmem:[#allocation2 + $0x28] sm:$0xf]
        %v5551 = vld [vmem:[#allocation2 + $0x30] sm:$0xf]
        %v5552 = vld [vmem:[#allocation2 + $0x38] sm:$0xf]
        %v5553 = vld [vmem:[#allocation2 + $0x40] sm:$0xf]
        %v5554 = vld [vmem:[#allocation2 + $0x48] sm:$0xf]
        %v5555 = vld [vmem:[#allocation2 + $0x50] sm:$0xf]
        %v5556 = vld [vmem:[#allocation2 + $0x58] sm:$0xf]
        %v5557 = vld [vmem:[#allocation2 + $0x60] sm:$0xf]
        %v5558 = vld [vmem:[#allocation2 + $0x68] sm:$0xf]
        %v5559 = vld [vmem:[#allocation2 + $0x70] sm:$0xf]
        %v5560 = vld [vmem:[#allocation2 + $0x78] sm:$0xf]
        %v5561 = vld [vmem:[#allocation2 + $0x80] sm:$0xf]
        %v5562 = vld [vmem:[#allocation2 + $0x88] sm:$0xf]
        %v5563 = vld [vmem:[#allocation2 + $0x90] sm:$0xf]
        %v5564 = vld [vmem:[#allocation2 + $0x98] sm:$0xf]
        %v5565 = vld [vmem:[#allocation2 + $0xa0] sm:$0xf]
        %v5566 = vld [vmem:[#allocation2 + $0xa8] sm:$0xf]
        %v5567 = vld [vmem:[#allocation2 + $0xb0] sm:$0xf]
        %v5568 = vld [vmem:[#allocation2 + $0xb8] sm:$0xf]
        %v5569 = vld [vmem:[#allocation2 + $0xc0] sm:$0xf]
        %v5570 = vld [vmem:[#allocation2 + $0xc8] sm:$0xf]
        %v5571 = vld [vmem:[#allocation2 + $0xd0] sm:$0xf]
        %v5572 = vld [vmem:[#allocation2 + $0xd8] sm:$0xf]
        %v5573 = vld [vmem:[#allocation2 + $0xe0] sm:$0xf]
        %v5574 = vld [vmem:[#allocation2 + $0xe8] sm:$0xf]
        %v5575 = vld [vmem:[#allocation2 + $0xf0] sm:$0xf]
        %v5576 = vld [vmem:[#allocation2 + $0xf8] sm:$0xf]
        %v5577 = vld [vmem:[#allocation2 + $0x100] sm:$0xf]
        %v5578 = vld [vmem:[#allocation2 + $0x108] sm:$0xf]
        %v5579 = vld [vmem:[#allocation2 + $0x110] sm:$0xf]
        %v5580 = vld [vmem:[#allocation2 + $0x118] sm:$0xf]
        %v5581 = vld [vmem:[#allocation31] sm:$0xff]
        %v5582 = vld [vmem:[#allocation31 + $0x8] sm:$0xff]
        %5584 = vset.pattern.permute.xlu0 0
        %5585 = vperm.xlu0 %5584, %v5581
        %v5586 = vpop.permute.xlu0 %5585
        %5589 = vset.pattern.permute.xlu0 0
        %5590 = vperm.xlu0 %5589, %v5582
        %v5591 = vpop.permute.xlu0 %5590
        %v5597 = vunpack.c.l.b16 %v5541
        %v5598 = vunpack.c.h.b16 %v5541
        %v5599 = vunpack.c.l.b16 %v5542
        %v5600 = vunpack.c.l.b16 %v5543
        %v5601 = vunpack.c.h.b16 %v5543
        %v5602 = vunpack.c.l.b16 %v5544
        %v5603 = vpack.c.b16 %v5600, %v5597
        %v5604 = vpack.c.b16 %v5601, %v5598
        %v5605 = vpack.c.b16 %v5602, %v5599
        %v5644 = vunpack.c.l.b16 %v5545
        %v5645 = vunpack.c.l.b16 %v5546
        %v5646 = vunpack.c.l.b16 %v5547
        %v5647 = vunpack.c.l.b16 %v5548
        %v5648 = vunpack.c.l.b16 %v5549
        %v5649 = vunpack.c.l.b16 %v5550
        %v5650 = vunpack.c.l.b16 %v5551
        %v5651 = vunpack.c.l.b16 %v5552
        %v5652 = vunpack.c.l.b16 %v5553
        %v5653 = vunpack.c.l.b16 %v5554
        %v5654 = vunpack.c.l.b16 %v5555
        %v5655 = vunpack.c.l.b16 %v5556
        %v5656 = vunpack.c.l.b16 %v5557
        %v5657 = vunpack.c.l.b16 %v5558
        %v5658 = vunpack.c.l.b16 %v5559
        %v5659 = vunpack.c.l.b16 %v5560
        %v5660 = vunpack.c.l.b16 %v5561
        %v5661 = vunpack.c.l.b16 %v5562
        %v5662 = vunpack.c.l.b16 %v5563
        %v5663 = vunpack.c.l.b16 %v5564
        %v5664 = vunpack.c.l.b16 %v5565
        %v5665 = vunpack.c.l.b16 %v5566
        %v5666 = vunpack.c.l.b16 %v5567
        %v5667 = vunpack.c.l.b16 %v5568
        %v5668 = vunpack.c.l.b16 %v5569
        %v5669 = vunpack.c.l.b16 %v5570
        %v5670 = vunpack.c.l.b16 %v5571
        %v5671 = vunpack.c.l.b16 %v5572
        %v5672 = vunpack.c.l.b16 %v5573
        %v5673 = vunpack.c.l.b16 %v5574
        %v5674 = vunpack.c.l.b16 %v5575
        %v5675 = vunpack.c.l.b16 %v5576
        %v5676 = vunpack.c.l.b16 %v5577
        %v5677 = vunpack.c.l.b16 %v5578
        %v5678 = vunpack.c.l.b16 %v5579
        %v5679 = vunpack.c.l.b16 %v5580
        %v5680 = vpack.c.b16 %v5645, %v5644
        %v5681 = vpack.c.b16 %v5647, %v5646
        %v5682 = vpack.c.b16 %v5649, %v5648
        %v5683 = vpack.c.b16 %v5651, %v5650
        %v5684 = vpack.c.b16 %v5653, %v5652
        %v5685 = vpack.c.b16 %v5655, %v5654
        %v5686 = vpack.c.b16 %v5657, %v5656
        %v5687 = vpack.c.b16 %v5659, %v5658
        %v5688 = vpack.c.b16 %v5661, %v5660
        %v5689 = vpack.c.b16 %v5663, %v5662
        %v5690 = vpack.c.b16 %v5665, %v5664
        %v5691 = vpack.c.b16 %v5667, %v5666
        %v5692 = vpack.c.b16 %v5669, %v5668
        %v5693 = vpack.c.b16 %v5671, %v5670
        %v5694 = vpack.c.b16 %v5673, %v5672
        %v5695 = vpack.c.b16 %v5675, %v5674
        %v5696 = vpack.c.b16 %v5677, %v5676
        %v5697 = vpack.c.b16 %v5679, %v5678
        %v5717 = vsel %vm4600, %v5605, 0
        %5719 = vmatprep.subr.bf16.mxu0 0
        %5720 = vmatpush1.bf16.msra.mxu0 %v5687
        %5721 = vmatprep.subr.bf16.mxu0 0
        %5722 = vmatpush1.bf16.msra.mxu0 %v5686
        %5723 = vmatprep.subr.bf16.mxu0 0
        %5724 = vmatpush1.bf16.msra.mxu0 %v5685
        %5725 = vmatprep.subr.bf16.mxu0 0
        %5726 = vmatpush1.bf16.msra.mxu0 %v5684
        %5727 = vmatprep.subr.bf16.mxu0 0
        %5728 = vmatpush1.bf16.msra.mxu0 %v5683
        %5729 = vmatprep.subr.bf16.mxu0 0
        %5730 = vmatpush1.bf16.msra.mxu0 %v5682
        %5731 = vmatprep.subr.bf16.mxu0 0
        %5732 = vmatpush1.bf16.msra.mxu0 %v5681
        %5733 = vmatprep.subr.bf16.mxu0 0
        %5734 = vmatpush1.bf16.msra.mxu0 %v5680
        %5735 = vmatprep.subr.bf16.mxu0 0
        %5736 = vmatpush2.bf16.msra.mxu0 %v5695
        %5737 = vmatprep.subr.bf16.mxu0 0
        %5738 = vmatpush2.bf16.msra.mxu0 %v5694
        %5739 = vmatprep.subr.bf16.mxu0 0
        %5740 = vmatpush2.bf16.msra.mxu0 %v5693
        %5741 = vmatprep.subr.bf16.mxu0 0
        %5742 = vmatpush2.bf16.msra.mxu0 %v5692
        %5743 = vmatprep.subr.bf16.mxu0 0
        %5744 = vmatpush2.bf16.msra.mxu0 %v5691
        %5745 = vmatprep.subr.bf16.mxu0 0
        %5746 = vmatpush2.bf16.msra.mxu0 %v5690
        %5747 = vmatprep.subr.bf16.mxu0 0
        %5748 = vmatpush2.bf16.msra.mxu0 %v5689
        %5749 = vmatprep.subr.bf16.mxu0 0
        %5750 = vmatpush2.bf16.msra.mxu0 %v5688
        %5751 = vmatprep.mubr.bf16.mxu0 %v5604
        %5752 = vmatmul.mubr.bf16.gmra.mxu0 %v5603
        %v5753 = vpop.f32.mrf.mxu0
        %v5754 = vadd.f32 %v5586, %v5753
        %v5755 = vpop.f32.mrf.mxu0
        %v5756 = vpop.f32.mrf.mxu0
        %v5757 = vadd.f32 %v5591, %v5756
        %v5758 = vpop.f32.mrf.mxu0
        %5759 = vdwg.mxu0
        %5760 = vmatprep.subr.bf16.mxu0 0
        %5761 = vmatpush1.bf16.msra.mxu0 0
        %5762 = vmatprep.subr.bf16.mxu0 0
        %5763 = vmatpush1.bf16.msra.mxu0 0
        %5764 = vmatprep.subr.bf16.mxu0 0
        %5765 = vmatpush1.bf16.msra.mxu0 0
        %5766 = vmatprep.subr.bf16.mxu0 0
        %5767 = vmatpush1.bf16.msra.mxu0 0
        %5768 = vmatprep.subr.bf16.mxu0 0
        %5769 = vmatpush1.bf16.msra.mxu0 0
        %5770 = vmatprep.subr.bf16.mxu0 0
        %5771 = vmatpush1.bf16.msra.mxu0 0
        %5772 = vmatprep.subr.bf16.mxu0 0
        %5773 = vmatpush1.bf16.msra.mxu0 %v5697
        %5774 = vmatprep.subr.bf16.mxu0 0
        %5775 = vmatpush1.bf16.msra.mxu0 %v5696
        %5776 = vmatprep.subr.bf16.mxu0 0
        %5777 = vmatpush2.bf16.msra.mxu0 0
        %5778 = vmatprep.subr.bf16.mxu0 0
        %5779 = vmatpush2.bf16.msra.mxu0 0
        %5780 = vmatprep.subr.bf16.mxu0 0
        %5781 = vmatpush2.bf16.msra.mxu0 0
        %5782 = vmatprep.subr.bf16.mxu0 0
        %5783 = vmatpush2.bf16.msra.mxu0 0
        %5784 = vmatprep.subr.bf16.mxu0 0
        %5785 = vmatpush2.bf16.msra.mxu0 0
        %5786 = vmatprep.subr.bf16.mxu0 0
        %5787 = vmatpush2.bf16.msra.mxu0 0
        %5788 = vmatprep.subr.bf16.mxu0 0
        %5789 = vmatpush2.bf16.msra.mxu0 0
        %5790 = vmatprep.subr.bf16.mxu0 0
        %5791 = vmatpush2.bf16.msra.mxu0 0
        %5792 = vmatprep.mubr.bf16.mxu0 0
        %5793 = vmatmul.mubr.bf16.gmra.mxu0 %v5717
        %v5794 = vpop.f32.mrf.mxu0
        %v5795 = vadd.f32 %v5754, %v5794
        %v5796 = vpop.f32.mrf.mxu0
        %v5797 = vpop.f32.mrf.mxu0
        %v5798 = vadd.f32 %v5757, %v5797
        %v5799 = vpop.f32.mrf.mxu0
        %5800 = vdwg.mxu0
        %v5801 = vmax.f32 %v5795, 0.0
        %v5802 = vmax.f32 %v5798, 0.0
        %v5803 = vpack.c.bf16 %v5802, %v5801
        %5804 = vst.msk [vmem:[#allocation2] sm:$0xf] %vm2796, 0
        %5805 = vst.msk [vmem:[#allocation2 + $0x8] sm:$0xf] %vm2796, 0
        %5806 = vst.msk [vmem:[#allocation2 + $0x10] sm:$0xf] %vm2796, 0
        %5807 = vst.msk [vmem:[#allocation2 + $0x18] sm:$0xf] %vm2796, 0
        %5808 = vst.msk [vmem:[#allocation2 + $0x20] sm:$0xf] %vm2796, 0
        %5809 = vst.msk [vmem:[#allocation2 + $0x28] sm:$0xf] %vm2796, 0
        %5810 = vst.msk [vmem:[#allocation2 + $0x30] sm:$0xf] %vm2796, 0
        %5811 = vst.msk [vmem:[#allocation2 + $0x38] sm:$0xf] %vm2796, 0
        %5812 = vst.msk [vmem:[#allocation2 + $0x40] sm:$0xf] %vm2796, 0
        %5813 = vst.msk [vmem:[#allocation2 + $0x48] sm:$0xf] %vm2796, 0
        %5814 = vst.msk [vmem:[#allocation2 + $0x50] sm:$0xf] %vm2796, 0
        %5815 = vst.msk [vmem:[#allocation2 + $0x58] sm:$0xf] %vm2796, 0
        %5816 = vst.msk [vmem:[#allocation2 + $0x60] sm:$0xf] %vm2796, 0
        %5817 = vst.msk [vmem:[#allocation2 + $0x68] sm:$0xf] %vm2796, 0
        %5818 = vst.msk [vmem:[#allocation2 + $0x70] sm:$0xf] %vm2796, 0
        %5819 = vst.msk [vmem:[#allocation2 + $0x78] sm:$0xf] %vm2796, 0
        %5820 = vst.msk [vmem:[#allocation2 + $0x80] sm:$0xf] %vm2796, 0
        %5821 = vst.msk [vmem:[#allocation2 + $0x88] sm:$0xf] %vm2796, 0
        %v5822 = vld [vmem:[#allocation3] sm:$0x1]
        %v5824 = vpack.i.b16 %v5822, %v5822
        %v5826 = vlaneseq
        %v5827 = vshrl.u32 %v5826, 7
        %v5828 = vsub.s32 0, %v5827
        %v5829 = vrot.slane %v5824, %v5828
        %5831 = vrot.lane.b32.xlu0 %v5829, 119
        %v5832 = vpop.permute.xlu0 %5831
        %v5834 = vmul.bf16 %v5803, %v5832
        %v5836 = vunpack.c.l.b16 %v5834
        %v5837 = vunpack.c.h.b16 %v5834
        %v5838 = vpack.c.b16 %v5836, %v5836
        %v5839 = vpack.c.b16 %v5837, %v5837
        %5840 = vrot.lane.b32.xlu0 %v5838, 9
        %v5841 = vpop.permute.xlu0 %5840
        %5842 = vrot.lane.b32.xlu0 %v5839, 9
        %v5843 = vpop.permute.xlu0 %5842
        %5846 = vst.msk [vmem:[#allocation2] sm:$0xf] %vm2825, %v5841
        %5847 = vst.msk [vmem:[#allocation2 + $0x8] sm:$0xf] %vm2825, %v5843
        %v5848 = vld [vmem:[#allocation3] sm:$0x1]
        %v5850 = vshrl.u32 %v5848, 16
        %v5851 = vpack.i.b16 %v5850, %v5850
        %v5853 = vlaneseq
        %v5854 = vshrl.u32 %v5853, 7
        %v5855 = vsub.s32 0, %v5854
        %v5856 = vrot.slane %v5851, %v5855
        %5858 = vrot.lane.b32.xlu0 %v5856, 120
        %v5859 = vpop.permute.xlu0 %5858
        %v5861 = vmul.bf16 %v5803, %v5859
        %v5863 = vunpack.c.l.b16 %v5861
        %v5864 = vunpack.c.h.b16 %v5861
        %v5865 = vpack.c.b16 %v5863, %v5863
        %v5866 = vpack.c.b16 %v5864, %v5864
        %5867 = vrot.lane.b32.xlu0 %v5865, 8
        %v5868 = vpop.permute.xlu0 %5867
        %5869 = vrot.lane.b32.xlu0 %v5866, 8
        %v5870 = vpop.permute.xlu0 %5869
        %5873 = vst.msk [vmem:[#allocation2 + $0x10] sm:$0xf] %vm2847, %v5868
        %5874 = vst.msk [vmem:[#allocation2 + $0x18] sm:$0xf] %vm2847, %v5870
        %v5875 = vld [vmem:[#allocation3] sm:$0x2]
        %v5877 = vpack.i.b16 %v5875, %v5875
        %v5879 = vlaneseq
        %v5880 = vshrl.u32 %v5879, 7
        %v5881 = vsub.s32 1, %v5880
        %v5882 = vrot.slane %v5877, %v5881
        %5884 = vrot.lane.b32.xlu0 %v5882, 121
        %v5885 = vpop.permute.xlu0 %5884
        %v5887 = vmul.bf16 %v5803, %v5885
        %v5889 = vunpack.c.l.b16 %v5887
        %v5890 = vunpack.c.h.b16 %v5887
        %v5891 = vpack.c.b16 %v5889, %v5889
        %v5892 = vpack.c.b16 %v5890, %v5890
        %5893 = vrot.lane.b32.xlu0 %v5891, 7
        %v5894 = vpop.permute.xlu0 %5893
        %5895 = vrot.lane.b32.xlu0 %v5892, 7
        %v5896 = vpop.permute.xlu0 %5895
        %5899 = vst.msk [vmem:[#allocation2 + $0x20] sm:$0xf] %vm2868, %v5894
        %5900 = vst.msk [vmem:[#allocation2 + $0x28] sm:$0xf] %vm2868, %v5896
        %v5901 = vld [vmem:[#allocation3] sm:$0x1]
        %v5903 = vpack.i.b16 %v5901, %v5901
        %v5905 = vlaneseq
        %v5906 = vshrl.u32 %v5905, 7
        %v5907 = vsub.s32 0, %v5906
        %v5908 = vrot.slane %v5903, %v5907
        %5910 = vrot.lane.b32.xlu0 %v5908, 127
        %v5911 = vpop.permute.xlu0 %5910
        %v5913 = vmul.bf16 %v5803, %v5911
        %v5915 = vunpack.c.l.b16 %v5913
        %v5916 = vunpack.c.h.b16 %v5913
        %v5917 = vpack.c.b16 %v5915, %v5915
        %v5918 = vpack.c.b16 %v5916, %v5916
        %5919 = vrot.lane.b32.xlu0 %v5917, 1
        %v5920 = vpop.permute.xlu0 %5919
        %5921 = vrot.lane.b32.xlu0 %v5918, 1
        %v5922 = vpop.permute.xlu0 %5921
        %5925 = vst.msk [vmem:[#allocation2 + $0x30] sm:$0xf] %vm2889, %v5920
        %5926 = vst.msk [vmem:[#allocation2 + $0x38] sm:$0xf] %vm2889, %v5922
        %v5927 = vld [vmem:[#allocation3] sm:$0x1]
        %v5929 = vshrl.u32 %v5927, 16
        %v5930 = vpack.i.b16 %v5929, %v5929
        %v5932 = vlaneseq
        %v5933 = vshrl.u32 %v5932, 7
        %v5934 = vsub.s32 0, %v5933
        %v5935 = vrot.slane %v5930, %v5934
        %v5936 = vmul.bf16 %v5803, %v5935
        %v5938 = vunpack.c.l.b16 %v5936
        %v5939 = vunpack.c.h.b16 %v5936
        %v5940 = vpack.c.b16 %v5938, %v5938
        %v5941 = vpack.c.b16 %v5939, %v5939
        %5944 = vst.msk [vmem:[#allocation2 + $0x40] sm:$0xf] %vm2796, %v5940
        %5945 = vst.msk [vmem:[#allocation2 + $0x48] sm:$0xf] %vm2796, %v5941
        %v5946 = vld [vmem:[#allocation3] sm:$0x2]
        %v5948 = vpack.i.b16 %v5946, %v5946
        %v5950 = vlaneseq
        %v5951 = vshrl.u32 %v5950, 7
        %v5952 = vsub.s32 1, %v5951
        %v5953 = vrot.slane %v5948, %v5952
        %5955 = vrot.lane.b32.xlu0 %v5953, 1
        %v5956 = vpop.permute.xlu0 %5955
        %v5958 = vmul.bf16 %v5803, %v5956
        %v5960 = vunpack.c.l.b16 %v5958
        %v5961 = vunpack.c.h.b16 %v5958
        %v5962 = vpack.c.b16 %v5960, %v5960
        %v5963 = vpack.c.b16 %v5961, %v5961
        %5964 = vrot.lane.b32.xlu0 %v5962, 127
        %v5965 = vpop.permute.xlu0 %5964
        %5966 = vrot.lane.b32.xlu0 %v5963, 127
        %v5967 = vpop.permute.xlu0 %5966
        %5970 = vst.msk [vmem:[#allocation2 + $0x50] sm:$0xf] %vm2921, %v5965
        %5971 = vst.msk [vmem:[#allocation2 + $0x58] sm:$0xf] %vm2921, %v5967
        %v5972 = vld [vmem:[#allocation3] sm:$0x1]
        %v5974 = vpack.i.b16 %v5972, %v5972
        %v5976 = vlaneseq
        %v5977 = vshrl.u32 %v5976, 7
        %v5978 = vsub.s32 0, %v5977
        %v5979 = vrot.slane %v5974, %v5978
        %5981 = vrot.lane.b32.xlu0 %v5979, 7
        %v5982 = vpop.permute.xlu0 %5981
        %v5984 = vmul.bf16 %v5803, %v5982
        %v5986 = vunpack.c.l.b16 %v5984
        %v5987 = vunpack.c.h.b16 %v5984
        %v5988 = vpack.c.b16 %v5986, %v5986
        %v5989 = vpack.c.b16 %v5987, %v5987
        %5990 = vrot.lane.b32.xlu0 %v5988, 121
        %v5991 = vpop.permute.xlu0 %5990
        %5992 = vrot.lane.b32.xlu0 %v5989, 121
        %v5993 = vpop.permute.xlu0 %5992
        %5996 = vst.msk [vmem:[#allocation2 + $0x60] sm:$0xf] %vm2942, %v5991
        %5997 = vst.msk [vmem:[#allocation2 + $0x68] sm:$0xf] %vm2942, %v5993
        %v5998 = vld [vmem:[#allocation3] sm:$0x1]
        %v6000 = vshrl.u32 %v5998, 16
        %v6001 = vpack.i.b16 %v6000, %v6000
        %v6003 = vlaneseq
        %v6004 = vshrl.u32 %v6003, 7
        %v6005 = vsub.s32 0, %v6004
        %v6006 = vrot.slane %v6001, %v6005
        %6008 = vrot.lane.b32.xlu0 %v6006, 8
        %v6009 = vpop.permute.xlu0 %6008
        %v6011 = vmul.bf16 %v5803, %v6009
        %v6013 = vunpack.c.l.b16 %v6011
        %v6014 = vunpack.c.h.b16 %v6011
        %v6015 = vpack.c.b16 %v6013, %v6013
        %v6016 = vpack.c.b16 %v6014, %v6014
        %6017 = vrot.lane.b32.xlu0 %v6015, 120
        %v6018 = vpop.permute.xlu0 %6017
        %6019 = vrot.lane.b32.xlu0 %v6016, 120
        %v6020 = vpop.permute.xlu0 %6019
        %6023 = vst.msk [vmem:[#allocation2 + $0x70] sm:$0xf] %vm2964, %v6018
        %6024 = vst.msk [vmem:[#allocation2 + $0x78] sm:$0xf] %vm2964, %v6020
        %v6025 = vld [vmem:[#allocation3] sm:$0x2]
        %v6027 = vpack.i.b16 %v6025, %v6025
        %v6029 = vlaneseq
        %v6030 = vshrl.u32 %v6029, 7
        %v6031 = vsub.s32 1, %v6030
        %v6032 = vrot.slane %v6027, %v6031
        %6034 = vrot.lane.b32.xlu0 %v6032, 9
        %v6035 = vpop.permute.xlu0 %6034
        %v6037 = vmul.bf16 %v5803, %v6035
        %v6039 = vunpack.c.l.b16 %v6037
        %v6040 = vunpack.c.h.b16 %v6037
        %v6041 = vpack.c.b16 %v6039, %v6039
        %v6042 = vpack.c.b16 %v6040, %v6040
        %6043 = vrot.lane.b32.xlu0 %v6041, 119
        %v6044 = vpop.permute.xlu0 %6043
        %6045 = vrot.lane.b32.xlu0 %v6042, 119
        %v6046 = vpop.permute.xlu0 %6045
        %6049 = vst.msk [vmem:[#allocation2 + $0x80] sm:$0xf] %vm2985, %v6044
        %6050 = vst.msk [vmem:[#allocation2 + $0x88] sm:$0xf] %vm2985, %v6046
        %v6051 = vld [vmem:[#allocation32] sm:$0xff]
        %v6052 = vld [vmem:[#allocation32 + $0x8] sm:$0xff]
        %v6053 = vld [vmem:[#allocation2] sm:$0xf]
        %v6054 = vld [vmem:[#allocation2 + $0x8] sm:$0xf]
        %v6055 = vld [vmem:[#allocation2 + $0x10] sm:$0xf]
        %v6056 = vld [vmem:[#allocation2 + $0x18] sm:$0xf]
        %v6057 = vld [vmem:[#allocation2 + $0x20] sm:$0xf]
        %v6058 = vld [vmem:[#allocation2 + $0x28] sm:$0xf]
        %v6059 = vld [vmem:[#allocation2 + $0x30] sm:$0xf]
        %v6060 = vld [vmem:[#allocation2 + $0x38] sm:$0xf]
        %v6061 = vld [vmem:[#allocation2 + $0x40] sm:$0xf]
        %v6062 = vld [vmem:[#allocation2 + $0x48] sm:$0xf]
        %v6063 = vld [vmem:[#allocation2 + $0x50] sm:$0xf]
        %v6064 = vld [vmem:[#allocation2 + $0x58] sm:$0xf]
        %v6065 = vld [vmem:[#allocation2 + $0x60] sm:$0xf]
        %v6066 = vld [vmem:[#allocation2 + $0x68] sm:$0xf]
        %v6067 = vld [vmem:[#allocation2 + $0x70] sm:$0xf]
        %v6068 = vld [vmem:[#allocation2 + $0x78] sm:$0xf]
        %v6069 = vld [vmem:[#allocation2 + $0x80] sm:$0xf]
        %v6070 = vld [vmem:[#allocation2 + $0x88] sm:$0xf]
        %v6071 = vld [vmem:[#allocation34] sm:$0xff]
        %v6072 = vld [vmem:[#allocation34 + $0x8] sm:$0xff]
        %6074 = vset.pattern.permute.xlu0 0
        %6075 = vperm.xlu0 %6074, %v6071
        %v6076 = vpop.permute.xlu0 %6075
        %6079 = vset.pattern.permute.xlu0 0
        %6080 = vperm.xlu0 %6079, %v6072
        %v6081 = vpop.permute.xlu0 %6080
        %v6085 = vunpack.c.l.b16 %v6051
        %v6086 = vunpack.c.h.b16 %v6051
        %v6087 = vunpack.c.l.b16 %v6052
        %v6088 = vunpack.c.h.b16 %v6052
        %v6089 = vpack.c.b16 %v6087, %v6085
        %v6090 = vpack.c.b16 %v6088, %v6086
        %v6110 = vunpack.c.l.b16 %v6053
        %v6111 = vunpack.c.l.b16 %v6054
        %v6112 = vunpack.c.l.b16 %v6055
        %v6113 = vunpack.c.l.b16 %v6056
        %v6114 = vunpack.c.l.b16 %v6057
        %v6115 = vunpack.c.l.b16 %v6058
        %v6116 = vunpack.c.l.b16 %v6059
        %v6117 = vunpack.c.l.b16 %v6060
        %v6118 = vunpack.c.l.b16 %v6061
        %v6119 = vunpack.c.l.b16 %v6062
        %v6120 = vunpack.c.l.b16 %v6063
        %v6121 = vunpack.c.l.b16 %v6064
        %v6122 = vunpack.c.l.b16 %v6065
        %v6123 = vunpack.c.l.b16 %v6066
        %v6124 = vunpack.c.l.b16 %v6067
        %v6125 = vunpack.c.l.b16 %v6068
        %v6126 = vunpack.c.l.b16 %v6069
        %v6127 = vunpack.c.l.b16 %v6070
        %v6128 = vpack.c.b16 %v6111, %v6110
        %v6129 = vpack.c.b16 %v6113, %v6112
        %v6130 = vpack.c.b16 %v6115, %v6114
        %v6131 = vpack.c.b16 %v6117, %v6116
        %v6132 = vpack.c.b16 %v6119, %v6118
        %v6133 = vpack.c.b16 %v6121, %v6120
        %v6134 = vpack.c.b16 %v6123, %v6122
        %v6135 = vpack.c.b16 %v6125, %v6124
        %v6136 = vpack.c.b16 %v6127, %v6126
        %v6147 = vsel %vm3434, %v6090, 0
        %6149 = vmatprep.subr.bf16.mxu0 0
        %6150 = vmatpush1.bf16.msra.mxu0 %v6135
        %6151 = vmatprep.subr.bf16.mxu0 0
        %6152 = vmatpush1.bf16.msra.mxu0 %v6134
        %6153 = vmatprep.subr.bf16.mxu0 0
        %6154 = vmatpush1.bf16.msra.mxu0 %v6133
        %6155 = vmatprep.subr.bf16.mxu0 0
        %6156 = vmatpush1.bf16.msra.mxu0 %v6132
        %6157 = vmatprep.subr.bf16.mxu0 0
        %6158 = vmatpush1.bf16.msra.mxu0 %v6131
        %6159 = vmatprep.subr.bf16.mxu0 0
        %6160 = vmatpush1.bf16.msra.mxu0 %v6130
        %6161 = vmatprep.subr.bf16.mxu0 0
        %6162 = vmatpush1.bf16.msra.mxu0 %v6129
        %6163 = vmatprep.subr.bf16.mxu0 0
        %6164 = vmatpush1.bf16.msra.mxu0 %v6128
        %6165 = vmatprep.subr.bf16.mxu0 0
        %6166 = vmatpush2.bf16.msra.mxu0 0
        %6167 = vmatprep.subr.bf16.mxu0 0
        %6168 = vmatpush2.bf16.msra.mxu0 0
        %6169 = vmatprep.subr.bf16.mxu0 0
        %6170 = vmatpush2.bf16.msra.mxu0 0
        %6171 = vmatprep.subr.bf16.mxu0 0
        %6172 = vmatpush2.bf16.msra.mxu0 0
        %6173 = vmatprep.subr.bf16.mxu0 0
        %6174 = vmatpush2.bf16.msra.mxu0 0
        %6175 = vmatprep.subr.bf16.mxu0 0
        %6176 = vmatpush2.bf16.msra.mxu0 0
        %6177 = vmatprep.subr.bf16.mxu0 0
        %6178 = vmatpush2.bf16.msra.mxu0 0
        %6179 = vmatprep.subr.bf16.mxu0 0
        %6180 = vmatpush2.bf16.msra.mxu0 %v6136
        %6181 = vmatprep.mubr.bf16.mxu0 %v6147
        %6182 = vmatmul.mubr.bf16.gmra.mxu0 %v6089
        %v6183 = vpop.f32.mrf.mxu0
        %v6184 = vadd.f32 %v6076, %v6183
        %v6185 = vpop.f32.mrf.mxu0
        %v6186 = vpop.f32.mrf.mxu0
        %v6187 = vadd.f32 %v6081, %v6186
        %v6188 = vpop.f32.mrf.mxu0
        %6189 = vdwg.mxu0
        %v6190 = vmax.f32 %v6184, 0.0
        %v6191 = vmax.f32 %v6187, 0.0
        %v6192 = vpack.c.bf16 %v6191, %v6190
        %v6193 = vld [vmem:[#allocation35] sm:$0xf]
        %v6194 = vld [vmem:[#allocation35 + $0x4] sm:$0xf]
        %v6195 = vld [vmem:[#allocation35 + $0x8] sm:$0xf]
        %v6196 = vld [vmem:[#allocation35 + $0xc] sm:$0xf]
        %v6201 = vunpack.c.l.b16 %v6193
        %v6202 = vunpack.c.l.b16 %v6194
        %v6203 = vunpack.c.l.b16 %v6195
        %v6204 = vunpack.c.l.b16 %v6196
        %v6205 = vpack.c.b16 %v6202, %v6201
        %v6206 = vpack.c.b16 %v6204, %v6203
        %v6208 = vsel %vm3434, %v6205, 0
        %v6211 = vsel %vm3434, %v6206, 0
        %6213 = vmatprep.subr.bf16.mxu0 0
        %6214 = vmatpush1.bf16.msra.mxu0 0
        %6215 = vmatprep.subr.bf16.mxu0 0
        %6216 = vmatpush1.bf16.msra.mxu0 0
        %6217 = vmatprep.subr.bf16.mxu0 0
        %6218 = vmatpush1.bf16.msra.mxu0 0
        %6219 = vmatprep.subr.bf16.mxu0 0
        %6220 = vmatpush1.bf16.msra.mxu0 0
        %6221 = vmatprep.subr.bf16.mxu0 0
        %6222 = vmatpush1.bf16.msra.mxu0 0
        %6223 = vmatprep.subr.bf16.mxu0 0
        %6224 = vmatpush1.bf16.msra.mxu0 0
        %6225 = vmatprep.subr.bf16.mxu0 0
        %6226 = vmatpush1.bf16.msra.mxu0 0
        %6227 = vmatprep.subr.bf16.mxu0 0
        %6228 = vmatpush1.bf16.msra.mxu0 %v6192
        %6229 = vmatprep.subr.bf16.mxu0 0
        %6230 = vmatpush2.bf16.msra.mxu0 0
        %6231 = vmatprep.subr.bf16.mxu0 0
        %6232 = vmatpush2.bf16.msra.mxu0 0
        %6233 = vmatprep.subr.bf16.mxu0 0
        %6234 = vmatpush2.bf16.msra.mxu0 0
        %6235 = vmatprep.subr.bf16.mxu0 0
        %6236 = vmatpush2.bf16.msra.mxu0 0
        %6237 = vmatprep.subr.bf16.mxu0 0
        %6238 = vmatpush2.bf16.msra.mxu0 0
        %6239 = vmatprep.subr.bf16.mxu0 0
        %6240 = vmatpush2.bf16.msra.mxu0 0
        %6241 = vmatprep.subr.bf16.mxu0 0
        %6242 = vmatpush2.bf16.msra.mxu0 0
        %6243 = vmatprep.subr.bf16.mxu0 0
        %6244 = vmatpush2.bf16.msra.mxu0 0
        %6245 = vmatprep.mubr.bf16.mxu0 0
        %6246 = vmatmul.mubr.bf16.gmra.mxu0 %v6208
        %v6247 = vpop.f32.mrf.mxu0
        %v6248 = vadd.f32 0.0, %v6247
        %v6249 = vpop.f32.mrf.mxu0
        %v6250 = vpop.f32.mrf.mxu0
        %v6251 = vadd.f32 0.0, %v6250
        %v6252 = vpop.f32.mrf.mxu0
        %6253 = vmatprep.mubr.bf16.mxu0 0
        %6254 = vmatmul.mubr.bf16.gmra.mxu0 %v6211
        %v6255 = vpop.f32.mrf.mxu0
        %v6256 = vadd.f32 0.0, %v6255
        %v6257 = vpop.f32.mrf.mxu0
        %v6258 = vpop.f32.mrf.mxu0
        %v6259 = vadd.f32 0.0, %v6258
        %v6260 = vpop.f32.mrf.mxu0
        %6261 = vdwg.mxu0
        %v6262 = vpack.c.bf16 %v6251, %v6248
        %v6263 = vpack.c.bf16 %v6259, %v6256
        %v6264 = vld [vmem:[%s15] sm:$0xff]
        %v6265 = vld [vmem:[%s15 + $0x8] sm:$0xff]
        %v6266 = vld [vmem:[%s15 + $0x10] sm:$0xff]
        %v6267 = vld [vmem:[%s15 + $0x18] sm:$0xff]
        %v6268 = vld [vmem:[%s15 + $0x20] sm:$0xff]
        %v6269 = vld [vmem:[%s15 + $0x28] sm:$0xff]
        %v6270 = vld [vmem:[%s15 + $0x30] sm:$0xff]
        %v6271 = vld [vmem:[%s15 + $0x38] sm:$0xff]
        %v6272 = vld [vmem:[%s15 + $0x40] sm:$0xff]
        %v6273 = vld [vmem:[%s15 + $0x48] sm:$0xff]
        %v6274 = vld [vmem:[%s15 + $0x50] sm:$0xff]
        %v6275 = vld [vmem:[%s15 + $0x58] sm:$0xff]
        %v6276 = vld [vmem:[%s15 + $0x60] sm:$0xff]
        %v6277 = vld [vmem:[%s15 + $0x68] sm:$0xff]
        %v6278 = vld [vmem:[%s15 + $0x70] sm:$0xff]
        %v6279 = vld [vmem:[%s15 + $0x78] sm:$0xff]
        %v6281 = vrot.slane %v6262, 4
        %v6290 = vunpack.c.l.b16 %v6272
        %v6291 = vunpack.c.h.b16 %v6272
        %v6292 = vunpack.c.l.b16 %v6273
        %v6293 = vunpack.c.h.b16 %v6273
        %v6294 = vunpack.c.l.b16 %v6274
        %v6295 = vunpack.c.h.b16 %v6274
        %v6296 = vunpack.c.l.b16 %v6275
        %v6297 = vunpack.c.h.b16 %v6275
        %v6298 = vunpack.c.l.b16 %v6276
        %v6299 = vunpack.c.h.b16 %v6276
        %v6300 = vunpack.c.l.b16 %v6277
        %v6301 = vunpack.c.h.b16 %v6277
        %v6302 = vunpack.c.l.b16 %v6278
        %v6303 = vunpack.c.h.b16 %v6278
        %v6304 = vunpack.c.l.b16 %v6279
        %v6305 = vunpack.c.h.b16 %v6279
        %v6306 = vpack.c.b16 %v6292, %v6290
        %v6307 = vpack.c.b16 %v6293, %v6291
        %v6308 = vpack.c.b16 %v6296, %v6294
        %v6309 = vpack.c.b16 %v6297, %v6295
        %v6310 = vpack.c.b16 %v6300, %v6298
        %v6311 = vpack.c.b16 %v6301, %v6299
        %v6312 = vpack.c.b16 %v6304, %v6302
        %v6313 = vpack.c.b16 %v6305, %v6303
        %vm6322 = vcmask 523264
        %v6324 = vsel %vm6322, %v6281, 0
        %6326 = vmatprep.subr.bf16.mxu0 0
        %6327 = vmatpush1.bf16.msra.mxu0 0
        %6328 = vmatprep.subr.bf16.mxu0 0
        %6329 = vmatpush1.bf16.msra.mxu0 0
        %6330 = vmatprep.subr.bf16.mxu0 0
        %6331 = vmatpush1.bf16.msra.mxu0 0
        %6332 = vmatprep.subr.bf16.mxu0 0
        %6333 = vmatpush1.bf16.msra.mxu0 0
        %6334 = vmatprep.subr.bf16.mxu0 %v6313
        %6335 = vmatpush1.bf16.msra.mxu0 %v6312
        %6336 = vmatprep.subr.bf16.mxu0 %v6311
        %6337 = vmatpush1.bf16.msra.mxu0 %v6310
        %6338 = vmatprep.subr.bf16.mxu0 %v6309
        %6339 = vmatpush1.bf16.msra.mxu0 %v6308
        %6340 = vmatprep.subr.bf16.mxu0 %v6307
        %6341 = vmatpush1.bf16.msra.mxu0 %v6306
        %6342 = vmatprep.subr.bf16.mxu0 0
        %6343 = vmatpush2.bf16.msra.mxu0 0
        %6344 = vmatprep.subr.bf16.mxu0 0
        %6345 = vmatpush2.bf16.msra.mxu0 0
        %6346 = vmatprep.subr.bf16.mxu0 0
        %6347 = vmatpush2.bf16.msra.mxu0 0
        %6348 = vmatprep.subr.bf16.mxu0 0
        %6349 = vmatpush2.bf16.msra.mxu0 0
        %6350 = vmatprep.subr.bf16.mxu0 0
        %6351 = vmatpush2.bf16.msra.mxu0 0
        %6352 = vmatprep.subr.bf16.mxu0 0
        %6353 = vmatpush2.bf16.msra.mxu0 0
        %6354 = vmatprep.subr.bf16.mxu0 0
        %6355 = vmatpush2.bf16.msra.mxu0 0
        %6356 = vmatprep.subr.bf16.mxu0 0
        %6357 = vmatpush2.bf16.msra.mxu0 0
        %6358 = vmatprep.mubr.bf16.mxu0 0
        %6359 = vmatmul.mubr.bf16.gmra.mxu0 %v6324
        %v6360 = vpop.f32.mrf.mxu0
        %v6361 = vadd.f32 0.0, %v6360
        %v6362 = vpop.f32.mrf.mxu0
        %v6363 = vadd.f32 0.0, %v6362
        %v6364 = vpop.f32.mrf.mxu0
        %v6365 = vpop.f32.mrf.mxu0
        %6366 = vdwg.mxu0
        %v6375 = vunpack.c.l.b16 %v6264
        %v6376 = vunpack.c.h.b16 %v6264
        %v6377 = vunpack.c.l.b16 %v6265
        %v6378 = vunpack.c.h.b16 %v6265
        %v6379 = vunpack.c.l.b16 %v6266
        %v6380 = vunpack.c.h.b16 %v6266
        %v6381 = vunpack.c.l.b16 %v6267
        %v6382 = vunpack.c.h.b16 %v6267
        %v6383 = vunpack.c.l.b16 %v6268
        %v6384 = vunpack.c.h.b16 %v6268
        %v6385 = vunpack.c.l.b16 %v6269
        %v6386 = vunpack.c.h.b16 %v6269
        %v6387 = vunpack.c.l.b16 %v6270
        %v6388 = vunpack.c.h.b16 %v6270
        %v6389 = vunpack.c.l.b16 %v6271
        %v6390 = vunpack.c.h.b16 %v6271
        %v6391 = vpack.c.b16 %v6377, %v6375
        %v6392 = vpack.c.b16 %v6378, %v6376
        %v6393 = vpack.c.b16 %v6381, %v6379
        %v6394 = vpack.c.b16 %v6382, %v6380
        %v6395 = vpack.c.b16 %v6385, %v6383
        %v6396 = vpack.c.b16 %v6386, %v6384
        %v6397 = vpack.c.b16 %v6389, %v6387
        %v6398 = vpack.c.b16 %v6390, %v6388
        %v6408 = vsel %vm6322, %v6262, 0
        %6410 = vmatprep.subr.bf16.mxu0 0
        %6411 = vmatpush1.bf16.msra.mxu0 0
        %6412 = vmatprep.subr.bf16.mxu0 0
        %6413 = vmatpush1.bf16.msra.mxu0 0
        %6414 = vmatprep.subr.bf16.mxu0 0
        %6415 = vmatpush1.bf16.msra.mxu0 0
        %6416 = vmatprep.subr.bf16.mxu0 0
        %6417 = vmatpush1.bf16.msra.mxu0 0
        %6418 = vmatprep.subr.bf16.mxu0 %v6398
        %6419 = vmatpush1.bf16.msra.mxu0 %v6397
        %6420 = vmatprep.subr.bf16.mxu0 %v6396
        %6421 = vmatpush1.bf16.msra.mxu0 %v6395
        %6422 = vmatprep.subr.bf16.mxu0 %v6394
        %6423 = vmatpush1.bf16.msra.mxu0 %v6393
        %6424 = vmatprep.subr.bf16.mxu0 %v6392
        %6425 = vmatpush1.bf16.msra.mxu0 %v6391
        %6426 = vmatprep.subr.bf16.mxu0 0
        %6427 = vmatpush2.bf16.msra.mxu0 0
        %6428 = vmatprep.subr.bf16.mxu0 0
        %6429 = vmatpush2.bf16.msra.mxu0 0
        %6430 = vmatprep.subr.bf16.mxu0 0
        %6431 = vmatpush2.bf16.msra.mxu0 0
        %6432 = vmatprep.subr.bf16.mxu0 0
        %6433 = vmatpush2.bf16.msra.mxu0 0
        %6434 = vmatprep.subr.bf16.mxu0 0
        %6435 = vmatpush2.bf16.msra.mxu0 0
        %6436 = vmatprep.subr.bf16.mxu0 0
        %6437 = vmatpush2.bf16.msra.mxu0 0
        %6438 = vmatprep.subr.bf16.mxu0 0
        %6439 = vmatpush2.bf16.msra.mxu0 0
        %6440 = vmatprep.subr.bf16.mxu0 0
        %6441 = vmatpush2.bf16.msra.mxu0 0
        %6442 = vmatprep.mubr.bf16.mxu0 0
        %6443 = vmatmul.mubr.bf16.gmra.mxu0 %v6408
        %v6444 = vpop.f32.mrf.mxu0
        %v6445 = vadd.f32 %v6361, %v6444
        %v6446 = vpop.f32.mrf.mxu0
        %v6447 = vadd.f32 %v6363, %v6446
        %v6448 = vpop.f32.mrf.mxu0
        %v6449 = vpop.f32.mrf.mxu0
        %6450 = vdwg.mxu0
        %v6451 = vld [vmem:[%s15 + $0x80] sm:$0xff]
        %v6452 = vld [vmem:[%s15 + $0x88] sm:$0xff]
        %v6453 = vld [vmem:[%s15 + $0x90] sm:$0xff]
        %v6454 = vld [vmem:[%s15 + $0x98] sm:$0xff]
        %v6455 = vld [vmem:[%s15 + $0xa0] sm:$0xff]
        %v6456 = vld [vmem:[%s15 + $0xa8] sm:$0xff]
        %v6457 = vld [vmem:[%s15 + $0xb0] sm:$0xff]
        %v6458 = vld [vmem:[%s15 + $0xb8] sm:$0xff]
        %v6467 = vunpack.c.l.b16 %v6451
        %v6468 = vunpack.c.h.b16 %v6451
        %v6469 = vunpack.c.l.b16 %v6452
        %v6470 = vunpack.c.h.b16 %v6452
        %v6471 = vunpack.c.l.b16 %v6453
        %v6472 = vunpack.c.h.b16 %v6453
        %v6473 = vunpack.c.l.b16 %v6454
        %v6474 = vunpack.c.h.b16 %v6454
        %v6475 = vunpack.c.l.b16 %v6455
        %v6476 = vunpack.c.h.b16 %v6455
        %v6477 = vunpack.c.l.b16 %v6456
        %v6478 = vunpack.c.h.b16 %v6456
        %v6479 = vunpack.c.l.b16 %v6457
        %v6480 = vunpack.c.h.b16 %v6457
        %v6481 = vunpack.c.l.b16 %v6458
        %v6482 = vunpack.c.h.b16 %v6458
        %v6483 = vpack.c.b16 %v6469, %v6467
        %v6484 = vpack.c.b16 %v6470, %v6468
        %v6485 = vpack.c.b16 %v6473, %v6471
        %v6486 = vpack.c.b16 %v6474, %v6472
        %v6487 = vpack.c.b16 %v6477, %v6475
        %v6488 = vpack.c.b16 %v6478, %v6476
        %v6489 = vpack.c.b16 %v6481, %v6479
        %v6490 = vpack.c.b16 %v6482, %v6480
        %v6500 = vsel %vm6322, %v6263, 0
        %6502 = vmatprep.subr.bf16.mxu0 0
        %6503 = vmatpush1.bf16.msra.mxu0 0
        %6504 = vmatprep.subr.bf16.mxu0 0
        %6505 = vmatpush1.bf16.msra.mxu0 0
        %6506 = vmatprep.subr.bf16.mxu0 0
        %6507 = vmatpush1.bf16.msra.mxu0 0
        %6508 = vmatprep.subr.bf16.mxu0 0
        %6509 = vmatpush1.bf16.msra.mxu0 0
        %6510 = vmatprep.subr.bf16.mxu0 %v6490
        %6511 = vmatpush1.bf16.msra.mxu0 %v6489
        %6512 = vmatprep.subr.bf16.mxu0 %v6488
        %6513 = vmatpush1.bf16.msra.mxu0 %v6487
        %6514 = vmatprep.subr.bf16.mxu0 %v6486
        %6515 = vmatpush1.bf16.msra.mxu0 %v6485
        %6516 = vmatprep.subr.bf16.mxu0 %v6484
        %6517 = vmatpush1.bf16.msra.mxu0 %v6483
        %6518 = vmatprep.subr.bf16.mxu0 0
        %6519 = vmatpush2.bf16.msra.mxu0 0
        %6520 = vmatprep.subr.bf16.mxu0 0
        %6521 = vmatpush2.bf16.msra.mxu0 0
        %6522 = vmatprep.subr.bf16.mxu0 0
        %6523 = vmatpush2.bf16.msra.mxu0 0
        %6524 = vmatprep.subr.bf16.mxu0 0
        %6525 = vmatpush2.bf16.msra.mxu0 0
        %6526 = vmatprep.subr.bf16.mxu0 0
        %6527 = vmatpush2.bf16.msra.mxu0 0
        %6528 = vmatprep.subr.bf16.mxu0 0
        %6529 = vmatpush2.bf16.msra.mxu0 0
        %6530 = vmatprep.subr.bf16.mxu0 0
        %6531 = vmatpush2.bf16.msra.mxu0 0
        %6532 = vmatprep.subr.bf16.mxu0 0
        %6533 = vmatpush2.bf16.msra.mxu0 0
        %6534 = vmatprep.mubr.bf16.mxu0 0
        %6535 = vmatmul.mubr.bf16.gmra.mxu0 %v6500
        %v6536 = vpop.f32.mrf.mxu0
        %v6537 = vadd.f32 0.0, %v6536
        %v6538 = vpop.f32.mrf.mxu0
        %v6539 = vadd.f32 0.0, %v6538
        %v6540 = vpop.f32.mrf.mxu0
        %v6541 = vpop.f32.mrf.mxu0
        %6542 = vdwg.mxu0
        %v6543 = vadd.f32 %v6445, %v6537
        %v6544 = vadd.f32 %v6447, %v6539
        %v6545 = vld [vmem:[%s15 + $0xc0] sm:$0xff]
        %v6546 = vld [vmem:[%s15 + $0xc8] sm:$0xff]
        %v6547 = vld [vmem:[%s15 + $0xd0] sm:$0xff]
        %v6548 = vld [vmem:[%s15 + $0xd8] sm:$0xff]
        %v6549 = vld [vmem:[%s15 + $0xe0] sm:$0xff]
        %v6550 = vld [vmem:[%s15 + $0xe8] sm:$0xff]
        %v6551 = vld [vmem:[%s15 + $0xf0] sm:$0xff]
        %v6552 = vld [vmem:[%s15 + $0xf8] sm:$0xff]
        %v6554 = vrot.slane %v6263, 4
        %v6563 = vunpack.c.l.b16 %v6545
        %v6564 = vunpack.c.h.b16 %v6545
        %v6565 = vunpack.c.l.b16 %v6546
        %v6566 = vunpack.c.h.b16 %v6546
        %v6567 = vunpack.c.l.b16 %v6547
        %v6568 = vunpack.c.h.b16 %v6547
        %v6569 = vunpack.c.l.b16 %v6548
        %v6570 = vunpack.c.h.b16 %v6548
        %v6571 = vunpack.c.l.b16 %v6549
        %v6572 = vunpack.c.h.b16 %v6549
        %v6573 = vunpack.c.l.b16 %v6550
        %v6574 = vunpack.c.h.b16 %v6550
        %v6575 = vunpack.c.l.b16 %v6551
        %v6576 = vunpack.c.h.b16 %v6551
        %v6577 = vunpack.c.l.b16 %v6552
        %v6578 = vunpack.c.h.b16 %v6552
        %v6579 = vpack.c.b16 %v6565, %v6563
        %v6580 = vpack.c.b16 %v6566, %v6564
        %v6581 = vpack.c.b16 %v6569, %v6567
        %v6582 = vpack.c.b16 %v6570, %v6568
        %v6583 = vpack.c.b16 %v6573, %v6571
        %v6584 = vpack.c.b16 %v6574, %v6572
        %v6585 = vpack.c.b16 %v6577, %v6575
        %v6586 = vpack.c.b16 %v6578, %v6576
        %v6596 = vsel %vm6322, %v6554, 0
        %6598 = vmatprep.subr.bf16.mxu0 0
        %6599 = vmatpush1.bf16.msra.mxu0 0
        %6600 = vmatprep.subr.bf16.mxu0 0
        %6601 = vmatpush1.bf16.msra.mxu0 0
        %6602 = vmatprep.subr.bf16.mxu0 0
        %6603 = vmatpush1.bf16.msra.mxu0 0
        %6604 = vmatprep.subr.bf16.mxu0 0
        %6605 = vmatpush1.bf16.msra.mxu0 0
        %6606 = vmatprep.subr.bf16.mxu0 %v6586
        %6607 = vmatpush1.bf16.msra.mxu0 %v6585
        %6608 = vmatprep.subr.bf16.mxu0 %v6584
        %6609 = vmatpush1.bf16.msra.mxu0 %v6583
        %6610 = vmatprep.subr.bf16.mxu0 %v6582
        %6611 = vmatpush1.bf16.msra.mxu0 %v6581
        %6612 = vmatprep.subr.bf16.mxu0 %v6580
        %6613 = vmatpush1.bf16.msra.mxu0 %v6579
        %6614 = vmatprep.subr.bf16.mxu0 0
        %6615 = vmatpush2.bf16.msra.mxu0 0
        %6616 = vmatprep.subr.bf16.mxu0 0
        %6617 = vmatpush2.bf16.msra.mxu0 0
        %6618 = vmatprep.subr.bf16.mxu0 0
        %6619 = vmatpush2.bf16.msra.mxu0 0
        %6620 = vmatprep.subr.bf16.mxu0 0
        %6621 = vmatpush2.bf16.msra.mxu0 0
        %6622 = vmatprep.subr.bf16.mxu0 0
        %6623 = vmatpush2.bf16.msra.mxu0 0
        %6624 = vmatprep.subr.bf16.mxu0 0
        %6625 = vmatpush2.bf16.msra.mxu0 0
        %6626 = vmatprep.subr.bf16.mxu0 0
        %6627 = vmatpush2.bf16.msra.mxu0 0
        %6628 = vmatprep.subr.bf16.mxu0 0
        %6629 = vmatpush2.bf16.msra.mxu0 0
        %6630 = vmatprep.mubr.bf16.mxu0 0
        %6631 = vmatmul.mubr.bf16.gmra.mxu0 %v6596
        %v6632 = vpop.f32.mrf.mxu0
        %v6633 = vadd.f32 0.0, %v6632
        %v6634 = vpop.f32.mrf.mxu0
        %v6635 = vadd.f32 0.0, %v6634
        %v6636 = vpop.f32.mrf.mxu0
        %v6637 = vpop.f32.mrf.mxu0
        %6638 = vdwg.mxu0
        %v6639 = vadd.f32 %v6543, %v6633
        %v6640 = vadd.f32 %v6544, %v6635
        %v6641 = vld [vmem:[#allocation37] sm:$0xff]
        %6643 = vset.pattern.permute.xlu0 0
        %6644 = vperm.xlu0 %6643, %v6641
        %v6645 = vpop.permute.xlu0 %6644
        %v6647 = vadd.f32 %v6639, %v6645
        %v6648 = vadd.f32 %v6640, %v6645
        %v6649 = vpack.c.bf16 %v6647, %v6647
        %v6650 = vpack.c.bf16 %v6648, %v6648
        %6651 = vst [vmem:[#allocation2] sm:$0xff] 0
        %6652 = vst [vmem:[#allocation2 + $0x8] sm:$0xff] 0
        %6653 = vst [vmem:[#allocation2 + $0x10] sm:$0xff] 0
        %6654 = vst [vmem:[#allocation2 + $0x18] sm:$0xff] 0
        %6655 = vst [vmem:[#allocation2 + $0x20] sm:$0xff] 0
        %6656 = vst [vmem:[#allocation2 + $0x28] sm:$0xff] 0
        %6657 = vst [vmem:[#allocation2 + $0x30] sm:$0xff] 0
        %6658 = vst [vmem:[#allocation2 + $0x38] sm:$0xff] 0
        %6659 = vst [vmem:[#allocation2 + $0x40] sm:$0xff] 0
        %6660 = vst [vmem:[#allocation2 + $0x48] sm:$0xff] 0
        %6661 = vst [vmem:[#allocation2 + $0x50] sm:$0xff] 0
        %6662 = vst [vmem:[#allocation2 + $0x58] sm:$0xff] 0
        %6663 = vst [vmem:[#allocation2 + $0x60] sm:$0xff] 0
        %6664 = vst [vmem:[#allocation2 + $0x68] sm:$0xff] 0
        %6665 = vst [vmem:[#allocation2 + $0x70] sm:$0xff] 0
        %6666 = vst [vmem:[#allocation2 + $0x78] sm:$0xff] 0
        %6667 = vst [vmem:[#allocation2 + $0x80] sm:$0xff] 0
        %6668 = vst [vmem:[#allocation2 + $0x88] sm:$0xff] 0
        %v6669 = vld [vmem:[%s3] sm:$0x5]
        %v6672 = vunpack.c.l.s4 1983009808
        %v6673 = vunpack.c.0.s8 %v6672
        %v6674 = vlaneseq
        %v6675 = vshrl.u32 %v6674, 7
        %v6676 = vsub.s32 %v6673, %v6675
        %v6677 = vrot.slane %v6669, %v6676
        %v6678 = vcombine.high %v6677, %v6677
        %v6680 = vpack.i.b16 %v6677, %v6677
        %v6682 = vlaneseq
        %v6683 = vshrl.u32 %v6682, 7
        %v6684 = vsub.s32 0, %v6683
        %v6685 = vrot.slane %v6680, %v6684
        %v6687 = vpack.i.b16 %v6678, %v6678
        %v6689 = vlaneseq
        %v6690 = vshrl.u32 %v6689, 7
        %v6691 = vsub.s32 0, %v6690
        %v6692 = vrot.slane %v6687, %v6691
        %6695 = vrot.lane.b32.xlu0 %v6685, 111
        %v6696 = vpop.permute.xlu0 %6695
        %6697 = vrot.lane.b32.xlu0 %v6692, 111
        %v6698 = vpop.permute.xlu0 %6697
        %v6699 = vsel %vm1482, %v6696, %v6698
        %v6702 = vmul.bf16 %v6649, %v6699
        %v6703 = vmul.bf16 %v6650, %v6698
        %v6706 = vunpack.c.l.b16 %v6702
        %v6707 = vunpack.c.l.b16 %v6703
        %v6708 = vpack.c.b16 %v6707, %v6706
        %6709 = vrot.lane.b32.xlu0 %v6708, 17
        %v6710 = vpop.permute.xlu0 %6709
        %v6711 = vrot.slane %v6710, 4
        %v6712 = vsel %vm1497, %v6711, %v6710
        %6714 = vst.msk [vmem:[#allocation2] sm:$0xff] %vm2109, %v6712
        %v6715 = vld [vmem:[%s3] sm:$0x5]
        %v6718 = vunpack.c.l.s4 1983009808
        %v6719 = vunpack.c.0.s8 %v6718
        %v6720 = vlaneseq
        %v6721 = vshrl.u32 %v6720, 7
        %v6722 = vsub.s32 %v6719, %v6721
        %v6723 = vrot.slane %v6715, %v6722
        %v6724 = vcombine.high %v6723, %v6723
        %v6726 = vshrl.u32 %v6723, 16
        %v6727 = vpack.i.b16 %v6726, %v6726
        %v6729 = vlaneseq
        %v6730 = vshrl.u32 %v6729, 7
        %v6731 = vsub.s32 0, %v6730
        %v6732 = vrot.slane %v6727, %v6731
        %v6734 = vshrl.u32 %v6724, 16
        %v6735 = vpack.i.b16 %v6734, %v6734
        %v6737 = vlaneseq
        %v6738 = vshrl.u32 %v6737, 7
        %v6739 = vsub.s32 0, %v6738
        %v6740 = vrot.slane %v6735, %v6739
        %6743 = vrot.lane.b32.xlu0 %v6732, 112
        %v6744 = vpop.permute.xlu0 %6743
        %6745 = vrot.lane.b32.xlu0 %v6740, 112
        %v6746 = vpop.permute.xlu0 %6745
        %v6747 = vsel %vm1543, %v6744, %v6746
        %v6750 = vmul.bf16 %v6649, %v6747
        %v6751 = vmul.bf16 %v6650, %v6746
        %v6754 = vunpack.c.l.b16 %v6750
        %v6755 = vunpack.c.l.b16 %v6751
        %v6756 = vpack.c.b16 %v6755, %v6754
        %6757 = vrot.lane.b32.xlu0 %v6756, 16
        %v6758 = vpop.permute.xlu0 %6757
        %v6759 = vrot.slane %v6758, 4
        %v6760 = vsel %vm1559, %v6759, %v6758
        %6762 = vst.msk [vmem:[#allocation2 + $0x8] sm:$0xff] %vm2159, %v6760
        %v6763 = vld [vmem:[%s3] sm:$0xa]
        %v6766 = vunpack.c.l.s4 1983009808
        %v6767 = vunpack.c.0.s8 %v6766
        %v6768 = vlaneseq
        %v6769 = vshrl.u32 %v6768, 7
        %v6770 = vsub.s32 %v6767, %v6769
        %v6771 = vrot.slane %v6763, %v6770
        %v6772 = vcombine.high %v6771, %v6771
        %v6774 = vpack.i.b16 %v6771, %v6771
        %v6776 = vlaneseq
        %v6777 = vshrl.u32 %v6776, 7
        %v6778 = vsub.s32 1, %v6777
        %v6779 = vrot.slane %v6774, %v6778
        %v6781 = vpack.i.b16 %v6772, %v6772
        %v6783 = vlaneseq
        %v6784 = vshrl.u32 %v6783, 7
        %v6785 = vsub.s32 1, %v6784
        %v6786 = vrot.slane %v6781, %v6785
        %6789 = vrot.lane.b32.xlu0 %v6779, 113
        %v6790 = vpop.permute.xlu0 %6789
        %6791 = vrot.lane.b32.xlu0 %v6786, 113
        %v6792 = vpop.permute.xlu0 %6791
        %v6793 = vsel %vm1603, %v6790, %v6792
        %v6796 = vmul.bf16 %v6649, %v6793
        %v6797 = vmul.bf16 %v6650, %v6792
        %v6800 = vunpack.c.l.b16 %v6796
        %v6801 = vunpack.c.l.b16 %v6797
        %v6802 = vpack.c.b16 %v6801, %v6800
        %6803 = vrot.lane.b32.xlu0 %v6802, 15
        %v6804 = vpop.permute.xlu0 %6803
        %v6805 = vrot.slane %v6804, 4
        %v6806 = vsel %vm1618, %v6805, %v6804
        %6808 = vst.msk [vmem:[#allocation2 + $0x10] sm:$0xff] %vm2207, %v6806
        %v6809 = vld [vmem:[%s3] sm:$0x5]
        %v6812 = vunpack.c.l.s4 1983009808
        %v6813 = vunpack.c.0.s8 %v6812
        %v6814 = vlaneseq
        %v6815 = vshrl.u32 %v6814, 7
        %v6816 = vsub.s32 %v6813, %v6815
        %v6817 = vrot.slane %v6809, %v6816
        %v6818 = vcombine.high %v6817, %v6817
        %v6820 = vpack.i.b16 %v6817, %v6817
        %v6822 = vlaneseq
        %v6823 = vshrl.u32 %v6822, 7
        %v6824 = vsub.s32 0, %v6823
        %v6825 = vrot.slane %v6820, %v6824
        %v6827 = vpack.i.b16 %v6818, %v6818
        %v6829 = vlaneseq
        %v6830 = vshrl.u32 %v6829, 7
        %v6831 = vsub.s32 0, %v6830
        %v6832 = vrot.slane %v6827, %v6831
        %6835 = vrot.lane.b32.xlu0 %v6825, 127
        %v6836 = vpop.permute.xlu0 %6835
        %6837 = vrot.lane.b32.xlu0 %v6832, 127
        %v6838 = vpop.permute.xlu0 %6837
        %v6839 = vsel %vm1661, %v6836, %v6838
        %v6842 = vmul.bf16 %v6649, %v6839
        %v6843 = vmul.bf16 %v6650, %v6838
        %v6846 = vunpack.c.l.b16 %v6842
        %v6847 = vunpack.c.l.b16 %v6843
        %v6848 = vpack.c.b16 %v6847, %v6846
        %6849 = vrot.lane.b32.xlu0 %v6848, 1
        %v6850 = vpop.permute.xlu0 %6849
        %v6851 = vrot.slane %v6850, 4
        %v6852 = vsel %vm1677, %v6851, %v6850
        %6854 = vst.msk [vmem:[#allocation2 + $0x18] sm:$0xff] %vm2255, %v6852
        %v6855 = vld [vmem:[%s3] sm:$0x5]
        %v6858 = vunpack.c.l.s4 1983009808
        %v6859 = vunpack.c.0.s8 %v6858
        %v6860 = vlaneseq
        %v6861 = vshrl.u32 %v6860, 7
        %v6862 = vsub.s32 %v6859, %v6861
        %v6863 = vrot.slane %v6855, %v6862
        %v6864 = vcombine.high %v6863, %v6863
        %v6866 = vshrl.u32 %v6863, 16
        %v6867 = vpack.i.b16 %v6866, %v6866
        %v6869 = vlaneseq
        %v6870 = vshrl.u32 %v6869, 7
        %v6871 = vsub.s32 0, %v6870
        %v6872 = vrot.slane %v6867, %v6871
        %v6874 = vshrl.u32 %v6864, 16
        %v6875 = vpack.i.b16 %v6874, %v6874
        %v6877 = vlaneseq
        %v6878 = vshrl.u32 %v6877, 7
        %v6879 = vsub.s32 0, %v6878
        %v6880 = vrot.slane %v6875, %v6879
        %v6881 = vmul.bf16 %v6649, %v6872
        %v6882 = vmul.bf16 %v6650, %v6880
        %v6885 = vunpack.c.l.b16 %v6881
        %v6886 = vunpack.c.l.b16 %v6882
        %v6887 = vpack.c.b16 %v6886, %v6885
        %6889 = vst [vmem:[#allocation2 + $0x20] sm:$0xff] %v6887
        %v6890 = vld [vmem:[%s3] sm:$0xa]
        %v6893 = vunpack.c.l.s4 1983009808
        %v6894 = vunpack.c.0.s8 %v6893
        %v6895 = vlaneseq
        %v6896 = vshrl.u32 %v6895, 7
        %v6897 = vsub.s32 %v6894, %v6896
        %v6898 = vrot.slane %v6890, %v6897
        %v6899 = vcombine.high %v6898, %v6898
        %v6901 = vpack.i.b16 %v6898, %v6898
        %v6903 = vlaneseq
        %v6904 = vshrl.u32 %v6903, 7
        %v6905 = vsub.s32 1, %v6904
        %v6906 = vrot.slane %v6901, %v6905
        %v6908 = vpack.i.b16 %v6899, %v6899
        %v6910 = vlaneseq
        %v6911 = vshrl.u32 %v6910, 7
        %v6912 = vsub.s32 1, %v6911
        %v6913 = vrot.slane %v6908, %v6912
        %6916 = vrot.lane.b32.xlu0 %v6906, 1
        %v6917 = vpop.permute.xlu0 %6916
        %6918 = vrot.lane.b32.xlu0 %v6913, 1
        %v6919 = vpop.permute.xlu0 %6918
        %v6920 = vsel %vm1677, %v6917, %v6919
        %v6923 = vmul.bf16 %v6649, %v6917
        %v6924 = vmul.bf16 %v6650, %v6920
        %v6927 = vunpack.c.l.b16 %v6923
        %v6928 = vunpack.c.l.b16 %v6924
        %v6929 = vpack.c.b16 %v6928, %v6927
        %6930 = vrot.lane.b32.xlu0 %v6929, 127
        %v6931 = vpop.permute.xlu0 %6930
        %v6932 = vrot.slane %v6931, 4
        %v6933 = vsel %vm1661, %v6931, %v6932
        %6935 = vst.msk [vmem:[#allocation2 + $0x28] sm:$0xff] %vm2339, %v6933
        %v6936 = vld [vmem:[%s3] sm:$0x5]
        %v6939 = vunpack.c.l.s4 1983009808
        %v6940 = vunpack.c.0.s8 %v6939
        %v6941 = vlaneseq
        %v6942 = vshrl.u32 %v6941, 7
        %v6943 = vsub.s32 %v6940, %v6942
        %v6944 = vrot.slane %v6936, %v6943
        %v6945 = vcombine.high %v6944, %v6944
        %v6947 = vpack.i.b16 %v6944, %v6944
        %v6949 = vlaneseq
        %v6950 = vshrl.u32 %v6949, 7
        %v6951 = vsub.s32 0, %v6950
        %v6952 = vrot.slane %v6947, %v6951
        %v6954 = vpack.i.b16 %v6945, %v6945
        %v6956 = vlaneseq
        %v6957 = vshrl.u32 %v6956, 7
        %v6958 = vsub.s32 0, %v6957
        %v6959 = vrot.slane %v6954, %v6958
        %6962 = vrot.lane.b32.xlu0 %v6952, 15
        %v6963 = vpop.permute.xlu0 %6962
        %6964 = vrot.lane.b32.xlu0 %v6959, 15
        %v6965 = vpop.permute.xlu0 %6964
        %v6966 = vsel %vm1618, %v6963, %v6965
        %v6969 = vmul.bf16 %v6649, %v6963
        %v6970 = vmul.bf16 %v6650, %v6966
        %v6973 = vunpack.c.l.b16 %v6969
        %v6974 = vunpack.c.l.b16 %v6970
        %v6975 = vpack.c.b16 %v6974, %v6973
        %6976 = vrot.lane.b32.xlu0 %v6975, 113
        %v6977 = vpop.permute.xlu0 %6976
        %v6978 = vrot.slane %v6977, 4
        %v6979 = vsel %vm1603, %v6977, %v6978
        %6981 = vst.msk [vmem:[#allocation2 + $0x30] sm:$0xff] %vm2387, %v6979
        %v6982 = vld [vmem:[%s3] sm:$0x5]
        %v6985 = vunpack.c.l.s4 1983009808
        %v6986 = vunpack.c.0.s8 %v6985
        %v6987 = vlaneseq
        %v6988 = vshrl.u32 %v6987, 7
        %v6989 = vsub.s32 %v6986, %v6988
        %v6990 = vrot.slane %v6982, %v6989
        %v6991 = vcombine.high %v6990, %v6990
        %v6993 = vshrl.u32 %v6990, 16
        %v6994 = vpack.i.b16 %v6993, %v6993
        %v6996 = vlaneseq
        %v6997 = vshrl.u32 %v6996, 7
        %v6998 = vsub.s32 0, %v6997
        %v6999 = vrot.slane %v6994, %v6998
        %v7001 = vshrl.u32 %v6991, 16
        %v7002 = vpack.i.b16 %v7001, %v7001
        %v7004 = vlaneseq
        %v7005 = vshrl.u32 %v7004, 7
        %v7006 = vsub.s32 0, %v7005
        %v7007 = vrot.slane %v7002, %v7006
        %7010 = vrot.lane.b32.xlu0 %v6999, 16
        %v7011 = vpop.permute.xlu0 %7010
        %7012 = vrot.lane.b32.xlu0 %v7007, 16
        %v7013 = vpop.permute.xlu0 %7012
        %v7014 = vsel %vm1559, %v7011, %v7013
        %v7017 = vmul.bf16 %v6649, %v7011
        %v7018 = vmul.bf16 %v6650, %v7014
        %v7021 = vunpack.c.l.b16 %v7017
        %v7022 = vunpack.c.l.b16 %v7018
        %v7023 = vpack.c.b16 %v7022, %v7021
        %7024 = vrot.lane.b32.xlu0 %v7023, 112
        %v7025 = vpop.permute.xlu0 %7024
        %v7026 = vrot.slane %v7025, 4
        %v7027 = vsel %vm1543, %v7025, %v7026
        %7029 = vst.msk [vmem:[#allocation2 + $0x38] sm:$0xff] %vm2437, %v7027
        %v7030 = vld [vmem:[%s3] sm:$0xa]
        %v7033 = vunpack.c.l.s4 1983009808
        %v7034 = vunpack.c.0.s8 %v7033
        %v7035 = vlaneseq
        %v7036 = vshrl.u32 %v7035, 7
        %v7037 = vsub.s32 %v7034, %v7036
        %v7038 = vrot.slane %v7030, %v7037
        %v7039 = vcombine.high %v7038, %v7038
        %v7041 = vpack.i.b16 %v7038, %v7038
        %v7043 = vlaneseq
        %v7044 = vshrl.u32 %v7043, 7
        %v7045 = vsub.s32 1, %v7044
        %v7046 = vrot.slane %v7041, %v7045
        %v7048 = vpack.i.b16 %v7039, %v7039
        %v7050 = vlaneseq
        %v7051 = vshrl.u32 %v7050, 7
        %v7052 = vsub.s32 1, %v7051
        %v7053 = vrot.slane %v7048, %v7052
        %7056 = vrot.lane.b32.xlu0 %v7046, 17
        %v7057 = vpop.permute.xlu0 %7056
        %7058 = vrot.lane.b32.xlu0 %v7053, 17
        %v7059 = vpop.permute.xlu0 %7058
        %v7060 = vsel %vm1497, %v7057, %v7059
        %v7063 = vmul.bf16 %v6649, %v7057
        %v7064 = vmul.bf16 %v6650, %v7060
        %v7067 = vunpack.c.l.b16 %v7063
        %v7068 = vunpack.c.l.b16 %v7064
        %v7069 = vpack.c.b16 %v7068, %v7067
        %7070 = vrot.lane.b32.xlu0 %v7069, 111
        %v7071 = vpop.permute.xlu0 %7070
        %v7072 = vrot.slane %v7071, 4
        %v7073 = vsel %vm1482, %v7071, %v7072
        %7075 = vst.msk [vmem:[#allocation2 + $0x40] sm:$0xff] %vm2485, %v7073
        %v7076 = vld [vmem:[%s3] sm:$0x5]
        %v7079 = vunpack.c.l.s4 1983009808
        %v7080 = vunpack.c.0.s8 %v7079
        %v7081 = vlaneseq
        %v7082 = vshrl.u32 %v7081, 7
        %v7083 = vsub.s32 %v7080, %v7082
        %v7084 = vrot.slane %v7076, %v7083
        %v7085 = vcombine.high %v7084, %v7084
        %v7087 = vpack.i.b16 %v7084, %v7084
        %v7089 = vlaneseq
        %v7090 = vshrl.u32 %v7089, 7
        %v7091 = vsub.s32 0, %v7090
        %v7092 = vrot.slane %v7087, %v7091
        %v7094 = vpack.i.b16 %v7085, %v7085
        %v7096 = vlaneseq
        %v7097 = vshrl.u32 %v7096, 7
        %v7098 = vsub.s32 0, %v7097
        %v7099 = vrot.slane %v7094, %v7098
        %7102 = vrot.lane.b32.xlu0 %v7092, 111
        %v7103 = vpop.permute.xlu0 %7102
        %7104 = vrot.lane.b32.xlu0 %v7099, 111
        %v7105 = vpop.permute.xlu0 %7104
        %v7106 = vsel %vm1482, %v7103, %v7105
        %v7109 = vmul.bf16 %v2601, %v7106
        %v7110 = vmul.bf16 %v2602, %v7105
        %v7113 = vunpack.c.l.b16 %v7109
        %v7114 = vunpack.c.l.b16 %v7110
        %v7115 = vpack.c.b16 %v7114, %v7113
        %7116 = vrot.lane.b32.xlu0 %v7115, 17
        %v7117 = vpop.permute.xlu0 %7116
        %v7118 = vrot.slane %v7117, 4
        %v7119 = vsel %vm1497, %v7118, %v7117
        %7121 = vst.msk [vmem:[#allocation2 + $0x48] sm:$0xff] %vm2109, %v7119
        %v7122 = vld [vmem:[%s3] sm:$0x5]
        %v7125 = vunpack.c.l.s4 1983009808
        %v7126 = vunpack.c.0.s8 %v7125
        %v7127 = vlaneseq
        %v7128 = vshrl.u32 %v7127, 7
        %v7129 = vsub.s32 %v7126, %v7128
        %v7130 = vrot.slane %v7122, %v7129
        %v7131 = vcombine.high %v7130, %v7130
        %v7133 = vshrl.u32 %v7130, 16
        %v7134 = vpack.i.b16 %v7133, %v7133
        %v7136 = vlaneseq
        %v7137 = vshrl.u32 %v7136, 7
        %v7138 = vsub.s32 0, %v7137
        %v7139 = vrot.slane %v7134, %v7138
        %v7141 = vshrl.u32 %v7131, 16
        %v7142 = vpack.i.b16 %v7141, %v7141
        %v7144 = vlaneseq
        %v7145 = vshrl.u32 %v7144, 7
        %v7146 = vsub.s32 0, %v7145
        %v7147 = vrot.slane %v7142, %v7146
        %7150 = vrot.lane.b32.xlu0 %v7139, 112
        %v7151 = vpop.permute.xlu0 %7150
        %7152 = vrot.lane.b32.xlu0 %v7147, 112
        %v7153 = vpop.permute.xlu0 %7152
        %v7154 = vsel %vm1543, %v7151, %v7153
        %v7157 = vmul.bf16 %v2601, %v7154
        %v7158 = vmul.bf16 %v2602, %v7153
        %v7161 = vunpack.c.l.b16 %v7157
        %v7162 = vunpack.c.l.b16 %v7158
        %v7163 = vpack.c.b16 %v7162, %v7161
        %7164 = vrot.lane.b32.xlu0 %v7163, 16
        %v7165 = vpop.permute.xlu0 %7164
        %v7166 = vrot.slane %v7165, 4
        %v7167 = vsel %vm1559, %v7166, %v7165
        %7169 = vst.msk [vmem:[#allocation2 + $0x50] sm:$0xff] %vm2159, %v7167
        %v7170 = vld [vmem:[%s3] sm:$0xa]
        %v7173 = vunpack.c.l.s4 1983009808
        %v7174 = vunpack.c.0.s8 %v7173
        %v7175 = vlaneseq
        %v7176 = vshrl.u32 %v7175, 7
        %v7177 = vsub.s32 %v7174, %v7176
        %v7178 = vrot.slane %v7170, %v7177
        %v7179 = vcombine.high %v7178, %v7178
        %v7181 = vpack.i.b16 %v7178, %v7178
        %v7183 = vlaneseq
        %v7184 = vshrl.u32 %v7183, 7
        %v7185 = vsub.s32 1, %v7184
        %v7186 = vrot.slane %v7181, %v7185
        %v7188 = vpack.i.b16 %v7179, %v7179
        %v7190 = vlaneseq
        %v7191 = vshrl.u32 %v7190, 7
        %v7192 = vsub.s32 1, %v7191
        %v7193 = vrot.slane %v7188, %v7192
        %7196 = vrot.lane.b32.xlu0 %v7186, 113
        %v7197 = vpop.permute.xlu0 %7196
        %7198 = vrot.lane.b32.xlu0 %v7193, 113
        %v7199 = vpop.permute.xlu0 %7198
        %v7200 = vsel %vm1603, %v7197, %v7199
        %v7203 = vmul.bf16 %v2601, %v7200
        %v7204 = vmul.bf16 %v2602, %v7199
        %v7207 = vunpack.c.l.b16 %v7203
        %v7208 = vunpack.c.l.b16 %v7204
        %v7209 = vpack.c.b16 %v7208, %v7207
        %7210 = vrot.lane.b32.xlu0 %v7209, 15
        %v7211 = vpop.permute.xlu0 %7210
        %v7212 = vrot.slane %v7211, 4
        %v7213 = vsel %vm1618, %v7212, %v7211
        %7215 = vst.msk [vmem:[#allocation2 + $0x58] sm:$0xff] %vm2207, %v7213
        %v7216 = vld [vmem:[%s3] sm:$0x5]
        %v7219 = vunpack.c.l.s4 1983009808
        %v7220 = vunpack.c.0.s8 %v7219
        %v7221 = vlaneseq
        %v7222 = vshrl.u32 %v7221, 7
        %v7223 = vsub.s32 %v7220, %v7222
        %v7224 = vrot.slane %v7216, %v7223
        %v7225 = vcombine.high %v7224, %v7224
        %v7227 = vpack.i.b16 %v7224, %v7224
        %v7229 = vlaneseq
        %v7230 = vshrl.u32 %v7229, 7
        %v7231 = vsub.s32 0, %v7230
        %v7232 = vrot.slane %v7227, %v7231
        %v7234 = vpack.i.b16 %v7225, %v7225
        %v7236 = vlaneseq
        %v7237 = vshrl.u32 %v7236, 7
        %v7238 = vsub.s32 0, %v7237
        %v7239 = vrot.slane %v7234, %v7238
        %7242 = vrot.lane.b32.xlu0 %v7232, 127
        %v7243 = vpop.permute.xlu0 %7242
        %7244 = vrot.lane.b32.xlu0 %v7239, 127
        %v7245 = vpop.permute.xlu0 %7244
        %v7246 = vsel %vm1661, %v7243, %v7245
        %v7249 = vmul.bf16 %v2601, %v7246
        %v7250 = vmul.bf16 %v2602, %v7245
        %v7253 = vunpack.c.l.b16 %v7249
        %v7254 = vunpack.c.l.b16 %v7250
        %v7255 = vpack.c.b16 %v7254, %v7253
        %7256 = vrot.lane.b32.xlu0 %v7255, 1
        %v7257 = vpop.permute.xlu0 %7256
        %v7258 = vrot.slane %v7257, 4
        %v7259 = vsel %vm1677, %v7258, %v7257
        %7261 = vst.msk [vmem:[#allocation2 + $0x60] sm:$0xff] %vm2255, %v7259
        %v7262 = vld [vmem:[%s3] sm:$0x5]
        %v7265 = vunpack.c.l.s4 1983009808
        %v7266 = vunpack.c.0.s8 %v7265
        %v7267 = vlaneseq
        %v7268 = vshrl.u32 %v7267, 7
        %v7269 = vsub.s32 %v7266, %v7268
        %v7270 = vrot.slane %v7262, %v7269
        %v7271 = vcombine.high %v7270, %v7270
        %v7273 = vshrl.u32 %v7270, 16
        %v7274 = vpack.i.b16 %v7273, %v7273
        %v7276 = vlaneseq
        %v7277 = vshrl.u32 %v7276, 7
        %v7278 = vsub.s32 0, %v7277
        %v7279 = vrot.slane %v7274, %v7278
        %v7281 = vshrl.u32 %v7271, 16
        %v7282 = vpack.i.b16 %v7281, %v7281
        %v7284 = vlaneseq
        %v7285 = vshrl.u32 %v7284, 7
        %v7286 = vsub.s32 0, %v7285
        %v7287 = vrot.slane %v7282, %v7286
        %v7288 = vmul.bf16 %v2601, %v7279
        %v7289 = vmul.bf16 %v2602, %v7287
        %v7292 = vunpack.c.l.b16 %v7288
        %v7293 = vunpack.c.l.b16 %v7289
        %v7294 = vpack.c.b16 %v7293, %v7292
        %7296 = vst [vmem:[#allocation2 + $0x68] sm:$0xff] %v7294
        %v7297 = vld [vmem:[%s3] sm:$0xa]
        %v7300 = vunpack.c.l.s4 1983009808
        %v7301 = vunpack.c.0.s8 %v7300
        %v7302 = vlaneseq
        %v7303 = vshrl.u32 %v7302, 7
        %v7304 = vsub.s32 %v7301, %v7303
        %v7305 = vrot.slane %v7297, %v7304
        %v7306 = vcombine.high %v7305, %v7305
        %v7308 = vpack.i.b16 %v7305, %v7305
        %v7310 = vlaneseq
        %v7311 = vshrl.u32 %v7310, 7
        %v7312 = vsub.s32 1, %v7311
        %v7313 = vrot.slane %v7308, %v7312
        %v7315 = vpack.i.b16 %v7306, %v7306
        %v7317 = vlaneseq
        %v7318 = vshrl.u32 %v7317, 7
        %v7319 = vsub.s32 1, %v7318
        %v7320 = vrot.slane %v7315, %v7319
        %7323 = vrot.lane.b32.xlu0 %v7313, 1
        %v7324 = vpop.permute.xlu0 %7323
        %7325 = vrot.lane.b32.xlu0 %v7320, 1
        %v7326 = vpop.permute.xlu0 %7325
        %v7327 = vsel %vm1677, %v7324, %v7326
        %v7330 = vmul.bf16 %v2601, %v7324
        %v7331 = vmul.bf16 %v2602, %v7327
        %v7334 = vunpack.c.l.b16 %v7330
        %v7335 = vunpack.c.l.b16 %v7331
        %v7336 = vpack.c.b16 %v7335, %v7334
        %7337 = vrot.lane.b32.xlu0 %v7336, 127
        %v7338 = vpop.permute.xlu0 %7337
        %v7339 = vrot.slane %v7338, 4
        %v7340 = vsel %vm1661, %v7338, %v7339
        %7342 = vst.msk [vmem:[#allocation2 + $0x70] sm:$0xff] %vm2339, %v7340
        %v7343 = vld [vmem:[%s3] sm:$0x5]
        %v7346 = vunpack.c.l.s4 1983009808
        %v7347 = vunpack.c.0.s8 %v7346
        %v7348 = vlaneseq
        %v7349 = vshrl.u32 %v7348, 7
        %v7350 = vsub.s32 %v7347, %v7349
        %v7351 = vrot.slane %v7343, %v7350
        %v7352 = vcombine.high %v7351, %v7351
        %v7354 = vpack.i.b16 %v7351, %v7351
        %v7356 = vlaneseq
        %v7357 = vshrl.u32 %v7356, 7
        %v7358 = vsub.s32 0, %v7357
        %v7359 = vrot.slane %v7354, %v7358
        %v7361 = vpack.i.b16 %v7352, %v7352
        %v7363 = vlaneseq
        %v7364 = vshrl.u32 %v7363, 7
        %v7365 = vsub.s32 0, %v7364
        %v7366 = vrot.slane %v7361, %v7365
        %7369 = vrot.lane.b32.xlu0 %v7359, 15
        %v7370 = vpop.permute.xlu0 %7369
        %7371 = vrot.lane.b32.xlu0 %v7366, 15
        %v7372 = vpop.permute.xlu0 %7371
        %v7373 = vsel %vm1618, %v7370, %v7372
        %v7376 = vmul.bf16 %v2601, %v7370
        %v7377 = vmul.bf16 %v2602, %v7373
        %v7380 = vunpack.c.l.b16 %v7376
        %v7381 = vunpack.c.l.b16 %v7377
        %v7382 = vpack.c.b16 %v7381, %v7380
        %7383 = vrot.lane.b32.xlu0 %v7382, 113
        %v7384 = vpop.permute.xlu0 %7383
        %v7385 = vrot.slane %v7384, 4
        %v7386 = vsel %vm1603, %v7384, %v7385
        %7388 = vst.msk [vmem:[#allocation2 + $0x78] sm:$0xff] %vm2387, %v7386
        %v7389 = vld [vmem:[%s3] sm:$0x5]
        %v7392 = vunpack.c.l.s4 1983009808
        %v7393 = vunpack.c.0.s8 %v7392
        %v7394 = vlaneseq
        %v7395 = vshrl.u32 %v7394, 7
        %v7396 = vsub.s32 %v7393, %v7395
        %v7397 = vrot.slane %v7389, %v7396
        %v7398 = vcombine.high %v7397, %v7397
        %v7400 = vshrl.u32 %v7397, 16
        %v7401 = vpack.i.b16 %v7400, %v7400
        %v7403 = vlaneseq
        %v7404 = vshrl.u32 %v7403, 7
        %v7405 = vsub.s32 0, %v7404
        %v7406 = vrot.slane %v7401, %v7405
        %v7408 = vshrl.u32 %v7398, 16
        %v7409 = vpack.i.b16 %v7408, %v7408
        %v7411 = vlaneseq
        %v7412 = vshrl.u32 %v7411, 7
        %v7413 = vsub.s32 0, %v7412
        %v7414 = vrot.slane %v7409, %v7413
        %7417 = vrot.lane.b32.xlu0 %v7406, 16
        %v7418 = vpop.permute.xlu0 %7417
        %7419 = vrot.lane.b32.xlu0 %v7414, 16
        %v7420 = vpop.permute.xlu0 %7419
        %v7421 = vsel %vm1559, %v7418, %v7420
        %v7424 = vmul.bf16 %v2601, %v7418
        %v7425 = vmul.bf16 %v2602, %v7421
        %v7428 = vunpack.c.l.b16 %v7424
        %v7429 = vunpack.c.l.b16 %v7425
        %v7430 = vpack.c.b16 %v7429, %v7428
        %7431 = vrot.lane.b32.xlu0 %v7430, 112
        %v7432 = vpop.permute.xlu0 %7431
        %v7433 = vrot.slane %v7432, 4
        %v7434 = vsel %vm1543, %v7432, %v7433
        %7436 = vst.msk [vmem:[#allocation2 + $0x80] sm:$0xff] %vm2437, %v7434
        %v7437 = vld [vmem:[%s3] sm:$0xa]
        %v7440 = vunpack.c.l.s4 1983009808
        %v7441 = vunpack.c.0.s8 %v7440
        %v7442 = vlaneseq
        %v7443 = vshrl.u32 %v7442, 7
        %v7444 = vsub.s32 %v7441, %v7443
        %v7445 = vrot.slane %v7437, %v7444
        %v7446 = vcombine.high %v7445, %v7445
        %v7448 = vpack.i.b16 %v7445, %v7445
        %v7450 = vlaneseq
        %v7451 = vshrl.u32 %v7450, 7
        %v7452 = vsub.s32 1, %v7451
        %v7453 = vrot.slane %v7448, %v7452
        %v7455 = vpack.i.b16 %v7446, %v7446
        %v7457 = vlaneseq
        %v7458 = vshrl.u32 %v7457, 7
        %v7459 = vsub.s32 1, %v7458
        %v7460 = vrot.slane %v7455, %v7459
        %7463 = vrot.lane.b32.xlu0 %v7453, 17
        %v7464 = vpop.permute.xlu0 %7463
        %7465 = vrot.lane.b32.xlu0 %v7460, 17
        %v7466 = vpop.permute.xlu0 %7465
        %v7467 = vsel %vm1497, %v7464, %v7466
        %v7470 = vmul.bf16 %v2601, %v7464
        %v7471 = vmul.bf16 %v2602, %v7467
        %v7474 = vunpack.c.l.b16 %v7470
        %v7475 = vunpack.c.l.b16 %v7471
        %v7476 = vpack.c.b16 %v7475, %v7474
        %7477 = vrot.lane.b32.xlu0 %v7476, 111
        %v7478 = vpop.permute.xlu0 %7477
        %v7479 = vrot.slane %v7478, 4
        %v7480 = vsel %vm1482, %v7478, %v7479
        %7482 = vst.msk [vmem:[#allocation2 + $0x88] sm:$0xff] %vm2485, %v7480
        %v7483 = vld [vmem:[#allocation38] sm:$0xff]
        %v7484 = vld [vmem:[#allocation2] sm:$0xff]
        %v7485 = vld [vmem:[#allocation2 + $0x8] sm:$0xff]
        %v7486 = vld [vmem:[#allocation2 + $0x10] sm:$0xff]
        %v7487 = vld [vmem:[#allocation2 + $0x18] sm:$0xff]
        %v7488 = vld [vmem:[#allocation2 + $0x20] sm:$0xff]
        %v7489 = vld [vmem:[#allocation2 + $0x28] sm:$0xff]
        %v7490 = vld [vmem:[#allocation2 + $0x30] sm:$0xff]
        %v7491 = vld [vmem:[#allocation2 + $0x38] sm:$0xff]
        %v7492 = vld [vmem:[#allocation2 + $0x40] sm:$0xff]
        %v7493 = vld [vmem:[#allocation2 + $0x48] sm:$0xff]
        %v7494 = vld [vmem:[#allocation2 + $0x50] sm:$0xff]
        %v7495 = vld [vmem:[#allocation2 + $0x58] sm:$0xff]
        %v7496 = vld [vmem:[#allocation2 + $0x60] sm:$0xff]
        %v7497 = vld [vmem:[#allocation2 + $0x68] sm:$0xff]
        %v7498 = vld [vmem:[#allocation2 + $0x70] sm:$0xff]
        %v7499 = vld [vmem:[#allocation2 + $0x78] sm:$0xff]
        %v7500 = vld [vmem:[#allocation2 + $0x80] sm:$0xff]
        %v7501 = vld [vmem:[#allocation2 + $0x88] sm:$0xff]
        %v7502 = vld [vmem:[#allocation40] sm:$0xff]
        %7504 = vset.pattern.permute.xlu0 0
        %7505 = vperm.xlu0 %7504, %v7502
        %v7506 = vpop.permute.xlu0 %7505
        %v7509 = vunpack.c.l.b16 %v7483
        %v7510 = vunpack.c.h.b16 %v7483
        %v7511 = vpack.c.b16 %v7509, %v7509
        %v7512 = vpack.c.b16 %v7510, %v7510
        %v7532 = vunpack.c.l.b16 %v7484
        %v7533 = vunpack.c.h.b16 %v7484
        %v7534 = vunpack.c.l.b16 %v7485
        %v7535 = vunpack.c.h.b16 %v7485
        %v7536 = vunpack.c.l.b16 %v7486
        %v7537 = vunpack.c.h.b16 %v7486
        %v7538 = vunpack.c.l.b16 %v7487
        %v7539 = vunpack.c.h.b16 %v7487
        %v7540 = vunpack.c.l.b16 %v7488
        %v7541 = vunpack.c.h.b16 %v7488
        %v7542 = vunpack.c.l.b16 %v7489
        %v7543 = vunpack.c.h.b16 %v7489
        %v7544 = vunpack.c.l.b16 %v7490
        %v7545 = vunpack.c.h.b16 %v7490
        %v7546 = vunpack.c.l.b16 %v7491
        %v7547 = vunpack.c.h.b16 %v7491
        %v7548 = vunpack.c.l.b16 %v7492
        %v7549 = vunpack.c.h.b16 %v7492
        %v7550 = vunpack.c.l.b16 %v7493
        %v7551 = vunpack.c.h.b16 %v7493
        %v7552 = vunpack.c.l.b16 %v7494
        %v7553 = vunpack.c.h.b16 %v7494
        %v7554 = vunpack.c.l.b16 %v7495
        %v7555 = vunpack.c.h.b16 %v7495
        %v7556 = vunpack.c.l.b16 %v7496
        %v7557 = vunpack.c.h.b16 %v7496
        %v7558 = vunpack.c.l.b16 %v7497
        %v7559 = vunpack.c.h.b16 %v7497
        %v7560 = vunpack.c.l.b16 %v7498
        %v7561 = vunpack.c.h.b16 %v7498
        %v7562 = vunpack.c.l.b16 %v7499
        %v7563 = vunpack.c.h.b16 %v7499
        %v7564 = vunpack.c.l.b16 %v7500
        %v7565 = vunpack.c.h.b16 %v7500
        %v7566 = vunpack.c.l.b16 %v7501
        %v7567 = vunpack.c.h.b16 %v7501
        %v7568 = vpack.c.b16 %v7534, %v7532
        %v7569 = vpack.c.b16 %v7535, %v7533
        %v7570 = vpack.c.b16 %v7538, %v7536
        %v7571 = vpack.c.b16 %v7539, %v7537
        %v7572 = vpack.c.b16 %v7542, %v7540
        %v7573 = vpack.c.b16 %v7543, %v7541
        %v7574 = vpack.c.b16 %v7546, %v7544
        %v7575 = vpack.c.b16 %v7547, %v7545
        %v7576 = vpack.c.b16 %v7550, %v7548
        %v7577 = vpack.c.b16 %v7551, %v7549
        %v7578 = vpack.c.b16 %v7554, %v7552
        %v7579 = vpack.c.b16 %v7555, %v7553
        %v7580 = vpack.c.b16 %v7558, %v7556
        %v7581 = vpack.c.b16 %v7559, %v7557
        %v7582 = vpack.c.b16 %v7562, %v7560
        %v7583 = vpack.c.b16 %v7563, %v7561
        %v7584 = vpack.c.b16 %v7566, %v7564
        %v7585 = vpack.c.b16 %v7567, %v7565
        %v7605 = vsel %vm3434, %v7512, 0
        %7607 = vmatprep.subr.bf16.mxu0 %v7583
        %7608 = vmatpush1.bf16.msra.mxu0 %v7582
        %7609 = vmatprep.subr.bf16.mxu0 %v7581
        %7610 = vmatpush1.bf16.msra.mxu0 %v7580
        %7611 = vmatprep.subr.bf16.mxu0 %v7579
        %7612 = vmatpush1.bf16.msra.mxu0 %v7578
        %7613 = vmatprep.subr.bf16.mxu0 %v7577
        %7614 = vmatpush1.bf16.msra.mxu0 %v7576
        %7615 = vmatprep.subr.bf16.mxu0 %v7575
        %7616 = vmatpush1.bf16.msra.mxu0 %v7574
        %7617 = vmatprep.subr.bf16.mxu0 %v7573
        %7618 = vmatpush1.bf16.msra.mxu0 %v7572
        %7619 = vmatprep.subr.bf16.mxu0 %v7571
        %7620 = vmatpush1.bf16.msra.mxu0 %v7570
        %7621 = vmatprep.subr.bf16.mxu0 %v7569
        %7622 = vmatpush1.bf16.msra.mxu0 %v7568
        %7623 = vmatprep.subr.bf16.mxu0 0
        %7624 = vmatpush2.bf16.msra.mxu0 0
        %7625 = vmatprep.subr.bf16.mxu0 0
        %7626 = vmatpush2.bf16.msra.mxu0 0
        %7627 = vmatprep.subr.bf16.mxu0 0
        %7628 = vmatpush2.bf16.msra.mxu0 0
        %7629 = vmatprep.subr.bf16.mxu0 0
        %7630 = vmatpush2.bf16.msra.mxu0 0
        %7631 = vmatprep.subr.bf16.mxu0 0
        %7632 = vmatpush2.bf16.msra.mxu0 0
        %7633 = vmatprep.subr.bf16.mxu0 0
        %7634 = vmatpush2.bf16.msra.mxu0 0
        %7635 = vmatprep.subr.bf16.mxu0 0
        %7636 = vmatpush2.bf16.msra.mxu0 0
        %7637 = vmatprep.subr.bf16.mxu0 %v7585
        %7638 = vmatpush2.bf16.msra.mxu0 %v7584
        %7639 = vmatprep.mubr.bf16.mxu0 %v7605
        %7640 = vmatmul.mubr.bf16.gmra.mxu0 %v7511
        %v7641 = vpop.f32.mrf.mxu0
        %v7642 = vadd.f32 %v7506, %v7641
        %v7643 = vpop.f32.mrf.mxu0
        %v7644 = vadd.f32 %v7506, %v7643
        %v7645 = vpop.f32.mrf.mxu0
        %v7646 = vpop.f32.mrf.mxu0
        %7647 = vdwg.mxu0
        %v7648 = vmax.f32 %v7642, 0.0
        %v7649 = vmax.f32 %v7644, 0.0
        %v7650 = vpack.c.bf16 %v7648, %v7648
        %v7651 = vpack.c.bf16 %v7649, %v7649
        %7652 = vst [vmem:[#allocation2] sm:$0xff] 0
        %7653 = vst [vmem:[#allocation2 + $0x8] sm:$0xff] 0
        %7654 = vst [vmem:[#allocation2 + $0x10] sm:$0xff] 0
        %7655 = vst [vmem:[#allocation2 + $0x18] sm:$0xff] 0
        %7656 = vst [vmem:[#allocation2 + $0x20] sm:$0xff] 0
        %7657 = vst [vmem:[#allocation2 + $0x28] sm:$0xff] 0
        %7658 = vst [vmem:[#allocation2 + $0x30] sm:$0xff] 0
        %7659 = vst [vmem:[#allocation2 + $0x38] sm:$0xff] 0
        %7660 = vst [vmem:[#allocation2 + $0x40] sm:$0xff] 0
        %v7661 = vld [vmem:[%s3] sm:$0x5]
        %v7664 = vunpack.c.l.s4 1983009808
        %v7665 = vunpack.c.0.s8 %v7664
        %v7666 = vlaneseq
        %v7667 = vshrl.u32 %v7666, 7
        %v7668 = vsub.s32 %v7665, %v7667
        %v7669 = vrot.slane %v7661, %v7668
        %v7670 = vcombine.high %v7669, %v7669
        %v7672 = vpack.i.b16 %v7669, %v7669
        %v7674 = vlaneseq
        %v7675 = vshrl.u32 %v7674, 7
        %v7676 = vsub.s32 0, %v7675
        %v7677 = vrot.slane %v7672, %v7676
        %v7679 = vpack.i.b16 %v7670, %v7670
        %v7681 = vlaneseq
        %v7682 = vshrl.u32 %v7681, 7
        %v7683 = vsub.s32 0, %v7682
        %v7684 = vrot.slane %v7679, %v7683
        %7687 = vrot.lane.b32.xlu0 %v7677, 111
        %v7688 = vpop.permute.xlu0 %7687
        %7689 = vrot.lane.b32.xlu0 %v7684, 111
        %v7690 = vpop.permute.xlu0 %7689
        %v7691 = vsel %vm1482, %v7688, %v7690
        %v7694 = vmul.bf16 %v7650, %v7691
        %v7695 = vmul.bf16 %v7651, %v7690
        %v7698 = vunpack.c.l.b16 %v7694
        %v7699 = vunpack.c.l.b16 %v7695
        %v7700 = vpack.c.b16 %v7699, %v7698
        %7701 = vrot.lane.b32.xlu0 %v7700, 17
        %v7702 = vpop.permute.xlu0 %7701
        %v7703 = vrot.slane %v7702, 4
        %v7704 = vsel %vm1497, %v7703, %v7702
        %7706 = vst.msk [vmem:[#allocation2] sm:$0xff] %vm2109, %v7704
        %v7707 = vld [vmem:[%s3] sm:$0x5]
        %v7710 = vunpack.c.l.s4 1983009808
        %v7711 = vunpack.c.0.s8 %v7710
        %v7712 = vlaneseq
        %v7713 = vshrl.u32 %v7712, 7
        %v7714 = vsub.s32 %v7711, %v7713
        %v7715 = vrot.slane %v7707, %v7714
        %v7716 = vcombine.high %v7715, %v7715
        %v7718 = vshrl.u32 %v7715, 16
        %v7719 = vpack.i.b16 %v7718, %v7718
        %v7721 = vlaneseq
        %v7722 = vshrl.u32 %v7721, 7
        %v7723 = vsub.s32 0, %v7722
        %v7724 = vrot.slane %v7719, %v7723
        %v7726 = vshrl.u32 %v7716, 16
        %v7727 = vpack.i.b16 %v7726, %v7726
        %v7729 = vlaneseq
        %v7730 = vshrl.u32 %v7729, 7
        %v7731 = vsub.s32 0, %v7730
        %v7732 = vrot.slane %v7727, %v7731
        %7735 = vrot.lane.b32.xlu0 %v7724, 112
        %v7736 = vpop.permute.xlu0 %7735
        %7737 = vrot.lane.b32.xlu0 %v7732, 112
        %v7738 = vpop.permute.xlu0 %7737
        %v7739 = vsel %vm1543, %v7736, %v7738
        %v7742 = vmul.bf16 %v7650, %v7739
        %v7743 = vmul.bf16 %v7651, %v7738
        %v7746 = vunpack.c.l.b16 %v7742
        %v7747 = vunpack.c.l.b16 %v7743
        %v7748 = vpack.c.b16 %v7747, %v7746
        %7749 = vrot.lane.b32.xlu0 %v7748, 16
        %v7750 = vpop.permute.xlu0 %7749
        %v7751 = vrot.slane %v7750, 4
        %v7752 = vsel %vm1559, %v7751, %v7750
        %7754 = vst.msk [vmem:[#allocation2 + $0x8] sm:$0xff] %vm2159, %v7752
        %v7755 = vld [vmem:[%s3] sm:$0xa]
        %v7758 = vunpack.c.l.s4 1983009808
        %v7759 = vunpack.c.0.s8 %v7758
        %v7760 = vlaneseq
        %v7761 = vshrl.u32 %v7760, 7
        %v7762 = vsub.s32 %v7759, %v7761
        %v7763 = vrot.slane %v7755, %v7762
        %v7764 = vcombine.high %v7763, %v7763
        %v7766 = vpack.i.b16 %v7763, %v7763
        %v7768 = vlaneseq
        %v7769 = vshrl.u32 %v7768, 7
        %v7770 = vsub.s32 1, %v7769
        %v7771 = vrot.slane %v7766, %v7770
        %v7773 = vpack.i.b16 %v7764, %v7764
        %v7775 = vlaneseq
        %v7776 = vshrl.u32 %v7775, 7
        %v7777 = vsub.s32 1, %v7776
        %v7778 = vrot.slane %v7773, %v7777
        %7781 = vrot.lane.b32.xlu0 %v7771, 113
        %v7782 = vpop.permute.xlu0 %7781
        %7783 = vrot.lane.b32.xlu0 %v7778, 113
        %v7784 = vpop.permute.xlu0 %7783
        %v7785 = vsel %vm1603, %v7782, %v7784
        %v7788 = vmul.bf16 %v7650, %v7785
        %v7789 = vmul.bf16 %v7651, %v7784
        %v7792 = vunpack.c.l.b16 %v7788
        %v7793 = vunpack.c.l.b16 %v7789
        %v7794 = vpack.c.b16 %v7793, %v7792
        %7795 = vrot.lane.b32.xlu0 %v7794, 15
        %v7796 = vpop.permute.xlu0 %7795
        %v7797 = vrot.slane %v7796, 4
        %v7798 = vsel %vm1618, %v7797, %v7796
        %7800 = vst.msk [vmem:[#allocation2 + $0x10] sm:$0xff] %vm2207, %v7798
        %v7801 = vld [vmem:[%s3] sm:$0x5]
        %v7804 = vunpack.c.l.s4 1983009808
        %v7805 = vunpack.c.0.s8 %v7804
        %v7806 = vlaneseq
        %v7807 = vshrl.u32 %v7806, 7
        %v7808 = vsub.s32 %v7805, %v7807
        %v7809 = vrot.slane %v7801, %v7808
        %v7810 = vcombine.high %v7809, %v7809
        %v7812 = vpack.i.b16 %v7809, %v7809
        %v7814 = vlaneseq
        %v7815 = vshrl.u32 %v7814, 7
        %v7816 = vsub.s32 0, %v7815
        %v7817 = vrot.slane %v7812, %v7816
        %v7819 = vpack.i.b16 %v7810, %v7810
        %v7821 = vlaneseq
        %v7822 = vshrl.u32 %v7821, 7
        %v7823 = vsub.s32 0, %v7822
        %v7824 = vrot.slane %v7819, %v7823
        %7827 = vrot.lane.b32.xlu0 %v7817, 127
        %v7828 = vpop.permute.xlu0 %7827
        %7829 = vrot.lane.b32.xlu0 %v7824, 127
        %v7830 = vpop.permute.xlu0 %7829
        %v7831 = vsel %vm1661, %v7828, %v7830
        %v7834 = vmul.bf16 %v7650, %v7831
        %v7835 = vmul.bf16 %v7651, %v7830
        %v7838 = vunpack.c.l.b16 %v7834
        %v7839 = vunpack.c.l.b16 %v7835
        %v7840 = vpack.c.b16 %v7839, %v7838
        %7841 = vrot.lane.b32.xlu0 %v7840, 1
        %v7842 = vpop.permute.xlu0 %7841
        %v7843 = vrot.slane %v7842, 4
        %v7844 = vsel %vm1677, %v7843, %v7842
        %7846 = vst.msk [vmem:[#allocation2 + $0x18] sm:$0xff] %vm2255, %v7844
        %v7847 = vld [vmem:[%s3] sm:$0x5]
        %v7850 = vunpack.c.l.s4 1983009808
        %v7851 = vunpack.c.0.s8 %v7850
        %v7852 = vlaneseq
        %v7853 = vshrl.u32 %v7852, 7
        %v7854 = vsub.s32 %v7851, %v7853
        %v7855 = vrot.slane %v7847, %v7854
        %v7856 = vcombine.high %v7855, %v7855
        %v7858 = vshrl.u32 %v7855, 16
        %v7859 = vpack.i.b16 %v7858, %v7858
        %v7861 = vlaneseq
        %v7862 = vshrl.u32 %v7861, 7
        %v7863 = vsub.s32 0, %v7862
        %v7864 = vrot.slane %v7859, %v7863
        %v7866 = vshrl.u32 %v7856, 16
        %v7867 = vpack.i.b16 %v7866, %v7866
        %v7869 = vlaneseq
        %v7870 = vshrl.u32 %v7869, 7
        %v7871 = vsub.s32 0, %v7870
        %v7872 = vrot.slane %v7867, %v7871
        %v7873 = vmul.bf16 %v7650, %v7864
        %v7874 = vmul.bf16 %v7651, %v7872
        %v7877 = vunpack.c.l.b16 %v7873
        %v7878 = vunpack.c.l.b16 %v7874
        %v7879 = vpack.c.b16 %v7878, %v7877
        %7881 = vst [vmem:[#allocation2 + $0x20] sm:$0xff] %v7879
        %v7882 = vld [vmem:[%s3] sm:$0xa]
        %v7885 = vunpack.c.l.s4 1983009808
        %v7886 = vunpack.c.0.s8 %v7885
        %v7887 = vlaneseq
        %v7888 = vshrl.u32 %v7887, 7
        %v7889 = vsub.s32 %v7886, %v7888
        %v7890 = vrot.slane %v7882, %v7889
        %v7891 = vcombine.high %v7890, %v7890
        %v7893 = vpack.i.b16 %v7890, %v7890
        %v7895 = vlaneseq
        %v7896 = vshrl.u32 %v7895, 7
        %v7897 = vsub.s32 1, %v7896
        %v7898 = vrot.slane %v7893, %v7897
        %v7900 = vpack.i.b16 %v7891, %v7891
        %v7902 = vlaneseq
        %v7903 = vshrl.u32 %v7902, 7
        %v7904 = vsub.s32 1, %v7903
        %v7905 = vrot.slane %v7900, %v7904
        %7908 = vrot.lane.b32.xlu0 %v7898, 1
        %v7909 = vpop.permute.xlu0 %7908
        %7910 = vrot.lane.b32.xlu0 %v7905, 1
        %v7911 = vpop.permute.xlu0 %7910
        %v7912 = vsel %vm1677, %v7909, %v7911
        %v7915 = vmul.bf16 %v7650, %v7909
        %v7916 = vmul.bf16 %v7651, %v7912
        %v7919 = vunpack.c.l.b16 %v7915
        %v7920 = vunpack.c.l.b16 %v7916
        %v7921 = vpack.c.b16 %v7920, %v7919
        %7922 = vrot.lane.b32.xlu0 %v7921, 127
        %v7923 = vpop.permute.xlu0 %7922
        %v7924 = vrot.slane %v7923, 4
        %v7925 = vsel %vm1661, %v7923, %v7924
        %7927 = vst.msk [vmem:[#allocation2 + $0x28] sm:$0xff] %vm2339, %v7925
        %v7928 = vld [vmem:[%s3] sm:$0x5]
        %v7931 = vunpack.c.l.s4 1983009808
        %v7932 = vunpack.c.0.s8 %v7931
        %v7933 = vlaneseq
        %v7934 = vshrl.u32 %v7933, 7
        %v7935 = vsub.s32 %v7932, %v7934
        %v7936 = vrot.slane %v7928, %v7935
        %v7937 = vcombine.high %v7936, %v7936
        %v7939 = vpack.i.b16 %v7936, %v7936
        %v7941 = vlaneseq
        %v7942 = vshrl.u32 %v7941, 7
        %v7943 = vsub.s32 0, %v7942
        %v7944 = vrot.slane %v7939, %v7943
        %v7946 = vpack.i.b16 %v7937, %v7937
        %v7948 = vlaneseq
        %v7949 = vshrl.u32 %v7948, 7
        %v7950 = vsub.s32 0, %v7949
        %v7951 = vrot.slane %v7946, %v7950
        %7954 = vrot.lane.b32.xlu0 %v7944, 15
        %v7955 = vpop.permute.xlu0 %7954
        %7956 = vrot.lane.b32.xlu0 %v7951, 15
        %v7957 = vpop.permute.xlu0 %7956
        %v7958 = vsel %vm1618, %v7955, %v7957
        %v7961 = vmul.bf16 %v7650, %v7955
        %v7962 = vmul.bf16 %v7651, %v7958
        %v7965 = vunpack.c.l.b16 %v7961
        %v7966 = vunpack.c.l.b16 %v7962
        %v7967 = vpack.c.b16 %v7966, %v7965
        %7968 = vrot.lane.b32.xlu0 %v7967, 113
        %v7969 = vpop.permute.xlu0 %7968
        %v7970 = vrot.slane %v7969, 4
        %v7971 = vsel %vm1603, %v7969, %v7970
        %7973 = vst.msk [vmem:[#allocation2 + $0x30] sm:$0xff] %vm2387, %v7971
        %v7974 = vld [vmem:[%s3] sm:$0x5]
        %v7977 = vunpack.c.l.s4 1983009808
        %v7978 = vunpack.c.0.s8 %v7977
        %v7979 = vlaneseq
        %v7980 = vshrl.u32 %v7979, 7
        %v7981 = vsub.s32 %v7978, %v7980
        %v7982 = vrot.slane %v7974, %v7981
        %v7983 = vcombine.high %v7982, %v7982
        %v7985 = vshrl.u32 %v7982, 16
        %v7986 = vpack.i.b16 %v7985, %v7985
        %v7988 = vlaneseq
        %v7989 = vshrl.u32 %v7988, 7
        %v7990 = vsub.s32 0, %v7989
        %v7991 = vrot.slane %v7986, %v7990
        %v7993 = vshrl.u32 %v7983, 16
        %v7994 = vpack.i.b16 %v7993, %v7993
        %v7996 = vlaneseq
        %v7997 = vshrl.u32 %v7996, 7
        %v7998 = vsub.s32 0, %v7997
        %v7999 = vrot.slane %v7994, %v7998
        %8002 = vrot.lane.b32.xlu0 %v7991, 16
        %v8003 = vpop.permute.xlu0 %8002
        %8004 = vrot.lane.b32.xlu0 %v7999, 16
        %v8005 = vpop.permute.xlu0 %8004
        %v8006 = vsel %vm1559, %v8003, %v8005
        %v8009 = vmul.bf16 %v7650, %v8003
        %v8010 = vmul.bf16 %v7651, %v8006
        %v8013 = vunpack.c.l.b16 %v8009
        %v8014 = vunpack.c.l.b16 %v8010
        %v8015 = vpack.c.b16 %v8014, %v8013
        %8016 = vrot.lane.b32.xlu0 %v8015, 112
        %v8017 = vpop.permute.xlu0 %8016
        %v8018 = vrot.slane %v8017, 4
        %v8019 = vsel %vm1543, %v8017, %v8018
        %8021 = vst.msk [vmem:[#allocation2 + $0x38] sm:$0xff] %vm2437, %v8019
        %v8022 = vld [vmem:[%s3] sm:$0xa]
        %v8025 = vunpack.c.l.s4 1983009808
        %v8026 = vunpack.c.0.s8 %v8025
        %v8027 = vlaneseq
        %v8028 = vshrl.u32 %v8027, 7
        %v8029 = vsub.s32 %v8026, %v8028
        %v8030 = vrot.slane %v8022, %v8029
        %v8031 = vcombine.high %v8030, %v8030
        %v8033 = vpack.i.b16 %v8030, %v8030
        %v8035 = vlaneseq
        %v8036 = vshrl.u32 %v8035, 7
        %v8037 = vsub.s32 1, %v8036
        %v8038 = vrot.slane %v8033, %v8037
        %v8040 = vpack.i.b16 %v8031, %v8031
        %v8042 = vlaneseq
        %v8043 = vshrl.u32 %v8042, 7
        %v8044 = vsub.s32 1, %v8043
        %v8045 = vrot.slane %v8040, %v8044
        %8048 = vrot.lane.b32.xlu0 %v8038, 17
        %v8049 = vpop.permute.xlu0 %8048
        %8050 = vrot.lane.b32.xlu0 %v8045, 17
        %v8051 = vpop.permute.xlu0 %8050
        %v8052 = vsel %vm1497, %v8049, %v8051
        %v8055 = vmul.bf16 %v7650, %v8049
        %v8056 = vmul.bf16 %v7651, %v8052
        %v8059 = vunpack.c.l.b16 %v8055
        %v8060 = vunpack.c.l.b16 %v8056
        %v8061 = vpack.c.b16 %v8060, %v8059
        %8062 = vrot.lane.b32.xlu0 %v8061, 111
        %v8063 = vpop.permute.xlu0 %8062
        %v8064 = vrot.slane %v8063, 4
        %v8065 = vsel %vm1482, %v8063, %v8064
        %8067 = vst.msk [vmem:[#allocation2 + $0x40] sm:$0xff] %vm2485, %v8065
        %v8068 = vld [vmem:[#allocation41] sm:$0xf]
        %v8069 = vld [vmem:[#allocation2] sm:$0xff]
        %v8070 = vld [vmem:[#allocation2 + $0x8] sm:$0xff]
        %v8071 = vld [vmem:[#allocation2 + $0x10] sm:$0xff]
        %v8072 = vld [vmem:[#allocation2 + $0x18] sm:$0xff]
        %v8073 = vld [vmem:[#allocation2 + $0x20] sm:$0xff]
        %v8074 = vld [vmem:[#allocation2 + $0x28] sm:$0xff]
        %v8075 = vld [vmem:[#allocation2 + $0x30] sm:$0xff]
        %v8076 = vld [vmem:[#allocation2 + $0x38] sm:$0xff]
        %v8077 = vld [vmem:[#allocation2 + $0x40] sm:$0xff]
        %v8078 = vld [vmem:[#allocation43] sm:$0xff]
        %8080 = vset.pattern.permute.xlu0 0
        %8081 = vperm.xlu0 %8080, %v8078
        %v8082 = vpop.permute.xlu0 %8081
        %v8093 = vunpack.c.l.b16 %v8069
        %v8094 = vunpack.c.h.b16 %v8069
        %v8095 = vunpack.c.l.b16 %v8070
        %v8096 = vunpack.c.h.b16 %v8070
        %v8097 = vunpack.c.l.b16 %v8071
        %v8098 = vunpack.c.h.b16 %v8071
        %v8099 = vunpack.c.l.b16 %v8072
        %v8100 = vunpack.c.h.b16 %v8072
        %v8101 = vunpack.c.l.b16 %v8073
        %v8102 = vunpack.c.h.b16 %v8073
        %v8103 = vunpack.c.l.b16 %v8074
        %v8104 = vunpack.c.h.b16 %v8074
        %v8105 = vunpack.c.l.b16 %v8075
        %v8106 = vunpack.c.h.b16 %v8075
        %v8107 = vunpack.c.l.b16 %v8076
        %v8108 = vunpack.c.h.b16 %v8076
        %v8109 = vunpack.c.l.b16 %v8077
        %v8110 = vunpack.c.h.b16 %v8077
        %v8111 = vpack.c.b16 %v8095, %v8093
        %v8112 = vpack.c.b16 %v8096, %v8094
        %v8113 = vpack.c.b16 %v8099, %v8097
        %v8114 = vpack.c.b16 %v8100, %v8098
        %v8115 = vpack.c.b16 %v8103, %v8101
        %v8116 = vpack.c.b16 %v8104, %v8102
        %v8117 = vpack.c.b16 %v8107, %v8105
        %v8118 = vpack.c.b16 %v8108, %v8106
        %v8119 = vpack.c.b16 %v8109, %v8109
        %v8120 = vpack.c.b16 %v8110, %v8110
        %v8130 = vsel %vm2548, %v8068, 0
        %v8133 = vsel %vm2337, %v8119, 0
        %v8136 = vsel %vm2337, %v8120, 0
        %8138 = vmatprep.subr.bf16.mxu0 0
        %8139 = vmatpush1.bf16.msra.mxu0 0
        %8140 = vmatprep.subr.bf16.mxu0 0
        %8141 = vmatpush1.bf16.msra.mxu0 0
        %8142 = vmatprep.subr.bf16.mxu0 0
        %8143 = vmatpush1.bf16.msra.mxu0 0
        %8144 = vmatprep.subr.bf16.mxu0 %v8136
        %8145 = vmatpush1.bf16.msra.mxu0 %v8133
        %8146 = vmatprep.subr.bf16.mxu0 %v8118
        %8147 = vmatpush1.bf16.msra.mxu0 %v8117
        %8148 = vmatprep.subr.bf16.mxu0 %v8116
        %8149 = vmatpush1.bf16.msra.mxu0 %v8115
        %8150 = vmatprep.subr.bf16.mxu0 %v8114
        %8151 = vmatpush1.bf16.msra.mxu0 %v8113
        %8152 = vmatprep.subr.bf16.mxu0 %v8112
        %8153 = vmatpush1.bf16.msra.mxu0 %v8111
        %8154 = vmatprep.subr.bf16.mxu0 0
        %8155 = vmatpush2.bf16.msra.mxu0 0
        %8156 = vmatprep.subr.bf16.mxu0 0
        %8157 = vmatpush2.bf16.msra.mxu0 0
        %8158 = vmatprep.subr.bf16.mxu0 0
        %8159 = vmatpush2.bf16.msra.mxu0 0
        %8160 = vmatprep.subr.bf16.mxu0 0
        %8161 = vmatpush2.bf16.msra.mxu0 0
        %8162 = vmatprep.subr.bf16.mxu0 0
        %8163 = vmatpush2.bf16.msra.mxu0 0
        %8164 = vmatprep.subr.bf16.mxu0 0
        %8165 = vmatpush2.bf16.msra.mxu0 0
        %8166 = vmatprep.subr.bf16.mxu0 0
        %8167 = vmatpush2.bf16.msra.mxu0 0
        %8168 = vmatprep.subr.bf16.mxu0 0
        %8169 = vmatpush2.bf16.msra.mxu0 0
        %8170 = vmatprep.mubr.bf16.mxu0 0
        %8171 = vmatmul.mubr.bf16.gmra.mxu0 %v8130
        %v8172 = vpop.f32.mrf.mxu0
        %v8173 = vadd.f32 %v8082, %v8172
        %v8174 = vpop.f32.mrf.mxu0
        %v8175 = vadd.f32 %v8082, %v8174
        %v8176 = vpop.f32.mrf.mxu0
        %v8177 = vpop.f32.mrf.mxu0
        %8178 = vdwg.mxu0
        %v8179 = vmax.f32 %v8173, 0.0
        %v8180 = vmax.f32 %v8175, 0.0
        %v8181 = vpack.c.bf16 %v8179, %v8179
        %v8182 = vpack.c.bf16 %v8180, %v8180
        %v8183 = vld [vmem:[#allocation44] sm:$0x3]
        %v8184 = vld [vmem:[#allocation46] sm:$0x7]
        %8186 = vset.pattern.permute.xlu0 0
        %8187 = vperm.xlu0 %8186, %v8184
        %v8188 = vpop.permute.xlu0 %8187
        %vm8190 = vcmask 64512
        %v8192 = vsel %vm8190, %v8183, 0
        %v8195 = vsel %vm2337, %v8181, 0
        %v8198 = vsel %vm2337, %v8182, 0
        %8200 = vmatprep.subr.bf16.mxu0 0
        %8201 = vmatpush1.bf16.msra.mxu0 0
        %8202 = vmatprep.subr.bf16.mxu0 0
        %8203 = vmatpush1.bf16.msra.mxu0 0
        %8204 = vmatprep.subr.bf16.mxu0 0
        %8205 = vmatpush1.bf16.msra.mxu0 0
        %8206 = vmatprep.subr.bf16.mxu0 0
        %8207 = vmatpush1.bf16.msra.mxu0 0
        %8208 = vmatprep.subr.bf16.mxu0 0
        %8209 = vmatpush1.bf16.msra.mxu0 0
        %8210 = vmatprep.subr.bf16.mxu0 0
        %8211 = vmatpush1.bf16.msra.mxu0 0
        %8212 = vmatprep.subr.bf16.mxu0 0
        %8213 = vmatpush1.bf16.msra.mxu0 0
        %8214 = vmatprep.subr.bf16.mxu0 %v8198
        %8215 = vmatpush1.bf16.msra.mxu0 %v8195
        %8216 = vmatprep.subr.bf16.mxu0 0
        %8217 = vmatpush2.bf16.msra.mxu0 0
        %8218 = vmatprep.subr.bf16.mxu0 0
        %8219 = vmatpush2.bf16.msra.mxu0 0
        %8220 = vmatprep.subr.bf16.mxu0 0
        %8221 = vmatpush2.bf16.msra.mxu0 0
        %8222 = vmatprep.subr.bf16.mxu0 0
        %8223 = vmatpush2.bf16.msra.mxu0 0
        %8224 = vmatprep.subr.bf16.mxu0 0
        %8225 = vmatpush2.bf16.msra.mxu0 0
        %8226 = vmatprep.subr.bf16.mxu0 0
        %8227 = vmatpush2.bf16.msra.mxu0 0
        %8228 = vmatprep.subr.bf16.mxu0 0
        %8229 = vmatpush2.bf16.msra.mxu0 0
        %8230 = vmatprep.subr.bf16.mxu0 0
        %8231 = vmatpush2.bf16.msra.mxu0 0
        %8232 = vmatprep.mubr.bf16.mxu0 0
        %8233 = vmatmul.mubr.bf16.gmra.mxu0 %v8192
        %v8234 = vpop.f32.mrf.mxu0
        %v8235 = vadd.f32 %v8188, %v8234
        %v8236 = vpop.f32.mrf.mxu0
        %v8237 = vadd.f32 %v8188, %v8236
        %v8238 = vpop.f32.mrf.mxu0
        %v8239 = vpop.f32.mrf.mxu0
        %8240 = vdwg.mxu0
        %v8241 = vsel %vm3524, %v8235, -inf
        %v8242 = vrot.slane %v8241, 4
        %v8243 = vmax.f32 %v8241, %v8242
        %v8244 = vrot.slane %v8243, 2
        %v8245 = vmax.f32 %v8243, %v8244
        %v8246 = vrot.slane %v8245, 1
        %v8247 = vmax.f32 %v8245, %v8246
        %v8248 = vsel %vm3524, %v8237, -inf
        %v8249 = vrot.slane %v8248, 4
        %v8250 = vmax.f32 %v8248, %v8249
        %v8251 = vrot.slane %v8250, 2
        %v8252 = vmax.f32 %v8250, %v8251
        %v8253 = vrot.slane %v8252, 1
        %v8254 = vmax.f32 %v8252, %v8253
        %v8255 = vsub.f32 %v8235, %v8247
        %v8256 = vsub.f32 %v8237, %v8254
        %v8257 = vmul.f32 %v8255, 1.442695
        %v8258 = vpow.pop %v8257
        %v8259 = vmul.f32 %v8256, 1.442695
        %v8260 = vpow.pop %v8259
        %v8261 = vsel %vm3524, %v8258, 0.0
        %v8262 = vrot.slane %v8261, 4
        %v8263 = vadd.f32 %v8261, %v8262
        %v8264 = vrot.slane %v8263, 2
        %v8265 = vadd.f32 %v8263, %v8264
        %v8266 = vrot.slane %v8265, 1
        %v8267 = vadd.f32 %v8265, %v8266
        %v8268 = vsel %vm3524, %v8260, 0.0
        %v8269 = vrot.slane %v8268, 4
        %v8270 = vadd.f32 %v8268, %v8269
        %v8271 = vrot.slane %v8270, 2
        %v8272 = vadd.f32 %v8270, %v8271
        %v8273 = vrot.slane %v8272, 1
        %v8274 = vadd.f32 %v8272, %v8273
        %v8275 = vrcp.pop %v8267
        %v8276 = vrcp.pop %v8274
        %v8277 = vmul.f32 %v8258, %v8275
        %v8278 = vmul.f32 %v8260, %v8276
        %v8281 = vcombine.low %v8277, %v8278
        %8283 = vst [vmem:[%s1437] sm:$0x77] %v8281
        %p8284 = scmp.lt.s32.totalorder %s95, 1
        %s8285 = scalar_select %p8284, %s95, 1
        %s8286 = smul.addr %s8285, 2
        %s8287 = smul.addr %s8286, 4
        %s8288 = scalar_lea.vmem %s69, %s8287
        // Predicated region
        $region273: #{encoder_decoder_forward.1} parent=155 // pred_check
          %p8289 = pneg %p832
        $region274: #{encoder_decoder_forward.1} parent=155 // pred_check_branch
          %8291 = sbr.rel (%p8289) target = $region276
        $region275: #{encoder_decoder_forward.1} parent=155 // pred_region
          _
        $region276: #{encoder_decoder_forward.1} parent=155 // pred_fallthru
          _
      $region156: #{encoder_decoder_forward.1} parent=5 // pred_fallthru
        _
      %p8292 = scmp.le.s32.totalorder 2, %s90
      // Predicated region
      $region277: #{encoder_decoder_forward.1} parent=5 // pred_check
        %p8293 = pneg %p8292
      $region278: #{encoder_decoder_forward.1} parent=5 // pred_check_branch
        %8295 = sbr.rel (%p8293) target = $region280
      $region279: #{encoder_decoder_forward.1} parent=5 // pred_region
        %s8296 = ssub.s32 %s90, 2
        // Predicated region
        $region281: #{encoder_decoder_forward.1} parent=279 // pred_check
          %p8297 = pneg %p838
        $region282: #{encoder_decoder_forward.1} parent=279 // pred_check_branch
          %8299 = sbr.rel (%p8297) target = $region284
        $region283: #{encoder_decoder_forward.1} parent=279 // pred_region
          %p8300 = scmp.lt.s32.totalorder %s96, 1
          %s8301 = scalar_select %p8300, %s96, 1
          %s8302 = smul.addr %s8301, 2
          %s8303 = smul.addr %s8302, 4
          %s8304 = scalar_lea.vmem %s69, %s8303
        $region284: #{encoder_decoder_forward.1} parent=279 // pred_fallthru
          _
      $region280: #{encoder_decoder_forward.1} parent=5 // pred_fallthru
        _
    $region6: #{encoder_decoder_forward.1} parent=1 // loop_footer
      %s94 = sadd.s32 1, %s90
    $region7: #{encoder_decoder_forward.1} parent=1 // loop_footer_branch
      %89 = sbr.rel target = $region3
    $region8: #{encoder_decoder_forward.1} parent=1 // loop_exit
      _
    %8305 = vsyncpa [#allocation4], 1
    %s8306 = scalar_lea.sflag [#allocation4], 1
    %8307 = vsyncpa %s8306, 1
    %8308 = vsyncpa [#allocation6], 1
    %8309 = vsyncpa [#allocation9], 1
    %8310 = vsyncpa [#allocation12], 1
    %8311 = vsyncpa [#allocation15], 1
    %8312 = vsyncpa [#allocation18], 1
    %8313 = vsyncpa [#allocation21], 1
    %8314 = vsyncpa [#allocation24], 1
    %8315 = vsyncpa [#allocation27], 1
    %8316 = vsyncpa [#allocation30], 1
    %8317 = vsyncpa [#allocation33], 1
    %8318 = vsyncpa [#allocation36], 1
    %8319 = vsyncpa [#allocation39], 1
    %8320 = vsyncpa [#allocation42], 1
    %8321 = vsyncpa [#allocation45], 1

</llo_original>
